<compile_context>
chip_gen: v6e
topology: v6e:2x2x1
jax: 0.10.0
libtpu: 0.0.40
codegen_flags: <defaults>
</compile_context>

<pallas_src>
import functools

import jax
import jax.numpy as jnp
import numpy as np
from jax.experimental import pallas as pl
from jax.experimental.pallas import tpu as pltpu

D_IN_EACH = 1280          # each stream's feature width
D_CAT = 2 * D_IN_EACH     # 2560
D1, D2, D3, D_OUT = 1024, 512, 256, 64
D_OUT_PAD = 128           # lane-dense padded output width


def _round_up(x, m):
    return ((x + m - 1) // m) * m


def _prelu(h, a):
    # PReLU with a single scalar parameter a: max(0,x) + a*min(0,x)
    return jnp.where(h > 0, h, a * h)


def two_stream_mlp_kernel(s_ref, t_ref,
                          w1s_ref, w1t_ref, b1_ref,
                          w2_ref, b2_ref,
                          w3_ref, b3_ref,
                          w4_ref, b4_ref,
                          a_ref,
                          o_ref):
    bf16 = jnp.bfloat16
    f32 = jnp.float32

    # Layer 1: split-w1 form of cat([s, t]) @ W1 (no concat copy in VMEM).
    # s_ref / t_ref are already bf16 (cast once in the wrapper).
    h1 = (jnp.dot(s_ref[...], w1s_ref[...], preferred_element_type=f32)
          + jnp.dot(t_ref[...], w1t_ref[...], preferred_element_type=f32)
          + b1_ref[...])
    h1 = _prelu(h1, a_ref[0])

    h2 = jnp.dot(h1.astype(bf16), w2_ref[...],
                 preferred_element_type=f32) + b2_ref[...]
    h2 = _prelu(h2, a_ref[1])

    h3 = jnp.dot(h2.astype(bf16), w3_ref[...],
                 preferred_element_type=f32) + b3_ref[...]
    h3 = _prelu(h3, a_ref[2])

    # Final layer (padded to 128 lanes -> unmasked lane-dense store).
    o_ref[...] = (jnp.dot(h3.astype(bf16), w4_ref[...],
                          preferred_element_type=f32) + b4_ref[...])


def _pick_batch_tile(B, block_b):
    # >= 16 rows (bf16 sublane packing); cap near B/2 so large batches give the
    # grid >= 2 steps (both TensorCores on v7x / megacore halves get work).
    tb = min(block_b, _round_up(max(1, (B + 1) // 2), 16))
    return max(16, tb)


@functools.partial(jax.jit, static_argnames=("block_b",))
def two_stream_video_embedding(spatial_feat, temporal_feat, params, *,
                               block_b=256):
    """Forward pass.  `params` must come from prepare_params() (done once)."""
    B = spatial_feat.shape[0]
    TB = _pick_batch_tile(B, block_b)
    num_tiles = pl.cdiv(B, TB)
    B_pad = num_tiles * TB

    # Activations travel HBM->VMEM in bf16 (halves input DMA traffic).
    sp = spatial_feat if spatial_feat.dtype == jnp.bfloat16 else \
        spatial_feat.astype(jnp.bfloat16)
    tp = temporal_feat if temporal_feat.dtype == jnp.bfloat16 else \
        temporal_feat.astype(jnp.bfloat16)

    # Tail fallback only: no copy when the batch divides the tile.
    if B_pad != B:
        sp = jnp.pad(sp, ((0, B_pad - B), (0, 0)))
        tp = jnp.pad(tp, ((0, B_pad - B), (0, 0)))

    batch_spec = pl.BlockSpec((TB, D_IN_EACH), lambda i: (i, 0))
    # Constant index_map -> single DMA, then VMEM-resident for all grid steps.
    const = lambda shape: pl.BlockSpec(shape, lambda i: (0, 0))

    out_padded = pl.pallas_call(
        two_stream_mlp_kernel,
        out_shape=jax.ShapeDtypeStruct((B_pad, D_OUT_PAD), jnp.float32),
        grid=(num_tiles,),
        in_specs=[
            batch_spec,                          # spatial tile  (bf16)
            batch_spec,                          # temporal tile (bf16)
            const((D_IN_EACH, D1)),              # w1_s (resident, bf16)
            const((D_IN_EACH, D1)),              # w1_t (resident, bf16)
            const((1, D1)),                      # b1 (f32)
            const((D1, D2)),                     # w2
            const((1, D2)),                      # b2
            const((D2, D3)),                     # w3
            const((1, D3)),                      # b3
            const((D3, D_OUT_PAD)),              # w4 (lane-padded)
            const((1, D_OUT_PAD)),               # b4 (lane-padded)
            pl.BlockSpec(memory_space=pltpu.MemorySpace.SMEM),  # PReLU alphas
        ],
        out_specs=pl.BlockSpec((TB, D_OUT_PAD), lambda i: (i, 0)),
        compiler_params=pltpu.CompilerParams(
            dimension_semantics=("parallel",),
            vmem_limit_bytes=48 * 1024 * 1024,   # safe on v7x (64 MiB phys)
        ),
    )(sp, tp,
      params["w1_s"], params["w1_t"], params["b1"],
      params["w2"], params["b2"],
      params["w3"], params["b3"],
      params["w4"], params["b4"],
      params["alpha"])

    return out_padded[:B, :D_OUT]


def prepare_params(raw):
    """One-time parameter preprocessing (NOT done per forward call):
       - w1 split into spatial / temporal halves (avoids in-kernel concat)
       - w4 / b4 padded to 128 output lanes (lane-dense store)
       - weights cast to bf16; biases stay f32; PReLU scalars packed to (3,)
    NOTE: weights here are [in, out]; real PyTorch nn.Linear checkpoints are
    [out, in] and must be transposed when importing."""
    bf16 = jnp.bfloat16
    f32 = jnp.float32
    w1 = raw["w1"].astype(bf16)
    return {
        "w1_s": w1[:D_IN_EACH],
        "w1_t": w1[D_IN_EACH:],
        "b1": raw["b1"].astype(f32),
        "w2": raw["w2"].astype(bf16),
        "b2": raw["b2"].astype(f32),
        "w3": raw["w3"].astype(bf16),
        "b3": raw["b3"].astype(f32),
        "w4": jnp.pad(raw["w4"], ((0, 0), (0, D_OUT_PAD - D_OUT))).astype(bf16),
        "b4": jnp.pad(raw["b4"], ((0, 0), (0, D_OUT_PAD - D_OUT))).astype(f32),
        "alpha": jnp.stack([raw["a1"], raw["a2"], raw["a3"]]).astype(f32),
    }


def init_params(key):
    """Deterministic synthetic init matching the nn.Module shapes."""
    dims = [(D_CAT, D1), (D1, D2), (D2, D3), (D3, D_OUT)]
    raw = {}
    for i, (din, dout) in enumerate(dims, start=1):
        key, kw, kb = jax.random.split(key, 3)
        scale = 1.0 / np.sqrt(din)
        raw[f"w{i}"] = jax.random.uniform(kw, (din, dout), jnp.float32,
                                          minval=-scale, maxval=scale)
        raw[f"b{i}"] = jax.random.uniform(kb, (1, dout), jnp.float32,
                                          minval=-scale, maxval=scale)
    # nn.PReLU() default: one scalar parameter per layer, init 0.25.
    raw["a1"] = jnp.float32(0.25)
    raw["a2"] = jnp.float32(0.25)
    raw["a3"] = jnp.float32(0.25)
    return prepare_params(raw)


def reference_forward(spatial_feat, temporal_feat, p):
    """Pure-JAX reference with the same bf16-weight / f32-accum math."""
    bf16, f32 = jnp.bfloat16, jnp.float32
    s = spatial_feat.astype(bf16)
    t = temporal_feat.astype(bf16)
    h = (jnp.dot(s, p["w1_s"], preferred_element_type=f32)
         + jnp.dot(t, p["w1_t"], preferred_element_type=f32) + p["b1"])
    h = jnp.where(h > 0, h, p["alpha"][0] * h)
    h = jnp.dot(h.astype(bf16), p["w2"], preferred_element_type=f32) + p["b2"]
    h = jnp.where(h > 0, h, p["alpha"][1] * h)
    h = jnp.dot(h.astype(bf16), p["w3"], preferred_element_type=f32) + p["b3"]
    h = jnp.where(h > 0, h, p["alpha"][2] * h)
    out = jnp.dot(h.astype(bf16), p["w4"], preferred_element_type=f32) + p["b4"]
    return out[:, :D_OUT]


if __name__ == "__main__":
    key = jax.random.PRNGKey(0)
    key, ks, kt, kp = jax.random.split(key, 4)

    B = 2
    spatial_feat = jax.random.normal(ks, (B, D_IN_EACH), jnp.float32)
    temporal_feat = jax.random.normal(kt, (B, D_IN_EACH), jnp.float32)
    params = init_params(kp)           # one-time weight preprocessing

    out = two_stream_video_embedding(spatial_feat, temporal_feat, params)
    out = jax.block_until_ready(out)

    ref = reference_forward(spatial_feat, temporal_feat, params)
    np.testing.assert_allclose(np.asarray(out), np.asarray(ref),
                               rtol=2e-3, atol=2e-3)
    assert out.shape == (B, D_OUT)
    print("KERNEL_OK")
</pallas_src>

<mosaic_0001>
module attributes {stable_mosaic.version = 11 : i64} {
  func.func @two_stream_mlp_kernel(%arg0: i32, %arg1: memref<16x1280xbf16, #tpu.memory_space<vmem>>, %arg2: memref<16x1280xbf16, #tpu.memory_space<vmem>>, %arg3: memref<1280x1024xbf16, #tpu.memory_space<vmem>>, %arg4: memref<1280x1024xbf16, #tpu.memory_space<vmem>>, %arg5: memref<1x1024xf32, #tpu.memory_space<vmem>>, %arg6: memref<1024x512xbf16, #tpu.memory_space<vmem>>, %arg7: memref<1x512xf32, #tpu.memory_space<vmem>>, %arg8: memref<512x256xbf16, #tpu.memory_space<vmem>>, %arg9: memref<1x256xf32, #tpu.memory_space<vmem>>, %arg10: memref<256x128xbf16, #tpu.memory_space<vmem>>, %arg11: memref<1x128xf32, #tpu.memory_space<vmem>>, %arg12: memref<3xf32, #tpu.memory_space<smem>>, %arg13: memref<16x128xf32, #tpu.memory_space<vmem>>) attributes {dimension_semantics = [#tpu.dimension_semantics<parallel>], iteration_bounds = array<i64: 1>, scalar_prefetch = 0 : i64, scratch_operands = 0 : i64, tpu.core_type = #tpu.core_type<tc>, window_params = [{transform_indices = @transform_0, window_bounds = array<i64: 16, 1280>}, {transform_indices = @transform_1, window_bounds = array<i64: 16, 1280>}, {pipeline_mode = #tpu.pipeline_mode<synchronous>, transform_indices = @transform_2, window_bounds = array<i64: 1280, 1024>}, {pipeline_mode = #tpu.pipeline_mode<synchronous>, transform_indices = @transform_3, window_bounds = array<i64: 1280, 1024>}, {pipeline_mode = #tpu.pipeline_mode<synchronous>, transform_indices = @transform_4, window_bounds = array<i64: 1, 1024>}, {pipeline_mode = #tpu.pipeline_mode<synchronous>, transform_indices = @transform_5, window_bounds = array<i64: 1024, 512>}, {pipeline_mode = #tpu.pipeline_mode<synchronous>, transform_indices = @transform_6, window_bounds = array<i64: 1, 512>}, {pipeline_mode = #tpu.pipeline_mode<synchronous>, transform_indices = @transform_7, window_bounds = array<i64: 512, 256>}, {pipeline_mode = #tpu.pipeline_mode<synchronous>, transform_indices = @transform_8, window_bounds = array<i64: 1, 256>}, {pipeline_mode = #tpu.pipeline_mode<synchronous>, transform_indices = @transform_9, window_bounds = array<i64: 256, 128>}, {pipeline_mode = #tpu.pipeline_mode<synchronous>, transform_indices = @transform_10, window_bounds = array<i64: 1, 128>}, {transform_indices = @transform_11, window_bounds = array<i64: 3>}, {transform_indices = @transform_12, window_bounds = array<i64: 16, 128>}]} {
    %c0 = arith.constant 0 : index
    %c0_0 = arith.constant 0 : index
    %0 = vector.load %arg1[%c0, %c0_0] : memref<16x1280xbf16, #tpu.memory_space<vmem>>, vector<16x1280xbf16>
    %c0_1 = arith.constant 0 : index
    %c0_2 = arith.constant 0 : index
    %1 = vector.load %arg3[%c0_1, %c0_2] : memref<1280x1024xbf16, #tpu.memory_space<vmem>>, vector<1280x1024xbf16>
    %cst = arith.constant dense<0.000000e+00> : vector<16x1024xf32>
    %2 = tpu.matmul %0, %1, %cst {dimension_numbers = #tpu.dot_dimension_numbers<[1], [0], [0], [1], [0, 0, 1, 1], [], []>} : vector<16x1280xbf16>, vector<1280x1024xbf16>, vector<16x1024xf32> -> vector<16x1024xf32>
    %c0_3 = arith.constant 0 : index
    %c0_4 = arith.constant 0 : index
    %3 = vector.load %arg2[%c0_3, %c0_4] : memref<16x1280xbf16, #tpu.memory_space<vmem>>, vector<16x1280xbf16>
    %c0_5 = arith.constant 0 : index
    %c0_6 = arith.constant 0 : index
    %4 = vector.load %arg4[%c0_5, %c0_6] : memref<1280x1024xbf16, #tpu.memory_space<vmem>>, vector<1280x1024xbf16>
    %cst_7 = arith.constant dense<0.000000e+00> : vector<16x1024xf32>
    %5 = tpu.matmul %3, %4, %cst_7 {dimension_numbers = #tpu.dot_dimension_numbers<[1], [0], [0], [1], [0, 0, 1, 1], [], []>} : vector<16x1280xbf16>, vector<1280x1024xbf16>, vector<16x1024xf32> -> vector<16x1024xf32>
    %6 = arith.addf %2, %5 : vector<16x1024xf32>
    %c0_8 = arith.constant 0 : index
    %c0_9 = arith.constant 0 : index
    %7 = vector.load %arg5[%c0_8, %c0_9] : memref<1x1024xf32, #tpu.memory_space<vmem>>, vector<1x1024xf32>
    %8 = vector.broadcast %7 : vector<1x1024xf32> to vector<16x1024xf32>
    %9 = arith.addf %6, %8 : vector<16x1024xf32>
    %c0_10 = arith.constant 0 : index
    %10 = memref.load %arg12[%c0_10] : memref<3xf32, #tpu.memory_space<smem>>
    %cst_11 = arith.constant 0.000000e+00 : f32
    %11 = vector.broadcast %cst_11 : f32 to vector<16x1024xf32>
    %12 = arith.cmpf ogt, %9, %11 : vector<16x1024xf32>
    %13 = vector.broadcast %10 : f32 to vector<16x1024xf32>
    %14 = arith.mulf %13, %9 : vector<16x1024xf32>
    %15 = arith.select %12, %9, %14 : vector<16x1024xi1>, vector<16x1024xf32>
    %16 = arith.truncf %15 : vector<16x1024xf32> to vector<16x1024xbf16>
    %c0_12 = arith.constant 0 : index
    %c0_13 = arith.constant 0 : index
    %17 = vector.load %arg6[%c0_12, %c0_13] : memref<1024x512xbf16, #tpu.memory_space<vmem>>, vector<1024x512xbf16>
    %cst_14 = arith.constant dense<0.000000e+00> : vector<16x512xf32>
    %18 = tpu.matmul %16, %17, %cst_14 {dimension_numbers = #tpu.dot_dimension_numbers<[1], [0], [0], [1], [0, 0, 1, 1], [], []>} : vector<16x1024xbf16>, vector<1024x512xbf16>, vector<16x512xf32> -> vector<16x512xf32>
    %c0_15 = arith.constant 0 : index
    %c0_16 = arith.constant 0 : index
    %19 = vector.load %arg7[%c0_15, %c0_16] : memref<1x512xf32, #tpu.memory_space<vmem>>, vector<1x512xf32>
    %20 = vector.broadcast %19 : vector<1x512xf32> to vector<16x512xf32>
    %21 = arith.addf %18, %20 : vector<16x512xf32>
    %c1 = arith.constant 1 : index
    %22 = memref.load %arg12[%c1] : memref<3xf32, #tpu.memory_space<smem>>
    %cst_17 = arith.constant 0.000000e+00 : f32
    %23 = vector.broadcast %cst_17 : f32 to vector<16x512xf32>
    %24 = arith.cmpf ogt, %21, %23 : vector<16x512xf32>
    %25 = vector.broadcast %22 : f32 to vector<16x512xf32>
    %26 = arith.mulf %25, %21 : vector<16x512xf32>
    %27 = arith.select %24, %21, %26 : vector<16x512xi1>, vector<16x512xf32>
    %28 = arith.truncf %27 : vector<16x512xf32> to vector<16x512xbf16>
    %c0_18 = arith.constant 0 : index
    %c0_19 = arith.constant 0 : index
    %29 = vector.load %arg8[%c0_18, %c0_19] : memref<512x256xbf16, #tpu.memory_space<vmem>>, vector<512x256xbf16>
    %cst_20 = arith.constant dense<0.000000e+00> : vector<16x256xf32>
    %30 = tpu.matmul %28, %29, %cst_20 {dimension_numbers = #tpu.dot_dimension_numbers<[1], [0], [0], [1], [0, 0, 1, 1], [], []>} : vector<16x512xbf16>, vector<512x256xbf16>, vector<16x256xf32> -> vector<16x256xf32>
    %c0_21 = arith.constant 0 : index
    %c0_22 = arith.constant 0 : index
    %31 = vector.load %arg9[%c0_21, %c0_22] : memref<1x256xf32, #tpu.memory_space<vmem>>, vector<1x256xf32>
    %32 = vector.broadcast %31 : vector<1x256xf32> to vector<16x256xf32>
    %33 = arith.addf %30, %32 : vector<16x256xf32>
    %c2 = arith.constant 2 : index
    %34 = memref.load %arg12[%c2] : memref<3xf32, #tpu.memory_space<smem>>
    %cst_23 = arith.constant 0.000000e+00 : f32
    %35 = vector.broadcast %cst_23 : f32 to vector<16x256xf32>
    %36 = arith.cmpf ogt, %33, %35 : vector<16x256xf32>
    %37 = vector.broadcast %34 : f32 to vector<16x256xf32>
    %38 = arith.mulf %37, %33 : vector<16x256xf32>
    %39 = arith.select %36, %33, %38 : vector<16x256xi1>, vector<16x256xf32>
    %40 = arith.truncf %39 : vector<16x256xf32> to vector<16x256xbf16>
    %c0_24 = arith.constant 0 : index
    %c0_25 = arith.constant 0 : index
    %41 = vector.load %arg10[%c0_24, %c0_25] : memref<256x128xbf16, #tpu.memory_space<vmem>>, vector<256x128xbf16>
    %cst_26 = arith.constant dense<0.000000e+00> : vector<16x128xf32>
    %42 = tpu.matmul %40, %41, %cst_26 {dimension_numbers = #tpu.dot_dimension_numbers<[1], [0], [0], [1], [0, 0, 1, 1], [], []>} : vector<16x256xbf16>, vector<256x128xbf16>, vector<16x128xf32> -> vector<16x128xf32>
    %c0_27 = arith.constant 0 : index
    %c0_28 = arith.constant 0 : index
    %43 = vector.load %arg11[%c0_27, %c0_28] : memref<1x128xf32, #tpu.memory_space<vmem>>, vector<1x128xf32>
    %44 = vector.broadcast %43 : vector<1x128xf32> to vector<16x128xf32>
    %45 = arith.addf %42, %44 : vector<16x128xf32>
    %c0_29 = arith.constant 0 : index
    %c0_30 = arith.constant 0 : index
    %46 = vector.load %arg13[%c0_29, %c0_30] : memref<16x128xf32, #tpu.memory_space<vmem>>, vector<16x128xf32>
    tpu.vector_store %arg13[%c0_29, %c0_30], %45 {strides = array<i32>} : memref<16x128xf32, #tpu.memory_space<vmem>>, vector<16x128xf32>,
    return
  }
  func.func @transform_0(%arg0: i32) -> (i32, i32) {
    %c0_i32 = arith.constant 0 : i32
    %c0_i32_0 = arith.constant 0 : i32
    return %arg0, %c0_i32 : i32, i32
  }
  func.func @transform_1(%arg0: i32) -> (i32, i32) {
    %c0_i32 = arith.constant 0 : i32
    %c0_i32_0 = arith.constant 0 : i32
    return %arg0, %c0_i32 : i32, i32
  }
  func.func @transform_2(%arg0: i32) -> (i32, i32) {
    %c0_i32 = arith.constant 0 : i32
    %c0_i32_0 = arith.constant 0 : i32
    %c0_i32_1 = arith.constant 0 : i32
    return %c0_i32, %c0_i32_0 : i32, i32
  }
  func.func @transform_3(%arg0: i32) -> (i32, i32) {
    %c0_i32 = arith.constant 0 : i32
    %c0_i32_0 = arith.constant 0 : i32
    %c0_i32_1 = arith.constant 0 : i32
    return %c0_i32, %c0_i32_0 : i32, i32
  }
  func.func @transform_4(%arg0: i32) -> (i32, i32) {
    %c0_i32 = arith.constant 0 : i32
    %c0_i32_0 = arith.constant 0 : i32
    %c0_i32_1 = arith.constant 0 : i32
    return %c0_i32, %c0_i32_0 : i32, i32
  }
  func.func @transform_5(%arg0: i32) -> (i32, i32) {
    %c0_i32 = arith.constant 0 : i32
    %c0_i32_0 = arith.constant 0 : i32
    %c0_i32_1 = arith.constant 0 : i32
    return %c0_i32, %c0_i32_0 : i32, i32
  }
  func.func @transform_6(%arg0: i32) -> (i32, i32) {
    %c0_i32 = arith.constant 0 : i32
    %c0_i32_0 = arith.constant 0 : i32
    %c0_i32_1 = arith.constant 0 : i32
    return %c0_i32, %c0_i32_0 : i32, i32
  }
  func.func @transform_7(%arg0: i32) -> (i32, i32) {
    %c0_i32 = arith.constant 0 : i32
    %c0_i32_0 = arith.constant 0 : i32
    %c0_i32_1 = arith.constant 0 : i32
    return %c0_i32, %c0_i32_0 : i32, i32
  }
  func.func @transform_8(%arg0: i32) -> (i32, i32) {
    %c0_i32 = arith.constant 0 : i32
    %c0_i32_0 = arith.constant 0 : i32
    %c0_i32_1 = arith.constant 0 : i32
    return %c0_i32, %c0_i32_0 : i32, i32
  }
  func.func @transform_9(%arg0: i32) -> (i32, i32) {
    %c0_i32 = arith.constant 0 : i32
    %c0_i32_0 = arith.constant 0 : i32
    %c0_i32_1 = arith.constant 0 : i32
    return %c0_i32, %c0_i32_0 : i32, i32
  }
  func.func @transform_10(%arg0: i32) -> (i32, i32) {
    %c0_i32 = arith.constant 0 : i32
    %c0_i32_0 = arith.constant 0 : i32
    %c0_i32_1 = arith.constant 0 : i32
    return %c0_i32, %c0_i32_0 : i32, i32
  }
  func.func @transform_11(%arg0: i32) -> i32 {
    %c0_i32 = arith.constant 0 : i32
    %c0_i32_0 = arith.constant 0 : i32
    return %c0_i32 : i32
  }
  func.func @transform_12(%arg0: i32) -> (i32, i32) {
    %c0_i32 = arith.constant 0 : i32
    %c0_i32_0 = arith.constant 0 : i32
    return %arg0, %c0_i32 : i32, i32
  }
}

</mosaic_0001>

<llo_original>
// kernel: two_stream_video_embedding.1
$region0: #{two_stream_video_embedding.1}
  #allocation0 [shape = 'u32[]', space=smem, size = 0x4, offset = 0x4, fixed_abs, tag = 'smem constant byte address 0x4 - core index']
  #allocation1 [shape = 'u32[144,128]{1,0:T(1,128)}', space=vmem, size = 0x12000, scoped, tag = 'internal scratch']
  %s0 = inlined_call_operand.vmem [shape: bf16[16,1280], index: 0, kind: input, shape index: {}]
  %s1 = inlined_call_operand.vmem [shape: bf16[16,1280], index: 1, kind: input, shape index: {}]
  %s2 = inlined_call_operand.hbm [shape: bf16[1280,1024], index: 2, kind: input, shape index: {}]
  %s3 = inlined_call_operand.hbm [shape: bf16[1280,1024], index: 3, kind: input, shape index: {}]
  %s4 = inlined_call_operand.hbm [shape: f32[1,1024], index: 4, kind: input, shape index: {}]
  %s5 = inlined_call_operand.hbm [shape: bf16[1024,512], index: 5, kind: input, shape index: {}]
  %s6 = inlined_call_operand.hbm [shape: f32[1,512], index: 6, kind: input, shape index: {}]
  %s7 = inlined_call_operand.hbm [shape: bf16[512,256], index: 7, kind: input, shape index: {}]
  %s8 = inlined_call_operand.hbm [shape: f32[1,256], index: 8, kind: input, shape index: {}]
  %s9 = inlined_call_operand.hbm [shape: bf16[256,128], index: 9, kind: input, shape index: {}]
  %s10 = inlined_call_operand.hbm [shape: f32[1,128], index: 10, kind: input, shape index: {}]
  %s11 = inlined_call_operand.hbm [shape: f32[3], index: 11, kind: input, shape index: {}]
  %s12 = inlined_call_operand.vmem [shape: f32[16,128], index: 12, kind: output, shape index: {}]
  %s13 = sld [smem:[#allocation0]]
  $region98: #{two_stream_video_embedding.1} parent=0
    _
  %s15 = ssub.s32 1, %s13
  %s16 = scalar_select 0, %s15, %s13
  $region1: #{two_stream_video_embedding.1} parent=0
    #allocation2 [shape = 'u8[2621440]{0}', space=vmem, size = 0x280000, scoped, tag = 'input window, operand 2, single buffered']
    #allocation3 [shape = 's32[1]{0}', space=sflag, size = 0x4, scoped, tag = 'scoped memory for two_stream_video_embedding.1']
    #allocation4 [shape = 's32[1]{0}', space=sflag, size = 0x4, scoped, tag = 'scoped memory for two_stream_video_embedding.1']
    #allocation5 [shape = 'u8[2621440]{0}', space=vmem, size = 0x280000, scoped, tag = 'input window, operand 3, single buffered']
    #allocation6 [shape = 's32[1]{0}', space=sflag, size = 0x4, scoped, tag = 'scoped memory for two_stream_video_embedding.1']
    #allocation7 [shape = 'u8[4096]{0}', space=vmem, size = 0x1000, scoped, tag = 'input window, operand 4, single buffered']
    #allocation8 [shape = 'u8[1048576]{0}', space=vmem, size = 0x100000, scoped, tag = 'input window, operand 5, single buffered']
    #allocation9 [shape = 's32[1]{0}', space=sflag, size = 0x4, scoped, tag = 'scoped memory for two_stream_video_embedding.1']
    #allocation10 [shape = 'u8[2048]{0}', space=vmem, size = 0x800, scoped, tag = 'input window, operand 6, single buffered']
    #allocation11 [shape = 'u8[262144]{0}', space=vmem, size = 0x40000, scoped, tag = 'input window, operand 7, single buffered']
    #allocation12 [shape = 's32[1]{0}', space=sflag, size = 0x4, scoped, tag = 'scoped memory for two_stream_video_embedding.1']
    #allocation13 [shape = 'u8[1024]{0}', space=vmem, size = 0x400, scoped, tag = 'input window, operand 8, single buffered']
    #allocation14 [shape = 'u8[65536]{0}', space=vmem, size = 0x10000, scoped, tag = 'input window, operand 9, single buffered']
    #allocation15 [shape = 's32[1]{0}', space=sflag, size = 0x4, scoped, tag = 'scoped memory for two_stream_video_embedding.1']
    #allocation16 [shape = 'u8[512]{0}', space=vmem, size = 0x400, scoped, tag = 'input window, operand 10, single buffered']
    #allocation17 [shape = 'u8[512]{0}', space=smem, size = 0x200, scoped, tag = 'input window, operand 11, single buffered']
    %17 = vsyncpa [#allocation3], 0
    %18 = vsyncpa [#allocation6], 0
    %19 = vsyncpa [#allocation9], 0
    %20 = vsyncpa [#allocation12], 0
    %21 = vsyncpa [#allocation15], 0
    %22 = vsyncpa [#allocation4], 0
    // Predicated region
    $region2: #{two_stream_video_embedding.1} parent=1 // pred_check
      _
    $region3: #{two_stream_video_embedding.1} parent=1 // pred_check_branch
      %24 = sbr.rel (0) target = $region5
    $region4: #{two_stream_video_embedding.1} parent=1 // pred_region
      _
    $region5: #{two_stream_video_embedding.1} parent=1 // pred_fallthru
      _
    // Predicated region
    $region6: #{two_stream_video_embedding.1} parent=1 // pred_check
      _
    $region7: #{two_stream_video_embedding.1} parent=1 // pred_check_branch
      %26 = sbr.rel (0) target = $region9
    $region8: #{two_stream_video_embedding.1} parent=1 // pred_region
      _
    $region9: #{two_stream_video_embedding.1} parent=1 // pred_fallthru
      _
    // Predicated region
    $region10: #{two_stream_video_embedding.1} parent=1 // pred_check
      _
    $region11: #{two_stream_video_embedding.1} parent=1 // pred_check_branch
      %28 = sbr.rel (0) target = $region13
    $region12: #{two_stream_video_embedding.1} parent=1 // pred_region
      %s30 = ssub.s32 81920, 81920
      %31 = vsyncadd [#allocation3], %s30
      %s32 = sshll.u32 [#allocation2], 4
      %s33 = int_to_ptr.vmem [resolvable:$true] %s32
      %38 = dma.hbm_to_vmem [thread:$0]  %s2, 81920, %s33, [#allocation3], 512, 512, 32
    $region13: #{two_stream_video_embedding.1} parent=1 // pred_fallthru
      _
    // Predicated region
    $region14: #{two_stream_video_embedding.1} parent=1 // pred_check
      _
    $region15: #{two_stream_video_embedding.1} parent=1 // pred_check_branch
      %40 = sbr.rel (0) target = $region17
    $region16: #{two_stream_video_embedding.1} parent=1 // pred_region
      %s42 = ssub.s32 81920, 81920
      %43 = vsyncadd [#allocation6], %s42
      %s44 = sshll.u32 [#allocation5], 4
      %s45 = int_to_ptr.vmem [resolvable:$true] %s44
      %50 = dma.hbm_to_vmem [thread:$0]  %s3, 81920, %s45, [#allocation6], 512, 512, 32
    $region17: #{two_stream_video_embedding.1} parent=1 // pred_fallthru
      _
    // Predicated region
    $region18: #{two_stream_video_embedding.1} parent=1 // pred_check
      _
    $region19: #{two_stream_video_embedding.1} parent=1 // pred_check_branch
      %52 = sbr.rel (0) target = $region21
    $region20: #{two_stream_video_embedding.1} parent=1 // pred_region
      %s54 = ssub.s32 128, 128
      %55 = vsyncadd [#allocation6], %s54
      %s57 = sshll.u32 [#allocation7], 4
      %s58 = int_to_ptr.vmem [resolvable:$true] %s57
      %60 = dma.hbm_to_vmem [thread:$0]  %s4, 128, %s58, [#allocation6]
    $region21: #{two_stream_video_embedding.1} parent=1 // pred_fallthru
      _
    // Predicated region
    $region22: #{two_stream_video_embedding.1} parent=1 // pred_check
      _
    $region23: #{two_stream_video_embedding.1} parent=1 // pred_check_branch
      %62 = sbr.rel (0) target = $region25
    $region24: #{two_stream_video_embedding.1} parent=1 // pred_region
      %s64 = ssub.s32 32768, 32768
      %65 = vsyncadd [#allocation9], %s64
      %s66 = sshll.u32 [#allocation8], 4
      %s67 = int_to_ptr.vmem [resolvable:$true] %s66
      %72 = dma.hbm_to_vmem [thread:$0]  %s5, 32768, %s67, [#allocation9], 256, 256, 16
    $region25: #{two_stream_video_embedding.1} parent=1 // pred_fallthru
      _
    // Predicated region
    $region26: #{two_stream_video_embedding.1} parent=1 // pred_check
      _
    $region27: #{two_stream_video_embedding.1} parent=1 // pred_check_branch
      %74 = sbr.rel (0) target = $region29
    $region28: #{two_stream_video_embedding.1} parent=1 // pred_region
      %s76 = ssub.s32 64, 64
      %77 = vsyncadd [#allocation9], %s76
      %s79 = sshll.u32 [#allocation10], 4
      %s80 = int_to_ptr.vmem [resolvable:$true] %s79
      %82 = dma.hbm_to_vmem [thread:$0]  %s6, 64, %s80, [#allocation9]
    $region29: #{two_stream_video_embedding.1} parent=1 // pred_fallthru
      _
    // Predicated region
    $region30: #{two_stream_video_embedding.1} parent=1 // pred_check
      _
    $region31: #{two_stream_video_embedding.1} parent=1 // pred_check_branch
      %84 = sbr.rel (0) target = $region33
    $region32: #{two_stream_video_embedding.1} parent=1 // pred_region
      %s86 = ssub.s32 8192, 8192
      %87 = vsyncadd [#allocation12], %s86
      %s88 = sshll.u32 [#allocation11], 4
      %s89 = int_to_ptr.vmem [resolvable:$true] %s88
      %94 = dma.hbm_to_vmem [thread:$0]  %s7, 8192, %s89, [#allocation12], 128, 128, 8
    $region33: #{two_stream_video_embedding.1} parent=1 // pred_fallthru
      _
    // Predicated region
    $region34: #{two_stream_video_embedding.1} parent=1 // pred_check
      _
    $region35: #{two_stream_video_embedding.1} parent=1 // pred_check_branch
      %96 = sbr.rel (0) target = $region37
    $region36: #{two_stream_video_embedding.1} parent=1 // pred_region
      %s98 = ssub.s32 32, 32
      %99 = vsyncadd [#allocation12], %s98
      %s101 = sshll.u32 [#allocation13], 4
      %s102 = int_to_ptr.vmem [resolvable:$true] %s101
      %104 = dma.hbm_to_vmem [thread:$0]  %s8, 32, %s102, [#allocation12]
    $region37: #{two_stream_video_embedding.1} parent=1 // pred_fallthru
      _
    // Predicated region
    $region38: #{two_stream_video_embedding.1} parent=1 // pred_check
      _
    $region39: #{two_stream_video_embedding.1} parent=1 // pred_check_branch
      %106 = sbr.rel (0) target = $region41
    $region40: #{two_stream_video_embedding.1} parent=1 // pred_region
      %s108 = ssub.s32 2048, 2048
      %109 = vsyncadd [#allocation15], %s108
      %s110 = sshll.u32 [#allocation14], 4
      %s111 = int_to_ptr.vmem [resolvable:$true] %s110
      %116 = dma.hbm_to_vmem [thread:$0]  %s9, 2048, %s111, [#allocation15], 64, 64, 4
    $region41: #{two_stream_video_embedding.1} parent=1 // pred_fallthru
      _
    // Predicated region
    $region42: #{two_stream_video_embedding.1} parent=1 // pred_check
      _
    $region43: #{two_stream_video_embedding.1} parent=1 // pred_check_branch
      %118 = sbr.rel (0) target = $region45
    $region44: #{two_stream_video_embedding.1} parent=1 // pred_region
      %s120 = ssub.s32 16, 16
      %121 = vsyncadd [#allocation15], %s120
      %s123 = sshll.u32 [#allocation16], 4
      %s124 = int_to_ptr.vmem [resolvable:$true] %s123
      %126 = dma.hbm_to_vmem [thread:$0]  %s10, 16, %s124, [#allocation15]
    $region45: #{two_stream_video_embedding.1} parent=1 // pred_fallthru
      _
    // Predicated region
    $region46: #{two_stream_video_embedding.1} parent=1 // pred_check
      _
    $region47: #{two_stream_video_embedding.1} parent=1 // pred_check_branch
      %128 = sbr.rel (0) target = $region49
    $region48: #{two_stream_video_embedding.1} parent=1 // pred_region
      %s130 = ssub.s32 16, 16
      %131 = vsyncadd [#allocation4], %s130
      %134 = dma.hbm_to_smem %s11, 16, [#allocation17], [#allocation4]
    $region49: #{two_stream_video_embedding.1} parent=1 // pred_fallthru
      _
    // Predicated region
    $region50: #{two_stream_video_embedding.1} parent=1 // pred_check
      _
    $region51: #{two_stream_video_embedding.1} parent=1 // pred_check_branch
      %136 = sbr.rel (0) target = $region53
    $region52: #{two_stream_video_embedding.1} parent=1 // pred_region
      %137 = dma.done [#allocation3], 81920
    $region53: #{two_stream_video_embedding.1} parent=1 // pred_fallthru
      _
    // Predicated region
    $region54: #{two_stream_video_embedding.1} parent=1 // pred_check
      _
    $region55: #{two_stream_video_embedding.1} parent=1 // pred_check_branch
      %139 = sbr.rel (0) target = $region57
    $region56: #{two_stream_video_embedding.1} parent=1 // pred_region
      %140 = dma.done [#allocation6], 81920
    $region57: #{two_stream_video_embedding.1} parent=1 // pred_fallthru
      _
    // Predicated region
    $region58: #{two_stream_video_embedding.1} parent=1 // pred_check
      _
    $region59: #{two_stream_video_embedding.1} parent=1 // pred_check_branch
      %142 = sbr.rel (0) target = $region61
    $region60: #{two_stream_video_embedding.1} parent=1 // pred_region
      %143 = dma.done [#allocation6], 128
    $region61: #{two_stream_video_embedding.1} parent=1 // pred_fallthru
      _
    // Predicated region
    $region62: #{two_stream_video_embedding.1} parent=1 // pred_check
      _
    $region63: #{two_stream_video_embedding.1} parent=1 // pred_check_branch
      %145 = sbr.rel (0) target = $region65
    $region64: #{two_stream_video_embedding.1} parent=1 // pred_region
      %146 = dma.done [#allocation9], 32768
    $region65: #{two_stream_video_embedding.1} parent=1 // pred_fallthru
      _
    // Predicated region
    $region66: #{two_stream_video_embedding.1} parent=1 // pred_check
      _
    $region67: #{two_stream_video_embedding.1} parent=1 // pred_check_branch
      %148 = sbr.rel (0) target = $region69
    $region68: #{two_stream_video_embedding.1} parent=1 // pred_region
      %149 = dma.done [#allocation9], 64
    $region69: #{two_stream_video_embedding.1} parent=1 // pred_fallthru
      _
    // Predicated region
    $region70: #{two_stream_video_embedding.1} parent=1 // pred_check
      _
    $region71: #{two_stream_video_embedding.1} parent=1 // pred_check_branch
      %151 = sbr.rel (0) target = $region73
    $region72: #{two_stream_video_embedding.1} parent=1 // pred_region
      %152 = dma.done [#allocation12], 8192
    $region73: #{two_stream_video_embedding.1} parent=1 // pred_fallthru
      _
    // Predicated region
    $region74: #{two_stream_video_embedding.1} parent=1 // pred_check
      _
    $region75: #{two_stream_video_embedding.1} parent=1 // pred_check_branch
      %154 = sbr.rel (0) target = $region77
    $region76: #{two_stream_video_embedding.1} parent=1 // pred_region
      %155 = dma.done [#allocation12], 32
    $region77: #{two_stream_video_embedding.1} parent=1 // pred_fallthru
      _
    // Predicated region
    $region78: #{two_stream_video_embedding.1} parent=1 // pred_check
      _
    $region79: #{two_stream_video_embedding.1} parent=1 // pred_check_branch
      %157 = sbr.rel (0) target = $region81
    $region80: #{two_stream_video_embedding.1} parent=1 // pred_region
      %158 = dma.done [#allocation15], 2048
    $region81: #{two_stream_video_embedding.1} parent=1 // pred_fallthru
      _
    // Predicated region
    $region82: #{two_stream_video_embedding.1} parent=1 // pred_check
      _
    $region83: #{two_stream_video_embedding.1} parent=1 // pred_check_branch
      %160 = sbr.rel (0) target = $region85
    $region84: #{two_stream_video_embedding.1} parent=1 // pred_region
      %161 = dma.done [#allocation15], 16
    $region85: #{two_stream_video_embedding.1} parent=1 // pred_fallthru
      _
    // Predicated region
    $region86: #{two_stream_video_embedding.1} parent=1 // pred_check
      _
    $region87: #{two_stream_video_embedding.1} parent=1 // pred_check_branch
      %163 = sbr.rel (0) target = $region89
    $region88: #{two_stream_video_embedding.1} parent=1 // pred_region
      %164 = dma.done [#allocation4], 16
    $region89: #{two_stream_video_embedding.1} parent=1 // pred_fallthru
      _
    %165 = sfence
    %v167 = vld [vmem:[%s0] sm:$0xff]
    %v168 = vld [vmem:[%s0 + $0x8] sm:$0xff]
    %v169 = vld [vmem:[%s0 + $0x10] sm:$0xff]
    %v170 = vld [vmem:[%s0 + $0x18] sm:$0xff]
    %v171 = vld [vmem:[%s0 + $0x20] sm:$0xff]
    %v172 = vld [vmem:[%s0 + $0x28] sm:$0xff]
    %v173 = vld [vmem:[%s0 + $0x30] sm:$0xff]
    %v174 = vld [vmem:[%s0 + $0x38] sm:$0xff]
    %v175 = vld [vmem:[%s0 + $0x40] sm:$0xff]
    %v176 = vld [vmem:[%s0 + $0x48] sm:$0xff]
    %v177 = vld [vmem:[#allocation2] sm:$0xff]
    %v178 = vld [vmem:[#allocation2 + $0x8] sm:$0xff]
    %v179 = vld [vmem:[#allocation2 + $0x10] sm:$0xff]
    %v180 = vld [vmem:[#allocation2 + $0x18] sm:$0xff]
    %v181 = vld [vmem:[#allocation2 + $0x20] sm:$0xff]
    %v182 = vld [vmem:[#allocation2 + $0x28] sm:$0xff]
    %v183 = vld [vmem:[#allocation2 + $0x30] sm:$0xff]
    %v184 = vld [vmem:[#allocation2 + $0x38] sm:$0xff]
    %v185 = vld [vmem:[#allocation2 + $0x40] sm:$0xff]
    %v186 = vld [vmem:[#allocation2 + $0x48] sm:$0xff]
    %v187 = vld [vmem:[#allocation2 + $0x50] sm:$0xff]
    %v188 = vld [vmem:[#allocation2 + $0x58] sm:$0xff]
    %v189 = vld [vmem:[#allocation2 + $0x60] sm:$0xff]
    %v190 = vld [vmem:[#allocation2 + $0x68] sm:$0xff]
    %v191 = vld [vmem:[#allocation2 + $0x70] sm:$0xff]
    %v192 = vld [vmem:[#allocation2 + $0x78] sm:$0xff]
    %v193 = vld [vmem:[#allocation2 + $0x80] sm:$0xff]
    %v194 = vld [vmem:[#allocation2 + $0x88] sm:$0xff]
    %v195 = vld [vmem:[#allocation2 + $0x90] sm:$0xff]
    %v196 = vld [vmem:[#allocation2 + $0x98] sm:$0xff]
    %v197 = vld [vmem:[#allocation2 + $0xa0] sm:$0xff]
    %v198 = vld [vmem:[#allocation2 + $0xa8] sm:$0xff]
    %v199 = vld [vmem:[#allocation2 + $0xb0] sm:$0xff]
    %v200 = vld [vmem:[#allocation2 + $0xb8] sm:$0xff]
    %v201 = vld [vmem:[#allocation2 + $0xc0] sm:$0xff]
    %v202 = vld [vmem:[#allocation2 + $0xc8] sm:$0xff]
    %v203 = vld [vmem:[#allocation2 + $0xd0] sm:$0xff]
    %v204 = vld [vmem:[#allocation2 + $0xd8] sm:$0xff]
    %v205 = vld [vmem:[#allocation2 + $0xe0] sm:$0xff]
    %v206 = vld [vmem:[#allocation2 + $0xe8] sm:$0xff]
    %v207 = vld [vmem:[#allocation2 + $0xf0] sm:$0xff]
    %v208 = vld [vmem:[#allocation2 + $0xf8] sm:$0xff]
    %v209 = vld [vmem:[#allocation2 + $0x100] sm:$0xff]
    %v210 = vld [vmem:[#allocation2 + $0x108] sm:$0xff]
    %v211 = vld [vmem:[#allocation2 + $0x110] sm:$0xff]
    %v212 = vld [vmem:[#allocation2 + $0x118] sm:$0xff]
    %v213 = vld [vmem:[#allocation2 + $0x120] sm:$0xff]
    %v214 = vld [vmem:[#allocation2 + $0x128] sm:$0xff]
    %v215 = vld [vmem:[#allocation2 + $0x130] sm:$0xff]
    %v216 = vld [vmem:[#allocation2 + $0x138] sm:$0xff]
    %v217 = vld [vmem:[#allocation2 + $0x140] sm:$0xff]
    %v218 = vld [vmem:[#allocation2 + $0x148] sm:$0xff]
    %v219 = vld [vmem:[#allocation2 + $0x150] sm:$0xff]
    %v220 = vld [vmem:[#allocation2 + $0x158] sm:$0xff]
    %v221 = vld [vmem:[#allocation2 + $0x160] sm:$0xff]
    %v222 = vld [vmem:[#allocation2 + $0x168] sm:$0xff]
    %v223 = vld [vmem:[#allocation2 + $0x170] sm:$0xff]
    %v224 = vld [vmem:[#allocation2 + $0x178] sm:$0xff]
    %v225 = vld [vmem:[#allocation2 + $0x180] sm:$0xff]
    %v226 = vld [vmem:[#allocation2 + $0x188] sm:$0xff]
    %v227 = vld [vmem:[#allocation2 + $0x190] sm:$0xff]
    %v228 = vld [vmem:[#allocation2 + $0x198] sm:$0xff]
    %v229 = vld [vmem:[#allocation2 + $0x1a0] sm:$0xff]
    %v230 = vld [vmem:[#allocation2 + $0x1a8] sm:$0xff]
    %v231 = vld [vmem:[#allocation2 + $0x1b0] sm:$0xff]
    %v232 = vld [vmem:[#allocation2 + $0x1b8] sm:$0xff]
    %v233 = vld [vmem:[#allocation2 + $0x1c0] sm:$0xff]
    %v234 = vld [vmem:[#allocation2 + $0x1c8] sm:$0xff]
    %v235 = vld [vmem:[#allocation2 + $0x1d0] sm:$0xff]
    %v236 = vld [vmem:[#allocation2 + $0x1d8] sm:$0xff]
    %v237 = vld [vmem:[#allocation2 + $0x1e0] sm:$0xff]
    %v238 = vld [vmem:[#allocation2 + $0x1e8] sm:$0xff]
    %v239 = vld [vmem:[#allocation2 + $0x1f0] sm:$0xff]
    %v240 = vld [vmem:[#allocation2 + $0x1f8] sm:$0xff]
    %v241 = vld [vmem:[#allocation2 + $0x200] sm:$0xff]
    %v242 = vld [vmem:[#allocation2 + $0x208] sm:$0xff]
    %v243 = vld [vmem:[#allocation2 + $0x210] sm:$0xff]
    %v244 = vld [vmem:[#allocation2 + $0x218] sm:$0xff]
    %v245 = vld [vmem:[#allocation2 + $0x220] sm:$0xff]
    %v246 = vld [vmem:[#allocation2 + $0x228] sm:$0xff]
    %v247 = vld [vmem:[#allocation2 + $0x230] sm:$0xff]
    %v248 = vld [vmem:[#allocation2 + $0x238] sm:$0xff]
    %v249 = vld [vmem:[#allocation2 + $0x240] sm:$0xff]
    %v250 = vld [vmem:[#allocation2 + $0x248] sm:$0xff]
    %v251 = vld [vmem:[#allocation2 + $0x250] sm:$0xff]
    %v252 = vld [vmem:[#allocation2 + $0x258] sm:$0xff]
    %v253 = vld [vmem:[#allocation2 + $0x260] sm:$0xff]
    %v254 = vld [vmem:[#allocation2 + $0x268] sm:$0xff]
    %v255 = vld [vmem:[#allocation2 + $0x270] sm:$0xff]
    %v256 = vld [vmem:[#allocation2 + $0x278] sm:$0xff]
    %v257 = vld [vmem:[#allocation2 + $0x280] sm:$0xff]
    %v258 = vld [vmem:[#allocation2 + $0x288] sm:$0xff]
    %v259 = vld [vmem:[#allocation2 + $0x290] sm:$0xff]
    %v260 = vld [vmem:[#allocation2 + $0x298] sm:$0xff]
    %v261 = vld [vmem:[#allocation2 + $0x2a0] sm:$0xff]
    %v262 = vld [vmem:[#allocation2 + $0x2a8] sm:$0xff]
    %v263 = vld [vmem:[#allocation2 + $0x2b0] sm:$0xff]
    %v264 = vld [vmem:[#allocation2 + $0x2b8] sm:$0xff]
    %v265 = vld [vmem:[#allocation2 + $0x2c0] sm:$0xff]
    %v266 = vld [vmem:[#allocation2 + $0x2c8] sm:$0xff]
    %v267 = vld [vmem:[#allocation2 + $0x2d0] sm:$0xff]
    %v268 = vld [vmem:[#allocation2 + $0x2d8] sm:$0xff]
    %v269 = vld [vmem:[#allocation2 + $0x2e0] sm:$0xff]
    %v270 = vld [vmem:[#allocation2 + $0x2e8] sm:$0xff]
    %v271 = vld [vmem:[#allocation2 + $0x2f0] sm:$0xff]
    %v272 = vld [vmem:[#allocation2 + $0x2f8] sm:$0xff]
    %v273 = vld [vmem:[#allocation2 + $0x300] sm:$0xff]
    %v274 = vld [vmem:[#allocation2 + $0x308] sm:$0xff]
    %v275 = vld [vmem:[#allocation2 + $0x310] sm:$0xff]
    %v276 = vld [vmem:[#allocation2 + $0x318] sm:$0xff]
    %v277 = vld [vmem:[#allocation2 + $0x320] sm:$0xff]
    %v278 = vld [vmem:[#allocation2 + $0x328] sm:$0xff]
    %v279 = vld [vmem:[#allocation2 + $0x330] sm:$0xff]
    %v280 = vld [vmem:[#allocation2 + $0x338] sm:$0xff]
    %v281 = vld [vmem:[#allocation2 + $0x340] sm:$0xff]
    %v282 = vld [vmem:[#allocation2 + $0x348] sm:$0xff]
    %v283 = vld [vmem:[#allocation2 + $0x350] sm:$0xff]
    %v284 = vld [vmem:[#allocation2 + $0x358] sm:$0xff]
    %v285 = vld [vmem:[#allocation2 + $0x360] sm:$0xff]
    %v286 = vld [vmem:[#allocation2 + $0x368] sm:$0xff]
    %v287 = vld [vmem:[#allocation2 + $0x370] sm:$0xff]
    %v288 = vld [vmem:[#allocation2 + $0x378] sm:$0xff]
    %v289 = vld [vmem:[#allocation2 + $0x380] sm:$0xff]
    %v290 = vld [vmem:[#allocation2 + $0x388] sm:$0xff]
    %v291 = vld [vmem:[#allocation2 + $0x390] sm:$0xff]
    %v292 = vld [vmem:[#allocation2 + $0x398] sm:$0xff]
    %v293 = vld [vmem:[#allocation2 + $0x3a0] sm:$0xff]
    %v294 = vld [vmem:[#allocation2 + $0x3a8] sm:$0xff]
    %v295 = vld [vmem:[#allocation2 + $0x3b0] sm:$0xff]
    %v296 = vld [vmem:[#allocation2 + $0x3b8] sm:$0xff]
    %v297 = vld [vmem:[#allocation2 + $0x3c0] sm:$0xff]
    %v298 = vld [vmem:[#allocation2 + $0x3c8] sm:$0xff]
    %v299 = vld [vmem:[#allocation2 + $0x3d0] sm:$0xff]
    %v300 = vld [vmem:[#allocation2 + $0x3d8] sm:$0xff]
    %v301 = vld [vmem:[#allocation2 + $0x3e0] sm:$0xff]
    %v302 = vld [vmem:[#allocation2 + $0x3e8] sm:$0xff]
    %v303 = vld [vmem:[#allocation2 + $0x3f0] sm:$0xff]
    %v304 = vld [vmem:[#allocation2 + $0x3f8] sm:$0xff]
    %v305 = vld [vmem:[#allocation2 + $0x400] sm:$0xff]
    %v306 = vld [vmem:[#allocation2 + $0x408] sm:$0xff]
    %v307 = vld [vmem:[#allocation2 + $0x410] sm:$0xff]
    %v308 = vld [vmem:[#allocation2 + $0x418] sm:$0xff]
    %v309 = vld [vmem:[#allocation2 + $0x420] sm:$0xff]
    %v310 = vld [vmem:[#allocation2 + $0x428] sm:$0xff]
    %v311 = vld [vmem:[#allocation2 + $0x430] sm:$0xff]
    %v312 = vld [vmem:[#allocation2 + $0x438] sm:$0xff]
    %v313 = vld [vmem:[#allocation2 + $0x440] sm:$0xff]
    %v314 = vld [vmem:[#allocation2 + $0x448] sm:$0xff]
    %v315 = vld [vmem:[#allocation2 + $0x450] sm:$0xff]
    %v316 = vld [vmem:[#allocation2 + $0x458] sm:$0xff]
    %v317 = vld [vmem:[#allocation2 + $0x460] sm:$0xff]
    %v318 = vld [vmem:[#allocation2 + $0x468] sm:$0xff]
    %v319 = vld [vmem:[#allocation2 + $0x470] sm:$0xff]
    %v320 = vld [vmem:[#allocation2 + $0x478] sm:$0xff]
    %v321 = vld [vmem:[#allocation2 + $0x480] sm:$0xff]
    %v322 = vld [vmem:[#allocation2 + $0x488] sm:$0xff]
    %v323 = vld [vmem:[#allocation2 + $0x490] sm:$0xff]
    %v324 = vld [vmem:[#allocation2 + $0x498] sm:$0xff]
    %v325 = vld [vmem:[#allocation2 + $0x4a0] sm:$0xff]
    %v326 = vld [vmem:[#allocation2 + $0x4a8] sm:$0xff]
    %v327 = vld [vmem:[#allocation2 + $0x4b0] sm:$0xff]
    %v328 = vld [vmem:[#allocation2 + $0x4b8] sm:$0xff]
    %v329 = vld [vmem:[#allocation2 + $0x4c0] sm:$0xff]
    %v330 = vld [vmem:[#allocation2 + $0x4c8] sm:$0xff]
    %v331 = vld [vmem:[#allocation2 + $0x4d0] sm:$0xff]
    %v332 = vld [vmem:[#allocation2 + $0x4d8] sm:$0xff]
    %v333 = vld [vmem:[#allocation2 + $0x4e0] sm:$0xff]
    %v334 = vld [vmem:[#allocation2 + $0x4e8] sm:$0xff]
    %v335 = vld [vmem:[#allocation2 + $0x4f0] sm:$0xff]
    %v336 = vld [vmem:[#allocation2 + $0x4f8] sm:$0xff]
    %v337 = vld [vmem:[#allocation2 + $0x500] sm:$0xff]
    %v338 = vld [vmem:[#allocation2 + $0x508] sm:$0xff]
    %v339 = vld [vmem:[#allocation2 + $0x510] sm:$0xff]
    %v340 = vld [vmem:[#allocation2 + $0x518] sm:$0xff]
    %v341 = vld [vmem:[#allocation2 + $0x520] sm:$0xff]
    %v342 = vld [vmem:[#allocation2 + $0x528] sm:$0xff]
    %v343 = vld [vmem:[#allocation2 + $0x530] sm:$0xff]
    %v344 = vld [vmem:[#allocation2 + $0x538] sm:$0xff]
    %v345 = vld [vmem:[#allocation2 + $0x540] sm:$0xff]
    %v346 = vld [vmem:[#allocation2 + $0x548] sm:$0xff]
    %v347 = vld [vmem:[#allocation2 + $0x550] sm:$0xff]
    %v348 = vld [vmem:[#allocation2 + $0x558] sm:$0xff]
    %v349 = vld [vmem:[#allocation2 + $0x560] sm:$0xff]
    %v350 = vld [vmem:[#allocation2 + $0x568] sm:$0xff]
    %v351 = vld [vmem:[#allocation2 + $0x570] sm:$0xff]
    %v352 = vld [vmem:[#allocation2 + $0x578] sm:$0xff]
    %v353 = vld [vmem:[#allocation2 + $0x580] sm:$0xff]
    %v354 = vld [vmem:[#allocation2 + $0x588] sm:$0xff]
    %v355 = vld [vmem:[#allocation2 + $0x590] sm:$0xff]
    %v356 = vld [vmem:[#allocation2 + $0x598] sm:$0xff]
    %v357 = vld [vmem:[#allocation2 + $0x5a0] sm:$0xff]
    %v358 = vld [vmem:[#allocation2 + $0x5a8] sm:$0xff]
    %v359 = vld [vmem:[#allocation2 + $0x5b0] sm:$0xff]
    %v360 = vld [vmem:[#allocation2 + $0x5b8] sm:$0xff]
    %v361 = vld [vmem:[#allocation2 + $0x5c0] sm:$0xff]
    %v362 = vld [vmem:[#allocation2 + $0x5c8] sm:$0xff]
    %v363 = vld [vmem:[#allocation2 + $0x5d0] sm:$0xff]
    %v364 = vld [vmem:[#allocation2 + $0x5d8] sm:$0xff]
    %v365 = vld [vmem:[#allocation2 + $0x5e0] sm:$0xff]
    %v366 = vld [vmem:[#allocation2 + $0x5e8] sm:$0xff]
    %v367 = vld [vmem:[#allocation2 + $0x5f0] sm:$0xff]
    %v368 = vld [vmem:[#allocation2 + $0x5f8] sm:$0xff]
    %v369 = vld [vmem:[#allocation2 + $0x600] sm:$0xff]
    %v370 = vld [vmem:[#allocation2 + $0x608] sm:$0xff]
    %v371 = vld [vmem:[#allocation2 + $0x610] sm:$0xff]
    %v372 = vld [vmem:[#allocation2 + $0x618] sm:$0xff]
    %v373 = vld [vmem:[#allocation2 + $0x620] sm:$0xff]
    %v374 = vld [vmem:[#allocation2 + $0x628] sm:$0xff]
    %v375 = vld [vmem:[#allocation2 + $0x630] sm:$0xff]
    %v376 = vld [vmem:[#allocation2 + $0x638] sm:$0xff]
    %v377 = vld [vmem:[#allocation2 + $0x640] sm:$0xff]
    %v378 = vld [vmem:[#allocation2 + $0x648] sm:$0xff]
    %v379 = vld [vmem:[#allocation2 + $0x650] sm:$0xff]
    %v380 = vld [vmem:[#allocation2 + $0x658] sm:$0xff]
    %v381 = vld [vmem:[#allocation2 + $0x660] sm:$0xff]
    %v382 = vld [vmem:[#allocation2 + $0x668] sm:$0xff]
    %v383 = vld [vmem:[#allocation2 + $0x670] sm:$0xff]
    %v384 = vld [vmem:[#allocation2 + $0x678] sm:$0xff]
    %v385 = vld [vmem:[#allocation2 + $0x680] sm:$0xff]
    %v386 = vld [vmem:[#allocation2 + $0x688] sm:$0xff]
    %v387 = vld [vmem:[#allocation2 + $0x690] sm:$0xff]
    %v388 = vld [vmem:[#allocation2 + $0x698] sm:$0xff]
    %v389 = vld [vmem:[#allocation2 + $0x6a0] sm:$0xff]
    %v390 = vld [vmem:[#allocation2 + $0x6a8] sm:$0xff]
    %v391 = vld [vmem:[#allocation2 + $0x6b0] sm:$0xff]
    %v392 = vld [vmem:[#allocation2 + $0x6b8] sm:$0xff]
    %v393 = vld [vmem:[#allocation2 + $0x6c0] sm:$0xff]
    %v394 = vld [vmem:[#allocation2 + $0x6c8] sm:$0xff]
    %v395 = vld [vmem:[#allocation2 + $0x6d0] sm:$0xff]
    %v396 = vld [vmem:[#allocation2 + $0x6d8] sm:$0xff]
    %v397 = vld [vmem:[#allocation2 + $0x6e0] sm:$0xff]
    %v398 = vld [vmem:[#allocation2 + $0x6e8] sm:$0xff]
    %v399 = vld [vmem:[#allocation2 + $0x6f0] sm:$0xff]
    %v400 = vld [vmem:[#allocation2 + $0x6f8] sm:$0xff]
    %v401 = vld [vmem:[#allocation2 + $0x700] sm:$0xff]
    %v402 = vld [vmem:[#allocation2 + $0x708] sm:$0xff]
    %v403 = vld [vmem:[#allocation2 + $0x710] sm:$0xff]
    %v404 = vld [vmem:[#allocation2 + $0x718] sm:$0xff]
    %v405 = vld [vmem:[#allocation2 + $0x720] sm:$0xff]
    %v406 = vld [vmem:[#allocation2 + $0x728] sm:$0xff]
    %v407 = vld [vmem:[#allocation2 + $0x730] sm:$0xff]
    %v408 = vld [vmem:[#allocation2 + $0x738] sm:$0xff]
    %v409 = vld [vmem:[#allocation2 + $0x740] sm:$0xff]
    %v410 = vld [vmem:[#allocation2 + $0x748] sm:$0xff]
    %v411 = vld [vmem:[#allocation2 + $0x750] sm:$0xff]
    %v412 = vld [vmem:[#allocation2 + $0x758] sm:$0xff]
    %v413 = vld [vmem:[#allocation2 + $0x760] sm:$0xff]
    %v414 = vld [vmem:[#allocation2 + $0x768] sm:$0xff]
    %v415 = vld [vmem:[#allocation2 + $0x770] sm:$0xff]
    %v416 = vld [vmem:[#allocation2 + $0x778] sm:$0xff]
    %v417 = vld [vmem:[#allocation2 + $0x780] sm:$0xff]
    %v418 = vld [vmem:[#allocation2 + $0x788] sm:$0xff]
    %v419 = vld [vmem:[#allocation2 + $0x790] sm:$0xff]
    %v420 = vld [vmem:[#allocation2 + $0x798] sm:$0xff]
    %v421 = vld [vmem:[#allocation2 + $0x7a0] sm:$0xff]
    %v422 = vld [vmem:[#allocation2 + $0x7a8] sm:$0xff]
    %v423 = vld [vmem:[#allocation2 + $0x7b0] sm:$0xff]
    %v424 = vld [vmem:[#allocation2 + $0x7b8] sm:$0xff]
    %v425 = vld [vmem:[#allocation2 + $0x7c0] sm:$0xff]
    %v426 = vld [vmem:[#allocation2 + $0x7c8] sm:$0xff]
    %v427 = vld [vmem:[#allocation2 + $0x7d0] sm:$0xff]
    %v428 = vld [vmem:[#allocation2 + $0x7d8] sm:$0xff]
    %v429 = vld [vmem:[#allocation2 + $0x7e0] sm:$0xff]
    %v430 = vld [vmem:[#allocation2 + $0x7e8] sm:$0xff]
    %v431 = vld [vmem:[#allocation2 + $0x7f0] sm:$0xff]
    %v432 = vld [vmem:[#allocation2 + $0x7f8] sm:$0xff]
    %v433 = vld [vmem:[#allocation2 + $0x800] sm:$0xff]
    %v434 = vld [vmem:[#allocation2 + $0x808] sm:$0xff]
    %v435 = vld [vmem:[#allocation2 + $0x810] sm:$0xff]
    %v436 = vld [vmem:[#allocation2 + $0x818] sm:$0xff]
    %v437 = vld [vmem:[#allocation2 + $0x820] sm:$0xff]
    %v438 = vld [vmem:[#allocation2 + $0x828] sm:$0xff]
    %v439 = vld [vmem:[#allocation2 + $0x830] sm:$0xff]
    %v440 = vld [vmem:[#allocation2 + $0x838] sm:$0xff]
    %v441 = vld [vmem:[#allocation2 + $0x840] sm:$0xff]
    %v442 = vld [vmem:[#allocation2 + $0x848] sm:$0xff]
    %v443 = vld [vmem:[#allocation2 + $0x850] sm:$0xff]
    %v444 = vld [vmem:[#allocation2 + $0x858] sm:$0xff]
    %v445 = vld [vmem:[#allocation2 + $0x860] sm:$0xff]
    %v446 = vld [vmem:[#allocation2 + $0x868] sm:$0xff]
    %v447 = vld [vmem:[#allocation2 + $0x870] sm:$0xff]
    %v448 = vld [vmem:[#allocation2 + $0x878] sm:$0xff]
    %v449 = vld [vmem:[#allocation2 + $0x880] sm:$0xff]
    %v450 = vld [vmem:[#allocation2 + $0x888] sm:$0xff]
    %v451 = vld [vmem:[#allocation2 + $0x890] sm:$0xff]
    %v452 = vld [vmem:[#allocation2 + $0x898] sm:$0xff]
    %v453 = vld [vmem:[#allocation2 + $0x8a0] sm:$0xff]
    %v454 = vld [vmem:[#allocation2 + $0x8a8] sm:$0xff]
    %v455 = vld [vmem:[#allocation2 + $0x8b0] sm:$0xff]
    %v456 = vld [vmem:[#allocation2 + $0x8b8] sm:$0xff]
    %v457 = vld [vmem:[#allocation2 + $0x8c0] sm:$0xff]
    %v458 = vld [vmem:[#allocation2 + $0x8c8] sm:$0xff]
    %v459 = vld [vmem:[#allocation2 + $0x8d0] sm:$0xff]
    %v460 = vld [vmem:[#allocation2 + $0x8d8] sm:$0xff]
    %v461 = vld [vmem:[#allocation2 + $0x8e0] sm:$0xff]
    %v462 = vld [vmem:[#allocation2 + $0x8e8] sm:$0xff]
    %v463 = vld [vmem:[#allocation2 + $0x8f0] sm:$0xff]
    %v464 = vld [vmem:[#allocation2 + $0x8f8] sm:$0xff]
    %v465 = vld [vmem:[#allocation2 + $0x900] sm:$0xff]
    %v466 = vld [vmem:[#allocation2 + $0x908] sm:$0xff]
    %v467 = vld [vmem:[#allocation2 + $0x910] sm:$0xff]
    %v468 = vld [vmem:[#allocation2 + $0x918] sm:$0xff]
    %v469 = vld [vmem:[#allocation2 + $0x920] sm:$0xff]
    %v470 = vld [vmem:[#allocation2 + $0x928] sm:$0xff]
    %v471 = vld [vmem:[#allocation2 + $0x930] sm:$0xff]
    %v472 = vld [vmem:[#allocation2 + $0x938] sm:$0xff]
    %v473 = vld [vmem:[#allocation2 + $0x940] sm:$0xff]
    %v474 = vld [vmem:[#allocation2 + $0x948] sm:$0xff]
    %v475 = vld [vmem:[#allocation2 + $0x950] sm:$0xff]
    %v476 = vld [vmem:[#allocation2 + $0x958] sm:$0xff]
    %v477 = vld [vmem:[#allocation2 + $0x960] sm:$0xff]
    %v478 = vld [vmem:[#allocation2 + $0x968] sm:$0xff]
    %v479 = vld [vmem:[#allocation2 + $0x970] sm:$0xff]
    %v480 = vld [vmem:[#allocation2 + $0x978] sm:$0xff]
    %v481 = vld [vmem:[#allocation2 + $0x980] sm:$0xff]
    %v482 = vld [vmem:[#allocation2 + $0x988] sm:$0xff]
    %v483 = vld [vmem:[#allocation2 + $0x990] sm:$0xff]
    %v484 = vld [vmem:[#allocation2 + $0x998] sm:$0xff]
    %v485 = vld [vmem:[#allocation2 + $0x9a0] sm:$0xff]
    %v486 = vld [vmem:[#allocation2 + $0x9a8] sm:$0xff]
    %v487 = vld [vmem:[#allocation2 + $0x9b0] sm:$0xff]
    %v488 = vld [vmem:[#allocation2 + $0x9b8] sm:$0xff]
    %v489 = vld [vmem:[#allocation2 + $0x9c0] sm:$0xff]
    %v490 = vld [vmem:[#allocation2 + $0x9c8] sm:$0xff]
    %v491 = vld [vmem:[#allocation2 + $0x9d0] sm:$0xff]
    %v492 = vld [vmem:[#allocation2 + $0x9d8] sm:$0xff]
    %v493 = vld [vmem:[#allocation2 + $0x9e0] sm:$0xff]
    %v494 = vld [vmem:[#allocation2 + $0x9e8] sm:$0xff]
    %v495 = vld [vmem:[#allocation2 + $0x9f0] sm:$0xff]
    %v496 = vld [vmem:[#allocation2 + $0x9f8] sm:$0xff]
    %v497 = vld [vmem:[#allocation2 + $0xa00] sm:$0xff]
    %v498 = vld [vmem:[#allocation2 + $0xa08] sm:$0xff]
    %v499 = vld [vmem:[#allocation2 + $0xa10] sm:$0xff]
    %v500 = vld [vmem:[#allocation2 + $0xa18] sm:$0xff]
    %v501 = vld [vmem:[#allocation2 + $0xa20] sm:$0xff]
    %v502 = vld [vmem:[#allocation2 + $0xa28] sm:$0xff]
    %v503 = vld [vmem:[#allocation2 + $0xa30] sm:$0xff]
    %v504 = vld [vmem:[#allocation2 + $0xa38] sm:$0xff]
    %v505 = vld [vmem:[#allocation2 + $0xa40] sm:$0xff]
    %v506 = vld [vmem:[#allocation2 + $0xa48] sm:$0xff]
    %v507 = vld [vmem:[#allocation2 + $0xa50] sm:$0xff]
    %v508 = vld [vmem:[#allocation2 + $0xa58] sm:$0xff]
    %v509 = vld [vmem:[#allocation2 + $0xa60] sm:$0xff]
    %v510 = vld [vmem:[#allocation2 + $0xa68] sm:$0xff]
    %v511 = vld [vmem:[#allocation2 + $0xa70] sm:$0xff]
    %v512 = vld [vmem:[#allocation2 + $0xa78] sm:$0xff]
    %v513 = vld [vmem:[#allocation2 + $0xa80] sm:$0xff]
    %v514 = vld [vmem:[#allocation2 + $0xa88] sm:$0xff]
    %v515 = vld [vmem:[#allocation2 + $0xa90] sm:$0xff]
    %v516 = vld [vmem:[#allocation2 + $0xa98] sm:$0xff]
    %v517 = vld [vmem:[#allocation2 + $0xaa0] sm:$0xff]
    %v518 = vld [vmem:[#allocation2 + $0xaa8] sm:$0xff]
    %v519 = vld [vmem:[#allocation2 + $0xab0] sm:$0xff]
    %v520 = vld [vmem:[#allocation2 + $0xab8] sm:$0xff]
    %v521 = vld [vmem:[#allocation2 + $0xac0] sm:$0xff]
    %v522 = vld [vmem:[#allocation2 + $0xac8] sm:$0xff]
    %v523 = vld [vmem:[#allocation2 + $0xad0] sm:$0xff]
    %v524 = vld [vmem:[#allocation2 + $0xad8] sm:$0xff]
    %v525 = vld [vmem:[#allocation2 + $0xae0] sm:$0xff]
    %v526 = vld [vmem:[#allocation2 + $0xae8] sm:$0xff]
    %v527 = vld [vmem:[#allocation2 + $0xaf0] sm:$0xff]
    %v528 = vld [vmem:[#allocation2 + $0xaf8] sm:$0xff]
    %v529 = vld [vmem:[#allocation2 + $0xb00] sm:$0xff]
    %v530 = vld [vmem:[#allocation2 + $0xb08] sm:$0xff]
    %v531 = vld [vmem:[#allocation2 + $0xb10] sm:$0xff]
    %v532 = vld [vmem:[#allocation2 + $0xb18] sm:$0xff]
    %v533 = vld [vmem:[#allocation2 + $0xb20] sm:$0xff]
    %v534 = vld [vmem:[#allocation2 + $0xb28] sm:$0xff]
    %v535 = vld [vmem:[#allocation2 + $0xb30] sm:$0xff]
    %v536 = vld [vmem:[#allocation2 + $0xb38] sm:$0xff]
    %v537 = vld [vmem:[#allocation2 + $0xb40] sm:$0xff]
    %v538 = vld [vmem:[#allocation2 + $0xb48] sm:$0xff]
    %v539 = vld [vmem:[#allocation2 + $0xb50] sm:$0xff]
    %v540 = vld [vmem:[#allocation2 + $0xb58] sm:$0xff]
    %v541 = vld [vmem:[#allocation2 + $0xb60] sm:$0xff]
    %v542 = vld [vmem:[#allocation2 + $0xb68] sm:$0xff]
    %v543 = vld [vmem:[#allocation2 + $0xb70] sm:$0xff]
    %v544 = vld [vmem:[#allocation2 + $0xb78] sm:$0xff]
    %v545 = vld [vmem:[#allocation2 + $0xb80] sm:$0xff]
    %v546 = vld [vmem:[#allocation2 + $0xb88] sm:$0xff]
    %v547 = vld [vmem:[#allocation2 + $0xb90] sm:$0xff]
    %v548 = vld [vmem:[#allocation2 + $0xb98] sm:$0xff]
    %v549 = vld [vmem:[#allocation2 + $0xba0] sm:$0xff]
    %v550 = vld [vmem:[#allocation2 + $0xba8] sm:$0xff]
    %v551 = vld [vmem:[#allocation2 + $0xbb0] sm:$0xff]
    %v552 = vld [vmem:[#allocation2 + $0xbb8] sm:$0xff]
    %v553 = vld [vmem:[#allocation2 + $0xbc0] sm:$0xff]
    %v554 = vld [vmem:[#allocation2 + $0xbc8] sm:$0xff]
    %v555 = vld [vmem:[#allocation2 + $0xbd0] sm:$0xff]
    %v556 = vld [vmem:[#allocation2 + $0xbd8] sm:$0xff]
    %v557 = vld [vmem:[#allocation2 + $0xbe0] sm:$0xff]
    %v558 = vld [vmem:[#allocation2 + $0xbe8] sm:$0xff]
    %v559 = vld [vmem:[#allocation2 + $0xbf0] sm:$0xff]
    %v560 = vld [vmem:[#allocation2 + $0xbf8] sm:$0xff]
    %v561 = vld [vmem:[#allocation2 + $0xc00] sm:$0xff]
    %v562 = vld [vmem:[#allocation2 + $0xc08] sm:$0xff]
    %v563 = vld [vmem:[#allocation2 + $0xc10] sm:$0xff]
    %v564 = vld [vmem:[#allocation2 + $0xc18] sm:$0xff]
    %v565 = vld [vmem:[#allocation2 + $0xc20] sm:$0xff]
    %v566 = vld [vmem:[#allocation2 + $0xc28] sm:$0xff]
    %v567 = vld [vmem:[#allocation2 + $0xc30] sm:$0xff]
    %v568 = vld [vmem:[#allocation2 + $0xc38] sm:$0xff]
    %v569 = vld [vmem:[#allocation2 + $0xc40] sm:$0xff]
    %v570 = vld [vmem:[#allocation2 + $0xc48] sm:$0xff]
    %v571 = vld [vmem:[#allocation2 + $0xc50] sm:$0xff]
    %v572 = vld [vmem:[#allocation2 + $0xc58] sm:$0xff]
    %v573 = vld [vmem:[#allocation2 + $0xc60] sm:$0xff]
    %v574 = vld [vmem:[#allocation2 + $0xc68] sm:$0xff]
    %v575 = vld [vmem:[#allocation2 + $0xc70] sm:$0xff]
    %v576 = vld [vmem:[#allocation2 + $0xc78] sm:$0xff]
    %v577 = vld [vmem:[#allocation2 + $0xc80] sm:$0xff]
    %v578 = vld [vmem:[#allocation2 + $0xc88] sm:$0xff]
    %v579 = vld [vmem:[#allocation2 + $0xc90] sm:$0xff]
    %v580 = vld [vmem:[#allocation2 + $0xc98] sm:$0xff]
    %v581 = vld [vmem:[#allocation2 + $0xca0] sm:$0xff]
    %v582 = vld [vmem:[#allocation2 + $0xca8] sm:$0xff]
    %v583 = vld [vmem:[#allocation2 + $0xcb0] sm:$0xff]
    %v584 = vld [vmem:[#allocation2 + $0xcb8] sm:$0xff]
    %v585 = vld [vmem:[#allocation2 + $0xcc0] sm:$0xff]
    %v586 = vld [vmem:[#allocation2 + $0xcc8] sm:$0xff]
    %v587 = vld [vmem:[#allocation2 + $0xcd0] sm:$0xff]
    %v588 = vld [vmem:[#allocation2 + $0xcd8] sm:$0xff]
    %v589 = vld [vmem:[#allocation2 + $0xce0] sm:$0xff]
    %v590 = vld [vmem:[#allocation2 + $0xce8] sm:$0xff]
    %v591 = vld [vmem:[#allocation2 + $0xcf0] sm:$0xff]
    %v592 = vld [vmem:[#allocation2 + $0xcf8] sm:$0xff]
    %v593 = vld [vmem:[#allocation2 + $0xd00] sm:$0xff]
    %v594 = vld [vmem:[#allocation2 + $0xd08] sm:$0xff]
    %v595 = vld [vmem:[#allocation2 + $0xd10] sm:$0xff]
    %v596 = vld [vmem:[#allocation2 + $0xd18] sm:$0xff]
    %v597 = vld [vmem:[#allocation2 + $0xd20] sm:$0xff]
    %v598 = vld [vmem:[#allocation2 + $0xd28] sm:$0xff]
    %v599 = vld [vmem:[#allocation2 + $0xd30] sm:$0xff]
    %v600 = vld [vmem:[#allocation2 + $0xd38] sm:$0xff]
    %v601 = vld [vmem:[#allocation2 + $0xd40] sm:$0xff]
    %v602 = vld [vmem:[#allocation2 + $0xd48] sm:$0xff]
    %v603 = vld [vmem:[#allocation2 + $0xd50] sm:$0xff]
    %v604 = vld [vmem:[#allocation2 + $0xd58] sm:$0xff]
    %v605 = vld [vmem:[#allocation2 + $0xd60] sm:$0xff]
    %v606 = vld [vmem:[#allocation2 + $0xd68] sm:$0xff]
    %v607 = vld [vmem:[#allocation2 + $0xd70] sm:$0xff]
    %v608 = vld [vmem:[#allocation2 + $0xd78] sm:$0xff]
    %v609 = vld [vmem:[#allocation2 + $0xd80] sm:$0xff]
    %v610 = vld [vmem:[#allocation2 + $0xd88] sm:$0xff]
    %v611 = vld [vmem:[#allocation2 + $0xd90] sm:$0xff]
    %v612 = vld [vmem:[#allocation2 + $0xd98] sm:$0xff]
    %v613 = vld [vmem:[#allocation2 + $0xda0] sm:$0xff]
    %v614 = vld [vmem:[#allocation2 + $0xda8] sm:$0xff]
    %v615 = vld [vmem:[#allocation2 + $0xdb0] sm:$0xff]
    %v616 = vld [vmem:[#allocation2 + $0xdb8] sm:$0xff]
    %v617 = vld [vmem:[#allocation2 + $0xdc0] sm:$0xff]
    %v618 = vld [vmem:[#allocation2 + $0xdc8] sm:$0xff]
    %v619 = vld [vmem:[#allocation2 + $0xdd0] sm:$0xff]
    %v620 = vld [vmem:[#allocation2 + $0xdd8] sm:$0xff]
    %v621 = vld [vmem:[#allocation2 + $0xde0] sm:$0xff]
    %v622 = vld [vmem:[#allocation2 + $0xde8] sm:$0xff]
    %v623 = vld [vmem:[#allocation2 + $0xdf0] sm:$0xff]
    %v624 = vld [vmem:[#allocation2 + $0xdf8] sm:$0xff]
    %v625 = vld [vmem:[#allocation2 + $0xe00] sm:$0xff]
    %v626 = vld [vmem:[#allocation2 + $0xe08] sm:$0xff]
    %v627 = vld [vmem:[#allocation2 + $0xe10] sm:$0xff]
    %v628 = vld [vmem:[#allocation2 + $0xe18] sm:$0xff]
    %v629 = vld [vmem:[#allocation2 + $0xe20] sm:$0xff]
    %v630 = vld [vmem:[#allocation2 + $0xe28] sm:$0xff]
    %v631 = vld [vmem:[#allocation2 + $0xe30] sm:$0xff]
    %v632 = vld [vmem:[#allocation2 + $0xe38] sm:$0xff]
    %v633 = vld [vmem:[#allocation2 + $0xe40] sm:$0xff]
    %v634 = vld [vmem:[#allocation2 + $0xe48] sm:$0xff]
    %v635 = vld [vmem:[#allocation2 + $0xe50] sm:$0xff]
    %v636 = vld [vmem:[#allocation2 + $0xe58] sm:$0xff]
    %v637 = vld [vmem:[#allocation2 + $0xe60] sm:$0xff]
    %v638 = vld [vmem:[#allocation2 + $0xe68] sm:$0xff]
    %v639 = vld [vmem:[#allocation2 + $0xe70] sm:$0xff]
    %v640 = vld [vmem:[#allocation2 + $0xe78] sm:$0xff]
    %v641 = vld [vmem:[#allocation2 + $0xe80] sm:$0xff]
    %v642 = vld [vmem:[#allocation2 + $0xe88] sm:$0xff]
    %v643 = vld [vmem:[#allocation2 + $0xe90] sm:$0xff]
    %v644 = vld [vmem:[#allocation2 + $0xe98] sm:$0xff]
    %v645 = vld [vmem:[#allocation2 + $0xea0] sm:$0xff]
    %v646 = vld [vmem:[#allocation2 + $0xea8] sm:$0xff]
    %v647 = vld [vmem:[#allocation2 + $0xeb0] sm:$0xff]
    %v648 = vld [vmem:[#allocation2 + $0xeb8] sm:$0xff]
    %v649 = vld [vmem:[#allocation2 + $0xec0] sm:$0xff]
    %v650 = vld [vmem:[#allocation2 + $0xec8] sm:$0xff]
    %v651 = vld [vmem:[#allocation2 + $0xed0] sm:$0xff]
    %v652 = vld [vmem:[#allocation2 + $0xed8] sm:$0xff]
    %v653 = vld [vmem:[#allocation2 + $0xee0] sm:$0xff]
    %v654 = vld [vmem:[#allocation2 + $0xee8] sm:$0xff]
    %v655 = vld [vmem:[#allocation2 + $0xef0] sm:$0xff]
    %v656 = vld [vmem:[#allocation2 + $0xef8] sm:$0xff]
    %v657 = vld [vmem:[#allocation2 + $0xf00] sm:$0xff]
    %v658 = vld [vmem:[#allocation2 + $0xf08] sm:$0xff]
    %v659 = vld [vmem:[#allocation2 + $0xf10] sm:$0xff]
    %v660 = vld [vmem:[#allocation2 + $0xf18] sm:$0xff]
    %v661 = vld [vmem:[#allocation2 + $0xf20] sm:$0xff]
    %v662 = vld [vmem:[#allocation2 + $0xf28] sm:$0xff]
    %v663 = vld [vmem:[#allocation2 + $0xf30] sm:$0xff]
    %v664 = vld [vmem:[#allocation2 + $0xf38] sm:$0xff]
    %v665 = vld [vmem:[#allocation2 + $0xf40] sm:$0xff]
    %v666 = vld [vmem:[#allocation2 + $0xf48] sm:$0xff]
    %v667 = vld [vmem:[#allocation2 + $0xf50] sm:$0xff]
    %v668 = vld [vmem:[#allocation2 + $0xf58] sm:$0xff]
    %v669 = vld [vmem:[#allocation2 + $0xf60] sm:$0xff]
    %v670 = vld [vmem:[#allocation2 + $0xf68] sm:$0xff]
    %v671 = vld [vmem:[#allocation2 + $0xf70] sm:$0xff]
    %v672 = vld [vmem:[#allocation2 + $0xf78] sm:$0xff]
    %v673 = vld [vmem:[#allocation2 + $0xf80] sm:$0xff]
    %v674 = vld [vmem:[#allocation2 + $0xf88] sm:$0xff]
    %v675 = vld [vmem:[#allocation2 + $0xf90] sm:$0xff]
    %v676 = vld [vmem:[#allocation2 + $0xf98] sm:$0xff]
    %v677 = vld [vmem:[#allocation2 + $0xfa0] sm:$0xff]
    %v678 = vld [vmem:[#allocation2 + $0xfa8] sm:$0xff]
    %v679 = vld [vmem:[#allocation2 + $0xfb0] sm:$0xff]
    %v680 = vld [vmem:[#allocation2 + $0xfb8] sm:$0xff]
    %v681 = vld [vmem:[#allocation2 + $0xfc0] sm:$0xff]
    %v682 = vld [vmem:[#allocation2 + $0xfc8] sm:$0xff]
    %v683 = vld [vmem:[#allocation2 + $0xfd0] sm:$0xff]
    %v684 = vld [vmem:[#allocation2 + $0xfd8] sm:$0xff]
    %v685 = vld [vmem:[#allocation2 + $0xfe0] sm:$0xff]
    %v686 = vld [vmem:[#allocation2 + $0xfe8] sm:$0xff]
    %v687 = vld [vmem:[#allocation2 + $0xff0] sm:$0xff]
    %v688 = vld [vmem:[#allocation2 + $0xff8] sm:$0xff]
    %v689 = vld [vmem:[#allocation2 + $0x1000] sm:$0xff]
    %v690 = vld [vmem:[#allocation2 + $0x1008] sm:$0xff]
    %v691 = vld [vmem:[#allocation2 + $0x1010] sm:$0xff]
    %v692 = vld [vmem:[#allocation2 + $0x1018] sm:$0xff]
    %v693 = vld [vmem:[#allocation2 + $0x1020] sm:$0xff]
    %v694 = vld [vmem:[#allocation2 + $0x1028] sm:$0xff]
    %v695 = vld [vmem:[#allocation2 + $0x1030] sm:$0xff]
    %v696 = vld [vmem:[#allocation2 + $0x1038] sm:$0xff]
    %v697 = vld [vmem:[#allocation2 + $0x1040] sm:$0xff]
    %v698 = vld [vmem:[#allocation2 + $0x1048] sm:$0xff]
    %v699 = vld [vmem:[#allocation2 + $0x1050] sm:$0xff]
    %v700 = vld [vmem:[#allocation2 + $0x1058] sm:$0xff]
    %v701 = vld [vmem:[#allocation2 + $0x1060] sm:$0xff]
    %v702 = vld [vmem:[#allocation2 + $0x1068] sm:$0xff]
    %v703 = vld [vmem:[#allocation2 + $0x1070] sm:$0xff]
    %v704 = vld [vmem:[#allocation2 + $0x1078] sm:$0xff]
    %v705 = vld [vmem:[#allocation2 + $0x1080] sm:$0xff]
    %v706 = vld [vmem:[#allocation2 + $0x1088] sm:$0xff]
    %v707 = vld [vmem:[#allocation2 + $0x1090] sm:$0xff]
    %v708 = vld [vmem:[#allocation2 + $0x1098] sm:$0xff]
    %v709 = vld [vmem:[#allocation2 + $0x10a0] sm:$0xff]
    %v710 = vld [vmem:[#allocation2 + $0x10a8] sm:$0xff]
    %v711 = vld [vmem:[#allocation2 + $0x10b0] sm:$0xff]
    %v712 = vld [vmem:[#allocation2 + $0x10b8] sm:$0xff]
    %v713 = vld [vmem:[#allocation2 + $0x10c0] sm:$0xff]
    %v714 = vld [vmem:[#allocation2 + $0x10c8] sm:$0xff]
    %v715 = vld [vmem:[#allocation2 + $0x10d0] sm:$0xff]
    %v716 = vld [vmem:[#allocation2 + $0x10d8] sm:$0xff]
    %v717 = vld [vmem:[#allocation2 + $0x10e0] sm:$0xff]
    %v718 = vld [vmem:[#allocation2 + $0x10e8] sm:$0xff]
    %v719 = vld [vmem:[#allocation2 + $0x10f0] sm:$0xff]
    %v720 = vld [vmem:[#allocation2 + $0x10f8] sm:$0xff]
    %v721 = vld [vmem:[#allocation2 + $0x1100] sm:$0xff]
    %v722 = vld [vmem:[#allocation2 + $0x1108] sm:$0xff]
    %v723 = vld [vmem:[#allocation2 + $0x1110] sm:$0xff]
    %v724 = vld [vmem:[#allocation2 + $0x1118] sm:$0xff]
    %v725 = vld [vmem:[#allocation2 + $0x1120] sm:$0xff]
    %v726 = vld [vmem:[#allocation2 + $0x1128] sm:$0xff]
    %v727 = vld [vmem:[#allocation2 + $0x1130] sm:$0xff]
    %v728 = vld [vmem:[#allocation2 + $0x1138] sm:$0xff]
    %v729 = vld [vmem:[#allocation2 + $0x1140] sm:$0xff]
    %v730 = vld [vmem:[#allocation2 + $0x1148] sm:$0xff]
    %v731 = vld [vmem:[#allocation2 + $0x1150] sm:$0xff]
    %v732 = vld [vmem:[#allocation2 + $0x1158] sm:$0xff]
    %v733 = vld [vmem:[#allocation2 + $0x1160] sm:$0xff]
    %v734 = vld [vmem:[#allocation2 + $0x1168] sm:$0xff]
    %v735 = vld [vmem:[#allocation2 + $0x1170] sm:$0xff]
    %v736 = vld [vmem:[#allocation2 + $0x1178] sm:$0xff]
    %v737 = vld [vmem:[#allocation2 + $0x1180] sm:$0xff]
    %v738 = vld [vmem:[#allocation2 + $0x1188] sm:$0xff]
    %v739 = vld [vmem:[#allocation2 + $0x1190] sm:$0xff]
    %v740 = vld [vmem:[#allocation2 + $0x1198] sm:$0xff]
    %v741 = vld [vmem:[#allocation2 + $0x11a0] sm:$0xff]
    %v742 = vld [vmem:[#allocation2 + $0x11a8] sm:$0xff]
    %v743 = vld [vmem:[#allocation2 + $0x11b0] sm:$0xff]
    %v744 = vld [vmem:[#allocation2 + $0x11b8] sm:$0xff]
    %v745 = vld [vmem:[#allocation2 + $0x11c0] sm:$0xff]
    %v746 = vld [vmem:[#allocation2 + $0x11c8] sm:$0xff]
    %v747 = vld [vmem:[#allocation2 + $0x11d0] sm:$0xff]
    %v748 = vld [vmem:[#allocation2 + $0x11d8] sm:$0xff]
    %v749 = vld [vmem:[#allocation2 + $0x11e0] sm:$0xff]
    %v750 = vld [vmem:[#allocation2 + $0x11e8] sm:$0xff]
    %v751 = vld [vmem:[#allocation2 + $0x11f0] sm:$0xff]
    %v752 = vld [vmem:[#allocation2 + $0x11f8] sm:$0xff]
    %v753 = vld [vmem:[#allocation2 + $0x1200] sm:$0xff]
    %v754 = vld [vmem:[#allocation2 + $0x1208] sm:$0xff]
    %v755 = vld [vmem:[#allocation2 + $0x1210] sm:$0xff]
    %v756 = vld [vmem:[#allocation2 + $0x1218] sm:$0xff]
    %v757 = vld [vmem:[#allocation2 + $0x1220] sm:$0xff]
    %v758 = vld [vmem:[#allocation2 + $0x1228] sm:$0xff]
    %v759 = vld [vmem:[#allocation2 + $0x1230] sm:$0xff]
    %v760 = vld [vmem:[#allocation2 + $0x1238] sm:$0xff]
    %v761 = vld [vmem:[#allocation2 + $0x1240] sm:$0xff]
    %v762 = vld [vmem:[#allocation2 + $0x1248] sm:$0xff]
    %v763 = vld [vmem:[#allocation2 + $0x1250] sm:$0xff]
    %v764 = vld [vmem:[#allocation2 + $0x1258] sm:$0xff]
    %v765 = vld [vmem:[#allocation2 + $0x1260] sm:$0xff]
    %v766 = vld [vmem:[#allocation2 + $0x1268] sm:$0xff]
    %v767 = vld [vmem:[#allocation2 + $0x1270] sm:$0xff]
    %v768 = vld [vmem:[#allocation2 + $0x1278] sm:$0xff]
    %v769 = vld [vmem:[#allocation2 + $0x1280] sm:$0xff]
    %v770 = vld [vmem:[#allocation2 + $0x1288] sm:$0xff]
    %v771 = vld [vmem:[#allocation2 + $0x1290] sm:$0xff]
    %v772 = vld [vmem:[#allocation2 + $0x1298] sm:$0xff]
    %v773 = vld [vmem:[#allocation2 + $0x12a0] sm:$0xff]
    %v774 = vld [vmem:[#allocation2 + $0x12a8] sm:$0xff]
    %v775 = vld [vmem:[#allocation2 + $0x12b0] sm:$0xff]
    %v776 = vld [vmem:[#allocation2 + $0x12b8] sm:$0xff]
    %v777 = vld [vmem:[#allocation2 + $0x12c0] sm:$0xff]
    %v778 = vld [vmem:[#allocation2 + $0x12c8] sm:$0xff]
    %v779 = vld [vmem:[#allocation2 + $0x12d0] sm:$0xff]
    %v780 = vld [vmem:[#allocation2 + $0x12d8] sm:$0xff]
    %v781 = vld [vmem:[#allocation2 + $0x12e0] sm:$0xff]
    %v782 = vld [vmem:[#allocation2 + $0x12e8] sm:$0xff]
    %v783 = vld [vmem:[#allocation2 + $0x12f0] sm:$0xff]
    %v784 = vld [vmem:[#allocation2 + $0x12f8] sm:$0xff]
    %v785 = vld [vmem:[#allocation2 + $0x1300] sm:$0xff]
    %v786 = vld [vmem:[#allocation2 + $0x1308] sm:$0xff]
    %v787 = vld [vmem:[#allocation2 + $0x1310] sm:$0xff]
    %v788 = vld [vmem:[#allocation2 + $0x1318] sm:$0xff]
    %v789 = vld [vmem:[#allocation2 + $0x1320] sm:$0xff]
    %v790 = vld [vmem:[#allocation2 + $0x1328] sm:$0xff]
    %v791 = vld [vmem:[#allocation2 + $0x1330] sm:$0xff]
    %v792 = vld [vmem:[#allocation2 + $0x1338] sm:$0xff]
    %v793 = vld [vmem:[#allocation2 + $0x1340] sm:$0xff]
    %v794 = vld [vmem:[#allocation2 + $0x1348] sm:$0xff]
    %v795 = vld [vmem:[#allocation2 + $0x1350] sm:$0xff]
    %v796 = vld [vmem:[#allocation2 + $0x1358] sm:$0xff]
    %v797 = vld [vmem:[#allocation2 + $0x1360] sm:$0xff]
    %v798 = vld [vmem:[#allocation2 + $0x1368] sm:$0xff]
    %v799 = vld [vmem:[#allocation2 + $0x1370] sm:$0xff]
    %v800 = vld [vmem:[#allocation2 + $0x1378] sm:$0xff]
    %v801 = vld [vmem:[#allocation2 + $0x1380] sm:$0xff]
    %v802 = vld [vmem:[#allocation2 + $0x1388] sm:$0xff]
    %v803 = vld [vmem:[#allocation2 + $0x1390] sm:$0xff]
    %v804 = vld [vmem:[#allocation2 + $0x1398] sm:$0xff]
    %v805 = vld [vmem:[#allocation2 + $0x13a0] sm:$0xff]
    %v806 = vld [vmem:[#allocation2 + $0x13a8] sm:$0xff]
    %v807 = vld [vmem:[#allocation2 + $0x13b0] sm:$0xff]
    %v808 = vld [vmem:[#allocation2 + $0x13b8] sm:$0xff]
    %v809 = vld [vmem:[#allocation2 + $0x13c0] sm:$0xff]
    %v810 = vld [vmem:[#allocation2 + $0x13c8] sm:$0xff]
    %v811 = vld [vmem:[#allocation2 + $0x13d0] sm:$0xff]
    %v812 = vld [vmem:[#allocation2 + $0x13d8] sm:$0xff]
    %v813 = vld [vmem:[#allocation2 + $0x13e0] sm:$0xff]
    %v814 = vld [vmem:[#allocation2 + $0x13e8] sm:$0xff]
    %v815 = vld [vmem:[#allocation2 + $0x13f0] sm:$0xff]
    %v816 = vld [vmem:[#allocation2 + $0x13f8] sm:$0xff]
    %v817 = vld [vmem:[%s1] sm:$0xff]
    %v818 = vld [vmem:[%s1 + $0x8] sm:$0xff]
    %v819 = vld [vmem:[%s1 + $0x10] sm:$0xff]
    %v820 = vld [vmem:[%s1 + $0x18] sm:$0xff]
    %v821 = vld [vmem:[%s1 + $0x20] sm:$0xff]
    %v822 = vld [vmem:[%s1 + $0x28] sm:$0xff]
    %v823 = vld [vmem:[%s1 + $0x30] sm:$0xff]
    %v824 = vld [vmem:[%s1 + $0x38] sm:$0xff]
    %v825 = vld [vmem:[%s1 + $0x40] sm:$0xff]
    %v826 = vld [vmem:[%s1 + $0x48] sm:$0xff]
    %v827 = vld [vmem:[#allocation5] sm:$0xff]
    %v828 = vld [vmem:[#allocation5 + $0x8] sm:$0xff]
    %v829 = vld [vmem:[#allocation5 + $0x10] sm:$0xff]
    %v830 = vld [vmem:[#allocation5 + $0x18] sm:$0xff]
    %v831 = vld [vmem:[#allocation5 + $0x20] sm:$0xff]
    %v832 = vld [vmem:[#allocation5 + $0x28] sm:$0xff]
    %v833 = vld [vmem:[#allocation5 + $0x30] sm:$0xff]
    %v834 = vld [vmem:[#allocation5 + $0x38] sm:$0xff]
    %v835 = vld [vmem:[#allocation5 + $0x40] sm:$0xff]
    %v836 = vld [vmem:[#allocation5 + $0x48] sm:$0xff]
    %v837 = vld [vmem:[#allocation5 + $0x50] sm:$0xff]
    %v838 = vld [vmem:[#allocation5 + $0x58] sm:$0xff]
    %v839 = vld [vmem:[#allocation5 + $0x60] sm:$0xff]
    %v840 = vld [vmem:[#allocation5 + $0x68] sm:$0xff]
    %v841 = vld [vmem:[#allocation5 + $0x70] sm:$0xff]
    %v842 = vld [vmem:[#allocation5 + $0x78] sm:$0xff]
    %v843 = vld [vmem:[#allocation5 + $0x80] sm:$0xff]
    %v844 = vld [vmem:[#allocation5 + $0x88] sm:$0xff]
    %v845 = vld [vmem:[#allocation5 + $0x90] sm:$0xff]
    %v846 = vld [vmem:[#allocation5 + $0x98] sm:$0xff]
    %v847 = vld [vmem:[#allocation5 + $0xa0] sm:$0xff]
    %v848 = vld [vmem:[#allocation5 + $0xa8] sm:$0xff]
    %v849 = vld [vmem:[#allocation5 + $0xb0] sm:$0xff]
    %v850 = vld [vmem:[#allocation5 + $0xb8] sm:$0xff]
    %v851 = vld [vmem:[#allocation5 + $0xc0] sm:$0xff]
    %v852 = vld [vmem:[#allocation5 + $0xc8] sm:$0xff]
    %v853 = vld [vmem:[#allocation5 + $0xd0] sm:$0xff]
    %v854 = vld [vmem:[#allocation5 + $0xd8] sm:$0xff]
    %v855 = vld [vmem:[#allocation5 + $0xe0] sm:$0xff]
    %v856 = vld [vmem:[#allocation5 + $0xe8] sm:$0xff]
    %v857 = vld [vmem:[#allocation5 + $0xf0] sm:$0xff]
    %v858 = vld [vmem:[#allocation5 + $0xf8] sm:$0xff]
    %v859 = vld [vmem:[#allocation5 + $0x100] sm:$0xff]
    %v860 = vld [vmem:[#allocation5 + $0x108] sm:$0xff]
    %v861 = vld [vmem:[#allocation5 + $0x110] sm:$0xff]
    %v862 = vld [vmem:[#allocation5 + $0x118] sm:$0xff]
    %v863 = vld [vmem:[#allocation5 + $0x120] sm:$0xff]
    %v864 = vld [vmem:[#allocation5 + $0x128] sm:$0xff]
    %v865 = vld [vmem:[#allocation5 + $0x130] sm:$0xff]
    %v866 = vld [vmem:[#allocation5 + $0x138] sm:$0xff]
    %v867 = vld [vmem:[#allocation5 + $0x140] sm:$0xff]
    %v868 = vld [vmem:[#allocation5 + $0x148] sm:$0xff]
    %v869 = vld [vmem:[#allocation5 + $0x150] sm:$0xff]
    %v870 = vld [vmem:[#allocation5 + $0x158] sm:$0xff]
    %v871 = vld [vmem:[#allocation5 + $0x160] sm:$0xff]
    %v872 = vld [vmem:[#allocation5 + $0x168] sm:$0xff]
    %v873 = vld [vmem:[#allocation5 + $0x170] sm:$0xff]
    %v874 = vld [vmem:[#allocation5 + $0x178] sm:$0xff]
    %v875 = vld [vmem:[#allocation5 + $0x180] sm:$0xff]
    %v876 = vld [vmem:[#allocation5 + $0x188] sm:$0xff]
    %v877 = vld [vmem:[#allocation5 + $0x190] sm:$0xff]
    %v878 = vld [vmem:[#allocation5 + $0x198] sm:$0xff]
    %v879 = vld [vmem:[#allocation5 + $0x1a0] sm:$0xff]
    %v880 = vld [vmem:[#allocation5 + $0x1a8] sm:$0xff]
    %v881 = vld [vmem:[#allocation5 + $0x1b0] sm:$0xff]
    %v882 = vld [vmem:[#allocation5 + $0x1b8] sm:$0xff]
    %v883 = vld [vmem:[#allocation5 + $0x1c0] sm:$0xff]
    %v884 = vld [vmem:[#allocation5 + $0x1c8] sm:$0xff]
    %v885 = vld [vmem:[#allocation5 + $0x1d0] sm:$0xff]
    %v886 = vld [vmem:[#allocation5 + $0x1d8] sm:$0xff]
    %v887 = vld [vmem:[#allocation5 + $0x1e0] sm:$0xff]
    %v888 = vld [vmem:[#allocation5 + $0x1e8] sm:$0xff]
    %v889 = vld [vmem:[#allocation5 + $0x1f0] sm:$0xff]
    %v890 = vld [vmem:[#allocation5 + $0x1f8] sm:$0xff]
    %v891 = vld [vmem:[#allocation5 + $0x200] sm:$0xff]
    %v892 = vld [vmem:[#allocation5 + $0x208] sm:$0xff]
    %v893 = vld [vmem:[#allocation5 + $0x210] sm:$0xff]
    %v894 = vld [vmem:[#allocation5 + $0x218] sm:$0xff]
    %v895 = vld [vmem:[#allocation5 + $0x220] sm:$0xff]
    %v896 = vld [vmem:[#allocation5 + $0x228] sm:$0xff]
    %v897 = vld [vmem:[#allocation5 + $0x230] sm:$0xff]
    %v898 = vld [vmem:[#allocation5 + $0x238] sm:$0xff]
    %v899 = vld [vmem:[#allocation5 + $0x240] sm:$0xff]
    %v900 = vld [vmem:[#allocation5 + $0x248] sm:$0xff]
    %v901 = vld [vmem:[#allocation5 + $0x250] sm:$0xff]
    %v902 = vld [vmem:[#allocation5 + $0x258] sm:$0xff]
    %v903 = vld [vmem:[#allocation5 + $0x260] sm:$0xff]
    %v904 = vld [vmem:[#allocation5 + $0x268] sm:$0xff]
    %v905 = vld [vmem:[#allocation5 + $0x270] sm:$0xff]
    %v906 = vld [vmem:[#allocation5 + $0x278] sm:$0xff]
    %v907 = vld [vmem:[#allocation5 + $0x280] sm:$0xff]
    %v908 = vld [vmem:[#allocation5 + $0x288] sm:$0xff]
    %v909 = vld [vmem:[#allocation5 + $0x290] sm:$0xff]
    %v910 = vld [vmem:[#allocation5 + $0x298] sm:$0xff]
    %v911 = vld [vmem:[#allocation5 + $0x2a0] sm:$0xff]
    %v912 = vld [vmem:[#allocation5 + $0x2a8] sm:$0xff]
    %v913 = vld [vmem:[#allocation5 + $0x2b0] sm:$0xff]
    %v914 = vld [vmem:[#allocation5 + $0x2b8] sm:$0xff]
    %v915 = vld [vmem:[#allocation5 + $0x2c0] sm:$0xff]
    %v916 = vld [vmem:[#allocation5 + $0x2c8] sm:$0xff]
    %v917 = vld [vmem:[#allocation5 + $0x2d0] sm:$0xff]
    %v918 = vld [vmem:[#allocation5 + $0x2d8] sm:$0xff]
    %v919 = vld [vmem:[#allocation5 + $0x2e0] sm:$0xff]
    %v920 = vld [vmem:[#allocation5 + $0x2e8] sm:$0xff]
    %v921 = vld [vmem:[#allocation5 + $0x2f0] sm:$0xff]
    %v922 = vld [vmem:[#allocation5 + $0x2f8] sm:$0xff]
    %v923 = vld [vmem:[#allocation5 + $0x300] sm:$0xff]
    %v924 = vld [vmem:[#allocation5 + $0x308] sm:$0xff]
    %v925 = vld [vmem:[#allocation5 + $0x310] sm:$0xff]
    %v926 = vld [vmem:[#allocation5 + $0x318] sm:$0xff]
    %v927 = vld [vmem:[#allocation5 + $0x320] sm:$0xff]
    %v928 = vld [vmem:[#allocation5 + $0x328] sm:$0xff]
    %v929 = vld [vmem:[#allocation5 + $0x330] sm:$0xff]
    %v930 = vld [vmem:[#allocation5 + $0x338] sm:$0xff]
    %v931 = vld [vmem:[#allocation5 + $0x340] sm:$0xff]
    %v932 = vld [vmem:[#allocation5 + $0x348] sm:$0xff]
    %v933 = vld [vmem:[#allocation5 + $0x350] sm:$0xff]
    %v934 = vld [vmem:[#allocation5 + $0x358] sm:$0xff]
    %v935 = vld [vmem:[#allocation5 + $0x360] sm:$0xff]
    %v936 = vld [vmem:[#allocation5 + $0x368] sm:$0xff]
    %v937 = vld [vmem:[#allocation5 + $0x370] sm:$0xff]
    %v938 = vld [vmem:[#allocation5 + $0x378] sm:$0xff]
    %v939 = vld [vmem:[#allocation5 + $0x380] sm:$0xff]
    %v940 = vld [vmem:[#allocation5 + $0x388] sm:$0xff]
    %v941 = vld [vmem:[#allocation5 + $0x390] sm:$0xff]
    %v942 = vld [vmem:[#allocation5 + $0x398] sm:$0xff]
    %v943 = vld [vmem:[#allocation5 + $0x3a0] sm:$0xff]
    %v944 = vld [vmem:[#allocation5 + $0x3a8] sm:$0xff]
    %v945 = vld [vmem:[#allocation5 + $0x3b0] sm:$0xff]
    %v946 = vld [vmem:[#allocation5 + $0x3b8] sm:$0xff]
    %v947 = vld [vmem:[#allocation5 + $0x3c0] sm:$0xff]
    %v948 = vld [vmem:[#allocation5 + $0x3c8] sm:$0xff]
    %v949 = vld [vmem:[#allocation5 + $0x3d0] sm:$0xff]
    %v950 = vld [vmem:[#allocation5 + $0x3d8] sm:$0xff]
    %v951 = vld [vmem:[#allocation5 + $0x3e0] sm:$0xff]
    %v952 = vld [vmem:[#allocation5 + $0x3e8] sm:$0xff]
    %v953 = vld [vmem:[#allocation5 + $0x3f0] sm:$0xff]
    %v954 = vld [vmem:[#allocation5 + $0x3f8] sm:$0xff]
    %v955 = vld [vmem:[#allocation5 + $0x400] sm:$0xff]
    %v956 = vld [vmem:[#allocation5 + $0x408] sm:$0xff]
    %v957 = vld [vmem:[#allocation5 + $0x410] sm:$0xff]
    %v958 = vld [vmem:[#allocation5 + $0x418] sm:$0xff]
    %v959 = vld [vmem:[#allocation5 + $0x420] sm:$0xff]
    %v960 = vld [vmem:[#allocation5 + $0x428] sm:$0xff]
    %v961 = vld [vmem:[#allocation5 + $0x430] sm:$0xff]
    %v962 = vld [vmem:[#allocation5 + $0x438] sm:$0xff]
    %v963 = vld [vmem:[#allocation5 + $0x440] sm:$0xff]
    %v964 = vld [vmem:[#allocation5 + $0x448] sm:$0xff]
    %v965 = vld [vmem:[#allocation5 + $0x450] sm:$0xff]
    %v966 = vld [vmem:[#allocation5 + $0x458] sm:$0xff]
    %v967 = vld [vmem:[#allocation5 + $0x460] sm:$0xff]
    %v968 = vld [vmem:[#allocation5 + $0x468] sm:$0xff]
    %v969 = vld [vmem:[#allocation5 + $0x470] sm:$0xff]
    %v970 = vld [vmem:[#allocation5 + $0x478] sm:$0xff]
    %v971 = vld [vmem:[#allocation5 + $0x480] sm:$0xff]
    %v972 = vld [vmem:[#allocation5 + $0x488] sm:$0xff]
    %v973 = vld [vmem:[#allocation5 + $0x490] sm:$0xff]
    %v974 = vld [vmem:[#allocation5 + $0x498] sm:$0xff]
    %v975 = vld [vmem:[#allocation5 + $0x4a0] sm:$0xff]
    %v976 = vld [vmem:[#allocation5 + $0x4a8] sm:$0xff]
    %v977 = vld [vmem:[#allocation5 + $0x4b0] sm:$0xff]
    %v978 = vld [vmem:[#allocation5 + $0x4b8] sm:$0xff]
    %v979 = vld [vmem:[#allocation5 + $0x4c0] sm:$0xff]
    %v980 = vld [vmem:[#allocation5 + $0x4c8] sm:$0xff]
    %v981 = vld [vmem:[#allocation5 + $0x4d0] sm:$0xff]
    %v982 = vld [vmem:[#allocation5 + $0x4d8] sm:$0xff]
    %v983 = vld [vmem:[#allocation5 + $0x4e0] sm:$0xff]
    %v984 = vld [vmem:[#allocation5 + $0x4e8] sm:$0xff]
    %v985 = vld [vmem:[#allocation5 + $0x4f0] sm:$0xff]
    %v986 = vld [vmem:[#allocation5 + $0x4f8] sm:$0xff]
    %v987 = vld [vmem:[#allocation5 + $0x500] sm:$0xff]
    %v988 = vld [vmem:[#allocation5 + $0x508] sm:$0xff]
    %v989 = vld [vmem:[#allocation5 + $0x510] sm:$0xff]
    %v990 = vld [vmem:[#allocation5 + $0x518] sm:$0xff]
    %v991 = vld [vmem:[#allocation5 + $0x520] sm:$0xff]
    %v992 = vld [vmem:[#allocation5 + $0x528] sm:$0xff]
    %v993 = vld [vmem:[#allocation5 + $0x530] sm:$0xff]
    %v994 = vld [vmem:[#allocation5 + $0x538] sm:$0xff]
    %v995 = vld [vmem:[#allocation5 + $0x540] sm:$0xff]
    %v996 = vld [vmem:[#allocation5 + $0x548] sm:$0xff]
    %v997 = vld [vmem:[#allocation5 + $0x550] sm:$0xff]
    %v998 = vld [vmem:[#allocation5 + $0x558] sm:$0xff]
    %v999 = vld [vmem:[#allocation5 + $0x560] sm:$0xff]
    %v1000 = vld [vmem:[#allocation5 + $0x568] sm:$0xff]
    %v1001 = vld [vmem:[#allocation5 + $0x570] sm:$0xff]
    %v1002 = vld [vmem:[#allocation5 + $0x578] sm:$0xff]
    %v1003 = vld [vmem:[#allocation5 + $0x580] sm:$0xff]
    %v1004 = vld [vmem:[#allocation5 + $0x588] sm:$0xff]
    %v1005 = vld [vmem:[#allocation5 + $0x590] sm:$0xff]
    %v1006 = vld [vmem:[#allocation5 + $0x598] sm:$0xff]
    %v1007 = vld [vmem:[#allocation5 + $0x5a0] sm:$0xff]
    %v1008 = vld [vmem:[#allocation5 + $0x5a8] sm:$0xff]
    %v1009 = vld [vmem:[#allocation5 + $0x5b0] sm:$0xff]
    %v1010 = vld [vmem:[#allocation5 + $0x5b8] sm:$0xff]
    %v1011 = vld [vmem:[#allocation5 + $0x5c0] sm:$0xff]
    %v1012 = vld [vmem:[#allocation5 + $0x5c8] sm:$0xff]
    %v1013 = vld [vmem:[#allocation5 + $0x5d0] sm:$0xff]
    %v1014 = vld [vmem:[#allocation5 + $0x5d8] sm:$0xff]
    %v1015 = vld [vmem:[#allocation5 + $0x5e0] sm:$0xff]
    %v1016 = vld [vmem:[#allocation5 + $0x5e8] sm:$0xff]
    %v1017 = vld [vmem:[#allocation5 + $0x5f0] sm:$0xff]
    %v1018 = vld [vmem:[#allocation5 + $0x5f8] sm:$0xff]
    %v1019 = vld [vmem:[#allocation5 + $0x600] sm:$0xff]
    %v1020 = vld [vmem:[#allocation5 + $0x608] sm:$0xff]
    %v1021 = vld [vmem:[#allocation5 + $0x610] sm:$0xff]
    %v1022 = vld [vmem:[#allocation5 + $0x618] sm:$0xff]
    %v1023 = vld [vmem:[#allocation5 + $0x620] sm:$0xff]
    %v1024 = vld [vmem:[#allocation5 + $0x628] sm:$0xff]
    %v1025 = vld [vmem:[#allocation5 + $0x630] sm:$0xff]
    %v1026 = vld [vmem:[#allocation5 + $0x638] sm:$0xff]
    %v1027 = vld [vmem:[#allocation5 + $0x640] sm:$0xff]
    %v1028 = vld [vmem:[#allocation5 + $0x648] sm:$0xff]
    %v1029 = vld [vmem:[#allocation5 + $0x650] sm:$0xff]
    %v1030 = vld [vmem:[#allocation5 + $0x658] sm:$0xff]
    %v1031 = vld [vmem:[#allocation5 + $0x660] sm:$0xff]
    %v1032 = vld [vmem:[#allocation5 + $0x668] sm:$0xff]
    %v1033 = vld [vmem:[#allocation5 + $0x670] sm:$0xff]
    %v1034 = vld [vmem:[#allocation5 + $0x678] sm:$0xff]
    %v1035 = vld [vmem:[#allocation5 + $0x680] sm:$0xff]
    %v1036 = vld [vmem:[#allocation5 + $0x688] sm:$0xff]
    %v1037 = vld [vmem:[#allocation5 + $0x690] sm:$0xff]
    %v1038 = vld [vmem:[#allocation5 + $0x698] sm:$0xff]
    %v1039 = vld [vmem:[#allocation5 + $0x6a0] sm:$0xff]
    %v1040 = vld [vmem:[#allocation5 + $0x6a8] sm:$0xff]
    %v1041 = vld [vmem:[#allocation5 + $0x6b0] sm:$0xff]
    %v1042 = vld [vmem:[#allocation5 + $0x6b8] sm:$0xff]
    %v1043 = vld [vmem:[#allocation5 + $0x6c0] sm:$0xff]
    %v1044 = vld [vmem:[#allocation5 + $0x6c8] sm:$0xff]
    %v1045 = vld [vmem:[#allocation5 + $0x6d0] sm:$0xff]
    %v1046 = vld [vmem:[#allocation5 + $0x6d8] sm:$0xff]
    %v1047 = vld [vmem:[#allocation5 + $0x6e0] sm:$0xff]
    %v1048 = vld [vmem:[#allocation5 + $0x6e8] sm:$0xff]
    %v1049 = vld [vmem:[#allocation5 + $0x6f0] sm:$0xff]
    %v1050 = vld [vmem:[#allocation5 + $0x6f8] sm:$0xff]
    %v1051 = vld [vmem:[#allocation5 + $0x700] sm:$0xff]
    %v1052 = vld [vmem:[#allocation5 + $0x708] sm:$0xff]
    %v1053 = vld [vmem:[#allocation5 + $0x710] sm:$0xff]
    %v1054 = vld [vmem:[#allocation5 + $0x718] sm:$0xff]
    %v1055 = vld [vmem:[#allocation5 + $0x720] sm:$0xff]
    %v1056 = vld [vmem:[#allocation5 + $0x728] sm:$0xff]
    %v1057 = vld [vmem:[#allocation5 + $0x730] sm:$0xff]
    %v1058 = vld [vmem:[#allocation5 + $0x738] sm:$0xff]
    %v1059 = vld [vmem:[#allocation5 + $0x740] sm:$0xff]
    %v1060 = vld [vmem:[#allocation5 + $0x748] sm:$0xff]
    %v1061 = vld [vmem:[#allocation5 + $0x750] sm:$0xff]
    %v1062 = vld [vmem:[#allocation5 + $0x758] sm:$0xff]
    %v1063 = vld [vmem:[#allocation5 + $0x760] sm:$0xff]
    %v1064 = vld [vmem:[#allocation5 + $0x768] sm:$0xff]
    %v1065 = vld [vmem:[#allocation5 + $0x770] sm:$0xff]
    %v1066 = vld [vmem:[#allocation5 + $0x778] sm:$0xff]
    %v1067 = vld [vmem:[#allocation5 + $0x780] sm:$0xff]
    %v1068 = vld [vmem:[#allocation5 + $0x788] sm:$0xff]
    %v1069 = vld [vmem:[#allocation5 + $0x790] sm:$0xff]
    %v1070 = vld [vmem:[#allocation5 + $0x798] sm:$0xff]
    %v1071 = vld [vmem:[#allocation5 + $0x7a0] sm:$0xff]
    %v1072 = vld [vmem:[#allocation5 + $0x7a8] sm:$0xff]
    %v1073 = vld [vmem:[#allocation5 + $0x7b0] sm:$0xff]
    %v1074 = vld [vmem:[#allocation5 + $0x7b8] sm:$0xff]
    %v1075 = vld [vmem:[#allocation5 + $0x7c0] sm:$0xff]
    %v1076 = vld [vmem:[#allocation5 + $0x7c8] sm:$0xff]
    %v1077 = vld [vmem:[#allocation5 + $0x7d0] sm:$0xff]
    %v1078 = vld [vmem:[#allocation5 + $0x7d8] sm:$0xff]
    %v1079 = vld [vmem:[#allocation5 + $0x7e0] sm:$0xff]
    %v1080 = vld [vmem:[#allocation5 + $0x7e8] sm:$0xff]
    %v1081 = vld [vmem:[#allocation5 + $0x7f0] sm:$0xff]
    %v1082 = vld [vmem:[#allocation5 + $0x7f8] sm:$0xff]
    %v1083 = vld [vmem:[#allocation5 + $0x800] sm:$0xff]
    %v1084 = vld [vmem:[#allocation5 + $0x808] sm:$0xff]
    %v1085 = vld [vmem:[#allocation5 + $0x810] sm:$0xff]
    %v1086 = vld [vmem:[#allocation5 + $0x818] sm:$0xff]
    %v1087 = vld [vmem:[#allocation5 + $0x820] sm:$0xff]
    %v1088 = vld [vmem:[#allocation5 + $0x828] sm:$0xff]
    %v1089 = vld [vmem:[#allocation5 + $0x830] sm:$0xff]
    %v1090 = vld [vmem:[#allocation5 + $0x838] sm:$0xff]
    %v1091 = vld [vmem:[#allocation5 + $0x840] sm:$0xff]
    %v1092 = vld [vmem:[#allocation5 + $0x848] sm:$0xff]
    %v1093 = vld [vmem:[#allocation5 + $0x850] sm:$0xff]
    %v1094 = vld [vmem:[#allocation5 + $0x858] sm:$0xff]
    %v1095 = vld [vmem:[#allocation5 + $0x860] sm:$0xff]
    %v1096 = vld [vmem:[#allocation5 + $0x868] sm:$0xff]
    %v1097 = vld [vmem:[#allocation5 + $0x870] sm:$0xff]
    %v1098 = vld [vmem:[#allocation5 + $0x878] sm:$0xff]
    %v1099 = vld [vmem:[#allocation5 + $0x880] sm:$0xff]
    %v1100 = vld [vmem:[#allocation5 + $0x888] sm:$0xff]
    %v1101 = vld [vmem:[#allocation5 + $0x890] sm:$0xff]
    %v1102 = vld [vmem:[#allocation5 + $0x898] sm:$0xff]
    %v1103 = vld [vmem:[#allocation5 + $0x8a0] sm:$0xff]
    %v1104 = vld [vmem:[#allocation5 + $0x8a8] sm:$0xff]
    %v1105 = vld [vmem:[#allocation5 + $0x8b0] sm:$0xff]
    %v1106 = vld [vmem:[#allocation5 + $0x8b8] sm:$0xff]
    %v1107 = vld [vmem:[#allocation5 + $0x8c0] sm:$0xff]
    %v1108 = vld [vmem:[#allocation5 + $0x8c8] sm:$0xff]
    %v1109 = vld [vmem:[#allocation5 + $0x8d0] sm:$0xff]
    %v1110 = vld [vmem:[#allocation5 + $0x8d8] sm:$0xff]
    %v1111 = vld [vmem:[#allocation5 + $0x8e0] sm:$0xff]
    %v1112 = vld [vmem:[#allocation5 + $0x8e8] sm:$0xff]
    %v1113 = vld [vmem:[#allocation5 + $0x8f0] sm:$0xff]
    %v1114 = vld [vmem:[#allocation5 + $0x8f8] sm:$0xff]
    %v1115 = vld [vmem:[#allocation5 + $0x900] sm:$0xff]
    %v1116 = vld [vmem:[#allocation5 + $0x908] sm:$0xff]
    %v1117 = vld [vmem:[#allocation5 + $0x910] sm:$0xff]
    %v1118 = vld [vmem:[#allocation5 + $0x918] sm:$0xff]
    %v1119 = vld [vmem:[#allocation5 + $0x920] sm:$0xff]
    %v1120 = vld [vmem:[#allocation5 + $0x928] sm:$0xff]
    %v1121 = vld [vmem:[#allocation5 + $0x930] sm:$0xff]
    %v1122 = vld [vmem:[#allocation5 + $0x938] sm:$0xff]
    %v1123 = vld [vmem:[#allocation5 + $0x940] sm:$0xff]
    %v1124 = vld [vmem:[#allocation5 + $0x948] sm:$0xff]
    %v1125 = vld [vmem:[#allocation5 + $0x950] sm:$0xff]
    %v1126 = vld [vmem:[#allocation5 + $0x958] sm:$0xff]
    %v1127 = vld [vmem:[#allocation5 + $0x960] sm:$0xff]
    %v1128 = vld [vmem:[#allocation5 + $0x968] sm:$0xff]
    %v1129 = vld [vmem:[#allocation5 + $0x970] sm:$0xff]
    %v1130 = vld [vmem:[#allocation5 + $0x978] sm:$0xff]
    %v1131 = vld [vmem:[#allocation5 + $0x980] sm:$0xff]
    %v1132 = vld [vmem:[#allocation5 + $0x988] sm:$0xff]
    %v1133 = vld [vmem:[#allocation5 + $0x990] sm:$0xff]
    %v1134 = vld [vmem:[#allocation5 + $0x998] sm:$0xff]
    %v1135 = vld [vmem:[#allocation5 + $0x9a0] sm:$0xff]
    %v1136 = vld [vmem:[#allocation5 + $0x9a8] sm:$0xff]
    %v1137 = vld [vmem:[#allocation5 + $0x9b0] sm:$0xff]
    %v1138 = vld [vmem:[#allocation5 + $0x9b8] sm:$0xff]
    %v1139 = vld [vmem:[#allocation5 + $0x9c0] sm:$0xff]
    %v1140 = vld [vmem:[#allocation5 + $0x9c8] sm:$0xff]
    %v1141 = vld [vmem:[#allocation5 + $0x9d0] sm:$0xff]
    %v1142 = vld [vmem:[#allocation5 + $0x9d8] sm:$0xff]
    %v1143 = vld [vmem:[#allocation5 + $0x9e0] sm:$0xff]
    %v1144 = vld [vmem:[#allocation5 + $0x9e8] sm:$0xff]
    %v1145 = vld [vmem:[#allocation5 + $0x9f0] sm:$0xff]
    %v1146 = vld [vmem:[#allocation5 + $0x9f8] sm:$0xff]
    %v1147 = vld [vmem:[#allocation5 + $0xa00] sm:$0xff]
    %v1148 = vld [vmem:[#allocation5 + $0xa08] sm:$0xff]
    %v1149 = vld [vmem:[#allocation5 + $0xa10] sm:$0xff]
    %v1150 = vld [vmem:[#allocation5 + $0xa18] sm:$0xff]
    %v1151 = vld [vmem:[#allocation5 + $0xa20] sm:$0xff]
    %v1152 = vld [vmem:[#allocation5 + $0xa28] sm:$0xff]
    %v1153 = vld [vmem:[#allocation5 + $0xa30] sm:$0xff]
    %v1154 = vld [vmem:[#allocation5 + $0xa38] sm:$0xff]
    %v1155 = vld [vmem:[#allocation5 + $0xa40] sm:$0xff]
    %v1156 = vld [vmem:[#allocation5 + $0xa48] sm:$0xff]
    %v1157 = vld [vmem:[#allocation5 + $0xa50] sm:$0xff]
    %v1158 = vld [vmem:[#allocation5 + $0xa58] sm:$0xff]
    %v1159 = vld [vmem:[#allocation5 + $0xa60] sm:$0xff]
    %v1160 = vld [vmem:[#allocation5 + $0xa68] sm:$0xff]
    %v1161 = vld [vmem:[#allocation5 + $0xa70] sm:$0xff]
    %v1162 = vld [vmem:[#allocation5 + $0xa78] sm:$0xff]
    %v1163 = vld [vmem:[#allocation5 + $0xa80] sm:$0xff]
    %v1164 = vld [vmem:[#allocation5 + $0xa88] sm:$0xff]
    %v1165 = vld [vmem:[#allocation5 + $0xa90] sm:$0xff]
    %v1166 = vld [vmem:[#allocation5 + $0xa98] sm:$0xff]
    %v1167 = vld [vmem:[#allocation5 + $0xaa0] sm:$0xff]
    %v1168 = vld [vmem:[#allocation5 + $0xaa8] sm:$0xff]
    %v1169 = vld [vmem:[#allocation5 + $0xab0] sm:$0xff]
    %v1170 = vld [vmem:[#allocation5 + $0xab8] sm:$0xff]
    %v1171 = vld [vmem:[#allocation5 + $0xac0] sm:$0xff]
    %v1172 = vld [vmem:[#allocation5 + $0xac8] sm:$0xff]
    %v1173 = vld [vmem:[#allocation5 + $0xad0] sm:$0xff]
    %v1174 = vld [vmem:[#allocation5 + $0xad8] sm:$0xff]
    %v1175 = vld [vmem:[#allocation5 + $0xae0] sm:$0xff]
    %v1176 = vld [vmem:[#allocation5 + $0xae8] sm:$0xff]
    %v1177 = vld [vmem:[#allocation5 + $0xaf0] sm:$0xff]
    %v1178 = vld [vmem:[#allocation5 + $0xaf8] sm:$0xff]
    %v1179 = vld [vmem:[#allocation5 + $0xb00] sm:$0xff]
    %v1180 = vld [vmem:[#allocation5 + $0xb08] sm:$0xff]
    %v1181 = vld [vmem:[#allocation5 + $0xb10] sm:$0xff]
    %v1182 = vld [vmem:[#allocation5 + $0xb18] sm:$0xff]
    %v1183 = vld [vmem:[#allocation5 + $0xb20] sm:$0xff]
    %v1184 = vld [vmem:[#allocation5 + $0xb28] sm:$0xff]
    %v1185 = vld [vmem:[#allocation5 + $0xb30] sm:$0xff]
    %v1186 = vld [vmem:[#allocation5 + $0xb38] sm:$0xff]
    %v1187 = vld [vmem:[#allocation5 + $0xb40] sm:$0xff]
    %v1188 = vld [vmem:[#allocation5 + $0xb48] sm:$0xff]
    %v1189 = vld [vmem:[#allocation5 + $0xb50] sm:$0xff]
    %v1190 = vld [vmem:[#allocation5 + $0xb58] sm:$0xff]
    %v1191 = vld [vmem:[#allocation5 + $0xb60] sm:$0xff]
    %v1192 = vld [vmem:[#allocation5 + $0xb68] sm:$0xff]
    %v1193 = vld [vmem:[#allocation5 + $0xb70] sm:$0xff]
    %v1194 = vld [vmem:[#allocation5 + $0xb78] sm:$0xff]
    %v1195 = vld [vmem:[#allocation5 + $0xb80] sm:$0xff]
    %v1196 = vld [vmem:[#allocation5 + $0xb88] sm:$0xff]
    %v1197 = vld [vmem:[#allocation5 + $0xb90] sm:$0xff]
    %v1198 = vld [vmem:[#allocation5 + $0xb98] sm:$0xff]
    %v1199 = vld [vmem:[#allocation5 + $0xba0] sm:$0xff]
    %v1200 = vld [vmem:[#allocation5 + $0xba8] sm:$0xff]
    %v1201 = vld [vmem:[#allocation5 + $0xbb0] sm:$0xff]
    %v1202 = vld [vmem:[#allocation5 + $0xbb8] sm:$0xff]
    %v1203 = vld [vmem:[#allocation5 + $0xbc0] sm:$0xff]
    %v1204 = vld [vmem:[#allocation5 + $0xbc8] sm:$0xff]
    %v1205 = vld [vmem:[#allocation5 + $0xbd0] sm:$0xff]
    %v1206 = vld [vmem:[#allocation5 + $0xbd8] sm:$0xff]
    %v1207 = vld [vmem:[#allocation5 + $0xbe0] sm:$0xff]
    %v1208 = vld [vmem:[#allocation5 + $0xbe8] sm:$0xff]
    %v1209 = vld [vmem:[#allocation5 + $0xbf0] sm:$0xff]
    %v1210 = vld [vmem:[#allocation5 + $0xbf8] sm:$0xff]
    %v1211 = vld [vmem:[#allocation5 + $0xc00] sm:$0xff]
    %v1212 = vld [vmem:[#allocation5 + $0xc08] sm:$0xff]
    %v1213 = vld [vmem:[#allocation5 + $0xc10] sm:$0xff]
    %v1214 = vld [vmem:[#allocation5 + $0xc18] sm:$0xff]
    %v1215 = vld [vmem:[#allocation5 + $0xc20] sm:$0xff]
    %v1216 = vld [vmem:[#allocation5 + $0xc28] sm:$0xff]
    %v1217 = vld [vmem:[#allocation5 + $0xc30] sm:$0xff]
    %v1218 = vld [vmem:[#allocation5 + $0xc38] sm:$0xff]
    %v1219 = vld [vmem:[#allocation5 + $0xc40] sm:$0xff]
    %v1220 = vld [vmem:[#allocation5 + $0xc48] sm:$0xff]
    %v1221 = vld [vmem:[#allocation5 + $0xc50] sm:$0xff]
    %v1222 = vld [vmem:[#allocation5 + $0xc58] sm:$0xff]
    %v1223 = vld [vmem:[#allocation5 + $0xc60] sm:$0xff]
    %v1224 = vld [vmem:[#allocation5 + $0xc68] sm:$0xff]
    %v1225 = vld [vmem:[#allocation5 + $0xc70] sm:$0xff]
    %v1226 = vld [vmem:[#allocation5 + $0xc78] sm:$0xff]
    %v1227 = vld [vmem:[#allocation5 + $0xc80] sm:$0xff]
    %v1228 = vld [vmem:[#allocation5 + $0xc88] sm:$0xff]
    %v1229 = vld [vmem:[#allocation5 + $0xc90] sm:$0xff]
    %v1230 = vld [vmem:[#allocation5 + $0xc98] sm:$0xff]
    %v1231 = vld [vmem:[#allocation5 + $0xca0] sm:$0xff]
    %v1232 = vld [vmem:[#allocation5 + $0xca8] sm:$0xff]
    %v1233 = vld [vmem:[#allocation5 + $0xcb0] sm:$0xff]
    %v1234 = vld [vmem:[#allocation5 + $0xcb8] sm:$0xff]
    %v1235 = vld [vmem:[#allocation5 + $0xcc0] sm:$0xff]
    %v1236 = vld [vmem:[#allocation5 + $0xcc8] sm:$0xff]
    %v1237 = vld [vmem:[#allocation5 + $0xcd0] sm:$0xff]
    %v1238 = vld [vmem:[#allocation5 + $0xcd8] sm:$0xff]
    %v1239 = vld [vmem:[#allocation5 + $0xce0] sm:$0xff]
    %v1240 = vld [vmem:[#allocation5 + $0xce8] sm:$0xff]
    %v1241 = vld [vmem:[#allocation5 + $0xcf0] sm:$0xff]
    %v1242 = vld [vmem:[#allocation5 + $0xcf8] sm:$0xff]
    %v1243 = vld [vmem:[#allocation5 + $0xd00] sm:$0xff]
    %v1244 = vld [vmem:[#allocation5 + $0xd08] sm:$0xff]
    %v1245 = vld [vmem:[#allocation5 + $0xd10] sm:$0xff]
    %v1246 = vld [vmem:[#allocation5 + $0xd18] sm:$0xff]
    %v1247 = vld [vmem:[#allocation5 + $0xd20] sm:$0xff]
    %v1248 = vld [vmem:[#allocation5 + $0xd28] sm:$0xff]
    %v1249 = vld [vmem:[#allocation5 + $0xd30] sm:$0xff]
    %v1250 = vld [vmem:[#allocation5 + $0xd38] sm:$0xff]
    %v1251 = vld [vmem:[#allocation5 + $0xd40] sm:$0xff]
    %v1252 = vld [vmem:[#allocation5 + $0xd48] sm:$0xff]
    %v1253 = vld [vmem:[#allocation5 + $0xd50] sm:$0xff]
    %v1254 = vld [vmem:[#allocation5 + $0xd58] sm:$0xff]
    %v1255 = vld [vmem:[#allocation5 + $0xd60] sm:$0xff]
    %v1256 = vld [vmem:[#allocation5 + $0xd68] sm:$0xff]
    %v1257 = vld [vmem:[#allocation5 + $0xd70] sm:$0xff]
    %v1258 = vld [vmem:[#allocation5 + $0xd78] sm:$0xff]
    %v1259 = vld [vmem:[#allocation5 + $0xd80] sm:$0xff]
    %v1260 = vld [vmem:[#allocation5 + $0xd88] sm:$0xff]
    %v1261 = vld [vmem:[#allocation5 + $0xd90] sm:$0xff]
    %v1262 = vld [vmem:[#allocation5 + $0xd98] sm:$0xff]
    %v1263 = vld [vmem:[#allocation5 + $0xda0] sm:$0xff]
    %v1264 = vld [vmem:[#allocation5 + $0xda8] sm:$0xff]
    %v1265 = vld [vmem:[#allocation5 + $0xdb0] sm:$0xff]
    %v1266 = vld [vmem:[#allocation5 + $0xdb8] sm:$0xff]
    %v1267 = vld [vmem:[#allocation5 + $0xdc0] sm:$0xff]
    %v1268 = vld [vmem:[#allocation5 + $0xdc8] sm:$0xff]
    %v1269 = vld [vmem:[#allocation5 + $0xdd0] sm:$0xff]
    %v1270 = vld [vmem:[#allocation5 + $0xdd8] sm:$0xff]
    %v1271 = vld [vmem:[#allocation5 + $0xde0] sm:$0xff]
    %v1272 = vld [vmem:[#allocation5 + $0xde8] sm:$0xff]
    %v1273 = vld [vmem:[#allocation5 + $0xdf0] sm:$0xff]
    %v1274 = vld [vmem:[#allocation5 + $0xdf8] sm:$0xff]
    %v1275 = vld [vmem:[#allocation5 + $0xe00] sm:$0xff]
    %v1276 = vld [vmem:[#allocation5 + $0xe08] sm:$0xff]
    %v1277 = vld [vmem:[#allocation5 + $0xe10] sm:$0xff]
    %v1278 = vld [vmem:[#allocation5 + $0xe18] sm:$0xff]
    %v1279 = vld [vmem:[#allocation5 + $0xe20] sm:$0xff]
    %v1280 = vld [vmem:[#allocation5 + $0xe28] sm:$0xff]
    %v1281 = vld [vmem:[#allocation5 + $0xe30] sm:$0xff]
    %v1282 = vld [vmem:[#allocation5 + $0xe38] sm:$0xff]
    %v1283 = vld [vmem:[#allocation5 + $0xe40] sm:$0xff]
    %v1284 = vld [vmem:[#allocation5 + $0xe48] sm:$0xff]
    %v1285 = vld [vmem:[#allocation5 + $0xe50] sm:$0xff]
    %v1286 = vld [vmem:[#allocation5 + $0xe58] sm:$0xff]
    %v1287 = vld [vmem:[#allocation5 + $0xe60] sm:$0xff]
    %v1288 = vld [vmem:[#allocation5 + $0xe68] sm:$0xff]
    %v1289 = vld [vmem:[#allocation5 + $0xe70] sm:$0xff]
    %v1290 = vld [vmem:[#allocation5 + $0xe78] sm:$0xff]
    %v1291 = vld [vmem:[#allocation5 + $0xe80] sm:$0xff]
    %v1292 = vld [vmem:[#allocation5 + $0xe88] sm:$0xff]
    %v1293 = vld [vmem:[#allocation5 + $0xe90] sm:$0xff]
    %v1294 = vld [vmem:[#allocation5 + $0xe98] sm:$0xff]
    %v1295 = vld [vmem:[#allocation5 + $0xea0] sm:$0xff]
    %v1296 = vld [vmem:[#allocation5 + $0xea8] sm:$0xff]
    %v1297 = vld [vmem:[#allocation5 + $0xeb0] sm:$0xff]
    %v1298 = vld [vmem:[#allocation5 + $0xeb8] sm:$0xff]
    %v1299 = vld [vmem:[#allocation5 + $0xec0] sm:$0xff]
    %v1300 = vld [vmem:[#allocation5 + $0xec8] sm:$0xff]
    %v1301 = vld [vmem:[#allocation5 + $0xed0] sm:$0xff]
    %v1302 = vld [vmem:[#allocation5 + $0xed8] sm:$0xff]
    %v1303 = vld [vmem:[#allocation5 + $0xee0] sm:$0xff]
    %v1304 = vld [vmem:[#allocation5 + $0xee8] sm:$0xff]
    %v1305 = vld [vmem:[#allocation5 + $0xef0] sm:$0xff]
    %v1306 = vld [vmem:[#allocation5 + $0xef8] sm:$0xff]
    %v1307 = vld [vmem:[#allocation5 + $0xf00] sm:$0xff]
    %v1308 = vld [vmem:[#allocation5 + $0xf08] sm:$0xff]
    %v1309 = vld [vmem:[#allocation5 + $0xf10] sm:$0xff]
    %v1310 = vld [vmem:[#allocation5 + $0xf18] sm:$0xff]
    %v1311 = vld [vmem:[#allocation5 + $0xf20] sm:$0xff]
    %v1312 = vld [vmem:[#allocation5 + $0xf28] sm:$0xff]
    %v1313 = vld [vmem:[#allocation5 + $0xf30] sm:$0xff]
    %v1314 = vld [vmem:[#allocation5 + $0xf38] sm:$0xff]
    %v1315 = vld [vmem:[#allocation5 + $0xf40] sm:$0xff]
    %v1316 = vld [vmem:[#allocation5 + $0xf48] sm:$0xff]
    %v1317 = vld [vmem:[#allocation5 + $0xf50] sm:$0xff]
    %v1318 = vld [vmem:[#allocation5 + $0xf58] sm:$0xff]
    %v1319 = vld [vmem:[#allocation5 + $0xf60] sm:$0xff]
    %v1320 = vld [vmem:[#allocation5 + $0xf68] sm:$0xff]
    %v1321 = vld [vmem:[#allocation5 + $0xf70] sm:$0xff]
    %v1322 = vld [vmem:[#allocation5 + $0xf78] sm:$0xff]
    %v1323 = vld [vmem:[#allocation5 + $0xf80] sm:$0xff]
    %v1324 = vld [vmem:[#allocation5 + $0xf88] sm:$0xff]
    %v1325 = vld [vmem:[#allocation5 + $0xf90] sm:$0xff]
    %v1326 = vld [vmem:[#allocation5 + $0xf98] sm:$0xff]
    %v1327 = vld [vmem:[#allocation5 + $0xfa0] sm:$0xff]
    %v1328 = vld [vmem:[#allocation5 + $0xfa8] sm:$0xff]
    %v1329 = vld [vmem:[#allocation5 + $0xfb0] sm:$0xff]
    %v1330 = vld [vmem:[#allocation5 + $0xfb8] sm:$0xff]
    %v1331 = vld [vmem:[#allocation5 + $0xfc0] sm:$0xff]
    %v1332 = vld [vmem:[#allocation5 + $0xfc8] sm:$0xff]
    %v1333 = vld [vmem:[#allocation5 + $0xfd0] sm:$0xff]
    %v1334 = vld [vmem:[#allocation5 + $0xfd8] sm:$0xff]
    %v1335 = vld [vmem:[#allocation5 + $0xfe0] sm:$0xff]
    %v1336 = vld [vmem:[#allocation5 + $0xfe8] sm:$0xff]
    %v1337 = vld [vmem:[#allocation5 + $0xff0] sm:$0xff]
    %v1338 = vld [vmem:[#allocation5 + $0xff8] sm:$0xff]
    %v1339 = vld [vmem:[#allocation5 + $0x1000] sm:$0xff]
    %v1340 = vld [vmem:[#allocation5 + $0x1008] sm:$0xff]
    %v1341 = vld [vmem:[#allocation5 + $0x1010] sm:$0xff]
    %v1342 = vld [vmem:[#allocation5 + $0x1018] sm:$0xff]
    %v1343 = vld [vmem:[#allocation5 + $0x1020] sm:$0xff]
    %v1344 = vld [vmem:[#allocation5 + $0x1028] sm:$0xff]
    %v1345 = vld [vmem:[#allocation5 + $0x1030] sm:$0xff]
    %v1346 = vld [vmem:[#allocation5 + $0x1038] sm:$0xff]
    %v1347 = vld [vmem:[#allocation5 + $0x1040] sm:$0xff]
    %v1348 = vld [vmem:[#allocation5 + $0x1048] sm:$0xff]
    %v1349 = vld [vmem:[#allocation5 + $0x1050] sm:$0xff]
    %v1350 = vld [vmem:[#allocation5 + $0x1058] sm:$0xff]
    %v1351 = vld [vmem:[#allocation5 + $0x1060] sm:$0xff]
    %v1352 = vld [vmem:[#allocation5 + $0x1068] sm:$0xff]
    %v1353 = vld [vmem:[#allocation5 + $0x1070] sm:$0xff]
    %v1354 = vld [vmem:[#allocation5 + $0x1078] sm:$0xff]
    %v1355 = vld [vmem:[#allocation5 + $0x1080] sm:$0xff]
    %v1356 = vld [vmem:[#allocation5 + $0x1088] sm:$0xff]
    %v1357 = vld [vmem:[#allocation5 + $0x1090] sm:$0xff]
    %v1358 = vld [vmem:[#allocation5 + $0x1098] sm:$0xff]
    %v1359 = vld [vmem:[#allocation5 + $0x10a0] sm:$0xff]
    %v1360 = vld [vmem:[#allocation5 + $0x10a8] sm:$0xff]
    %v1361 = vld [vmem:[#allocation5 + $0x10b0] sm:$0xff]
    %v1362 = vld [vmem:[#allocation5 + $0x10b8] sm:$0xff]
    %v1363 = vld [vmem:[#allocation5 + $0x10c0] sm:$0xff]
    %v1364 = vld [vmem:[#allocation5 + $0x10c8] sm:$0xff]
    %v1365 = vld [vmem:[#allocation5 + $0x10d0] sm:$0xff]
    %v1366 = vld [vmem:[#allocation5 + $0x10d8] sm:$0xff]
    %v1367 = vld [vmem:[#allocation5 + $0x10e0] sm:$0xff]
    %v1368 = vld [vmem:[#allocation5 + $0x10e8] sm:$0xff]
    %v1369 = vld [vmem:[#allocation5 + $0x10f0] sm:$0xff]
    %v1370 = vld [vmem:[#allocation5 + $0x10f8] sm:$0xff]
    %v1371 = vld [vmem:[#allocation5 + $0x1100] sm:$0xff]
    %v1372 = vld [vmem:[#allocation5 + $0x1108] sm:$0xff]
    %v1373 = vld [vmem:[#allocation5 + $0x1110] sm:$0xff]
    %v1374 = vld [vmem:[#allocation5 + $0x1118] sm:$0xff]
    %v1375 = vld [vmem:[#allocation5 + $0x1120] sm:$0xff]
    %v1376 = vld [vmem:[#allocation5 + $0x1128] sm:$0xff]
    %v1377 = vld [vmem:[#allocation5 + $0x1130] sm:$0xff]
    %v1378 = vld [vmem:[#allocation5 + $0x1138] sm:$0xff]
    %v1379 = vld [vmem:[#allocation5 + $0x1140] sm:$0xff]
    %v1380 = vld [vmem:[#allocation5 + $0x1148] sm:$0xff]
    %v1381 = vld [vmem:[#allocation5 + $0x1150] sm:$0xff]
    %v1382 = vld [vmem:[#allocation5 + $0x1158] sm:$0xff]
    %v1383 = vld [vmem:[#allocation5 + $0x1160] sm:$0xff]
    %v1384 = vld [vmem:[#allocation5 + $0x1168] sm:$0xff]
    %v1385 = vld [vmem:[#allocation5 + $0x1170] sm:$0xff]
    %v1386 = vld [vmem:[#allocation5 + $0x1178] sm:$0xff]
    %v1387 = vld [vmem:[#allocation5 + $0x1180] sm:$0xff]
    %v1388 = vld [vmem:[#allocation5 + $0x1188] sm:$0xff]
    %v1389 = vld [vmem:[#allocation5 + $0x1190] sm:$0xff]
    %v1390 = vld [vmem:[#allocation5 + $0x1198] sm:$0xff]
    %v1391 = vld [vmem:[#allocation5 + $0x11a0] sm:$0xff]
    %v1392 = vld [vmem:[#allocation5 + $0x11a8] sm:$0xff]
    %v1393 = vld [vmem:[#allocation5 + $0x11b0] sm:$0xff]
    %v1394 = vld [vmem:[#allocation5 + $0x11b8] sm:$0xff]
    %v1395 = vld [vmem:[#allocation5 + $0x11c0] sm:$0xff]
    %v1396 = vld [vmem:[#allocation5 + $0x11c8] sm:$0xff]
    %v1397 = vld [vmem:[#allocation5 + $0x11d0] sm:$0xff]
    %v1398 = vld [vmem:[#allocation5 + $0x11d8] sm:$0xff]
    %v1399 = vld [vmem:[#allocation5 + $0x11e0] sm:$0xff]
    %v1400 = vld [vmem:[#allocation5 + $0x11e8] sm:$0xff]
    %v1401 = vld [vmem:[#allocation5 + $0x11f0] sm:$0xff]
    %v1402 = vld [vmem:[#allocation5 + $0x11f8] sm:$0xff]
    %v1403 = vld [vmem:[#allocation5 + $0x1200] sm:$0xff]
    %v1404 = vld [vmem:[#allocation5 + $0x1208] sm:$0xff]
    %v1405 = vld [vmem:[#allocation5 + $0x1210] sm:$0xff]
    %v1406 = vld [vmem:[#allocation5 + $0x1218] sm:$0xff]
    %v1407 = vld [vmem:[#allocation5 + $0x1220] sm:$0xff]
    %v1408 = vld [vmem:[#allocation5 + $0x1228] sm:$0xff]
    %v1409 = vld [vmem:[#allocation5 + $0x1230] sm:$0xff]
    %v1410 = vld [vmem:[#allocation5 + $0x1238] sm:$0xff]
    %v1411 = vld [vmem:[#allocation5 + $0x1240] sm:$0xff]
    %v1412 = vld [vmem:[#allocation5 + $0x1248] sm:$0xff]
    %v1413 = vld [vmem:[#allocation5 + $0x1250] sm:$0xff]
    %v1414 = vld [vmem:[#allocation5 + $0x1258] sm:$0xff]
    %v1415 = vld [vmem:[#allocation5 + $0x1260] sm:$0xff]
    %v1416 = vld [vmem:[#allocation5 + $0x1268] sm:$0xff]
    %v1417 = vld [vmem:[#allocation5 + $0x1270] sm:$0xff]
    %v1418 = vld [vmem:[#allocation5 + $0x1278] sm:$0xff]
    %v1419 = vld [vmem:[#allocation5 + $0x1280] sm:$0xff]
    %v1420 = vld [vmem:[#allocation5 + $0x1288] sm:$0xff]
    %v1421 = vld [vmem:[#allocation5 + $0x1290] sm:$0xff]
    %v1422 = vld [vmem:[#allocation5 + $0x1298] sm:$0xff]
    %v1423 = vld [vmem:[#allocation5 + $0x12a0] sm:$0xff]
    %v1424 = vld [vmem:[#allocation5 + $0x12a8] sm:$0xff]
    %v1425 = vld [vmem:[#allocation5 + $0x12b0] sm:$0xff]
    %v1426 = vld [vmem:[#allocation5 + $0x12b8] sm:$0xff]
    %v1427 = vld [vmem:[#allocation5 + $0x12c0] sm:$0xff]
    %v1428 = vld [vmem:[#allocation5 + $0x12c8] sm:$0xff]
    %v1429 = vld [vmem:[#allocation5 + $0x12d0] sm:$0xff]
    %v1430 = vld [vmem:[#allocation5 + $0x12d8] sm:$0xff]
    %v1431 = vld [vmem:[#allocation5 + $0x12e0] sm:$0xff]
    %v1432 = vld [vmem:[#allocation5 + $0x12e8] sm:$0xff]
    %v1433 = vld [vmem:[#allocation5 + $0x12f0] sm:$0xff]
    %v1434 = vld [vmem:[#allocation5 + $0x12f8] sm:$0xff]
    %v1435 = vld [vmem:[#allocation5 + $0x1300] sm:$0xff]
    %v1436 = vld [vmem:[#allocation5 + $0x1308] sm:$0xff]
    %v1437 = vld [vmem:[#allocation5 + $0x1310] sm:$0xff]
    %v1438 = vld [vmem:[#allocation5 + $0x1318] sm:$0xff]
    %v1439 = vld [vmem:[#allocation5 + $0x1320] sm:$0xff]
    %v1440 = vld [vmem:[#allocation5 + $0x1328] sm:$0xff]
    %v1441 = vld [vmem:[#allocation5 + $0x1330] sm:$0xff]
    %v1442 = vld [vmem:[#allocation5 + $0x1338] sm:$0xff]
    %v1443 = vld [vmem:[#allocation5 + $0x1340] sm:$0xff]
    %v1444 = vld [vmem:[#allocation5 + $0x1348] sm:$0xff]
    %v1445 = vld [vmem:[#allocation5 + $0x1350] sm:$0xff]
    %v1446 = vld [vmem:[#allocation5 + $0x1358] sm:$0xff]
    %v1447 = vld [vmem:[#allocation5 + $0x1360] sm:$0xff]
    %v1448 = vld [vmem:[#allocation5 + $0x1368] sm:$0xff]
    %v1449 = vld [vmem:[#allocation5 + $0x1370] sm:$0xff]
    %v1450 = vld [vmem:[#allocation5 + $0x1378] sm:$0xff]
    %v1451 = vld [vmem:[#allocation5 + $0x1380] sm:$0xff]
    %v1452 = vld [vmem:[#allocation5 + $0x1388] sm:$0xff]
    %v1453 = vld [vmem:[#allocation5 + $0x1390] sm:$0xff]
    %v1454 = vld [vmem:[#allocation5 + $0x1398] sm:$0xff]
    %v1455 = vld [vmem:[#allocation5 + $0x13a0] sm:$0xff]
    %v1456 = vld [vmem:[#allocation5 + $0x13a8] sm:$0xff]
    %v1457 = vld [vmem:[#allocation5 + $0x13b0] sm:$0xff]
    %v1458 = vld [vmem:[#allocation5 + $0x13b8] sm:$0xff]
    %v1459 = vld [vmem:[#allocation5 + $0x13c0] sm:$0xff]
    %v1460 = vld [vmem:[#allocation5 + $0x13c8] sm:$0xff]
    %v1461 = vld [vmem:[#allocation5 + $0x13d0] sm:$0xff]
    %v1462 = vld [vmem:[#allocation5 + $0x13d8] sm:$0xff]
    %v1463 = vld [vmem:[#allocation5 + $0x13e0] sm:$0xff]
    %v1464 = vld [vmem:[#allocation5 + $0x13e8] sm:$0xff]
    %v1465 = vld [vmem:[#allocation5 + $0x13f0] sm:$0xff]
    %v1466 = vld [vmem:[#allocation5 + $0x13f8] sm:$0xff]
    %v1477 = vunpack.c.l.b16 %v817
    %v1478 = vunpack.c.h.b16 %v817
    %v1479 = vunpack.c.l.b16 %v818
    %v1480 = vunpack.c.h.b16 %v818
    %v1481 = vunpack.c.l.b16 %v819
    %v1482 = vunpack.c.h.b16 %v819
    %v1483 = vunpack.c.l.b16 %v820
    %v1484 = vunpack.c.h.b16 %v820
    %v1485 = vunpack.c.l.b16 %v821
    %v1486 = vunpack.c.h.b16 %v821
    %v1487 = vunpack.c.l.b16 %v822
    %v1488 = vunpack.c.h.b16 %v822
    %v1489 = vunpack.c.l.b16 %v823
    %v1490 = vunpack.c.h.b16 %v823
    %v1491 = vunpack.c.l.b16 %v824
    %v1492 = vunpack.c.h.b16 %v824
    %v1493 = vunpack.c.l.b16 %v825
    %v1494 = vunpack.c.h.b16 %v825
    %v1495 = vunpack.c.l.b16 %v826
    %v1496 = vunpack.c.h.b16 %v826
    %v1497 = vpack.c.b16 %v1487, %v1477
    %v1498 = vpack.c.b16 %v1488, %v1478
    %v1499 = vpack.c.b16 %v1489, %v1479
    %v1500 = vpack.c.b16 %v1490, %v1480
    %v1501 = vpack.c.b16 %v1491, %v1481
    %v1502 = vpack.c.b16 %v1492, %v1482
    %v1503 = vpack.c.b16 %v1493, %v1483
    %v1504 = vpack.c.b16 %v1494, %v1484
    %v1505 = vpack.c.b16 %v1495, %v1485
    %v1506 = vpack.c.b16 %v1496, %v1486
    %v2157 = vunpack.c.l.b16 %v827
    %v2158 = vunpack.c.h.b16 %v827
    %v2159 = vunpack.c.l.b16 %v828
    %v2160 = vunpack.c.h.b16 %v828
    %v2161 = vunpack.c.l.b16 %v829
    %v2162 = vunpack.c.h.b16 %v829
    %v2163 = vunpack.c.l.b16 %v830
    %v2164 = vunpack.c.h.b16 %v830
    %v2165 = vunpack.c.l.b16 %v831
    %v2166 = vunpack.c.h.b16 %v831
    %v2167 = vunpack.c.l.b16 %v832
    %v2168 = vunpack.c.h.b16 %v832
    %v2169 = vunpack.c.l.b16 %v833
    %v2170 = vunpack.c.h.b16 %v833
    %v2171 = vunpack.c.l.b16 %v834
    %v2172 = vunpack.c.h.b16 %v834
    %v2173 = vunpack.c.l.b16 %v835
    %v2174 = vunpack.c.h.b16 %v835
    %v2175 = vunpack.c.l.b16 %v836
    %v2176 = vunpack.c.h.b16 %v836
    %v2177 = vunpack.c.l.b16 %v837
    %v2178 = vunpack.c.h.b16 %v837
    %v2179 = vunpack.c.l.b16 %v838
    %v2180 = vunpack.c.h.b16 %v838
    %v2181 = vunpack.c.l.b16 %v839
    %v2182 = vunpack.c.h.b16 %v839
    %v2183 = vunpack.c.l.b16 %v840
    %v2184 = vunpack.c.h.b16 %v840
    %v2185 = vunpack.c.l.b16 %v841
    %v2186 = vunpack.c.h.b16 %v841
    %v2187 = vunpack.c.l.b16 %v842
    %v2188 = vunpack.c.h.b16 %v842
    %v2189 = vunpack.c.l.b16 %v843
    %v2190 = vunpack.c.h.b16 %v843
    %v2191 = vunpack.c.l.b16 %v844
    %v2192 = vunpack.c.h.b16 %v844
    %v2193 = vunpack.c.l.b16 %v845
    %v2194 = vunpack.c.h.b16 %v845
    %v2195 = vunpack.c.l.b16 %v846
    %v2196 = vunpack.c.h.b16 %v846
    %v2197 = vunpack.c.l.b16 %v847
    %v2198 = vunpack.c.h.b16 %v847
    %v2199 = vunpack.c.l.b16 %v848
    %v2200 = vunpack.c.h.b16 %v848
    %v2201 = vunpack.c.l.b16 %v849
    %v2202 = vunpack.c.h.b16 %v849
    %v2203 = vunpack.c.l.b16 %v850
    %v2204 = vunpack.c.h.b16 %v850
    %v2205 = vunpack.c.l.b16 %v851
    %v2206 = vunpack.c.h.b16 %v851
    %v2207 = vunpack.c.l.b16 %v852
    %v2208 = vunpack.c.h.b16 %v852
    %v2209 = vunpack.c.l.b16 %v853
    %v2210 = vunpack.c.h.b16 %v853
    %v2211 = vunpack.c.l.b16 %v854
    %v2212 = vunpack.c.h.b16 %v854
    %v2213 = vunpack.c.l.b16 %v855
    %v2214 = vunpack.c.h.b16 %v855
    %v2215 = vunpack.c.l.b16 %v856
    %v2216 = vunpack.c.h.b16 %v856
    %v2217 = vunpack.c.l.b16 %v857
    %v2218 = vunpack.c.h.b16 %v857
    %v2219 = vunpack.c.l.b16 %v858
    %v2220 = vunpack.c.h.b16 %v858
    %v2221 = vunpack.c.l.b16 %v859
    %v2222 = vunpack.c.h.b16 %v859
    %v2223 = vunpack.c.l.b16 %v860
    %v2224 = vunpack.c.h.b16 %v860
    %v2225 = vunpack.c.l.b16 %v861
    %v2226 = vunpack.c.h.b16 %v861
    %v2227 = vunpack.c.l.b16 %v862
    %v2228 = vunpack.c.h.b16 %v862
    %v2229 = vunpack.c.l.b16 %v863
    %v2230 = vunpack.c.h.b16 %v863
    %v2231 = vunpack.c.l.b16 %v864
    %v2232 = vunpack.c.h.b16 %v864
    %v2233 = vunpack.c.l.b16 %v865
    %v2234 = vunpack.c.h.b16 %v865
    %v2235 = vunpack.c.l.b16 %v866
    %v2236 = vunpack.c.h.b16 %v866
    %v2237 = vunpack.c.l.b16 %v867
    %v2238 = vunpack.c.h.b16 %v867
    %v2239 = vunpack.c.l.b16 %v868
    %v2240 = vunpack.c.h.b16 %v868
    %v2241 = vunpack.c.l.b16 %v869
    %v2242 = vunpack.c.h.b16 %v869
    %v2243 = vunpack.c.l.b16 %v870
    %v2244 = vunpack.c.h.b16 %v870
    %v2245 = vunpack.c.l.b16 %v871
    %v2246 = vunpack.c.h.b16 %v871
    %v2247 = vunpack.c.l.b16 %v872
    %v2248 = vunpack.c.h.b16 %v872
    %v2249 = vunpack.c.l.b16 %v873
    %v2250 = vunpack.c.h.b16 %v873
    %v2251 = vunpack.c.l.b16 %v874
    %v2252 = vunpack.c.h.b16 %v874
    %v2253 = vunpack.c.l.b16 %v875
    %v2254 = vunpack.c.h.b16 %v875
    %v2255 = vunpack.c.l.b16 %v876
    %v2256 = vunpack.c.h.b16 %v876
    %v2257 = vunpack.c.l.b16 %v877
    %v2258 = vunpack.c.h.b16 %v877
    %v2259 = vunpack.c.l.b16 %v878
    %v2260 = vunpack.c.h.b16 %v878
    %v2261 = vunpack.c.l.b16 %v879
    %v2262 = vunpack.c.h.b16 %v879
    %v2263 = vunpack.c.l.b16 %v880
    %v2264 = vunpack.c.h.b16 %v880
    %v2265 = vunpack.c.l.b16 %v881
    %v2266 = vunpack.c.h.b16 %v881
    %v2267 = vunpack.c.l.b16 %v882
    %v2268 = vunpack.c.h.b16 %v882
    %v2269 = vunpack.c.l.b16 %v883
    %v2270 = vunpack.c.h.b16 %v883
    %v2271 = vunpack.c.l.b16 %v884
    %v2272 = vunpack.c.h.b16 %v884
    %v2273 = vunpack.c.l.b16 %v885
    %v2274 = vunpack.c.h.b16 %v885
    %v2275 = vunpack.c.l.b16 %v886
    %v2276 = vunpack.c.h.b16 %v886
    %v2277 = vunpack.c.l.b16 %v887
    %v2278 = vunpack.c.h.b16 %v887
    %v2279 = vunpack.c.l.b16 %v888
    %v2280 = vunpack.c.h.b16 %v888
    %v2281 = vunpack.c.l.b16 %v889
    %v2282 = vunpack.c.h.b16 %v889
    %v2283 = vunpack.c.l.b16 %v890
    %v2284 = vunpack.c.h.b16 %v890
    %v2285 = vunpack.c.l.b16 %v891
    %v2286 = vunpack.c.h.b16 %v891
    %v2287 = vunpack.c.l.b16 %v892
    %v2288 = vunpack.c.h.b16 %v892
    %v2289 = vunpack.c.l.b16 %v893
    %v2290 = vunpack.c.h.b16 %v893
    %v2291 = vunpack.c.l.b16 %v894
    %v2292 = vunpack.c.h.b16 %v894
    %v2293 = vunpack.c.l.b16 %v895
    %v2294 = vunpack.c.h.b16 %v895
    %v2295 = vunpack.c.l.b16 %v896
    %v2296 = vunpack.c.h.b16 %v896
    %v2297 = vunpack.c.l.b16 %v897
    %v2298 = vunpack.c.h.b16 %v897
    %v2299 = vunpack.c.l.b16 %v898
    %v2300 = vunpack.c.h.b16 %v898
    %v2301 = vunpack.c.l.b16 %v899
    %v2302 = vunpack.c.h.b16 %v899
    %v2303 = vunpack.c.l.b16 %v900
    %v2304 = vunpack.c.h.b16 %v900
    %v2305 = vunpack.c.l.b16 %v901
    %v2306 = vunpack.c.h.b16 %v901
    %v2307 = vunpack.c.l.b16 %v902
    %v2308 = vunpack.c.h.b16 %v902
    %v2309 = vunpack.c.l.b16 %v903
    %v2310 = vunpack.c.h.b16 %v903
    %v2311 = vunpack.c.l.b16 %v904
    %v2312 = vunpack.c.h.b16 %v904
    %v2313 = vunpack.c.l.b16 %v905
    %v2314 = vunpack.c.h.b16 %v905
    %v2315 = vunpack.c.l.b16 %v906
    %v2316 = vunpack.c.h.b16 %v906
    %v2317 = vunpack.c.l.b16 %v907
    %v2318 = vunpack.c.h.b16 %v907
    %v2319 = vunpack.c.l.b16 %v908
    %v2320 = vunpack.c.h.b16 %v908
    %v2321 = vunpack.c.l.b16 %v909
    %v2322 = vunpack.c.h.b16 %v909
    %v2323 = vunpack.c.l.b16 %v910
    %v2324 = vunpack.c.h.b16 %v910
    %v2325 = vunpack.c.l.b16 %v911
    %v2326 = vunpack.c.h.b16 %v911
    %v2327 = vunpack.c.l.b16 %v912
    %v2328 = vunpack.c.h.b16 %v912
    %v2329 = vunpack.c.l.b16 %v913
    %v2330 = vunpack.c.h.b16 %v913
    %v2331 = vunpack.c.l.b16 %v914
    %v2332 = vunpack.c.h.b16 %v914
    %v2333 = vunpack.c.l.b16 %v915
    %v2334 = vunpack.c.h.b16 %v915
    %v2335 = vunpack.c.l.b16 %v916
    %v2336 = vunpack.c.h.b16 %v916
    %v2337 = vunpack.c.l.b16 %v917
    %v2338 = vunpack.c.h.b16 %v917
    %v2339 = vunpack.c.l.b16 %v918
    %v2340 = vunpack.c.h.b16 %v918
    %v2341 = vunpack.c.l.b16 %v919
    %v2342 = vunpack.c.h.b16 %v919
    %v2343 = vunpack.c.l.b16 %v920
    %v2344 = vunpack.c.h.b16 %v920
    %v2345 = vunpack.c.l.b16 %v921
    %v2346 = vunpack.c.h.b16 %v921
    %v2347 = vunpack.c.l.b16 %v922
    %v2348 = vunpack.c.h.b16 %v922
    %v2349 = vunpack.c.l.b16 %v923
    %v2350 = vunpack.c.h.b16 %v923
    %v2351 = vunpack.c.l.b16 %v924
    %v2352 = vunpack.c.h.b16 %v924
    %v2353 = vunpack.c.l.b16 %v925
    %v2354 = vunpack.c.h.b16 %v925
    %v2355 = vunpack.c.l.b16 %v926
    %v2356 = vunpack.c.h.b16 %v926
    %v2357 = vunpack.c.l.b16 %v927
    %v2358 = vunpack.c.h.b16 %v927
    %v2359 = vunpack.c.l.b16 %v928
    %v2360 = vunpack.c.h.b16 %v928
    %v2361 = vunpack.c.l.b16 %v929
    %v2362 = vunpack.c.h.b16 %v929
    %v2363 = vunpack.c.l.b16 %v930
    %v2364 = vunpack.c.h.b16 %v930
    %v2365 = vunpack.c.l.b16 %v931
    %v2366 = vunpack.c.h.b16 %v931
    %v2367 = vunpack.c.l.b16 %v932
    %v2368 = vunpack.c.h.b16 %v932
    %v2369 = vunpack.c.l.b16 %v933
    %v2370 = vunpack.c.h.b16 %v933
    %v2371 = vunpack.c.l.b16 %v934
    %v2372 = vunpack.c.h.b16 %v934
    %v2373 = vunpack.c.l.b16 %v935
    %v2374 = vunpack.c.h.b16 %v935
    %v2375 = vunpack.c.l.b16 %v936
    %v2376 = vunpack.c.h.b16 %v936
    %v2377 = vunpack.c.l.b16 %v937
    %v2378 = vunpack.c.h.b16 %v937
    %v2379 = vunpack.c.l.b16 %v938
    %v2380 = vunpack.c.h.b16 %v938
    %v2381 = vunpack.c.l.b16 %v939
    %v2382 = vunpack.c.h.b16 %v939
    %v2383 = vunpack.c.l.b16 %v940
    %v2384 = vunpack.c.h.b16 %v940
    %v2385 = vunpack.c.l.b16 %v941
    %v2386 = vunpack.c.h.b16 %v941
    %v2387 = vunpack.c.l.b16 %v942
    %v2388 = vunpack.c.h.b16 %v942
    %v2389 = vunpack.c.l.b16 %v943
    %v2390 = vunpack.c.h.b16 %v943
    %v2391 = vunpack.c.l.b16 %v944
    %v2392 = vunpack.c.h.b16 %v944
    %v2393 = vunpack.c.l.b16 %v945
    %v2394 = vunpack.c.h.b16 %v945
    %v2395 = vunpack.c.l.b16 %v946
    %v2396 = vunpack.c.h.b16 %v946
    %v2397 = vunpack.c.l.b16 %v947
    %v2398 = vunpack.c.h.b16 %v947
    %v2399 = vunpack.c.l.b16 %v948
    %v2400 = vunpack.c.h.b16 %v948
    %v2401 = vunpack.c.l.b16 %v949
    %v2402 = vunpack.c.h.b16 %v949
    %v2403 = vunpack.c.l.b16 %v950
    %v2404 = vunpack.c.h.b16 %v950
    %v2405 = vunpack.c.l.b16 %v951
    %v2406 = vunpack.c.h.b16 %v951
    %v2407 = vunpack.c.l.b16 %v952
    %v2408 = vunpack.c.h.b16 %v952
    %v2409 = vunpack.c.l.b16 %v953
    %v2410 = vunpack.c.h.b16 %v953
    %v2411 = vunpack.c.l.b16 %v954
    %v2412 = vunpack.c.h.b16 %v954
    %v2413 = vunpack.c.l.b16 %v955
    %v2414 = vunpack.c.h.b16 %v955
    %v2415 = vunpack.c.l.b16 %v956
    %v2416 = vunpack.c.h.b16 %v956
    %v2417 = vunpack.c.l.b16 %v957
    %v2418 = vunpack.c.h.b16 %v957
    %v2419 = vunpack.c.l.b16 %v958
    %v2420 = vunpack.c.h.b16 %v958
    %v2421 = vunpack.c.l.b16 %v959
    %v2422 = vunpack.c.h.b16 %v959
    %v2423 = vunpack.c.l.b16 %v960
    %v2424 = vunpack.c.h.b16 %v960
    %v2425 = vunpack.c.l.b16 %v961
    %v2426 = vunpack.c.h.b16 %v961
    %v2427 = vunpack.c.l.b16 %v962
    %v2428 = vunpack.c.h.b16 %v962
    %v2429 = vunpack.c.l.b16 %v963
    %v2430 = vunpack.c.h.b16 %v963
    %v2431 = vunpack.c.l.b16 %v964
    %v2432 = vunpack.c.h.b16 %v964
    %v2433 = vunpack.c.l.b16 %v965
    %v2434 = vunpack.c.h.b16 %v965
    %v2435 = vunpack.c.l.b16 %v966
    %v2436 = vunpack.c.h.b16 %v966
    %v2437 = vunpack.c.l.b16 %v967
    %v2438 = vunpack.c.h.b16 %v967
    %v2439 = vunpack.c.l.b16 %v968
    %v2440 = vunpack.c.h.b16 %v968
    %v2441 = vunpack.c.l.b16 %v969
    %v2442 = vunpack.c.h.b16 %v969
    %v2443 = vunpack.c.l.b16 %v970
    %v2444 = vunpack.c.h.b16 %v970
    %v2445 = vunpack.c.l.b16 %v971
    %v2446 = vunpack.c.h.b16 %v971
    %v2447 = vunpack.c.l.b16 %v972
    %v2448 = vunpack.c.h.b16 %v972
    %v2449 = vunpack.c.l.b16 %v973
    %v2450 = vunpack.c.h.b16 %v973
    %v2451 = vunpack.c.l.b16 %v974
    %v2452 = vunpack.c.h.b16 %v974
    %v2453 = vunpack.c.l.b16 %v975
    %v2454 = vunpack.c.h.b16 %v975
    %v2455 = vunpack.c.l.b16 %v976
    %v2456 = vunpack.c.h.b16 %v976
    %v2457 = vunpack.c.l.b16 %v977
    %v2458 = vunpack.c.h.b16 %v977
    %v2459 = vunpack.c.l.b16 %v978
    %v2460 = vunpack.c.h.b16 %v978
    %v2461 = vunpack.c.l.b16 %v979
    %v2462 = vunpack.c.h.b16 %v979
    %v2463 = vunpack.c.l.b16 %v980
    %v2464 = vunpack.c.h.b16 %v980
    %v2465 = vunpack.c.l.b16 %v981
    %v2466 = vunpack.c.h.b16 %v981
    %v2467 = vunpack.c.l.b16 %v982
    %v2468 = vunpack.c.h.b16 %v982
    %v2469 = vunpack.c.l.b16 %v983
    %v2470 = vunpack.c.h.b16 %v983
    %v2471 = vunpack.c.l.b16 %v984
    %v2472 = vunpack.c.h.b16 %v984
    %v2473 = vunpack.c.l.b16 %v985
    %v2474 = vunpack.c.h.b16 %v985
    %v2475 = vunpack.c.l.b16 %v986
    %v2476 = vunpack.c.h.b16 %v986
    %v2477 = vunpack.c.l.b16 %v987
    %v2478 = vunpack.c.h.b16 %v987
    %v2479 = vunpack.c.l.b16 %v988
    %v2480 = vunpack.c.h.b16 %v988
    %v2481 = vunpack.c.l.b16 %v989
    %v2482 = vunpack.c.h.b16 %v989
    %v2483 = vunpack.c.l.b16 %v990
    %v2484 = vunpack.c.h.b16 %v990
    %v2485 = vunpack.c.l.b16 %v991
    %v2486 = vunpack.c.h.b16 %v991
    %v2487 = vunpack.c.l.b16 %v992
    %v2488 = vunpack.c.h.b16 %v992
    %v2489 = vunpack.c.l.b16 %v993
    %v2490 = vunpack.c.h.b16 %v993
    %v2491 = vunpack.c.l.b16 %v994
    %v2492 = vunpack.c.h.b16 %v994
    %v2493 = vunpack.c.l.b16 %v995
    %v2494 = vunpack.c.h.b16 %v995
    %v2495 = vunpack.c.l.b16 %v996
    %v2496 = vunpack.c.h.b16 %v996
    %v2497 = vunpack.c.l.b16 %v997
    %v2498 = vunpack.c.h.b16 %v997
    %v2499 = vunpack.c.l.b16 %v998
    %v2500 = vunpack.c.h.b16 %v998
    %v2501 = vunpack.c.l.b16 %v999
    %v2502 = vunpack.c.h.b16 %v999
    %v2503 = vunpack.c.l.b16 %v1000
    %v2504 = vunpack.c.h.b16 %v1000
    %v2505 = vunpack.c.l.b16 %v1001
    %v2506 = vunpack.c.h.b16 %v1001
    %v2507 = vunpack.c.l.b16 %v1002
    %v2508 = vunpack.c.h.b16 %v1002
    %v2509 = vunpack.c.l.b16 %v1003
    %v2510 = vunpack.c.h.b16 %v1003
    %v2511 = vunpack.c.l.b16 %v1004
    %v2512 = vunpack.c.h.b16 %v1004
    %v2513 = vunpack.c.l.b16 %v1005
    %v2514 = vunpack.c.h.b16 %v1005
    %v2515 = vunpack.c.l.b16 %v1006
    %v2516 = vunpack.c.h.b16 %v1006
    %v2517 = vunpack.c.l.b16 %v1007
    %v2518 = vunpack.c.h.b16 %v1007
    %v2519 = vunpack.c.l.b16 %v1008
    %v2520 = vunpack.c.h.b16 %v1008
    %v2521 = vunpack.c.l.b16 %v1009
    %v2522 = vunpack.c.h.b16 %v1009
    %v2523 = vunpack.c.l.b16 %v1010
    %v2524 = vunpack.c.h.b16 %v1010
    %v2525 = vunpack.c.l.b16 %v1011
    %v2526 = vunpack.c.h.b16 %v1011
    %v2527 = vunpack.c.l.b16 %v1012
    %v2528 = vunpack.c.h.b16 %v1012
    %v2529 = vunpack.c.l.b16 %v1013
    %v2530 = vunpack.c.h.b16 %v1013
    %v2531 = vunpack.c.l.b16 %v1014
    %v2532 = vunpack.c.h.b16 %v1014
    %v2533 = vunpack.c.l.b16 %v1015
    %v2534 = vunpack.c.h.b16 %v1015
    %v2535 = vunpack.c.l.b16 %v1016
    %v2536 = vunpack.c.h.b16 %v1016
    %v2537 = vunpack.c.l.b16 %v1017
    %v2538 = vunpack.c.h.b16 %v1017
    %v2539 = vunpack.c.l.b16 %v1018
    %v2540 = vunpack.c.h.b16 %v1018
    %v2541 = vunpack.c.l.b16 %v1019
    %v2542 = vunpack.c.h.b16 %v1019
    %v2543 = vunpack.c.l.b16 %v1020
    %v2544 = vunpack.c.h.b16 %v1020
    %v2545 = vunpack.c.l.b16 %v1021
    %v2546 = vunpack.c.h.b16 %v1021
    %v2547 = vunpack.c.l.b16 %v1022
    %v2548 = vunpack.c.h.b16 %v1022
    %v2549 = vunpack.c.l.b16 %v1023
    %v2550 = vunpack.c.h.b16 %v1023
    %v2551 = vunpack.c.l.b16 %v1024
    %v2552 = vunpack.c.h.b16 %v1024
    %v2553 = vunpack.c.l.b16 %v1025
    %v2554 = vunpack.c.h.b16 %v1025
    %v2555 = vunpack.c.l.b16 %v1026
    %v2556 = vunpack.c.h.b16 %v1026
    %v2557 = vunpack.c.l.b16 %v1027
    %v2558 = vunpack.c.h.b16 %v1027
    %v2559 = vunpack.c.l.b16 %v1028
    %v2560 = vunpack.c.h.b16 %v1028
    %v2561 = vunpack.c.l.b16 %v1029
    %v2562 = vunpack.c.h.b16 %v1029
    %v2563 = vunpack.c.l.b16 %v1030
    %v2564 = vunpack.c.h.b16 %v1030
    %v2565 = vunpack.c.l.b16 %v1031
    %v2566 = vunpack.c.h.b16 %v1031
    %v2567 = vunpack.c.l.b16 %v1032
    %v2568 = vunpack.c.h.b16 %v1032
    %v2569 = vunpack.c.l.b16 %v1033
    %v2570 = vunpack.c.h.b16 %v1033
    %v2571 = vunpack.c.l.b16 %v1034
    %v2572 = vunpack.c.h.b16 %v1034
    %v2573 = vunpack.c.l.b16 %v1035
    %v2574 = vunpack.c.h.b16 %v1035
    %v2575 = vunpack.c.l.b16 %v1036
    %v2576 = vunpack.c.h.b16 %v1036
    %v2577 = vunpack.c.l.b16 %v1037
    %v2578 = vunpack.c.h.b16 %v1037
    %v2579 = vunpack.c.l.b16 %v1038
    %v2580 = vunpack.c.h.b16 %v1038
    %v2581 = vunpack.c.l.b16 %v1039
    %v2582 = vunpack.c.h.b16 %v1039
    %v2583 = vunpack.c.l.b16 %v1040
    %v2584 = vunpack.c.h.b16 %v1040
    %v2585 = vunpack.c.l.b16 %v1041
    %v2586 = vunpack.c.h.b16 %v1041
    %v2587 = vunpack.c.l.b16 %v1042
    %v2588 = vunpack.c.h.b16 %v1042
    %v2589 = vunpack.c.l.b16 %v1043
    %v2590 = vunpack.c.h.b16 %v1043
    %v2591 = vunpack.c.l.b16 %v1044
    %v2592 = vunpack.c.h.b16 %v1044
    %v2593 = vunpack.c.l.b16 %v1045
    %v2594 = vunpack.c.h.b16 %v1045
    %v2595 = vunpack.c.l.b16 %v1046
    %v2596 = vunpack.c.h.b16 %v1046
    %v2597 = vunpack.c.l.b16 %v1047
    %v2598 = vunpack.c.h.b16 %v1047
    %v2599 = vunpack.c.l.b16 %v1048
    %v2600 = vunpack.c.h.b16 %v1048
    %v2601 = vunpack.c.l.b16 %v1049
    %v2602 = vunpack.c.h.b16 %v1049
    %v2603 = vunpack.c.l.b16 %v1050
    %v2604 = vunpack.c.h.b16 %v1050
    %v2605 = vunpack.c.l.b16 %v1051
    %v2606 = vunpack.c.h.b16 %v1051
    %v2607 = vunpack.c.l.b16 %v1052
    %v2608 = vunpack.c.h.b16 %v1052
    %v2609 = vunpack.c.l.b16 %v1053
    %v2610 = vunpack.c.h.b16 %v1053
    %v2611 = vunpack.c.l.b16 %v1054
    %v2612 = vunpack.c.h.b16 %v1054
    %v2613 = vunpack.c.l.b16 %v1055
    %v2614 = vunpack.c.h.b16 %v1055
    %v2615 = vunpack.c.l.b16 %v1056
    %v2616 = vunpack.c.h.b16 %v1056
    %v2617 = vunpack.c.l.b16 %v1057
    %v2618 = vunpack.c.h.b16 %v1057
    %v2619 = vunpack.c.l.b16 %v1058
    %v2620 = vunpack.c.h.b16 %v1058
    %v2621 = vunpack.c.l.b16 %v1059
    %v2622 = vunpack.c.h.b16 %v1059
    %v2623 = vunpack.c.l.b16 %v1060
    %v2624 = vunpack.c.h.b16 %v1060
    %v2625 = vunpack.c.l.b16 %v1061
    %v2626 = vunpack.c.h.b16 %v1061
    %v2627 = vunpack.c.l.b16 %v1062
    %v2628 = vunpack.c.h.b16 %v1062
    %v2629 = vunpack.c.l.b16 %v1063
    %v2630 = vunpack.c.h.b16 %v1063
    %v2631 = vunpack.c.l.b16 %v1064
    %v2632 = vunpack.c.h.b16 %v1064
    %v2633 = vunpack.c.l.b16 %v1065
    %v2634 = vunpack.c.h.b16 %v1065
    %v2635 = vunpack.c.l.b16 %v1066
    %v2636 = vunpack.c.h.b16 %v1066
    %v2637 = vunpack.c.l.b16 %v1067
    %v2638 = vunpack.c.h.b16 %v1067
    %v2639 = vunpack.c.l.b16 %v1068
    %v2640 = vunpack.c.h.b16 %v1068
    %v2641 = vunpack.c.l.b16 %v1069
    %v2642 = vunpack.c.h.b16 %v1069
    %v2643 = vunpack.c.l.b16 %v1070
    %v2644 = vunpack.c.h.b16 %v1070
    %v2645 = vunpack.c.l.b16 %v1071
    %v2646 = vunpack.c.h.b16 %v1071
    %v2647 = vunpack.c.l.b16 %v1072
    %v2648 = vunpack.c.h.b16 %v1072
    %v2649 = vunpack.c.l.b16 %v1073
    %v2650 = vunpack.c.h.b16 %v1073
    %v2651 = vunpack.c.l.b16 %v1074
    %v2652 = vunpack.c.h.b16 %v1074
    %v2653 = vunpack.c.l.b16 %v1075
    %v2654 = vunpack.c.h.b16 %v1075
    %v2655 = vunpack.c.l.b16 %v1076
    %v2656 = vunpack.c.h.b16 %v1076
    %v2657 = vunpack.c.l.b16 %v1077
    %v2658 = vunpack.c.h.b16 %v1077
    %v2659 = vunpack.c.l.b16 %v1078
    %v2660 = vunpack.c.h.b16 %v1078
    %v2661 = vunpack.c.l.b16 %v1079
    %v2662 = vunpack.c.h.b16 %v1079
    %v2663 = vunpack.c.l.b16 %v1080
    %v2664 = vunpack.c.h.b16 %v1080
    %v2665 = vunpack.c.l.b16 %v1081
    %v2666 = vunpack.c.h.b16 %v1081
    %v2667 = vunpack.c.l.b16 %v1082
    %v2668 = vunpack.c.h.b16 %v1082
    %v2669 = vunpack.c.l.b16 %v1083
    %v2670 = vunpack.c.h.b16 %v1083
    %v2671 = vunpack.c.l.b16 %v1084
    %v2672 = vunpack.c.h.b16 %v1084
    %v2673 = vunpack.c.l.b16 %v1085
    %v2674 = vunpack.c.h.b16 %v1085
    %v2675 = vunpack.c.l.b16 %v1086
    %v2676 = vunpack.c.h.b16 %v1086
    %v2677 = vunpack.c.l.b16 %v1087
    %v2678 = vunpack.c.h.b16 %v1087
    %v2679 = vunpack.c.l.b16 %v1088
    %v2680 = vunpack.c.h.b16 %v1088
    %v2681 = vunpack.c.l.b16 %v1089
    %v2682 = vunpack.c.h.b16 %v1089
    %v2683 = vunpack.c.l.b16 %v1090
    %v2684 = vunpack.c.h.b16 %v1090
    %v2685 = vunpack.c.l.b16 %v1091
    %v2686 = vunpack.c.h.b16 %v1091
    %v2687 = vunpack.c.l.b16 %v1092
    %v2688 = vunpack.c.h.b16 %v1092
    %v2689 = vunpack.c.l.b16 %v1093
    %v2690 = vunpack.c.h.b16 %v1093
    %v2691 = vunpack.c.l.b16 %v1094
    %v2692 = vunpack.c.h.b16 %v1094
    %v2693 = vunpack.c.l.b16 %v1095
    %v2694 = vunpack.c.h.b16 %v1095
    %v2695 = vunpack.c.l.b16 %v1096
    %v2696 = vunpack.c.h.b16 %v1096
    %v2697 = vunpack.c.l.b16 %v1097
    %v2698 = vunpack.c.h.b16 %v1097
    %v2699 = vunpack.c.l.b16 %v1098
    %v2700 = vunpack.c.h.b16 %v1098
    %v2701 = vunpack.c.l.b16 %v1099
    %v2702 = vunpack.c.h.b16 %v1099
    %v2703 = vunpack.c.l.b16 %v1100
    %v2704 = vunpack.c.h.b16 %v1100
    %v2705 = vunpack.c.l.b16 %v1101
    %v2706 = vunpack.c.h.b16 %v1101
    %v2707 = vunpack.c.l.b16 %v1102
    %v2708 = vunpack.c.h.b16 %v1102
    %v2709 = vunpack.c.l.b16 %v1103
    %v2710 = vunpack.c.h.b16 %v1103
    %v2711 = vunpack.c.l.b16 %v1104
    %v2712 = vunpack.c.h.b16 %v1104
    %v2713 = vunpack.c.l.b16 %v1105
    %v2714 = vunpack.c.h.b16 %v1105
    %v2715 = vunpack.c.l.b16 %v1106
    %v2716 = vunpack.c.h.b16 %v1106
    %v2717 = vunpack.c.l.b16 %v1107
    %v2718 = vunpack.c.h.b16 %v1107
    %v2719 = vunpack.c.l.b16 %v1108
    %v2720 = vunpack.c.h.b16 %v1108
    %v2721 = vunpack.c.l.b16 %v1109
    %v2722 = vunpack.c.h.b16 %v1109
    %v2723 = vunpack.c.l.b16 %v1110
    %v2724 = vunpack.c.h.b16 %v1110
    %v2725 = vunpack.c.l.b16 %v1111
    %v2726 = vunpack.c.h.b16 %v1111
    %v2727 = vunpack.c.l.b16 %v1112
    %v2728 = vunpack.c.h.b16 %v1112
    %v2729 = vunpack.c.l.b16 %v1113
    %v2730 = vunpack.c.h.b16 %v1113
    %v2731 = vunpack.c.l.b16 %v1114
    %v2732 = vunpack.c.h.b16 %v1114
    %v2733 = vunpack.c.l.b16 %v1115
    %v2734 = vunpack.c.h.b16 %v1115
    %v2735 = vunpack.c.l.b16 %v1116
    %v2736 = vunpack.c.h.b16 %v1116
    %v2737 = vunpack.c.l.b16 %v1117
    %v2738 = vunpack.c.h.b16 %v1117
    %v2739 = vunpack.c.l.b16 %v1118
    %v2740 = vunpack.c.h.b16 %v1118
    %v2741 = vunpack.c.l.b16 %v1119
    %v2742 = vunpack.c.h.b16 %v1119
    %v2743 = vunpack.c.l.b16 %v1120
    %v2744 = vunpack.c.h.b16 %v1120
    %v2745 = vunpack.c.l.b16 %v1121
    %v2746 = vunpack.c.h.b16 %v1121
    %v2747 = vunpack.c.l.b16 %v1122
    %v2748 = vunpack.c.h.b16 %v1122
    %v2749 = vunpack.c.l.b16 %v1123
    %v2750 = vunpack.c.h.b16 %v1123
    %v2751 = vunpack.c.l.b16 %v1124
    %v2752 = vunpack.c.h.b16 %v1124
    %v2753 = vunpack.c.l.b16 %v1125
    %v2754 = vunpack.c.h.b16 %v1125
    %v2755 = vunpack.c.l.b16 %v1126
    %v2756 = vunpack.c.h.b16 %v1126
    %v2757 = vunpack.c.l.b16 %v1127
    %v2758 = vunpack.c.h.b16 %v1127
    %v2759 = vunpack.c.l.b16 %v1128
    %v2760 = vunpack.c.h.b16 %v1128
    %v2761 = vunpack.c.l.b16 %v1129
    %v2762 = vunpack.c.h.b16 %v1129
    %v2763 = vunpack.c.l.b16 %v1130
    %v2764 = vunpack.c.h.b16 %v1130
    %v2765 = vunpack.c.l.b16 %v1131
    %v2766 = vunpack.c.h.b16 %v1131
    %v2767 = vunpack.c.l.b16 %v1132
    %v2768 = vunpack.c.h.b16 %v1132
    %v2769 = vunpack.c.l.b16 %v1133
    %v2770 = vunpack.c.h.b16 %v1133
    %v2771 = vunpack.c.l.b16 %v1134
    %v2772 = vunpack.c.h.b16 %v1134
    %v2773 = vunpack.c.l.b16 %v1135
    %v2774 = vunpack.c.h.b16 %v1135
    %v2775 = vunpack.c.l.b16 %v1136
    %v2776 = vunpack.c.h.b16 %v1136
    %v2777 = vunpack.c.l.b16 %v1137
    %v2778 = vunpack.c.h.b16 %v1137
    %v2779 = vunpack.c.l.b16 %v1138
    %v2780 = vunpack.c.h.b16 %v1138
    %v2781 = vunpack.c.l.b16 %v1139
    %v2782 = vunpack.c.h.b16 %v1139
    %v2783 = vunpack.c.l.b16 %v1140
    %v2784 = vunpack.c.h.b16 %v1140
    %v2785 = vunpack.c.l.b16 %v1141
    %v2786 = vunpack.c.h.b16 %v1141
    %v2787 = vunpack.c.l.b16 %v1142
    %v2788 = vunpack.c.h.b16 %v1142
    %v2789 = vunpack.c.l.b16 %v1143
    %v2790 = vunpack.c.h.b16 %v1143
    %v2791 = vunpack.c.l.b16 %v1144
    %v2792 = vunpack.c.h.b16 %v1144
    %v2793 = vunpack.c.l.b16 %v1145
    %v2794 = vunpack.c.h.b16 %v1145
    %v2795 = vunpack.c.l.b16 %v1146
    %v2796 = vunpack.c.h.b16 %v1146
    %v2797 = vunpack.c.l.b16 %v1147
    %v2798 = vunpack.c.h.b16 %v1147
    %v2799 = vunpack.c.l.b16 %v1148
    %v2800 = vunpack.c.h.b16 %v1148
    %v2801 = vunpack.c.l.b16 %v1149
    %v2802 = vunpack.c.h.b16 %v1149
    %v2803 = vunpack.c.l.b16 %v1150
    %v2804 = vunpack.c.h.b16 %v1150
    %v2805 = vunpack.c.l.b16 %v1151
    %v2806 = vunpack.c.h.b16 %v1151
    %v2807 = vunpack.c.l.b16 %v1152
    %v2808 = vunpack.c.h.b16 %v1152
    %v2809 = vunpack.c.l.b16 %v1153
    %v2810 = vunpack.c.h.b16 %v1153
    %v2811 = vunpack.c.l.b16 %v1154
    %v2812 = vunpack.c.h.b16 %v1154
    %v2813 = vunpack.c.l.b16 %v1155
    %v2814 = vunpack.c.h.b16 %v1155
    %v2815 = vunpack.c.l.b16 %v1156
    %v2816 = vunpack.c.h.b16 %v1156
    %v2817 = vunpack.c.l.b16 %v1157
    %v2818 = vunpack.c.h.b16 %v1157
    %v2819 = vunpack.c.l.b16 %v1158
    %v2820 = vunpack.c.h.b16 %v1158
    %v2821 = vunpack.c.l.b16 %v1159
    %v2822 = vunpack.c.h.b16 %v1159
    %v2823 = vunpack.c.l.b16 %v1160
    %v2824 = vunpack.c.h.b16 %v1160
    %v2825 = vunpack.c.l.b16 %v1161
    %v2826 = vunpack.c.h.b16 %v1161
    %v2827 = vunpack.c.l.b16 %v1162
    %v2828 = vunpack.c.h.b16 %v1162
    %v2829 = vunpack.c.l.b16 %v1163
    %v2830 = vunpack.c.h.b16 %v1163
    %v2831 = vunpack.c.l.b16 %v1164
    %v2832 = vunpack.c.h.b16 %v1164
    %v2833 = vunpack.c.l.b16 %v1165
    %v2834 = vunpack.c.h.b16 %v1165
    %v2835 = vunpack.c.l.b16 %v1166
    %v2836 = vunpack.c.h.b16 %v1166
    %v2837 = vunpack.c.l.b16 %v1167
    %v2838 = vunpack.c.h.b16 %v1167
    %v2839 = vunpack.c.l.b16 %v1168
    %v2840 = vunpack.c.h.b16 %v1168
    %v2841 = vunpack.c.l.b16 %v1169
    %v2842 = vunpack.c.h.b16 %v1169
    %v2843 = vunpack.c.l.b16 %v1170
    %v2844 = vunpack.c.h.b16 %v1170
    %v2845 = vunpack.c.l.b16 %v1171
    %v2846 = vunpack.c.h.b16 %v1171
    %v2847 = vunpack.c.l.b16 %v1172
    %v2848 = vunpack.c.h.b16 %v1172
    %v2849 = vunpack.c.l.b16 %v1173
    %v2850 = vunpack.c.h.b16 %v1173
    %v2851 = vunpack.c.l.b16 %v1174
    %v2852 = vunpack.c.h.b16 %v1174
    %v2853 = vunpack.c.l.b16 %v1175
    %v2854 = vunpack.c.h.b16 %v1175
    %v2855 = vunpack.c.l.b16 %v1176
    %v2856 = vunpack.c.h.b16 %v1176
    %v2857 = vunpack.c.l.b16 %v1177
    %v2858 = vunpack.c.h.b16 %v1177
    %v2859 = vunpack.c.l.b16 %v1178
    %v2860 = vunpack.c.h.b16 %v1178
    %v2861 = vunpack.c.l.b16 %v1179
    %v2862 = vunpack.c.h.b16 %v1179
    %v2863 = vunpack.c.l.b16 %v1180
    %v2864 = vunpack.c.h.b16 %v1180
    %v2865 = vunpack.c.l.b16 %v1181
    %v2866 = vunpack.c.h.b16 %v1181
    %v2867 = vunpack.c.l.b16 %v1182
    %v2868 = vunpack.c.h.b16 %v1182
    %v2869 = vunpack.c.l.b16 %v1183
    %v2870 = vunpack.c.h.b16 %v1183
    %v2871 = vunpack.c.l.b16 %v1184
    %v2872 = vunpack.c.h.b16 %v1184
    %v2873 = vunpack.c.l.b16 %v1185
    %v2874 = vunpack.c.h.b16 %v1185
    %v2875 = vunpack.c.l.b16 %v1186
    %v2876 = vunpack.c.h.b16 %v1186
    %v2877 = vunpack.c.l.b16 %v1187
    %v2878 = vunpack.c.h.b16 %v1187
    %v2879 = vunpack.c.l.b16 %v1188
    %v2880 = vunpack.c.h.b16 %v1188
    %v2881 = vunpack.c.l.b16 %v1189
    %v2882 = vunpack.c.h.b16 %v1189
    %v2883 = vunpack.c.l.b16 %v1190
    %v2884 = vunpack.c.h.b16 %v1190
    %v2885 = vunpack.c.l.b16 %v1191
    %v2886 = vunpack.c.h.b16 %v1191
    %v2887 = vunpack.c.l.b16 %v1192
    %v2888 = vunpack.c.h.b16 %v1192
    %v2889 = vunpack.c.l.b16 %v1193
    %v2890 = vunpack.c.h.b16 %v1193
    %v2891 = vunpack.c.l.b16 %v1194
    %v2892 = vunpack.c.h.b16 %v1194
    %v2893 = vunpack.c.l.b16 %v1195
    %v2894 = vunpack.c.h.b16 %v1195
    %v2895 = vunpack.c.l.b16 %v1196
    %v2896 = vunpack.c.h.b16 %v1196
    %v2897 = vunpack.c.l.b16 %v1197
    %v2898 = vunpack.c.h.b16 %v1197
    %v2899 = vunpack.c.l.b16 %v1198
    %v2900 = vunpack.c.h.b16 %v1198
    %v2901 = vunpack.c.l.b16 %v1199
    %v2902 = vunpack.c.h.b16 %v1199
    %v2903 = vunpack.c.l.b16 %v1200
    %v2904 = vunpack.c.h.b16 %v1200
    %v2905 = vunpack.c.l.b16 %v1201
    %v2906 = vunpack.c.h.b16 %v1201
    %v2907 = vunpack.c.l.b16 %v1202
    %v2908 = vunpack.c.h.b16 %v1202
    %v2909 = vunpack.c.l.b16 %v1203
    %v2910 = vunpack.c.h.b16 %v1203
    %v2911 = vunpack.c.l.b16 %v1204
    %v2912 = vunpack.c.h.b16 %v1204
    %v2913 = vunpack.c.l.b16 %v1205
    %v2914 = vunpack.c.h.b16 %v1205
    %v2915 = vunpack.c.l.b16 %v1206
    %v2916 = vunpack.c.h.b16 %v1206
    %v2917 = vunpack.c.l.b16 %v1207
    %v2918 = vunpack.c.h.b16 %v1207
    %v2919 = vunpack.c.l.b16 %v1208
    %v2920 = vunpack.c.h.b16 %v1208
    %v2921 = vunpack.c.l.b16 %v1209
    %v2922 = vunpack.c.h.b16 %v1209
    %v2923 = vunpack.c.l.b16 %v1210
    %v2924 = vunpack.c.h.b16 %v1210
    %v2925 = vunpack.c.l.b16 %v1211
    %v2926 = vunpack.c.h.b16 %v1211
    %v2927 = vunpack.c.l.b16 %v1212
    %v2928 = vunpack.c.h.b16 %v1212
    %v2929 = vunpack.c.l.b16 %v1213
    %v2930 = vunpack.c.h.b16 %v1213
    %v2931 = vunpack.c.l.b16 %v1214
    %v2932 = vunpack.c.h.b16 %v1214
    %v2933 = vunpack.c.l.b16 %v1215
    %v2934 = vunpack.c.h.b16 %v1215
    %v2935 = vunpack.c.l.b16 %v1216
    %v2936 = vunpack.c.h.b16 %v1216
    %v2937 = vunpack.c.l.b16 %v1217
    %v2938 = vunpack.c.h.b16 %v1217
    %v2939 = vunpack.c.l.b16 %v1218
    %v2940 = vunpack.c.h.b16 %v1218
    %v2941 = vunpack.c.l.b16 %v1219
    %v2942 = vunpack.c.h.b16 %v1219
    %v2943 = vunpack.c.l.b16 %v1220
    %v2944 = vunpack.c.h.b16 %v1220
    %v2945 = vunpack.c.l.b16 %v1221
    %v2946 = vunpack.c.h.b16 %v1221
    %v2947 = vunpack.c.l.b16 %v1222
    %v2948 = vunpack.c.h.b16 %v1222
    %v2949 = vunpack.c.l.b16 %v1223
    %v2950 = vunpack.c.h.b16 %v1223
    %v2951 = vunpack.c.l.b16 %v1224
    %v2952 = vunpack.c.h.b16 %v1224
    %v2953 = vunpack.c.l.b16 %v1225
    %v2954 = vunpack.c.h.b16 %v1225
    %v2955 = vunpack.c.l.b16 %v1226
    %v2956 = vunpack.c.h.b16 %v1226
    %v2957 = vunpack.c.l.b16 %v1227
    %v2958 = vunpack.c.h.b16 %v1227
    %v2959 = vunpack.c.l.b16 %v1228
    %v2960 = vunpack.c.h.b16 %v1228
    %v2961 = vunpack.c.l.b16 %v1229
    %v2962 = vunpack.c.h.b16 %v1229
    %v2963 = vunpack.c.l.b16 %v1230
    %v2964 = vunpack.c.h.b16 %v1230
    %v2965 = vunpack.c.l.b16 %v1231
    %v2966 = vunpack.c.h.b16 %v1231
    %v2967 = vunpack.c.l.b16 %v1232
    %v2968 = vunpack.c.h.b16 %v1232
    %v2969 = vunpack.c.l.b16 %v1233
    %v2970 = vunpack.c.h.b16 %v1233
    %v2971 = vunpack.c.l.b16 %v1234
    %v2972 = vunpack.c.h.b16 %v1234
    %v2973 = vunpack.c.l.b16 %v1235
    %v2974 = vunpack.c.h.b16 %v1235
    %v2975 = vunpack.c.l.b16 %v1236
    %v2976 = vunpack.c.h.b16 %v1236
    %v2977 = vunpack.c.l.b16 %v1237
    %v2978 = vunpack.c.h.b16 %v1237
    %v2979 = vunpack.c.l.b16 %v1238
    %v2980 = vunpack.c.h.b16 %v1238
    %v2981 = vunpack.c.l.b16 %v1239
    %v2982 = vunpack.c.h.b16 %v1239
    %v2983 = vunpack.c.l.b16 %v1240
    %v2984 = vunpack.c.h.b16 %v1240
    %v2985 = vunpack.c.l.b16 %v1241
    %v2986 = vunpack.c.h.b16 %v1241
    %v2987 = vunpack.c.l.b16 %v1242
    %v2988 = vunpack.c.h.b16 %v1242
    %v2989 = vunpack.c.l.b16 %v1243
    %v2990 = vunpack.c.h.b16 %v1243
    %v2991 = vunpack.c.l.b16 %v1244
    %v2992 = vunpack.c.h.b16 %v1244
    %v2993 = vunpack.c.l.b16 %v1245
    %v2994 = vunpack.c.h.b16 %v1245
    %v2995 = vunpack.c.l.b16 %v1246
    %v2996 = vunpack.c.h.b16 %v1246
    %v2997 = vunpack.c.l.b16 %v1247
    %v2998 = vunpack.c.h.b16 %v1247
    %v2999 = vunpack.c.l.b16 %v1248
    %v3000 = vunpack.c.h.b16 %v1248
    %v3001 = vunpack.c.l.b16 %v1249
    %v3002 = vunpack.c.h.b16 %v1249
    %v3003 = vunpack.c.l.b16 %v1250
    %v3004 = vunpack.c.h.b16 %v1250
    %v3005 = vunpack.c.l.b16 %v1251
    %v3006 = vunpack.c.h.b16 %v1251
    %v3007 = vunpack.c.l.b16 %v1252
    %v3008 = vunpack.c.h.b16 %v1252
    %v3009 = vunpack.c.l.b16 %v1253
    %v3010 = vunpack.c.h.b16 %v1253
    %v3011 = vunpack.c.l.b16 %v1254
    %v3012 = vunpack.c.h.b16 %v1254
    %v3013 = vunpack.c.l.b16 %v1255
    %v3014 = vunpack.c.h.b16 %v1255
    %v3015 = vunpack.c.l.b16 %v1256
    %v3016 = vunpack.c.h.b16 %v1256
    %v3017 = vunpack.c.l.b16 %v1257
    %v3018 = vunpack.c.h.b16 %v1257
    %v3019 = vunpack.c.l.b16 %v1258
    %v3020 = vunpack.c.h.b16 %v1258
    %v3021 = vunpack.c.l.b16 %v1259
    %v3022 = vunpack.c.h.b16 %v1259
    %v3023 = vunpack.c.l.b16 %v1260
    %v3024 = vunpack.c.h.b16 %v1260
    %v3025 = vunpack.c.l.b16 %v1261
    %v3026 = vunpack.c.h.b16 %v1261
    %v3027 = vunpack.c.l.b16 %v1262
    %v3028 = vunpack.c.h.b16 %v1262
    %v3029 = vunpack.c.l.b16 %v1263
    %v3030 = vunpack.c.h.b16 %v1263
    %v3031 = vunpack.c.l.b16 %v1264
    %v3032 = vunpack.c.h.b16 %v1264
    %v3033 = vunpack.c.l.b16 %v1265
    %v3034 = vunpack.c.h.b16 %v1265
    %v3035 = vunpack.c.l.b16 %v1266
    %v3036 = vunpack.c.h.b16 %v1266
    %v3037 = vunpack.c.l.b16 %v1267
    %v3038 = vunpack.c.h.b16 %v1267
    %v3039 = vunpack.c.l.b16 %v1268
    %v3040 = vunpack.c.h.b16 %v1268
    %v3041 = vunpack.c.l.b16 %v1269
    %v3042 = vunpack.c.h.b16 %v1269
    %v3043 = vunpack.c.l.b16 %v1270
    %v3044 = vunpack.c.h.b16 %v1270
    %v3045 = vunpack.c.l.b16 %v1271
    %v3046 = vunpack.c.h.b16 %v1271
    %v3047 = vunpack.c.l.b16 %v1272
    %v3048 = vunpack.c.h.b16 %v1272
    %v3049 = vunpack.c.l.b16 %v1273
    %v3050 = vunpack.c.h.b16 %v1273
    %v3051 = vunpack.c.l.b16 %v1274
    %v3052 = vunpack.c.h.b16 %v1274
    %v3053 = vunpack.c.l.b16 %v1275
    %v3054 = vunpack.c.h.b16 %v1275
    %v3055 = vunpack.c.l.b16 %v1276
    %v3056 = vunpack.c.h.b16 %v1276
    %v3057 = vunpack.c.l.b16 %v1277
    %v3058 = vunpack.c.h.b16 %v1277
    %v3059 = vunpack.c.l.b16 %v1278
    %v3060 = vunpack.c.h.b16 %v1278
    %v3061 = vunpack.c.l.b16 %v1279
    %v3062 = vunpack.c.h.b16 %v1279
    %v3063 = vunpack.c.l.b16 %v1280
    %v3064 = vunpack.c.h.b16 %v1280
    %v3065 = vunpack.c.l.b16 %v1281
    %v3066 = vunpack.c.h.b16 %v1281
    %v3067 = vunpack.c.l.b16 %v1282
    %v3068 = vunpack.c.h.b16 %v1282
    %v3069 = vunpack.c.l.b16 %v1283
    %v3070 = vunpack.c.h.b16 %v1283
    %v3071 = vunpack.c.l.b16 %v1284
    %v3072 = vunpack.c.h.b16 %v1284
    %v3073 = vunpack.c.l.b16 %v1285
    %v3074 = vunpack.c.h.b16 %v1285
    %v3075 = vunpack.c.l.b16 %v1286
    %v3076 = vunpack.c.h.b16 %v1286
    %v3077 = vunpack.c.l.b16 %v1287
    %v3078 = vunpack.c.h.b16 %v1287
    %v3079 = vunpack.c.l.b16 %v1288
    %v3080 = vunpack.c.h.b16 %v1288
    %v3081 = vunpack.c.l.b16 %v1289
    %v3082 = vunpack.c.h.b16 %v1289
    %v3083 = vunpack.c.l.b16 %v1290
    %v3084 = vunpack.c.h.b16 %v1290
    %v3085 = vunpack.c.l.b16 %v1291
    %v3086 = vunpack.c.h.b16 %v1291
    %v3087 = vunpack.c.l.b16 %v1292
    %v3088 = vunpack.c.h.b16 %v1292
    %v3089 = vunpack.c.l.b16 %v1293
    %v3090 = vunpack.c.h.b16 %v1293
    %v3091 = vunpack.c.l.b16 %v1294
    %v3092 = vunpack.c.h.b16 %v1294
    %v3093 = vunpack.c.l.b16 %v1295
    %v3094 = vunpack.c.h.b16 %v1295
    %v3095 = vunpack.c.l.b16 %v1296
    %v3096 = vunpack.c.h.b16 %v1296
    %v3097 = vunpack.c.l.b16 %v1297
    %v3098 = vunpack.c.h.b16 %v1297
    %v3099 = vunpack.c.l.b16 %v1298
    %v3100 = vunpack.c.h.b16 %v1298
    %v3101 = vunpack.c.l.b16 %v1299
    %v3102 = vunpack.c.h.b16 %v1299
    %v3103 = vunpack.c.l.b16 %v1300
    %v3104 = vunpack.c.h.b16 %v1300
    %v3105 = vunpack.c.l.b16 %v1301
    %v3106 = vunpack.c.h.b16 %v1301
    %v3107 = vunpack.c.l.b16 %v1302
    %v3108 = vunpack.c.h.b16 %v1302
    %v3109 = vunpack.c.l.b16 %v1303
    %v3110 = vunpack.c.h.b16 %v1303
    %v3111 = vunpack.c.l.b16 %v1304
    %v3112 = vunpack.c.h.b16 %v1304
    %v3113 = vunpack.c.l.b16 %v1305
    %v3114 = vunpack.c.h.b16 %v1305
    %v3115 = vunpack.c.l.b16 %v1306
    %v3116 = vunpack.c.h.b16 %v1306
    %v3117 = vunpack.c.l.b16 %v1307
    %v3118 = vunpack.c.h.b16 %v1307
    %v3119 = vunpack.c.l.b16 %v1308
    %v3120 = vunpack.c.h.b16 %v1308
    %v3121 = vunpack.c.l.b16 %v1309
    %v3122 = vunpack.c.h.b16 %v1309
    %v3123 = vunpack.c.l.b16 %v1310
    %v3124 = vunpack.c.h.b16 %v1310
    %v3125 = vunpack.c.l.b16 %v1311
    %v3126 = vunpack.c.h.b16 %v1311
    %v3127 = vunpack.c.l.b16 %v1312
    %v3128 = vunpack.c.h.b16 %v1312
    %v3129 = vunpack.c.l.b16 %v1313
    %v3130 = vunpack.c.h.b16 %v1313
    %v3131 = vunpack.c.l.b16 %v1314
    %v3132 = vunpack.c.h.b16 %v1314
    %v3133 = vunpack.c.l.b16 %v1315
    %v3134 = vunpack.c.h.b16 %v1315
    %v3135 = vunpack.c.l.b16 %v1316
    %v3136 = vunpack.c.h.b16 %v1316
    %v3137 = vunpack.c.l.b16 %v1317
    %v3138 = vunpack.c.h.b16 %v1317
    %v3139 = vunpack.c.l.b16 %v1318
    %v3140 = vunpack.c.h.b16 %v1318
    %v3141 = vunpack.c.l.b16 %v1319
    %v3142 = vunpack.c.h.b16 %v1319
    %v3143 = vunpack.c.l.b16 %v1320
    %v3144 = vunpack.c.h.b16 %v1320
    %v3145 = vunpack.c.l.b16 %v1321
    %v3146 = vunpack.c.h.b16 %v1321
    %v3147 = vunpack.c.l.b16 %v1322
    %v3148 = vunpack.c.h.b16 %v1322
    %v3149 = vunpack.c.l.b16 %v1323
    %v3150 = vunpack.c.h.b16 %v1323
    %v3151 = vunpack.c.l.b16 %v1324
    %v3152 = vunpack.c.h.b16 %v1324
    %v3153 = vunpack.c.l.b16 %v1325
    %v3154 = vunpack.c.h.b16 %v1325
    %v3155 = vunpack.c.l.b16 %v1326
    %v3156 = vunpack.c.h.b16 %v1326
    %v3157 = vunpack.c.l.b16 %v1327
    %v3158 = vunpack.c.h.b16 %v1327
    %v3159 = vunpack.c.l.b16 %v1328
    %v3160 = vunpack.c.h.b16 %v1328
    %v3161 = vunpack.c.l.b16 %v1329
    %v3162 = vunpack.c.h.b16 %v1329
    %v3163 = vunpack.c.l.b16 %v1330
    %v3164 = vunpack.c.h.b16 %v1330
    %v3165 = vunpack.c.l.b16 %v1331
    %v3166 = vunpack.c.h.b16 %v1331
    %v3167 = vunpack.c.l.b16 %v1332
    %v3168 = vunpack.c.h.b16 %v1332
    %v3169 = vunpack.c.l.b16 %v1333
    %v3170 = vunpack.c.h.b16 %v1333
    %v3171 = vunpack.c.l.b16 %v1334
    %v3172 = vunpack.c.h.b16 %v1334
    %v3173 = vunpack.c.l.b16 %v1335
    %v3174 = vunpack.c.h.b16 %v1335
    %v3175 = vunpack.c.l.b16 %v1336
    %v3176 = vunpack.c.h.b16 %v1336
    %v3177 = vunpack.c.l.b16 %v1337
    %v3178 = vunpack.c.h.b16 %v1337
    %v3179 = vunpack.c.l.b16 %v1338
    %v3180 = vunpack.c.h.b16 %v1338
    %v3181 = vunpack.c.l.b16 %v1339
    %v3182 = vunpack.c.h.b16 %v1339
    %v3183 = vunpack.c.l.b16 %v1340
    %v3184 = vunpack.c.h.b16 %v1340
    %v3185 = vunpack.c.l.b16 %v1341
    %v3186 = vunpack.c.h.b16 %v1341
    %v3187 = vunpack.c.l.b16 %v1342
    %v3188 = vunpack.c.h.b16 %v1342
    %v3189 = vunpack.c.l.b16 %v1343
    %v3190 = vunpack.c.h.b16 %v1343
    %v3191 = vunpack.c.l.b16 %v1344
    %v3192 = vunpack.c.h.b16 %v1344
    %v3193 = vunpack.c.l.b16 %v1345
    %v3194 = vunpack.c.h.b16 %v1345
    %v3195 = vunpack.c.l.b16 %v1346
    %v3196 = vunpack.c.h.b16 %v1346
    %v3197 = vunpack.c.l.b16 %v1347
    %v3198 = vunpack.c.h.b16 %v1347
    %v3199 = vunpack.c.l.b16 %v1348
    %v3200 = vunpack.c.h.b16 %v1348
    %v3201 = vunpack.c.l.b16 %v1349
    %v3202 = vunpack.c.h.b16 %v1349
    %v3203 = vunpack.c.l.b16 %v1350
    %v3204 = vunpack.c.h.b16 %v1350
    %v3205 = vunpack.c.l.b16 %v1351
    %v3206 = vunpack.c.h.b16 %v1351
    %v3207 = vunpack.c.l.b16 %v1352
    %v3208 = vunpack.c.h.b16 %v1352
    %v3209 = vunpack.c.l.b16 %v1353
    %v3210 = vunpack.c.h.b16 %v1353
    %v3211 = vunpack.c.l.b16 %v1354
    %v3212 = vunpack.c.h.b16 %v1354
    %v3213 = vunpack.c.l.b16 %v1355
    %v3214 = vunpack.c.h.b16 %v1355
    %v3215 = vunpack.c.l.b16 %v1356
    %v3216 = vunpack.c.h.b16 %v1356
    %v3217 = vunpack.c.l.b16 %v1357
    %v3218 = vunpack.c.h.b16 %v1357
    %v3219 = vunpack.c.l.b16 %v1358
    %v3220 = vunpack.c.h.b16 %v1358
    %v3221 = vunpack.c.l.b16 %v1359
    %v3222 = vunpack.c.h.b16 %v1359
    %v3223 = vunpack.c.l.b16 %v1360
    %v3224 = vunpack.c.h.b16 %v1360
    %v3225 = vunpack.c.l.b16 %v1361
    %v3226 = vunpack.c.h.b16 %v1361
    %v3227 = vunpack.c.l.b16 %v1362
    %v3228 = vunpack.c.h.b16 %v1362
    %v3229 = vunpack.c.l.b16 %v1363
    %v3230 = vunpack.c.h.b16 %v1363
    %v3231 = vunpack.c.l.b16 %v1364
    %v3232 = vunpack.c.h.b16 %v1364
    %v3233 = vunpack.c.l.b16 %v1365
    %v3234 = vunpack.c.h.b16 %v1365
    %v3235 = vunpack.c.l.b16 %v1366
    %v3236 = vunpack.c.h.b16 %v1366
    %v3237 = vunpack.c.l.b16 %v1367
    %v3238 = vunpack.c.h.b16 %v1367
    %v3239 = vunpack.c.l.b16 %v1368
    %v3240 = vunpack.c.h.b16 %v1368
    %v3241 = vunpack.c.l.b16 %v1369
    %v3242 = vunpack.c.h.b16 %v1369
    %v3243 = vunpack.c.l.b16 %v1370
    %v3244 = vunpack.c.h.b16 %v1370
    %v3245 = vunpack.c.l.b16 %v1371
    %v3246 = vunpack.c.h.b16 %v1371
    %v3247 = vunpack.c.l.b16 %v1372
    %v3248 = vunpack.c.h.b16 %v1372
    %v3249 = vunpack.c.l.b16 %v1373
    %v3250 = vunpack.c.h.b16 %v1373
    %v3251 = vunpack.c.l.b16 %v1374
    %v3252 = vunpack.c.h.b16 %v1374
    %v3253 = vunpack.c.l.b16 %v1375
    %v3254 = vunpack.c.h.b16 %v1375
    %v3255 = vunpack.c.l.b16 %v1376
    %v3256 = vunpack.c.h.b16 %v1376
    %v3257 = vunpack.c.l.b16 %v1377
    %v3258 = vunpack.c.h.b16 %v1377
    %v3259 = vunpack.c.l.b16 %v1378
    %v3260 = vunpack.c.h.b16 %v1378
    %v3261 = vunpack.c.l.b16 %v1379
    %v3262 = vunpack.c.h.b16 %v1379
    %v3263 = vunpack.c.l.b16 %v1380
    %v3264 = vunpack.c.h.b16 %v1380
    %v3265 = vunpack.c.l.b16 %v1381
    %v3266 = vunpack.c.h.b16 %v1381
    %v3267 = vunpack.c.l.b16 %v1382
    %v3268 = vunpack.c.h.b16 %v1382
    %v3269 = vunpack.c.l.b16 %v1383
    %v3270 = vunpack.c.h.b16 %v1383
    %v3271 = vunpack.c.l.b16 %v1384
    %v3272 = vunpack.c.h.b16 %v1384
    %v3273 = vunpack.c.l.b16 %v1385
    %v3274 = vunpack.c.h.b16 %v1385
    %v3275 = vunpack.c.l.b16 %v1386
    %v3276 = vunpack.c.h.b16 %v1386
    %v3277 = vunpack.c.l.b16 %v1387
    %v3278 = vunpack.c.h.b16 %v1387
    %v3279 = vunpack.c.l.b16 %v1388
    %v3280 = vunpack.c.h.b16 %v1388
    %v3281 = vunpack.c.l.b16 %v1389
    %v3282 = vunpack.c.h.b16 %v1389
    %v3283 = vunpack.c.l.b16 %v1390
    %v3284 = vunpack.c.h.b16 %v1390
    %v3285 = vunpack.c.l.b16 %v1391
    %v3286 = vunpack.c.h.b16 %v1391
    %v3287 = vunpack.c.l.b16 %v1392
    %v3288 = vunpack.c.h.b16 %v1392
    %v3289 = vunpack.c.l.b16 %v1393
    %v3290 = vunpack.c.h.b16 %v1393
    %v3291 = vunpack.c.l.b16 %v1394
    %v3292 = vunpack.c.h.b16 %v1394
    %v3293 = vunpack.c.l.b16 %v1395
    %v3294 = vunpack.c.h.b16 %v1395
    %v3295 = vunpack.c.l.b16 %v1396
    %v3296 = vunpack.c.h.b16 %v1396
    %v3297 = vunpack.c.l.b16 %v1397
    %v3298 = vunpack.c.h.b16 %v1397
    %v3299 = vunpack.c.l.b16 %v1398
    %v3300 = vunpack.c.h.b16 %v1398
    %v3301 = vunpack.c.l.b16 %v1399
    %v3302 = vunpack.c.h.b16 %v1399
    %v3303 = vunpack.c.l.b16 %v1400
    %v3304 = vunpack.c.h.b16 %v1400
    %v3305 = vunpack.c.l.b16 %v1401
    %v3306 = vunpack.c.h.b16 %v1401
    %v3307 = vunpack.c.l.b16 %v1402
    %v3308 = vunpack.c.h.b16 %v1402
    %v3309 = vunpack.c.l.b16 %v1403
    %v3310 = vunpack.c.h.b16 %v1403
    %v3311 = vunpack.c.l.b16 %v1404
    %v3312 = vunpack.c.h.b16 %v1404
    %v3313 = vunpack.c.l.b16 %v1405
    %v3314 = vunpack.c.h.b16 %v1405
    %v3315 = vunpack.c.l.b16 %v1406
    %v3316 = vunpack.c.h.b16 %v1406
    %v3317 = vunpack.c.l.b16 %v1407
    %v3318 = vunpack.c.h.b16 %v1407
    %v3319 = vunpack.c.l.b16 %v1408
    %v3320 = vunpack.c.h.b16 %v1408
    %v3321 = vunpack.c.l.b16 %v1409
    %v3322 = vunpack.c.h.b16 %v1409
    %v3323 = vunpack.c.l.b16 %v1410
    %v3324 = vunpack.c.h.b16 %v1410
    %v3325 = vunpack.c.l.b16 %v1411
    %v3326 = vunpack.c.h.b16 %v1411
    %v3327 = vunpack.c.l.b16 %v1412
    %v3328 = vunpack.c.h.b16 %v1412
    %v3329 = vunpack.c.l.b16 %v1413
    %v3330 = vunpack.c.h.b16 %v1413
    %v3331 = vunpack.c.l.b16 %v1414
    %v3332 = vunpack.c.h.b16 %v1414
    %v3333 = vunpack.c.l.b16 %v1415
    %v3334 = vunpack.c.h.b16 %v1415
    %v3335 = vunpack.c.l.b16 %v1416
    %v3336 = vunpack.c.h.b16 %v1416
    %v3337 = vunpack.c.l.b16 %v1417
    %v3338 = vunpack.c.h.b16 %v1417
    %v3339 = vunpack.c.l.b16 %v1418
    %v3340 = vunpack.c.h.b16 %v1418
    %v3341 = vunpack.c.l.b16 %v1419
    %v3342 = vunpack.c.h.b16 %v1419
    %v3343 = vunpack.c.l.b16 %v1420
    %v3344 = vunpack.c.h.b16 %v1420
    %v3345 = vunpack.c.l.b16 %v1421
    %v3346 = vunpack.c.h.b16 %v1421
    %v3347 = vunpack.c.l.b16 %v1422
    %v3348 = vunpack.c.h.b16 %v1422
    %v3349 = vunpack.c.l.b16 %v1423
    %v3350 = vunpack.c.h.b16 %v1423
    %v3351 = vunpack.c.l.b16 %v1424
    %v3352 = vunpack.c.h.b16 %v1424
    %v3353 = vunpack.c.l.b16 %v1425
    %v3354 = vunpack.c.h.b16 %v1425
    %v3355 = vunpack.c.l.b16 %v1426
    %v3356 = vunpack.c.h.b16 %v1426
    %v3357 = vunpack.c.l.b16 %v1427
    %v3358 = vunpack.c.h.b16 %v1427
    %v3359 = vunpack.c.l.b16 %v1428
    %v3360 = vunpack.c.h.b16 %v1428
    %v3361 = vunpack.c.l.b16 %v1429
    %v3362 = vunpack.c.h.b16 %v1429
    %v3363 = vunpack.c.l.b16 %v1430
    %v3364 = vunpack.c.h.b16 %v1430
    %v3365 = vunpack.c.l.b16 %v1431
    %v3366 = vunpack.c.h.b16 %v1431
    %v3367 = vunpack.c.l.b16 %v1432
    %v3368 = vunpack.c.h.b16 %v1432
    %v3369 = vunpack.c.l.b16 %v1433
    %v3370 = vunpack.c.h.b16 %v1433
    %v3371 = vunpack.c.l.b16 %v1434
    %v3372 = vunpack.c.h.b16 %v1434
    %v3373 = vunpack.c.l.b16 %v1435
    %v3374 = vunpack.c.h.b16 %v1435
    %v3375 = vunpack.c.l.b16 %v1436
    %v3376 = vunpack.c.h.b16 %v1436
    %v3377 = vunpack.c.l.b16 %v1437
    %v3378 = vunpack.c.h.b16 %v1437
    %v3379 = vunpack.c.l.b16 %v1438
    %v3380 = vunpack.c.h.b16 %v1438
    %v3381 = vunpack.c.l.b16 %v1439
    %v3382 = vunpack.c.h.b16 %v1439
    %v3383 = vunpack.c.l.b16 %v1440
    %v3384 = vunpack.c.h.b16 %v1440
    %v3385 = vunpack.c.l.b16 %v1441
    %v3386 = vunpack.c.h.b16 %v1441
    %v3387 = vunpack.c.l.b16 %v1442
    %v3388 = vunpack.c.h.b16 %v1442
    %v3389 = vunpack.c.l.b16 %v1443
    %v3390 = vunpack.c.h.b16 %v1443
    %v3391 = vunpack.c.l.b16 %v1444
    %v3392 = vunpack.c.h.b16 %v1444
    %v3393 = vunpack.c.l.b16 %v1445
    %v3394 = vunpack.c.h.b16 %v1445
    %v3395 = vunpack.c.l.b16 %v1446
    %v3396 = vunpack.c.h.b16 %v1446
    %v3397 = vunpack.c.l.b16 %v1447
    %v3398 = vunpack.c.h.b16 %v1447
    %v3399 = vunpack.c.l.b16 %v1448
    %v3400 = vunpack.c.h.b16 %v1448
    %v3401 = vunpack.c.l.b16 %v1449
    %v3402 = vunpack.c.h.b16 %v1449
    %v3403 = vunpack.c.l.b16 %v1450
    %v3404 = vunpack.c.h.b16 %v1450
    %v3405 = vunpack.c.l.b16 %v1451
    %v3406 = vunpack.c.h.b16 %v1451
    %v3407 = vunpack.c.l.b16 %v1452
    %v3408 = vunpack.c.h.b16 %v1452
    %v3409 = vunpack.c.l.b16 %v1453
    %v3410 = vunpack.c.h.b16 %v1453
    %v3411 = vunpack.c.l.b16 %v1454
    %v3412 = vunpack.c.h.b16 %v1454
    %v3413 = vunpack.c.l.b16 %v1455
    %v3414 = vunpack.c.h.b16 %v1455
    %v3415 = vunpack.c.l.b16 %v1456
    %v3416 = vunpack.c.h.b16 %v1456
    %v3417 = vunpack.c.l.b16 %v1457
    %v3418 = vunpack.c.h.b16 %v1457
    %v3419 = vunpack.c.l.b16 %v1458
    %v3420 = vunpack.c.h.b16 %v1458
    %v3421 = vunpack.c.l.b16 %v1459
    %v3422 = vunpack.c.h.b16 %v1459
    %v3423 = vunpack.c.l.b16 %v1460
    %v3424 = vunpack.c.h.b16 %v1460
    %v3425 = vunpack.c.l.b16 %v1461
    %v3426 = vunpack.c.h.b16 %v1461
    %v3427 = vunpack.c.l.b16 %v1462
    %v3428 = vunpack.c.h.b16 %v1462
    %v3429 = vunpack.c.l.b16 %v1463
    %v3430 = vunpack.c.h.b16 %v1463
    %v3431 = vunpack.c.l.b16 %v1464
    %v3432 = vunpack.c.h.b16 %v1464
    %v3433 = vunpack.c.l.b16 %v1465
    %v3434 = vunpack.c.h.b16 %v1465
    %v3435 = vunpack.c.l.b16 %v1466
    %v3436 = vunpack.c.h.b16 %v1466
    %v3437 = vpack.c.b16 %v2165, %v2157
    %v3438 = vpack.c.b16 %v2166, %v2158
    %v3439 = vpack.c.b16 %v2167, %v2159
    %v3440 = vpack.c.b16 %v2168, %v2160
    %v3441 = vpack.c.b16 %v2169, %v2161
    %v3442 = vpack.c.b16 %v2170, %v2162
    %v3443 = vpack.c.b16 %v2171, %v2163
    %v3444 = vpack.c.b16 %v2172, %v2164
    %v3445 = vpack.c.b16 %v2181, %v2173
    %v3446 = vpack.c.b16 %v2182, %v2174
    %v3447 = vpack.c.b16 %v2183, %v2175
    %v3448 = vpack.c.b16 %v2184, %v2176
    %v3449 = vpack.c.b16 %v2185, %v2177
    %v3450 = vpack.c.b16 %v2186, %v2178
    %v3451 = vpack.c.b16 %v2187, %v2179
    %v3452 = vpack.c.b16 %v2188, %v2180
    %v3453 = vpack.c.b16 %v2197, %v2189
    %v3454 = vpack.c.b16 %v2198, %v2190
    %v3455 = vpack.c.b16 %v2199, %v2191
    %v3456 = vpack.c.b16 %v2200, %v2192
    %v3457 = vpack.c.b16 %v2201, %v2193
    %v3458 = vpack.c.b16 %v2202, %v2194
    %v3459 = vpack.c.b16 %v2203, %v2195
    %v3460 = vpack.c.b16 %v2204, %v2196
    %v3461 = vpack.c.b16 %v2213, %v2205
    %v3462 = vpack.c.b16 %v2214, %v2206
    %v3463 = vpack.c.b16 %v2215, %v2207
    %v3464 = vpack.c.b16 %v2216, %v2208
    %v3465 = vpack.c.b16 %v2217, %v2209
    %v3466 = vpack.c.b16 %v2218, %v2210
    %v3467 = vpack.c.b16 %v2219, %v2211
    %v3468 = vpack.c.b16 %v2220, %v2212
    %v3469 = vpack.c.b16 %v2229, %v2221
    %v3470 = vpack.c.b16 %v2230, %v2222
    %v3471 = vpack.c.b16 %v2231, %v2223
    %v3472 = vpack.c.b16 %v2232, %v2224
    %v3473 = vpack.c.b16 %v2233, %v2225
    %v3474 = vpack.c.b16 %v2234, %v2226
    %v3475 = vpack.c.b16 %v2235, %v2227
    %v3476 = vpack.c.b16 %v2236, %v2228
    %v3477 = vpack.c.b16 %v2245, %v2237
    %v3478 = vpack.c.b16 %v2246, %v2238
    %v3479 = vpack.c.b16 %v2247, %v2239
    %v3480 = vpack.c.b16 %v2248, %v2240
    %v3481 = vpack.c.b16 %v2249, %v2241
    %v3482 = vpack.c.b16 %v2250, %v2242
    %v3483 = vpack.c.b16 %v2251, %v2243
    %v3484 = vpack.c.b16 %v2252, %v2244
    %v3485 = vpack.c.b16 %v2261, %v2253
    %v3486 = vpack.c.b16 %v2262, %v2254
    %v3487 = vpack.c.b16 %v2263, %v2255
    %v3488 = vpack.c.b16 %v2264, %v2256
    %v3489 = vpack.c.b16 %v2265, %v2257
    %v3490 = vpack.c.b16 %v2266, %v2258
    %v3491 = vpack.c.b16 %v2267, %v2259
    %v3492 = vpack.c.b16 %v2268, %v2260
    %v3493 = vpack.c.b16 %v2277, %v2269
    %v3494 = vpack.c.b16 %v2278, %v2270
    %v3495 = vpack.c.b16 %v2279, %v2271
    %v3496 = vpack.c.b16 %v2280, %v2272
    %v3497 = vpack.c.b16 %v2281, %v2273
    %v3498 = vpack.c.b16 %v2282, %v2274
    %v3499 = vpack.c.b16 %v2283, %v2275
    %v3500 = vpack.c.b16 %v2284, %v2276
    %v3501 = vpack.c.b16 %v2293, %v2285
    %v3502 = vpack.c.b16 %v2294, %v2286
    %v3503 = vpack.c.b16 %v2295, %v2287
    %v3504 = vpack.c.b16 %v2296, %v2288
    %v3505 = vpack.c.b16 %v2297, %v2289
    %v3506 = vpack.c.b16 %v2298, %v2290
    %v3507 = vpack.c.b16 %v2299, %v2291
    %v3508 = vpack.c.b16 %v2300, %v2292
    %v3509 = vpack.c.b16 %v2309, %v2301
    %v3510 = vpack.c.b16 %v2310, %v2302
    %v3511 = vpack.c.b16 %v2311, %v2303
    %v3512 = vpack.c.b16 %v2312, %v2304
    %v3513 = vpack.c.b16 %v2313, %v2305
    %v3514 = vpack.c.b16 %v2314, %v2306
    %v3515 = vpack.c.b16 %v2315, %v2307
    %v3516 = vpack.c.b16 %v2316, %v2308
    %v3517 = vpack.c.b16 %v2325, %v2317
    %v3518 = vpack.c.b16 %v2326, %v2318
    %v3519 = vpack.c.b16 %v2327, %v2319
    %v3520 = vpack.c.b16 %v2328, %v2320
    %v3521 = vpack.c.b16 %v2329, %v2321
    %v3522 = vpack.c.b16 %v2330, %v2322
    %v3523 = vpack.c.b16 %v2331, %v2323
    %v3524 = vpack.c.b16 %v2332, %v2324
    %v3525 = vpack.c.b16 %v2341, %v2333
    %v3526 = vpack.c.b16 %v2342, %v2334
    %v3527 = vpack.c.b16 %v2343, %v2335
    %v3528 = vpack.c.b16 %v2344, %v2336
    %v3529 = vpack.c.b16 %v2345, %v2337
    %v3530 = vpack.c.b16 %v2346, %v2338
    %v3531 = vpack.c.b16 %v2347, %v2339
    %v3532 = vpack.c.b16 %v2348, %v2340
    %v3533 = vpack.c.b16 %v2357, %v2349
    %v3534 = vpack.c.b16 %v2358, %v2350
    %v3535 = vpack.c.b16 %v2359, %v2351
    %v3536 = vpack.c.b16 %v2360, %v2352
    %v3537 = vpack.c.b16 %v2361, %v2353
    %v3538 = vpack.c.b16 %v2362, %v2354
    %v3539 = vpack.c.b16 %v2363, %v2355
    %v3540 = vpack.c.b16 %v2364, %v2356
    %v3541 = vpack.c.b16 %v2373, %v2365
    %v3542 = vpack.c.b16 %v2374, %v2366
    %v3543 = vpack.c.b16 %v2375, %v2367
    %v3544 = vpack.c.b16 %v2376, %v2368
    %v3545 = vpack.c.b16 %v2377, %v2369
    %v3546 = vpack.c.b16 %v2378, %v2370
    %v3547 = vpack.c.b16 %v2379, %v2371
    %v3548 = vpack.c.b16 %v2380, %v2372
    %v3549 = vpack.c.b16 %v2389, %v2381
    %v3550 = vpack.c.b16 %v2390, %v2382
    %v3551 = vpack.c.b16 %v2391, %v2383
    %v3552 = vpack.c.b16 %v2392, %v2384
    %v3553 = vpack.c.b16 %v2393, %v2385
    %v3554 = vpack.c.b16 %v2394, %v2386
    %v3555 = vpack.c.b16 %v2395, %v2387
    %v3556 = vpack.c.b16 %v2396, %v2388
    %v3557 = vpack.c.b16 %v2405, %v2397
    %v3558 = vpack.c.b16 %v2406, %v2398
    %v3559 = vpack.c.b16 %v2407, %v2399
    %v3560 = vpack.c.b16 %v2408, %v2400
    %v3561 = vpack.c.b16 %v2409, %v2401
    %v3562 = vpack.c.b16 %v2410, %v2402
    %v3563 = vpack.c.b16 %v2411, %v2403
    %v3564 = vpack.c.b16 %v2412, %v2404
    %v3565 = vpack.c.b16 %v2421, %v2413
    %v3566 = vpack.c.b16 %v2422, %v2414
    %v3567 = vpack.c.b16 %v2423, %v2415
    %v3568 = vpack.c.b16 %v2424, %v2416
    %v3569 = vpack.c.b16 %v2425, %v2417
    %v3570 = vpack.c.b16 %v2426, %v2418
    %v3571 = vpack.c.b16 %v2427, %v2419
    %v3572 = vpack.c.b16 %v2428, %v2420
    %v3573 = vpack.c.b16 %v2437, %v2429
    %v3574 = vpack.c.b16 %v2438, %v2430
    %v3575 = vpack.c.b16 %v2439, %v2431
    %v3576 = vpack.c.b16 %v2440, %v2432
    %v3577 = vpack.c.b16 %v2441, %v2433
    %v3578 = vpack.c.b16 %v2442, %v2434
    %v3579 = vpack.c.b16 %v2443, %v2435
    %v3580 = vpack.c.b16 %v2444, %v2436
    %v3581 = vpack.c.b16 %v2453, %v2445
    %v3582 = vpack.c.b16 %v2454, %v2446
    %v3583 = vpack.c.b16 %v2455, %v2447
    %v3584 = vpack.c.b16 %v2456, %v2448
    %v3585 = vpack.c.b16 %v2457, %v2449
    %v3586 = vpack.c.b16 %v2458, %v2450
    %v3587 = vpack.c.b16 %v2459, %v2451
    %v3588 = vpack.c.b16 %v2460, %v2452
    %v3589 = vpack.c.b16 %v2469, %v2461
    %v3590 = vpack.c.b16 %v2470, %v2462
    %v3591 = vpack.c.b16 %v2471, %v2463
    %v3592 = vpack.c.b16 %v2472, %v2464
    %v3593 = vpack.c.b16 %v2473, %v2465
    %v3594 = vpack.c.b16 %v2474, %v2466
    %v3595 = vpack.c.b16 %v2475, %v2467
    %v3596 = vpack.c.b16 %v2476, %v2468
    %v3597 = vpack.c.b16 %v2485, %v2477
    %v3598 = vpack.c.b16 %v2486, %v2478
    %v3599 = vpack.c.b16 %v2487, %v2479
    %v3600 = vpack.c.b16 %v2488, %v2480
    %v3601 = vpack.c.b16 %v2489, %v2481
    %v3602 = vpack.c.b16 %v2490, %v2482
    %v3603 = vpack.c.b16 %v2491, %v2483
    %v3604 = vpack.c.b16 %v2492, %v2484
    %v3605 = vpack.c.b16 %v2501, %v2493
    %v3606 = vpack.c.b16 %v2502, %v2494
    %v3607 = vpack.c.b16 %v2503, %v2495
    %v3608 = vpack.c.b16 %v2504, %v2496
    %v3609 = vpack.c.b16 %v2505, %v2497
    %v3610 = vpack.c.b16 %v2506, %v2498
    %v3611 = vpack.c.b16 %v2507, %v2499
    %v3612 = vpack.c.b16 %v2508, %v2500
    %v3613 = vpack.c.b16 %v2517, %v2509
    %v3614 = vpack.c.b16 %v2518, %v2510
    %v3615 = vpack.c.b16 %v2519, %v2511
    %v3616 = vpack.c.b16 %v2520, %v2512
    %v3617 = vpack.c.b16 %v2521, %v2513
    %v3618 = vpack.c.b16 %v2522, %v2514
    %v3619 = vpack.c.b16 %v2523, %v2515
    %v3620 = vpack.c.b16 %v2524, %v2516
    %v3621 = vpack.c.b16 %v2533, %v2525
    %v3622 = vpack.c.b16 %v2534, %v2526
    %v3623 = vpack.c.b16 %v2535, %v2527
    %v3624 = vpack.c.b16 %v2536, %v2528
    %v3625 = vpack.c.b16 %v2537, %v2529
    %v3626 = vpack.c.b16 %v2538, %v2530
    %v3627 = vpack.c.b16 %v2539, %v2531
    %v3628 = vpack.c.b16 %v2540, %v2532
    %v3629 = vpack.c.b16 %v2549, %v2541
    %v3630 = vpack.c.b16 %v2550, %v2542
    %v3631 = vpack.c.b16 %v2551, %v2543
    %v3632 = vpack.c.b16 %v2552, %v2544
    %v3633 = vpack.c.b16 %v2553, %v2545
    %v3634 = vpack.c.b16 %v2554, %v2546
    %v3635 = vpack.c.b16 %v2555, %v2547
    %v3636 = vpack.c.b16 %v2556, %v2548
    %v3637 = vpack.c.b16 %v2565, %v2557
    %v3638 = vpack.c.b16 %v2566, %v2558
    %v3639 = vpack.c.b16 %v2567, %v2559
    %v3640 = vpack.c.b16 %v2568, %v2560
    %v3641 = vpack.c.b16 %v2569, %v2561
    %v3642 = vpack.c.b16 %v2570, %v2562
    %v3643 = vpack.c.b16 %v2571, %v2563
    %v3644 = vpack.c.b16 %v2572, %v2564
    %v3645 = vpack.c.b16 %v2581, %v2573
    %v3646 = vpack.c.b16 %v2582, %v2574
    %v3647 = vpack.c.b16 %v2583, %v2575
    %v3648 = vpack.c.b16 %v2584, %v2576
    %v3649 = vpack.c.b16 %v2585, %v2577
    %v3650 = vpack.c.b16 %v2586, %v2578
    %v3651 = vpack.c.b16 %v2587, %v2579
    %v3652 = vpack.c.b16 %v2588, %v2580
    %v3653 = vpack.c.b16 %v2597, %v2589
    %v3654 = vpack.c.b16 %v2598, %v2590
    %v3655 = vpack.c.b16 %v2599, %v2591
    %v3656 = vpack.c.b16 %v2600, %v2592
    %v3657 = vpack.c.b16 %v2601, %v2593
    %v3658 = vpack.c.b16 %v2602, %v2594
    %v3659 = vpack.c.b16 %v2603, %v2595
    %v3660 = vpack.c.b16 %v2604, %v2596
    %v3661 = vpack.c.b16 %v2613, %v2605
    %v3662 = vpack.c.b16 %v2614, %v2606
    %v3663 = vpack.c.b16 %v2615, %v2607
    %v3664 = vpack.c.b16 %v2616, %v2608
    %v3665 = vpack.c.b16 %v2617, %v2609
    %v3666 = vpack.c.b16 %v2618, %v2610
    %v3667 = vpack.c.b16 %v2619, %v2611
    %v3668 = vpack.c.b16 %v2620, %v2612
    %v3669 = vpack.c.b16 %v2629, %v2621
    %v3670 = vpack.c.b16 %v2630, %v2622
    %v3671 = vpack.c.b16 %v2631, %v2623
    %v3672 = vpack.c.b16 %v2632, %v2624
    %v3673 = vpack.c.b16 %v2633, %v2625
    %v3674 = vpack.c.b16 %v2634, %v2626
    %v3675 = vpack.c.b16 %v2635, %v2627
    %v3676 = vpack.c.b16 %v2636, %v2628
    %v3677 = vpack.c.b16 %v2645, %v2637
    %v3678 = vpack.c.b16 %v2646, %v2638
    %v3679 = vpack.c.b16 %v2647, %v2639
    %v3680 = vpack.c.b16 %v2648, %v2640
    %v3681 = vpack.c.b16 %v2649, %v2641
    %v3682 = vpack.c.b16 %v2650, %v2642
    %v3683 = vpack.c.b16 %v2651, %v2643
    %v3684 = vpack.c.b16 %v2652, %v2644
    %v3685 = vpack.c.b16 %v2661, %v2653
    %v3686 = vpack.c.b16 %v2662, %v2654
    %v3687 = vpack.c.b16 %v2663, %v2655
    %v3688 = vpack.c.b16 %v2664, %v2656
    %v3689 = vpack.c.b16 %v2665, %v2657
    %v3690 = vpack.c.b16 %v2666, %v2658
    %v3691 = vpack.c.b16 %v2667, %v2659
    %v3692 = vpack.c.b16 %v2668, %v2660
    %v3693 = vpack.c.b16 %v2677, %v2669
    %v3694 = vpack.c.b16 %v2678, %v2670
    %v3695 = vpack.c.b16 %v2679, %v2671
    %v3696 = vpack.c.b16 %v2680, %v2672
    %v3697 = vpack.c.b16 %v2681, %v2673
    %v3698 = vpack.c.b16 %v2682, %v2674
    %v3699 = vpack.c.b16 %v2683, %v2675
    %v3700 = vpack.c.b16 %v2684, %v2676
    %v3701 = vpack.c.b16 %v2693, %v2685
    %v3702 = vpack.c.b16 %v2694, %v2686
    %v3703 = vpack.c.b16 %v2695, %v2687
    %v3704 = vpack.c.b16 %v2696, %v2688
    %v3705 = vpack.c.b16 %v2697, %v2689
    %v3706 = vpack.c.b16 %v2698, %v2690
    %v3707 = vpack.c.b16 %v2699, %v2691
    %v3708 = vpack.c.b16 %v2700, %v2692
    %v3709 = vpack.c.b16 %v2709, %v2701
    %v3710 = vpack.c.b16 %v2710, %v2702
    %v3711 = vpack.c.b16 %v2711, %v2703
    %v3712 = vpack.c.b16 %v2712, %v2704
    %v3713 = vpack.c.b16 %v2713, %v2705
    %v3714 = vpack.c.b16 %v2714, %v2706
    %v3715 = vpack.c.b16 %v2715, %v2707
    %v3716 = vpack.c.b16 %v2716, %v2708
    %v3717 = vpack.c.b16 %v2725, %v2717
    %v3718 = vpack.c.b16 %v2726, %v2718
    %v3719 = vpack.c.b16 %v2727, %v2719
    %v3720 = vpack.c.b16 %v2728, %v2720
    %v3721 = vpack.c.b16 %v2729, %v2721
    %v3722 = vpack.c.b16 %v2730, %v2722
    %v3723 = vpack.c.b16 %v2731, %v2723
    %v3724 = vpack.c.b16 %v2732, %v2724
    %v3725 = vpack.c.b16 %v2741, %v2733
    %v3726 = vpack.c.b16 %v2742, %v2734
    %v3727 = vpack.c.b16 %v2743, %v2735
    %v3728 = vpack.c.b16 %v2744, %v2736
    %v3729 = vpack.c.b16 %v2745, %v2737
    %v3730 = vpack.c.b16 %v2746, %v2738
    %v3731 = vpack.c.b16 %v2747, %v2739
    %v3732 = vpack.c.b16 %v2748, %v2740
    %v3733 = vpack.c.b16 %v2757, %v2749
    %v3734 = vpack.c.b16 %v2758, %v2750
    %v3735 = vpack.c.b16 %v2759, %v2751
    %v3736 = vpack.c.b16 %v2760, %v2752
    %v3737 = vpack.c.b16 %v2761, %v2753
    %v3738 = vpack.c.b16 %v2762, %v2754
    %v3739 = vpack.c.b16 %v2763, %v2755
    %v3740 = vpack.c.b16 %v2764, %v2756
    %v3741 = vpack.c.b16 %v2773, %v2765
    %v3742 = vpack.c.b16 %v2774, %v2766
    %v3743 = vpack.c.b16 %v2775, %v2767
    %v3744 = vpack.c.b16 %v2776, %v2768
    %v3745 = vpack.c.b16 %v2777, %v2769
    %v3746 = vpack.c.b16 %v2778, %v2770
    %v3747 = vpack.c.b16 %v2779, %v2771
    %v3748 = vpack.c.b16 %v2780, %v2772
    %v3749 = vpack.c.b16 %v2789, %v2781
    %v3750 = vpack.c.b16 %v2790, %v2782
    %v3751 = vpack.c.b16 %v2791, %v2783
    %v3752 = vpack.c.b16 %v2792, %v2784
    %v3753 = vpack.c.b16 %v2793, %v2785
    %v3754 = vpack.c.b16 %v2794, %v2786
    %v3755 = vpack.c.b16 %v2795, %v2787
    %v3756 = vpack.c.b16 %v2796, %v2788
    %v3757 = vpack.c.b16 %v2805, %v2797
    %v3758 = vpack.c.b16 %v2806, %v2798
    %v3759 = vpack.c.b16 %v2807, %v2799
    %v3760 = vpack.c.b16 %v2808, %v2800
    %v3761 = vpack.c.b16 %v2809, %v2801
    %v3762 = vpack.c.b16 %v2810, %v2802
    %v3763 = vpack.c.b16 %v2811, %v2803
    %v3764 = vpack.c.b16 %v2812, %v2804
    %v3765 = vpack.c.b16 %v2821, %v2813
    %v3766 = vpack.c.b16 %v2822, %v2814
    %v3767 = vpack.c.b16 %v2823, %v2815
    %v3768 = vpack.c.b16 %v2824, %v2816
    %v3769 = vpack.c.b16 %v2825, %v2817
    %v3770 = vpack.c.b16 %v2826, %v2818
    %v3771 = vpack.c.b16 %v2827, %v2819
    %v3772 = vpack.c.b16 %v2828, %v2820
    %v3773 = vpack.c.b16 %v2837, %v2829
    %v3774 = vpack.c.b16 %v2838, %v2830
    %v3775 = vpack.c.b16 %v2839, %v2831
    %v3776 = vpack.c.b16 %v2840, %v2832
    %v3777 = vpack.c.b16 %v2841, %v2833
    %v3778 = vpack.c.b16 %v2842, %v2834
    %v3779 = vpack.c.b16 %v2843, %v2835
    %v3780 = vpack.c.b16 %v2844, %v2836
    %v3781 = vpack.c.b16 %v2853, %v2845
    %v3782 = vpack.c.b16 %v2854, %v2846
    %v3783 = vpack.c.b16 %v2855, %v2847
    %v3784 = vpack.c.b16 %v2856, %v2848
    %v3785 = vpack.c.b16 %v2857, %v2849
    %v3786 = vpack.c.b16 %v2858, %v2850
    %v3787 = vpack.c.b16 %v2859, %v2851
    %v3788 = vpack.c.b16 %v2860, %v2852
    %v3789 = vpack.c.b16 %v2869, %v2861
    %v3790 = vpack.c.b16 %v2870, %v2862
    %v3791 = vpack.c.b16 %v2871, %v2863
    %v3792 = vpack.c.b16 %v2872, %v2864
    %v3793 = vpack.c.b16 %v2873, %v2865
    %v3794 = vpack.c.b16 %v2874, %v2866
    %v3795 = vpack.c.b16 %v2875, %v2867
    %v3796 = vpack.c.b16 %v2876, %v2868
    %v3797 = vpack.c.b16 %v2885, %v2877
    %v3798 = vpack.c.b16 %v2886, %v2878
    %v3799 = vpack.c.b16 %v2887, %v2879
    %v3800 = vpack.c.b16 %v2888, %v2880
    %v3801 = vpack.c.b16 %v2889, %v2881
    %v3802 = vpack.c.b16 %v2890, %v2882
    %v3803 = vpack.c.b16 %v2891, %v2883
    %v3804 = vpack.c.b16 %v2892, %v2884
    %v3805 = vpack.c.b16 %v2901, %v2893
    %v3806 = vpack.c.b16 %v2902, %v2894
    %v3807 = vpack.c.b16 %v2903, %v2895
    %v3808 = vpack.c.b16 %v2904, %v2896
    %v3809 = vpack.c.b16 %v2905, %v2897
    %v3810 = vpack.c.b16 %v2906, %v2898
    %v3811 = vpack.c.b16 %v2907, %v2899
    %v3812 = vpack.c.b16 %v2908, %v2900
    %v3813 = vpack.c.b16 %v2917, %v2909
    %v3814 = vpack.c.b16 %v2918, %v2910
    %v3815 = vpack.c.b16 %v2919, %v2911
    %v3816 = vpack.c.b16 %v2920, %v2912
    %v3817 = vpack.c.b16 %v2921, %v2913
    %v3818 = vpack.c.b16 %v2922, %v2914
    %v3819 = vpack.c.b16 %v2923, %v2915
    %v3820 = vpack.c.b16 %v2924, %v2916
    %v3821 = vpack.c.b16 %v2933, %v2925
    %v3822 = vpack.c.b16 %v2934, %v2926
    %v3823 = vpack.c.b16 %v2935, %v2927
    %v3824 = vpack.c.b16 %v2936, %v2928
    %v3825 = vpack.c.b16 %v2937, %v2929
    %v3826 = vpack.c.b16 %v2938, %v2930
    %v3827 = vpack.c.b16 %v2939, %v2931
    %v3828 = vpack.c.b16 %v2940, %v2932
    %v3829 = vpack.c.b16 %v2949, %v2941
    %v3830 = vpack.c.b16 %v2950, %v2942
    %v3831 = vpack.c.b16 %v2951, %v2943
    %v3832 = vpack.c.b16 %v2952, %v2944
    %v3833 = vpack.c.b16 %v2953, %v2945
    %v3834 = vpack.c.b16 %v2954, %v2946
    %v3835 = vpack.c.b16 %v2955, %v2947
    %v3836 = vpack.c.b16 %v2956, %v2948
    %v3837 = vpack.c.b16 %v2965, %v2957
    %v3838 = vpack.c.b16 %v2966, %v2958
    %v3839 = vpack.c.b16 %v2967, %v2959
    %v3840 = vpack.c.b16 %v2968, %v2960
    %v3841 = vpack.c.b16 %v2969, %v2961
    %v3842 = vpack.c.b16 %v2970, %v2962
    %v3843 = vpack.c.b16 %v2971, %v2963
    %v3844 = vpack.c.b16 %v2972, %v2964
    %v3845 = vpack.c.b16 %v2981, %v2973
    %v3846 = vpack.c.b16 %v2982, %v2974
    %v3847 = vpack.c.b16 %v2983, %v2975
    %v3848 = vpack.c.b16 %v2984, %v2976
    %v3849 = vpack.c.b16 %v2985, %v2977
    %v3850 = vpack.c.b16 %v2986, %v2978
    %v3851 = vpack.c.b16 %v2987, %v2979
    %v3852 = vpack.c.b16 %v2988, %v2980
    %v3853 = vpack.c.b16 %v2997, %v2989
    %v3854 = vpack.c.b16 %v2998, %v2990
    %v3855 = vpack.c.b16 %v2999, %v2991
    %v3856 = vpack.c.b16 %v3000, %v2992
    %v3857 = vpack.c.b16 %v3001, %v2993
    %v3858 = vpack.c.b16 %v3002, %v2994
    %v3859 = vpack.c.b16 %v3003, %v2995
    %v3860 = vpack.c.b16 %v3004, %v2996
    %v3861 = vpack.c.b16 %v3013, %v3005
    %v3862 = vpack.c.b16 %v3014, %v3006
    %v3863 = vpack.c.b16 %v3015, %v3007
    %v3864 = vpack.c.b16 %v3016, %v3008
    %v3865 = vpack.c.b16 %v3017, %v3009
    %v3866 = vpack.c.b16 %v3018, %v3010
    %v3867 = vpack.c.b16 %v3019, %v3011
    %v3868 = vpack.c.b16 %v3020, %v3012
    %v3869 = vpack.c.b16 %v3029, %v3021
    %v3870 = vpack.c.b16 %v3030, %v3022
    %v3871 = vpack.c.b16 %v3031, %v3023
    %v3872 = vpack.c.b16 %v3032, %v3024
    %v3873 = vpack.c.b16 %v3033, %v3025
    %v3874 = vpack.c.b16 %v3034, %v3026
    %v3875 = vpack.c.b16 %v3035, %v3027
    %v3876 = vpack.c.b16 %v3036, %v3028
    %v3877 = vpack.c.b16 %v3045, %v3037
    %v3878 = vpack.c.b16 %v3046, %v3038
    %v3879 = vpack.c.b16 %v3047, %v3039
    %v3880 = vpack.c.b16 %v3048, %v3040
    %v3881 = vpack.c.b16 %v3049, %v3041
    %v3882 = vpack.c.b16 %v3050, %v3042
    %v3883 = vpack.c.b16 %v3051, %v3043
    %v3884 = vpack.c.b16 %v3052, %v3044
    %v3885 = vpack.c.b16 %v3061, %v3053
    %v3886 = vpack.c.b16 %v3062, %v3054
    %v3887 = vpack.c.b16 %v3063, %v3055
    %v3888 = vpack.c.b16 %v3064, %v3056
    %v3889 = vpack.c.b16 %v3065, %v3057
    %v3890 = vpack.c.b16 %v3066, %v3058
    %v3891 = vpack.c.b16 %v3067, %v3059
    %v3892 = vpack.c.b16 %v3068, %v3060
    %v3893 = vpack.c.b16 %v3077, %v3069
    %v3894 = vpack.c.b16 %v3078, %v3070
    %v3895 = vpack.c.b16 %v3079, %v3071
    %v3896 = vpack.c.b16 %v3080, %v3072
    %v3897 = vpack.c.b16 %v3081, %v3073
    %v3898 = vpack.c.b16 %v3082, %v3074
    %v3899 = vpack.c.b16 %v3083, %v3075
    %v3900 = vpack.c.b16 %v3084, %v3076
    %v3901 = vpack.c.b16 %v3093, %v3085
    %v3902 = vpack.c.b16 %v3094, %v3086
    %v3903 = vpack.c.b16 %v3095, %v3087
    %v3904 = vpack.c.b16 %v3096, %v3088
    %v3905 = vpack.c.b16 %v3097, %v3089
    %v3906 = vpack.c.b16 %v3098, %v3090
    %v3907 = vpack.c.b16 %v3099, %v3091
    %v3908 = vpack.c.b16 %v3100, %v3092
    %v3909 = vpack.c.b16 %v3109, %v3101
    %v3910 = vpack.c.b16 %v3110, %v3102
    %v3911 = vpack.c.b16 %v3111, %v3103
    %v3912 = vpack.c.b16 %v3112, %v3104
    %v3913 = vpack.c.b16 %v3113, %v3105
    %v3914 = vpack.c.b16 %v3114, %v3106
    %v3915 = vpack.c.b16 %v3115, %v3107
    %v3916 = vpack.c.b16 %v3116, %v3108
    %v3917 = vpack.c.b16 %v3125, %v3117
    %v3918 = vpack.c.b16 %v3126, %v3118
    %v3919 = vpack.c.b16 %v3127, %v3119
    %v3920 = vpack.c.b16 %v3128, %v3120
    %v3921 = vpack.c.b16 %v3129, %v3121
    %v3922 = vpack.c.b16 %v3130, %v3122
    %v3923 = vpack.c.b16 %v3131, %v3123
    %v3924 = vpack.c.b16 %v3132, %v3124
    %v3925 = vpack.c.b16 %v3141, %v3133
    %v3926 = vpack.c.b16 %v3142, %v3134
    %v3927 = vpack.c.b16 %v3143, %v3135
    %v3928 = vpack.c.b16 %v3144, %v3136
    %v3929 = vpack.c.b16 %v3145, %v3137
    %v3930 = vpack.c.b16 %v3146, %v3138
    %v3931 = vpack.c.b16 %v3147, %v3139
    %v3932 = vpack.c.b16 %v3148, %v3140
    %v3933 = vpack.c.b16 %v3157, %v3149
    %v3934 = vpack.c.b16 %v3158, %v3150
    %v3935 = vpack.c.b16 %v3159, %v3151
    %v3936 = vpack.c.b16 %v3160, %v3152
    %v3937 = vpack.c.b16 %v3161, %v3153
    %v3938 = vpack.c.b16 %v3162, %v3154
    %v3939 = vpack.c.b16 %v3163, %v3155
    %v3940 = vpack.c.b16 %v3164, %v3156
    %v3941 = vpack.c.b16 %v3173, %v3165
    %v3942 = vpack.c.b16 %v3174, %v3166
    %v3943 = vpack.c.b16 %v3175, %v3167
    %v3944 = vpack.c.b16 %v3176, %v3168
    %v3945 = vpack.c.b16 %v3177, %v3169
    %v3946 = vpack.c.b16 %v3178, %v3170
    %v3947 = vpack.c.b16 %v3179, %v3171
    %v3948 = vpack.c.b16 %v3180, %v3172
    %v3949 = vpack.c.b16 %v3189, %v3181
    %v3950 = vpack.c.b16 %v3190, %v3182
    %v3951 = vpack.c.b16 %v3191, %v3183
    %v3952 = vpack.c.b16 %v3192, %v3184
    %v3953 = vpack.c.b16 %v3193, %v3185
    %v3954 = vpack.c.b16 %v3194, %v3186
    %v3955 = vpack.c.b16 %v3195, %v3187
    %v3956 = vpack.c.b16 %v3196, %v3188
    %v3957 = vpack.c.b16 %v3205, %v3197
    %v3958 = vpack.c.b16 %v3206, %v3198
    %v3959 = vpack.c.b16 %v3207, %v3199
    %v3960 = vpack.c.b16 %v3208, %v3200
    %v3961 = vpack.c.b16 %v3209, %v3201
    %v3962 = vpack.c.b16 %v3210, %v3202
    %v3963 = vpack.c.b16 %v3211, %v3203
    %v3964 = vpack.c.b16 %v3212, %v3204
    %v3965 = vpack.c.b16 %v3221, %v3213
    %v3966 = vpack.c.b16 %v3222, %v3214
    %v3967 = vpack.c.b16 %v3223, %v3215
    %v3968 = vpack.c.b16 %v3224, %v3216
    %v3969 = vpack.c.b16 %v3225, %v3217
    %v3970 = vpack.c.b16 %v3226, %v3218
    %v3971 = vpack.c.b16 %v3227, %v3219
    %v3972 = vpack.c.b16 %v3228, %v3220
    %v3973 = vpack.c.b16 %v3237, %v3229
    %v3974 = vpack.c.b16 %v3238, %v3230
    %v3975 = vpack.c.b16 %v3239, %v3231
    %v3976 = vpack.c.b16 %v3240, %v3232
    %v3977 = vpack.c.b16 %v3241, %v3233
    %v3978 = vpack.c.b16 %v3242, %v3234
    %v3979 = vpack.c.b16 %v3243, %v3235
    %v3980 = vpack.c.b16 %v3244, %v3236
    %v3981 = vpack.c.b16 %v3253, %v3245
    %v3982 = vpack.c.b16 %v3254, %v3246
    %v3983 = vpack.c.b16 %v3255, %v3247
    %v3984 = vpack.c.b16 %v3256, %v3248
    %v3985 = vpack.c.b16 %v3257, %v3249
    %v3986 = vpack.c.b16 %v3258, %v3250
    %v3987 = vpack.c.b16 %v3259, %v3251
    %v3988 = vpack.c.b16 %v3260, %v3252
    %v3989 = vpack.c.b16 %v3269, %v3261
    %v3990 = vpack.c.b16 %v3270, %v3262
    %v3991 = vpack.c.b16 %v3271, %v3263
    %v3992 = vpack.c.b16 %v3272, %v3264
    %v3993 = vpack.c.b16 %v3273, %v3265
    %v3994 = vpack.c.b16 %v3274, %v3266
    %v3995 = vpack.c.b16 %v3275, %v3267
    %v3996 = vpack.c.b16 %v3276, %v3268
    %v3997 = vpack.c.b16 %v3285, %v3277
    %v3998 = vpack.c.b16 %v3286, %v3278
    %v3999 = vpack.c.b16 %v3287, %v3279
    %v4000 = vpack.c.b16 %v3288, %v3280
    %v4001 = vpack.c.b16 %v3289, %v3281
    %v4002 = vpack.c.b16 %v3290, %v3282
    %v4003 = vpack.c.b16 %v3291, %v3283
    %v4004 = vpack.c.b16 %v3292, %v3284
    %v4005 = vpack.c.b16 %v3301, %v3293
    %v4006 = vpack.c.b16 %v3302, %v3294
    %v4007 = vpack.c.b16 %v3303, %v3295
    %v4008 = vpack.c.b16 %v3304, %v3296
    %v4009 = vpack.c.b16 %v3305, %v3297
    %v4010 = vpack.c.b16 %v3306, %v3298
    %v4011 = vpack.c.b16 %v3307, %v3299
    %v4012 = vpack.c.b16 %v3308, %v3300
    %v4013 = vpack.c.b16 %v3317, %v3309
    %v4014 = vpack.c.b16 %v3318, %v3310
    %v4015 = vpack.c.b16 %v3319, %v3311
    %v4016 = vpack.c.b16 %v3320, %v3312
    %v4017 = vpack.c.b16 %v3321, %v3313
    %v4018 = vpack.c.b16 %v3322, %v3314
    %v4019 = vpack.c.b16 %v3323, %v3315
    %v4020 = vpack.c.b16 %v3324, %v3316
    %v4021 = vpack.c.b16 %v3333, %v3325
    %v4022 = vpack.c.b16 %v3334, %v3326
    %v4023 = vpack.c.b16 %v3335, %v3327
    %v4024 = vpack.c.b16 %v3336, %v3328
    %v4025 = vpack.c.b16 %v3337, %v3329
    %v4026 = vpack.c.b16 %v3338, %v3330
    %v4027 = vpack.c.b16 %v3339, %v3331
    %v4028 = vpack.c.b16 %v3340, %v3332
    %v4029 = vpack.c.b16 %v3349, %v3341
    %v4030 = vpack.c.b16 %v3350, %v3342
    %v4031 = vpack.c.b16 %v3351, %v3343
    %v4032 = vpack.c.b16 %v3352, %v3344
    %v4033 = vpack.c.b16 %v3353, %v3345
    %v4034 = vpack.c.b16 %v3354, %v3346
    %v4035 = vpack.c.b16 %v3355, %v3347
    %v4036 = vpack.c.b16 %v3356, %v3348
    %v4037 = vpack.c.b16 %v3365, %v3357
    %v4038 = vpack.c.b16 %v3366, %v3358
    %v4039 = vpack.c.b16 %v3367, %v3359
    %v4040 = vpack.c.b16 %v3368, %v3360
    %v4041 = vpack.c.b16 %v3369, %v3361
    %v4042 = vpack.c.b16 %v3370, %v3362
    %v4043 = vpack.c.b16 %v3371, %v3363
    %v4044 = vpack.c.b16 %v3372, %v3364
    %v4045 = vpack.c.b16 %v3381, %v3373
    %v4046 = vpack.c.b16 %v3382, %v3374
    %v4047 = vpack.c.b16 %v3383, %v3375
    %v4048 = vpack.c.b16 %v3384, %v3376
    %v4049 = vpack.c.b16 %v3385, %v3377
    %v4050 = vpack.c.b16 %v3386, %v3378
    %v4051 = vpack.c.b16 %v3387, %v3379
    %v4052 = vpack.c.b16 %v3388, %v3380
    %v4053 = vpack.c.b16 %v3397, %v3389
    %v4054 = vpack.c.b16 %v3398, %v3390
    %v4055 = vpack.c.b16 %v3399, %v3391
    %v4056 = vpack.c.b16 %v3400, %v3392
    %v4057 = vpack.c.b16 %v3401, %v3393
    %v4058 = vpack.c.b16 %v3402, %v3394
    %v4059 = vpack.c.b16 %v3403, %v3395
    %v4060 = vpack.c.b16 %v3404, %v3396
    %v4061 = vpack.c.b16 %v3413, %v3405
    %v4062 = vpack.c.b16 %v3414, %v3406
    %v4063 = vpack.c.b16 %v3415, %v3407
    %v4064 = vpack.c.b16 %v3416, %v3408
    %v4065 = vpack.c.b16 %v3417, %v3409
    %v4066 = vpack.c.b16 %v3418, %v3410
    %v4067 = vpack.c.b16 %v3419, %v3411
    %v4068 = vpack.c.b16 %v3420, %v3412
    %v4069 = vpack.c.b16 %v3429, %v3421
    %v4070 = vpack.c.b16 %v3430, %v3422
    %v4071 = vpack.c.b16 %v3431, %v3423
    %v4072 = vpack.c.b16 %v3432, %v3424
    %v4073 = vpack.c.b16 %v3433, %v3425
    %v4074 = vpack.c.b16 %v3434, %v3426
    %v4075 = vpack.c.b16 %v3435, %v3427
    %v4076 = vpack.c.b16 %v3436, %v3428
    %4717 = vmatprep.subr.bf16.mxu0 %v3494
    %4718 = vmatpush1.bf16.msra.mxu0 %v3493
    %4719 = vmatprep.subr.bf16.mxu0 %v3486
    %4720 = vmatpush1.bf16.msra.mxu0 %v3485
    %4721 = vmatprep.subr.bf16.mxu0 %v3478
    %4722 = vmatpush1.bf16.msra.mxu0 %v3477
    %4723 = vmatprep.subr.bf16.mxu0 %v3470
    %4724 = vmatpush1.bf16.msra.mxu0 %v3469
    %4725 = vmatprep.subr.bf16.mxu0 %v3462
    %4726 = vmatpush1.bf16.msra.mxu0 %v3461
    %4727 = vmatprep.subr.bf16.mxu0 %v3454
    %4728 = vmatpush1.bf16.msra.mxu0 %v3453
    %4729 = vmatprep.subr.bf16.mxu0 %v3446
    %4730 = vmatpush1.bf16.msra.mxu0 %v3445
    %4731 = vmatprep.subr.bf16.mxu0 %v3438
    %4732 = vmatpush1.bf16.msra.mxu0 %v3437
    %4733 = vmatprep.subr.bf16.mxu0 %v3558
    %4734 = vmatpush2.bf16.msra.mxu0 %v3557
    %4735 = vmatprep.subr.bf16.mxu0 %v3550
    %4736 = vmatpush2.bf16.msra.mxu0 %v3549
    %4737 = vmatprep.subr.bf16.mxu0 %v3542
    %4738 = vmatpush2.bf16.msra.mxu0 %v3541
    %4739 = vmatprep.subr.bf16.mxu0 %v3534
    %4740 = vmatpush2.bf16.msra.mxu0 %v3533
    %4741 = vmatprep.subr.bf16.mxu0 %v3526
    %4742 = vmatpush2.bf16.msra.mxu0 %v3525
    %4743 = vmatprep.subr.bf16.mxu0 %v3518
    %4744 = vmatpush2.bf16.msra.mxu0 %v3517
    %4745 = vmatprep.subr.bf16.mxu0 %v3510
    %4746 = vmatpush2.bf16.msra.mxu0 %v3509
    %4747 = vmatprep.subr.bf16.mxu0 %v3502
    %4748 = vmatpush2.bf16.msra.mxu0 %v3501
    %4749 = vmatprep.mubr.bf16.mxu0 %v1498
    %4750 = vmatmul.mubr.bf16.gmra.mxu0 %v1497
    %v4751 = vpop.f32.mrf.mxu0
    %v4752 = vadd.f32 0.0, %v4751
    %v4753 = vpop.f32.mrf.mxu0
    %v4754 = vadd.f32 0.0, %v4753
    %v4755 = vpop.f32.mrf.mxu0
    %v4756 = vadd.f32 0.0, %v4755
    %v4757 = vpop.f32.mrf.mxu0
    %v4758 = vadd.f32 0.0, %v4757
    %4759 = vdwg.mxu0
    %4760 = vmatprep.subr.bf16.mxu0 %v3622
    %4761 = vmatpush1.bf16.msra.mxu0 %v3621
    %4762 = vmatprep.subr.bf16.mxu0 %v3614
    %4763 = vmatpush1.bf16.msra.mxu0 %v3613
    %4764 = vmatprep.subr.bf16.mxu0 %v3606
    %4765 = vmatpush1.bf16.msra.mxu0 %v3605
    %4766 = vmatprep.subr.bf16.mxu0 %v3598
    %4767 = vmatpush1.bf16.msra.mxu0 %v3597
    %4768 = vmatprep.subr.bf16.mxu0 %v3590
    %4769 = vmatpush1.bf16.msra.mxu0 %v3589
    %4770 = vmatprep.subr.bf16.mxu0 %v3582
    %4771 = vmatpush1.bf16.msra.mxu0 %v3581
    %4772 = vmatprep.subr.bf16.mxu0 %v3574
    %4773 = vmatpush1.bf16.msra.mxu0 %v3573
    %4774 = vmatprep.subr.bf16.mxu0 %v3566
    %4775 = vmatpush1.bf16.msra.mxu0 %v3565
    %4776 = vmatprep.subr.bf16.mxu0 %v3686
    %4777 = vmatpush2.bf16.msra.mxu0 %v3685
    %4778 = vmatprep.subr.bf16.mxu0 %v3678
    %4779 = vmatpush2.bf16.msra.mxu0 %v3677
    %4780 = vmatprep.subr.bf16.mxu0 %v3670
    %4781 = vmatpush2.bf16.msra.mxu0 %v3669
    %4782 = vmatprep.subr.bf16.mxu0 %v3662
    %4783 = vmatpush2.bf16.msra.mxu0 %v3661
    %4784 = vmatprep.subr.bf16.mxu0 %v3654
    %4785 = vmatpush2.bf16.msra.mxu0 %v3653
    %4786 = vmatprep.subr.bf16.mxu0 %v3646
    %4787 = vmatpush2.bf16.msra.mxu0 %v3645
    %4788 = vmatprep.subr.bf16.mxu0 %v3638
    %4789 = vmatpush2.bf16.msra.mxu0 %v3637
    %4790 = vmatprep.subr.bf16.mxu0 %v3630
    %4791 = vmatpush2.bf16.msra.mxu0 %v3629
    %4792 = vmatprep.mubr.bf16.mxu0 %v1500
    %4793 = vmatmul.mubr.bf16.gmra.mxu0 %v1499
    %v4794 = vpop.f32.mrf.mxu0
    %v4795 = vadd.f32 %v4752, %v4794
    %v4796 = vpop.f32.mrf.mxu0
    %v4797 = vadd.f32 %v4754, %v4796
    %v4798 = vpop.f32.mrf.mxu0
    %v4799 = vadd.f32 %v4756, %v4798
    %v4800 = vpop.f32.mrf.mxu0
    %v4801 = vadd.f32 %v4758, %v4800
    %4802 = vdwg.mxu0
    %4803 = vmatprep.subr.bf16.mxu0 %v3750
    %4804 = vmatpush1.bf16.msra.mxu0 %v3749
    %4805 = vmatprep.subr.bf16.mxu0 %v3742
    %4806 = vmatpush1.bf16.msra.mxu0 %v3741
    %4807 = vmatprep.subr.bf16.mxu0 %v3734
    %4808 = vmatpush1.bf16.msra.mxu0 %v3733
    %4809 = vmatprep.subr.bf16.mxu0 %v3726
    %4810 = vmatpush1.bf16.msra.mxu0 %v3725
    %4811 = vmatprep.subr.bf16.mxu0 %v3718
    %4812 = vmatpush1.bf16.msra.mxu0 %v3717
    %4813 = vmatprep.subr.bf16.mxu0 %v3710
    %4814 = vmatpush1.bf16.msra.mxu0 %v3709
    %4815 = vmatprep.subr.bf16.mxu0 %v3702
    %4816 = vmatpush1.bf16.msra.mxu0 %v3701
    %4817 = vmatprep.subr.bf16.mxu0 %v3694
    %4818 = vmatpush1.bf16.msra.mxu0 %v3693
    %4819 = vmatprep.subr.bf16.mxu0 %v3814
    %4820 = vmatpush2.bf16.msra.mxu0 %v3813
    %4821 = vmatprep.subr.bf16.mxu0 %v3806
    %4822 = vmatpush2.bf16.msra.mxu0 %v3805
    %4823 = vmatprep.subr.bf16.mxu0 %v3798
    %4824 = vmatpush2.bf16.msra.mxu0 %v3797
    %4825 = vmatprep.subr.bf16.mxu0 %v3790
    %4826 = vmatpush2.bf16.msra.mxu0 %v3789
    %4827 = vmatprep.subr.bf16.mxu0 %v3782
    %4828 = vmatpush2.bf16.msra.mxu0 %v3781
    %4829 = vmatprep.subr.bf16.mxu0 %v3774
    %4830 = vmatpush2.bf16.msra.mxu0 %v3773
    %4831 = vmatprep.subr.bf16.mxu0 %v3766
    %4832 = vmatpush2.bf16.msra.mxu0 %v3765
    %4833 = vmatprep.subr.bf16.mxu0 %v3758
    %4834 = vmatpush2.bf16.msra.mxu0 %v3757
    %4835 = vmatprep.mubr.bf16.mxu0 %v1502
    %4836 = vmatmul.mubr.bf16.gmra.mxu0 %v1501
    %v4837 = vpop.f32.mrf.mxu0
    %v4838 = vadd.f32 %v4795, %v4837
    %v4839 = vpop.f32.mrf.mxu0
    %v4840 = vadd.f32 %v4797, %v4839
    %v4841 = vpop.f32.mrf.mxu0
    %v4842 = vadd.f32 %v4799, %v4841
    %v4843 = vpop.f32.mrf.mxu0
    %v4844 = vadd.f32 %v4801, %v4843
    %4845 = vdwg.mxu0
    %4846 = vmatprep.subr.bf16.mxu0 %v3878
    %4847 = vmatpush1.bf16.msra.mxu0 %v3877
    %4848 = vmatprep.subr.bf16.mxu0 %v3870
    %4849 = vmatpush1.bf16.msra.mxu0 %v3869
    %4850 = vmatprep.subr.bf16.mxu0 %v3862
    %4851 = vmatpush1.bf16.msra.mxu0 %v3861
    %4852 = vmatprep.subr.bf16.mxu0 %v3854
    %4853 = vmatpush1.bf16.msra.mxu0 %v3853
    %4854 = vmatprep.subr.bf16.mxu0 %v3846
    %4855 = vmatpush1.bf16.msra.mxu0 %v3845
    %4856 = vmatprep.subr.bf16.mxu0 %v3838
    %4857 = vmatpush1.bf16.msra.mxu0 %v3837
    %4858 = vmatprep.subr.bf16.mxu0 %v3830
    %4859 = vmatpush1.bf16.msra.mxu0 %v3829
    %4860 = vmatprep.subr.bf16.mxu0 %v3822
    %4861 = vmatpush1.bf16.msra.mxu0 %v3821
    %4862 = vmatprep.subr.bf16.mxu0 %v3942
    %4863 = vmatpush2.bf16.msra.mxu0 %v3941
    %4864 = vmatprep.subr.bf16.mxu0 %v3934
    %4865 = vmatpush2.bf16.msra.mxu0 %v3933
    %4866 = vmatprep.subr.bf16.mxu0 %v3926
    %4867 = vmatpush2.bf16.msra.mxu0 %v3925
    %4868 = vmatprep.subr.bf16.mxu0 %v3918
    %4869 = vmatpush2.bf16.msra.mxu0 %v3917
    %4870 = vmatprep.subr.bf16.mxu0 %v3910
    %4871 = vmatpush2.bf16.msra.mxu0 %v3909
    %4872 = vmatprep.subr.bf16.mxu0 %v3902
    %4873 = vmatpush2.bf16.msra.mxu0 %v3901
    %4874 = vmatprep.subr.bf16.mxu0 %v3894
    %4875 = vmatpush2.bf16.msra.mxu0 %v3893
    %4876 = vmatprep.subr.bf16.mxu0 %v3886
    %4877 = vmatpush2.bf16.msra.mxu0 %v3885
    %4878 = vmatprep.mubr.bf16.mxu0 %v1504
    %4879 = vmatmul.mubr.bf16.gmra.mxu0 %v1503
    %v4880 = vpop.f32.mrf.mxu0
    %v4881 = vadd.f32 %v4838, %v4880
    %v4882 = vpop.f32.mrf.mxu0
    %v4883 = vadd.f32 %v4840, %v4882
    %v4884 = vpop.f32.mrf.mxu0
    %v4885 = vadd.f32 %v4842, %v4884
    %v4886 = vpop.f32.mrf.mxu0
    %v4887 = vadd.f32 %v4844, %v4886
    %4888 = vdwg.mxu0
    %4889 = vmatprep.subr.bf16.mxu0 %v4006
    %4890 = vmatpush1.bf16.msra.mxu0 %v4005
    %4891 = vmatprep.subr.bf16.mxu0 %v3998
    %4892 = vmatpush1.bf16.msra.mxu0 %v3997
    %4893 = vmatprep.subr.bf16.mxu0 %v3990
    %4894 = vmatpush1.bf16.msra.mxu0 %v3989
    %4895 = vmatprep.subr.bf16.mxu0 %v3982
    %4896 = vmatpush1.bf16.msra.mxu0 %v3981
    %4897 = vmatprep.subr.bf16.mxu0 %v3974
    %4898 = vmatpush1.bf16.msra.mxu0 %v3973
    %4899 = vmatprep.subr.bf16.mxu0 %v3966
    %4900 = vmatpush1.bf16.msra.mxu0 %v3965
    %4901 = vmatprep.subr.bf16.mxu0 %v3958
    %4902 = vmatpush1.bf16.msra.mxu0 %v3957
    %4903 = vmatprep.subr.bf16.mxu0 %v3950
    %4904 = vmatpush1.bf16.msra.mxu0 %v3949
    %4905 = vmatprep.subr.bf16.mxu0 %v4070
    %4906 = vmatpush2.bf16.msra.mxu0 %v4069
    %4907 = vmatprep.subr.bf16.mxu0 %v4062
    %4908 = vmatpush2.bf16.msra.mxu0 %v4061
    %4909 = vmatprep.subr.bf16.mxu0 %v4054
    %4910 = vmatpush2.bf16.msra.mxu0 %v4053
    %4911 = vmatprep.subr.bf16.mxu0 %v4046
    %4912 = vmatpush2.bf16.msra.mxu0 %v4045
    %4913 = vmatprep.subr.bf16.mxu0 %v4038
    %4914 = vmatpush2.bf16.msra.mxu0 %v4037
    %4915 = vmatprep.subr.bf16.mxu0 %v4030
    %4916 = vmatpush2.bf16.msra.mxu0 %v4029
    %4917 = vmatprep.subr.bf16.mxu0 %v4022
    %4918 = vmatpush2.bf16.msra.mxu0 %v4021
    %4919 = vmatprep.subr.bf16.mxu0 %v4014
    %4920 = vmatpush2.bf16.msra.mxu0 %v4013
    %4921 = vmatprep.mubr.bf16.mxu0 %v1506
    %4922 = vmatmul.mubr.bf16.gmra.mxu0 %v1505
    %v4923 = vpop.f32.mrf.mxu0
    %v4924 = vadd.f32 %v4881, %v4923
    %v4925 = vpop.f32.mrf.mxu0
    %v4926 = vadd.f32 %v4883, %v4925
    %v4927 = vpop.f32.mrf.mxu0
    %v4928 = vadd.f32 %v4885, %v4927
    %v4929 = vpop.f32.mrf.mxu0
    %v4930 = vadd.f32 %v4887, %v4929
    %4931 = vdwg.mxu0
    %4932 = vmatprep.subr.bf16.mxu0 %v3496
    %4933 = vmatpush1.bf16.msra.mxu0 %v3495
    %4934 = vmatprep.subr.bf16.mxu0 %v3488
    %4935 = vmatpush1.bf16.msra.mxu0 %v3487
    %4936 = vmatprep.subr.bf16.mxu0 %v3480
    %4937 = vmatpush1.bf16.msra.mxu0 %v3479
    %4938 = vmatprep.subr.bf16.mxu0 %v3472
    %4939 = vmatpush1.bf16.msra.mxu0 %v3471
    %4940 = vmatprep.subr.bf16.mxu0 %v3464
    %4941 = vmatpush1.bf16.msra.mxu0 %v3463
    %4942 = vmatprep.subr.bf16.mxu0 %v3456
    %4943 = vmatpush1.bf16.msra.mxu0 %v3455
    %4944 = vmatprep.subr.bf16.mxu0 %v3448
    %4945 = vmatpush1.bf16.msra.mxu0 %v3447
    %4946 = vmatprep.subr.bf16.mxu0 %v3440
    %4947 = vmatpush1.bf16.msra.mxu0 %v3439
    %4948 = vmatprep.subr.bf16.mxu0 %v3560
    %4949 = vmatpush2.bf16.msra.mxu0 %v3559
    %4950 = vmatprep.subr.bf16.mxu0 %v3552
    %4951 = vmatpush2.bf16.msra.mxu0 %v3551
    %4952 = vmatprep.subr.bf16.mxu0 %v3544
    %4953 = vmatpush2.bf16.msra.mxu0 %v3543
    %4954 = vmatprep.subr.bf16.mxu0 %v3536
    %4955 = vmatpush2.bf16.msra.mxu0 %v3535
    %4956 = vmatprep.subr.bf16.mxu0 %v3528
    %4957 = vmatpush2.bf16.msra.mxu0 %v3527
    %4958 = vmatprep.subr.bf16.mxu0 %v3520
    %4959 = vmatpush2.bf16.msra.mxu0 %v3519
    %4960 = vmatprep.subr.bf16.mxu0 %v3512
    %4961 = vmatpush2.bf16.msra.mxu0 %v3511
    %4962 = vmatprep.subr.bf16.mxu0 %v3504
    %4963 = vmatpush2.bf16.msra.mxu0 %v3503
    %4964 = vmatprep.mubr.bf16.mxu0 %v1498
    %4965 = vmatmul.mubr.bf16.gmra.mxu0 %v1497
    %v4966 = vpop.f32.mrf.mxu0
    %v4967 = vadd.f32 0.0, %v4966
    %v4968 = vpop.f32.mrf.mxu0
    %v4969 = vadd.f32 0.0, %v4968
    %v4970 = vpop.f32.mrf.mxu0
    %v4971 = vadd.f32 0.0, %v4970
    %v4972 = vpop.f32.mrf.mxu0
    %v4973 = vadd.f32 0.0, %v4972
    %4974 = vdwg.mxu0
    %4975 = vmatprep.subr.bf16.mxu0 %v3624
    %4976 = vmatpush1.bf16.msra.mxu0 %v3623
    %4977 = vmatprep.subr.bf16.mxu0 %v3616
    %4978 = vmatpush1.bf16.msra.mxu0 %v3615
    %4979 = vmatprep.subr.bf16.mxu0 %v3608
    %4980 = vmatpush1.bf16.msra.mxu0 %v3607
    %4981 = vmatprep.subr.bf16.mxu0 %v3600
    %4982 = vmatpush1.bf16.msra.mxu0 %v3599
    %4983 = vmatprep.subr.bf16.mxu0 %v3592
    %4984 = vmatpush1.bf16.msra.mxu0 %v3591
    %4985 = vmatprep.subr.bf16.mxu0 %v3584
    %4986 = vmatpush1.bf16.msra.mxu0 %v3583
    %4987 = vmatprep.subr.bf16.mxu0 %v3576
    %4988 = vmatpush1.bf16.msra.mxu0 %v3575
    %4989 = vmatprep.subr.bf16.mxu0 %v3568
    %4990 = vmatpush1.bf16.msra.mxu0 %v3567
    %4991 = vmatprep.subr.bf16.mxu0 %v3688
    %4992 = vmatpush2.bf16.msra.mxu0 %v3687
    %4993 = vmatprep.subr.bf16.mxu0 %v3680
    %4994 = vmatpush2.bf16.msra.mxu0 %v3679
    %4995 = vmatprep.subr.bf16.mxu0 %v3672
    %4996 = vmatpush2.bf16.msra.mxu0 %v3671
    %4997 = vmatprep.subr.bf16.mxu0 %v3664
    %4998 = vmatpush2.bf16.msra.mxu0 %v3663
    %4999 = vmatprep.subr.bf16.mxu0 %v3656
    %5000 = vmatpush2.bf16.msra.mxu0 %v3655
    %5001 = vmatprep.subr.bf16.mxu0 %v3648
    %5002 = vmatpush2.bf16.msra.mxu0 %v3647
    %5003 = vmatprep.subr.bf16.mxu0 %v3640
    %5004 = vmatpush2.bf16.msra.mxu0 %v3639
    %5005 = vmatprep.subr.bf16.mxu0 %v3632
    %5006 = vmatpush2.bf16.msra.mxu0 %v3631
    %5007 = vmatprep.mubr.bf16.mxu0 %v1500
    %5008 = vmatmul.mubr.bf16.gmra.mxu0 %v1499
    %v5009 = vpop.f32.mrf.mxu0
    %v5010 = vadd.f32 %v4967, %v5009
    %v5011 = vpop.f32.mrf.mxu0
    %v5012 = vadd.f32 %v4969, %v5011
    %v5013 = vpop.f32.mrf.mxu0
    %v5014 = vadd.f32 %v4971, %v5013
    %v5015 = vpop.f32.mrf.mxu0
    %v5016 = vadd.f32 %v4973, %v5015
    %5017 = vdwg.mxu0
    %5018 = vmatprep.subr.bf16.mxu0 %v3752
    %5019 = vmatpush1.bf16.msra.mxu0 %v3751
    %5020 = vmatprep.subr.bf16.mxu0 %v3744
    %5021 = vmatpush1.bf16.msra.mxu0 %v3743
    %5022 = vmatprep.subr.bf16.mxu0 %v3736
    %5023 = vmatpush1.bf16.msra.mxu0 %v3735
    %5024 = vmatprep.subr.bf16.mxu0 %v3728
    %5025 = vmatpush1.bf16.msra.mxu0 %v3727
    %5026 = vmatprep.subr.bf16.mxu0 %v3720
    %5027 = vmatpush1.bf16.msra.mxu0 %v3719
    %5028 = vmatprep.subr.bf16.mxu0 %v3712
    %5029 = vmatpush1.bf16.msra.mxu0 %v3711
    %5030 = vmatprep.subr.bf16.mxu0 %v3704
    %5031 = vmatpush1.bf16.msra.mxu0 %v3703
    %5032 = vmatprep.subr.bf16.mxu0 %v3696
    %5033 = vmatpush1.bf16.msra.mxu0 %v3695
    %5034 = vmatprep.subr.bf16.mxu0 %v3816
    %5035 = vmatpush2.bf16.msra.mxu0 %v3815
    %5036 = vmatprep.subr.bf16.mxu0 %v3808
    %5037 = vmatpush2.bf16.msra.mxu0 %v3807
    %5038 = vmatprep.subr.bf16.mxu0 %v3800
    %5039 = vmatpush2.bf16.msra.mxu0 %v3799
    %5040 = vmatprep.subr.bf16.mxu0 %v3792
    %5041 = vmatpush2.bf16.msra.mxu0 %v3791
    %5042 = vmatprep.subr.bf16.mxu0 %v3784
    %5043 = vmatpush2.bf16.msra.mxu0 %v3783
    %5044 = vmatprep.subr.bf16.mxu0 %v3776
    %5045 = vmatpush2.bf16.msra.mxu0 %v3775
    %5046 = vmatprep.subr.bf16.mxu0 %v3768
    %5047 = vmatpush2.bf16.msra.mxu0 %v3767
    %5048 = vmatprep.subr.bf16.mxu0 %v3760
    %5049 = vmatpush2.bf16.msra.mxu0 %v3759
    %5050 = vmatprep.mubr.bf16.mxu0 %v1502
    %5051 = vmatmul.mubr.bf16.gmra.mxu0 %v1501
    %v5052 = vpop.f32.mrf.mxu0
    %v5053 = vadd.f32 %v5010, %v5052
    %v5054 = vpop.f32.mrf.mxu0
    %v5055 = vadd.f32 %v5012, %v5054
    %v5056 = vpop.f32.mrf.mxu0
    %v5057 = vadd.f32 %v5014, %v5056
    %v5058 = vpop.f32.mrf.mxu0
    %v5059 = vadd.f32 %v5016, %v5058
    %5060 = vdwg.mxu0
    %5061 = vmatprep.subr.bf16.mxu0 %v3880
    %5062 = vmatpush1.bf16.msra.mxu0 %v3879
    %5063 = vmatprep.subr.bf16.mxu0 %v3872
    %5064 = vmatpush1.bf16.msra.mxu0 %v3871
    %5065 = vmatprep.subr.bf16.mxu0 %v3864
    %5066 = vmatpush1.bf16.msra.mxu0 %v3863
    %5067 = vmatprep.subr.bf16.mxu0 %v3856
    %5068 = vmatpush1.bf16.msra.mxu0 %v3855
    %5069 = vmatprep.subr.bf16.mxu0 %v3848
    %5070 = vmatpush1.bf16.msra.mxu0 %v3847
    %5071 = vmatprep.subr.bf16.mxu0 %v3840
    %5072 = vmatpush1.bf16.msra.mxu0 %v3839
    %5073 = vmatprep.subr.bf16.mxu0 %v3832
    %5074 = vmatpush1.bf16.msra.mxu0 %v3831
    %5075 = vmatprep.subr.bf16.mxu0 %v3824
    %5076 = vmatpush1.bf16.msra.mxu0 %v3823
    %5077 = vmatprep.subr.bf16.mxu0 %v3944
    %5078 = vmatpush2.bf16.msra.mxu0 %v3943
    %5079 = vmatprep.subr.bf16.mxu0 %v3936
    %5080 = vmatpush2.bf16.msra.mxu0 %v3935
    %5081 = vmatprep.subr.bf16.mxu0 %v3928
    %5082 = vmatpush2.bf16.msra.mxu0 %v3927
    %5083 = vmatprep.subr.bf16.mxu0 %v3920
    %5084 = vmatpush2.bf16.msra.mxu0 %v3919
    %5085 = vmatprep.subr.bf16.mxu0 %v3912
    %5086 = vmatpush2.bf16.msra.mxu0 %v3911
    %5087 = vmatprep.subr.bf16.mxu0 %v3904
    %5088 = vmatpush2.bf16.msra.mxu0 %v3903
    %5089 = vmatprep.subr.bf16.mxu0 %v3896
    %5090 = vmatpush2.bf16.msra.mxu0 %v3895
    %5091 = vmatprep.subr.bf16.mxu0 %v3888
    %5092 = vmatpush2.bf16.msra.mxu0 %v3887
    %5093 = vmatprep.mubr.bf16.mxu0 %v1504
    %5094 = vmatmul.mubr.bf16.gmra.mxu0 %v1503
    %v5095 = vpop.f32.mrf.mxu0
    %v5096 = vadd.f32 %v5053, %v5095
    %v5097 = vpop.f32.mrf.mxu0
    %v5098 = vadd.f32 %v5055, %v5097
    %v5099 = vpop.f32.mrf.mxu0
    %v5100 = vadd.f32 %v5057, %v5099
    %v5101 = vpop.f32.mrf.mxu0
    %v5102 = vadd.f32 %v5059, %v5101
    %5103 = vdwg.mxu0
    %5104 = vmatprep.subr.bf16.mxu0 %v4008
    %5105 = vmatpush1.bf16.msra.mxu0 %v4007
    %5106 = vmatprep.subr.bf16.mxu0 %v4000
    %5107 = vmatpush1.bf16.msra.mxu0 %v3999
    %5108 = vmatprep.subr.bf16.mxu0 %v3992
    %5109 = vmatpush1.bf16.msra.mxu0 %v3991
    %5110 = vmatprep.subr.bf16.mxu0 %v3984
    %5111 = vmatpush1.bf16.msra.mxu0 %v3983
    %5112 = vmatprep.subr.bf16.mxu0 %v3976
    %5113 = vmatpush1.bf16.msra.mxu0 %v3975
    %5114 = vmatprep.subr.bf16.mxu0 %v3968
    %5115 = vmatpush1.bf16.msra.mxu0 %v3967
    %5116 = vmatprep.subr.bf16.mxu0 %v3960
    %5117 = vmatpush1.bf16.msra.mxu0 %v3959
    %5118 = vmatprep.subr.bf16.mxu0 %v3952
    %5119 = vmatpush1.bf16.msra.mxu0 %v3951
    %5120 = vmatprep.subr.bf16.mxu0 %v4072
    %5121 = vmatpush2.bf16.msra.mxu0 %v4071
    %5122 = vmatprep.subr.bf16.mxu0 %v4064
    %5123 = vmatpush2.bf16.msra.mxu0 %v4063
    %5124 = vmatprep.subr.bf16.mxu0 %v4056
    %5125 = vmatpush2.bf16.msra.mxu0 %v4055
    %5126 = vmatprep.subr.bf16.mxu0 %v4048
    %5127 = vmatpush2.bf16.msra.mxu0 %v4047
    %5128 = vmatprep.subr.bf16.mxu0 %v4040
    %5129 = vmatpush2.bf16.msra.mxu0 %v4039
    %5130 = vmatprep.subr.bf16.mxu0 %v4032
    %5131 = vmatpush2.bf16.msra.mxu0 %v4031
    %5132 = vmatprep.subr.bf16.mxu0 %v4024
    %5133 = vmatpush2.bf16.msra.mxu0 %v4023
    %5134 = vmatprep.subr.bf16.mxu0 %v4016
    %5135 = vmatpush2.bf16.msra.mxu0 %v4015
    %5136 = vmatprep.mubr.bf16.mxu0 %v1506
    %5137 = vmatmul.mubr.bf16.gmra.mxu0 %v1505
    %v5138 = vpop.f32.mrf.mxu0
    %v5139 = vadd.f32 %v5096, %v5138
    %v5140 = vpop.f32.mrf.mxu0
    %v5141 = vadd.f32 %v5098, %v5140
    %v5142 = vpop.f32.mrf.mxu0
    %v5143 = vadd.f32 %v5100, %v5142
    %v5144 = vpop.f32.mrf.mxu0
    %v5145 = vadd.f32 %v5102, %v5144
    %5146 = vdwg.mxu0
    %5147 = vmatprep.subr.bf16.mxu0 %v3498
    %5148 = vmatpush1.bf16.msra.mxu0 %v3497
    %5149 = vmatprep.subr.bf16.mxu0 %v3490
    %5150 = vmatpush1.bf16.msra.mxu0 %v3489
    %5151 = vmatprep.subr.bf16.mxu0 %v3482
    %5152 = vmatpush1.bf16.msra.mxu0 %v3481
    %5153 = vmatprep.subr.bf16.mxu0 %v3474
    %5154 = vmatpush1.bf16.msra.mxu0 %v3473
    %5155 = vmatprep.subr.bf16.mxu0 %v3466
    %5156 = vmatpush1.bf16.msra.mxu0 %v3465
    %5157 = vmatprep.subr.bf16.mxu0 %v3458
    %5158 = vmatpush1.bf16.msra.mxu0 %v3457
    %5159 = vmatprep.subr.bf16.mxu0 %v3450
    %5160 = vmatpush1.bf16.msra.mxu0 %v3449
    %5161 = vmatprep.subr.bf16.mxu0 %v3442
    %5162 = vmatpush1.bf16.msra.mxu0 %v3441
    %5163 = vmatprep.subr.bf16.mxu0 %v3562
    %5164 = vmatpush2.bf16.msra.mxu0 %v3561
    %5165 = vmatprep.subr.bf16.mxu0 %v3554
    %5166 = vmatpush2.bf16.msra.mxu0 %v3553
    %5167 = vmatprep.subr.bf16.mxu0 %v3546
    %5168 = vmatpush2.bf16.msra.mxu0 %v3545
    %5169 = vmatprep.subr.bf16.mxu0 %v3538
    %5170 = vmatpush2.bf16.msra.mxu0 %v3537
    %5171 = vmatprep.subr.bf16.mxu0 %v3530
    %5172 = vmatpush2.bf16.msra.mxu0 %v3529
    %5173 = vmatprep.subr.bf16.mxu0 %v3522
    %5174 = vmatpush2.bf16.msra.mxu0 %v3521
    %5175 = vmatprep.subr.bf16.mxu0 %v3514
    %5176 = vmatpush2.bf16.msra.mxu0 %v3513
    %5177 = vmatprep.subr.bf16.mxu0 %v3506
    %5178 = vmatpush2.bf16.msra.mxu0 %v3505
    %5179 = vmatprep.mubr.bf16.mxu0 %v1498
    %5180 = vmatmul.mubr.bf16.gmra.mxu0 %v1497
    %v5181 = vpop.f32.mrf.mxu0
    %v5182 = vadd.f32 0.0, %v5181
    %v5183 = vpop.f32.mrf.mxu0
    %v5184 = vadd.f32 0.0, %v5183
    %v5185 = vpop.f32.mrf.mxu0
    %v5186 = vadd.f32 0.0, %v5185
    %v5187 = vpop.f32.mrf.mxu0
    %v5188 = vadd.f32 0.0, %v5187
    %5189 = vdwg.mxu0
    %5190 = vmatprep.subr.bf16.mxu0 %v3626
    %5191 = vmatpush1.bf16.msra.mxu0 %v3625
    %5192 = vmatprep.subr.bf16.mxu0 %v3618
    %5193 = vmatpush1.bf16.msra.mxu0 %v3617
    %5194 = vmatprep.subr.bf16.mxu0 %v3610
    %5195 = vmatpush1.bf16.msra.mxu0 %v3609
    %5196 = vmatprep.subr.bf16.mxu0 %v3602
    %5197 = vmatpush1.bf16.msra.mxu0 %v3601
    %5198 = vmatprep.subr.bf16.mxu0 %v3594
    %5199 = vmatpush1.bf16.msra.mxu0 %v3593
    %5200 = vmatprep.subr.bf16.mxu0 %v3586
    %5201 = vmatpush1.bf16.msra.mxu0 %v3585
    %5202 = vmatprep.subr.bf16.mxu0 %v3578
    %5203 = vmatpush1.bf16.msra.mxu0 %v3577
    %5204 = vmatprep.subr.bf16.mxu0 %v3570
    %5205 = vmatpush1.bf16.msra.mxu0 %v3569
    %5206 = vmatprep.subr.bf16.mxu0 %v3690
    %5207 = vmatpush2.bf16.msra.mxu0 %v3689
    %5208 = vmatprep.subr.bf16.mxu0 %v3682
    %5209 = vmatpush2.bf16.msra.mxu0 %v3681
    %5210 = vmatprep.subr.bf16.mxu0 %v3674
    %5211 = vmatpush2.bf16.msra.mxu0 %v3673
    %5212 = vmatprep.subr.bf16.mxu0 %v3666
    %5213 = vmatpush2.bf16.msra.mxu0 %v3665
    %5214 = vmatprep.subr.bf16.mxu0 %v3658
    %5215 = vmatpush2.bf16.msra.mxu0 %v3657
    %5216 = vmatprep.subr.bf16.mxu0 %v3650
    %5217 = vmatpush2.bf16.msra.mxu0 %v3649
    %5218 = vmatprep.subr.bf16.mxu0 %v3642
    %5219 = vmatpush2.bf16.msra.mxu0 %v3641
    %5220 = vmatprep.subr.bf16.mxu0 %v3634
    %5221 = vmatpush2.bf16.msra.mxu0 %v3633
    %5222 = vmatprep.mubr.bf16.mxu0 %v1500
    %5223 = vmatmul.mubr.bf16.gmra.mxu0 %v1499
    %v5224 = vpop.f32.mrf.mxu0
    %v5225 = vadd.f32 %v5182, %v5224
    %v5226 = vpop.f32.mrf.mxu0
    %v5227 = vadd.f32 %v5184, %v5226
    %v5228 = vpop.f32.mrf.mxu0
    %v5229 = vadd.f32 %v5186, %v5228
    %v5230 = vpop.f32.mrf.mxu0
    %v5231 = vadd.f32 %v5188, %v5230
    %5232 = vdwg.mxu0
    %5233 = vmatprep.subr.bf16.mxu0 %v3754
    %5234 = vmatpush1.bf16.msra.mxu0 %v3753
    %5235 = vmatprep.subr.bf16.mxu0 %v3746
    %5236 = vmatpush1.bf16.msra.mxu0 %v3745
    %5237 = vmatprep.subr.bf16.mxu0 %v3738
    %5238 = vmatpush1.bf16.msra.mxu0 %v3737
    %5239 = vmatprep.subr.bf16.mxu0 %v3730
    %5240 = vmatpush1.bf16.msra.mxu0 %v3729
    %5241 = vmatprep.subr.bf16.mxu0 %v3722
    %5242 = vmatpush1.bf16.msra.mxu0 %v3721
    %5243 = vmatprep.subr.bf16.mxu0 %v3714
    %5244 = vmatpush1.bf16.msra.mxu0 %v3713
    %5245 = vmatprep.subr.bf16.mxu0 %v3706
    %5246 = vmatpush1.bf16.msra.mxu0 %v3705
    %5247 = vmatprep.subr.bf16.mxu0 %v3698
    %5248 = vmatpush1.bf16.msra.mxu0 %v3697
    %5249 = vmatprep.subr.bf16.mxu0 %v3818
    %5250 = vmatpush2.bf16.msra.mxu0 %v3817
    %5251 = vmatprep.subr.bf16.mxu0 %v3810
    %5252 = vmatpush2.bf16.msra.mxu0 %v3809
    %5253 = vmatprep.subr.bf16.mxu0 %v3802
    %5254 = vmatpush2.bf16.msra.mxu0 %v3801
    %5255 = vmatprep.subr.bf16.mxu0 %v3794
    %5256 = vmatpush2.bf16.msra.mxu0 %v3793
    %5257 = vmatprep.subr.bf16.mxu0 %v3786
    %5258 = vmatpush2.bf16.msra.mxu0 %v3785
    %5259 = vmatprep.subr.bf16.mxu0 %v3778
    %5260 = vmatpush2.bf16.msra.mxu0 %v3777
    %5261 = vmatprep.subr.bf16.mxu0 %v3770
    %5262 = vmatpush2.bf16.msra.mxu0 %v3769
    %5263 = vmatprep.subr.bf16.mxu0 %v3762
    %5264 = vmatpush2.bf16.msra.mxu0 %v3761
    %5265 = vmatprep.mubr.bf16.mxu0 %v1502
    %5266 = vmatmul.mubr.bf16.gmra.mxu0 %v1501
    %v5267 = vpop.f32.mrf.mxu0
    %v5268 = vadd.f32 %v5225, %v5267
    %v5269 = vpop.f32.mrf.mxu0
    %v5270 = vadd.f32 %v5227, %v5269
    %v5271 = vpop.f32.mrf.mxu0
    %v5272 = vadd.f32 %v5229, %v5271
    %v5273 = vpop.f32.mrf.mxu0
    %v5274 = vadd.f32 %v5231, %v5273
    %5275 = vdwg.mxu0
    %5276 = vmatprep.subr.bf16.mxu0 %v3882
    %5277 = vmatpush1.bf16.msra.mxu0 %v3881
    %5278 = vmatprep.subr.bf16.mxu0 %v3874
    %5279 = vmatpush1.bf16.msra.mxu0 %v3873
    %5280 = vmatprep.subr.bf16.mxu0 %v3866
    %5281 = vmatpush1.bf16.msra.mxu0 %v3865
    %5282 = vmatprep.subr.bf16.mxu0 %v3858
    %5283 = vmatpush1.bf16.msra.mxu0 %v3857
    %5284 = vmatprep.subr.bf16.mxu0 %v3850
    %5285 = vmatpush1.bf16.msra.mxu0 %v3849
    %5286 = vmatprep.subr.bf16.mxu0 %v3842
    %5287 = vmatpush1.bf16.msra.mxu0 %v3841
    %5288 = vmatprep.subr.bf16.mxu0 %v3834
    %5289 = vmatpush1.bf16.msra.mxu0 %v3833
    %5290 = vmatprep.subr.bf16.mxu0 %v3826
    %5291 = vmatpush1.bf16.msra.mxu0 %v3825
    %5292 = vmatprep.subr.bf16.mxu0 %v3946
    %5293 = vmatpush2.bf16.msra.mxu0 %v3945
    %5294 = vmatprep.subr.bf16.mxu0 %v3938
    %5295 = vmatpush2.bf16.msra.mxu0 %v3937
    %5296 = vmatprep.subr.bf16.mxu0 %v3930
    %5297 = vmatpush2.bf16.msra.mxu0 %v3929
    %5298 = vmatprep.subr.bf16.mxu0 %v3922
    %5299 = vmatpush2.bf16.msra.mxu0 %v3921
    %5300 = vmatprep.subr.bf16.mxu0 %v3914
    %5301 = vmatpush2.bf16.msra.mxu0 %v3913
    %5302 = vmatprep.subr.bf16.mxu0 %v3906
    %5303 = vmatpush2.bf16.msra.mxu0 %v3905
    %5304 = vmatprep.subr.bf16.mxu0 %v3898
    %5305 = vmatpush2.bf16.msra.mxu0 %v3897
    %5306 = vmatprep.subr.bf16.mxu0 %v3890
    %5307 = vmatpush2.bf16.msra.mxu0 %v3889
    %5308 = vmatprep.mubr.bf16.mxu0 %v1504
    %5309 = vmatmul.mubr.bf16.gmra.mxu0 %v1503
    %v5310 = vpop.f32.mrf.mxu0
    %v5311 = vadd.f32 %v5268, %v5310
    %v5312 = vpop.f32.mrf.mxu0
    %v5313 = vadd.f32 %v5270, %v5312
    %v5314 = vpop.f32.mrf.mxu0
    %v5315 = vadd.f32 %v5272, %v5314
    %v5316 = vpop.f32.mrf.mxu0
    %v5317 = vadd.f32 %v5274, %v5316
    %5318 = vdwg.mxu0
    %5319 = vmatprep.subr.bf16.mxu0 %v4010
    %5320 = vmatpush1.bf16.msra.mxu0 %v4009
    %5321 = vmatprep.subr.bf16.mxu0 %v4002
    %5322 = vmatpush1.bf16.msra.mxu0 %v4001
    %5323 = vmatprep.subr.bf16.mxu0 %v3994
    %5324 = vmatpush1.bf16.msra.mxu0 %v3993
    %5325 = vmatprep.subr.bf16.mxu0 %v3986
    %5326 = vmatpush1.bf16.msra.mxu0 %v3985
    %5327 = vmatprep.subr.bf16.mxu0 %v3978
    %5328 = vmatpush1.bf16.msra.mxu0 %v3977
    %5329 = vmatprep.subr.bf16.mxu0 %v3970
    %5330 = vmatpush1.bf16.msra.mxu0 %v3969
    %5331 = vmatprep.subr.bf16.mxu0 %v3962
    %5332 = vmatpush1.bf16.msra.mxu0 %v3961
    %5333 = vmatprep.subr.bf16.mxu0 %v3954
    %5334 = vmatpush1.bf16.msra.mxu0 %v3953
    %5335 = vmatprep.subr.bf16.mxu0 %v4074
    %5336 = vmatpush2.bf16.msra.mxu0 %v4073
    %5337 = vmatprep.subr.bf16.mxu0 %v4066
    %5338 = vmatpush2.bf16.msra.mxu0 %v4065
    %5339 = vmatprep.subr.bf16.mxu0 %v4058
    %5340 = vmatpush2.bf16.msra.mxu0 %v4057
    %5341 = vmatprep.subr.bf16.mxu0 %v4050
    %5342 = vmatpush2.bf16.msra.mxu0 %v4049
    %5343 = vmatprep.subr.bf16.mxu0 %v4042
    %5344 = vmatpush2.bf16.msra.mxu0 %v4041
    %5345 = vmatprep.subr.bf16.mxu0 %v4034
    %5346 = vmatpush2.bf16.msra.mxu0 %v4033
    %5347 = vmatprep.subr.bf16.mxu0 %v4026
    %5348 = vmatpush2.bf16.msra.mxu0 %v4025
    %5349 = vmatprep.subr.bf16.mxu0 %v4018
    %5350 = vmatpush2.bf16.msra.mxu0 %v4017
    %5351 = vmatprep.mubr.bf16.mxu0 %v1506
    %5352 = vmatmul.mubr.bf16.gmra.mxu0 %v1505
    %v5353 = vpop.f32.mrf.mxu0
    %v5354 = vadd.f32 %v5311, %v5353
    %v5355 = vpop.f32.mrf.mxu0
    %v5356 = vadd.f32 %v5313, %v5355
    %v5357 = vpop.f32.mrf.mxu0
    %v5358 = vadd.f32 %v5315, %v5357
    %v5359 = vpop.f32.mrf.mxu0
    %v5360 = vadd.f32 %v5317, %v5359
    %5361 = vdwg.mxu0
    %5362 = vmatprep.subr.bf16.mxu0 %v3500
    %5363 = vmatpush1.bf16.msra.mxu0 %v3499
    %5364 = vmatprep.subr.bf16.mxu0 %v3492
    %5365 = vmatpush1.bf16.msra.mxu0 %v3491
    %5366 = vmatprep.subr.bf16.mxu0 %v3484
    %5367 = vmatpush1.bf16.msra.mxu0 %v3483
    %5368 = vmatprep.subr.bf16.mxu0 %v3476
    %5369 = vmatpush1.bf16.msra.mxu0 %v3475
    %5370 = vmatprep.subr.bf16.mxu0 %v3468
    %5371 = vmatpush1.bf16.msra.mxu0 %v3467
    %5372 = vmatprep.subr.bf16.mxu0 %v3460
    %5373 = vmatpush1.bf16.msra.mxu0 %v3459
    %5374 = vmatprep.subr.bf16.mxu0 %v3452
    %5375 = vmatpush1.bf16.msra.mxu0 %v3451
    %5376 = vmatprep.subr.bf16.mxu0 %v3444
    %5377 = vmatpush1.bf16.msra.mxu0 %v3443
    %5378 = vmatprep.subr.bf16.mxu0 %v3564
    %5379 = vmatpush2.bf16.msra.mxu0 %v3563
    %5380 = vmatprep.subr.bf16.mxu0 %v3556
    %5381 = vmatpush2.bf16.msra.mxu0 %v3555
    %5382 = vmatprep.subr.bf16.mxu0 %v3548
    %5383 = vmatpush2.bf16.msra.mxu0 %v3547
    %5384 = vmatprep.subr.bf16.mxu0 %v3540
    %5385 = vmatpush2.bf16.msra.mxu0 %v3539
    %5386 = vmatprep.subr.bf16.mxu0 %v3532
    %5387 = vmatpush2.bf16.msra.mxu0 %v3531
    %5388 = vmatprep.subr.bf16.mxu0 %v3524
    %5389 = vmatpush2.bf16.msra.mxu0 %v3523
    %5390 = vmatprep.subr.bf16.mxu0 %v3516
    %5391 = vmatpush2.bf16.msra.mxu0 %v3515
    %5392 = vmatprep.subr.bf16.mxu0 %v3508
    %5393 = vmatpush2.bf16.msra.mxu0 %v3507
    %5394 = vmatprep.mubr.bf16.mxu0 %v1498
    %5395 = vmatmul.mubr.bf16.gmra.mxu0 %v1497
    %v5396 = vpop.f32.mrf.mxu0
    %v5397 = vadd.f32 0.0, %v5396
    %v5398 = vpop.f32.mrf.mxu0
    %v5399 = vadd.f32 0.0, %v5398
    %v5400 = vpop.f32.mrf.mxu0
    %v5401 = vadd.f32 0.0, %v5400
    %v5402 = vpop.f32.mrf.mxu0
    %v5403 = vadd.f32 0.0, %v5402
    %5404 = vdwg.mxu0
    %5405 = vmatprep.subr.bf16.mxu0 %v3628
    %5406 = vmatpush1.bf16.msra.mxu0 %v3627
    %5407 = vmatprep.subr.bf16.mxu0 %v3620
    %5408 = vmatpush1.bf16.msra.mxu0 %v3619
    %5409 = vmatprep.subr.bf16.mxu0 %v3612
    %5410 = vmatpush1.bf16.msra.mxu0 %v3611
    %5411 = vmatprep.subr.bf16.mxu0 %v3604
    %5412 = vmatpush1.bf16.msra.mxu0 %v3603
    %5413 = vmatprep.subr.bf16.mxu0 %v3596
    %5414 = vmatpush1.bf16.msra.mxu0 %v3595
    %5415 = vmatprep.subr.bf16.mxu0 %v3588
    %5416 = vmatpush1.bf16.msra.mxu0 %v3587
    %5417 = vmatprep.subr.bf16.mxu0 %v3580
    %5418 = vmatpush1.bf16.msra.mxu0 %v3579
    %5419 = vmatprep.subr.bf16.mxu0 %v3572
    %5420 = vmatpush1.bf16.msra.mxu0 %v3571
    %5421 = vmatprep.subr.bf16.mxu0 %v3692
    %5422 = vmatpush2.bf16.msra.mxu0 %v3691
    %5423 = vmatprep.subr.bf16.mxu0 %v3684
    %5424 = vmatpush2.bf16.msra.mxu0 %v3683
    %5425 = vmatprep.subr.bf16.mxu0 %v3676
    %5426 = vmatpush2.bf16.msra.mxu0 %v3675
    %5427 = vmatprep.subr.bf16.mxu0 %v3668
    %5428 = vmatpush2.bf16.msra.mxu0 %v3667
    %5429 = vmatprep.subr.bf16.mxu0 %v3660
    %5430 = vmatpush2.bf16.msra.mxu0 %v3659
    %5431 = vmatprep.subr.bf16.mxu0 %v3652
    %5432 = vmatpush2.bf16.msra.mxu0 %v3651
    %5433 = vmatprep.subr.bf16.mxu0 %v3644
    %5434 = vmatpush2.bf16.msra.mxu0 %v3643
    %5435 = vmatprep.subr.bf16.mxu0 %v3636
    %5436 = vmatpush2.bf16.msra.mxu0 %v3635
    %5437 = vmatprep.mubr.bf16.mxu0 %v1500
    %5438 = vmatmul.mubr.bf16.gmra.mxu0 %v1499
    %v5439 = vpop.f32.mrf.mxu0
    %v5440 = vadd.f32 %v5397, %v5439
    %v5441 = vpop.f32.mrf.mxu0
    %v5442 = vadd.f32 %v5399, %v5441
    %v5443 = vpop.f32.mrf.mxu0
    %v5444 = vadd.f32 %v5401, %v5443
    %v5445 = vpop.f32.mrf.mxu0
    %v5446 = vadd.f32 %v5403, %v5445
    %5447 = vdwg.mxu0
    %5448 = vmatprep.subr.bf16.mxu0 %v3756
    %5449 = vmatpush1.bf16.msra.mxu0 %v3755
    %5450 = vmatprep.subr.bf16.mxu0 %v3748
    %5451 = vmatpush1.bf16.msra.mxu0 %v3747
    %5452 = vmatprep.subr.bf16.mxu0 %v3740
    %5453 = vmatpush1.bf16.msra.mxu0 %v3739
    %5454 = vmatprep.subr.bf16.mxu0 %v3732
    %5455 = vmatpush1.bf16.msra.mxu0 %v3731
    %5456 = vmatprep.subr.bf16.mxu0 %v3724
    %5457 = vmatpush1.bf16.msra.mxu0 %v3723
    %5458 = vmatprep.subr.bf16.mxu0 %v3716
    %5459 = vmatpush1.bf16.msra.mxu0 %v3715
    %5460 = vmatprep.subr.bf16.mxu0 %v3708
    %5461 = vmatpush1.bf16.msra.mxu0 %v3707
    %5462 = vmatprep.subr.bf16.mxu0 %v3700
    %5463 = vmatpush1.bf16.msra.mxu0 %v3699
    %5464 = vmatprep.subr.bf16.mxu0 %v3820
    %5465 = vmatpush2.bf16.msra.mxu0 %v3819
    %5466 = vmatprep.subr.bf16.mxu0 %v3812
    %5467 = vmatpush2.bf16.msra.mxu0 %v3811
    %5468 = vmatprep.subr.bf16.mxu0 %v3804
    %5469 = vmatpush2.bf16.msra.mxu0 %v3803
    %5470 = vmatprep.subr.bf16.mxu0 %v3796
    %5471 = vmatpush2.bf16.msra.mxu0 %v3795
    %5472 = vmatprep.subr.bf16.mxu0 %v3788
    %5473 = vmatpush2.bf16.msra.mxu0 %v3787
    %5474 = vmatprep.subr.bf16.mxu0 %v3780
    %5475 = vmatpush2.bf16.msra.mxu0 %v3779
    %5476 = vmatprep.subr.bf16.mxu0 %v3772
    %5477 = vmatpush2.bf16.msra.mxu0 %v3771
    %5478 = vmatprep.subr.bf16.mxu0 %v3764
    %5479 = vmatpush2.bf16.msra.mxu0 %v3763
    %5480 = vmatprep.mubr.bf16.mxu0 %v1502
    %5481 = vmatmul.mubr.bf16.gmra.mxu0 %v1501
    %v5482 = vpop.f32.mrf.mxu0
    %v5483 = vadd.f32 %v5440, %v5482
    %v5484 = vpop.f32.mrf.mxu0
    %v5485 = vadd.f32 %v5442, %v5484
    %v5486 = vpop.f32.mrf.mxu0
    %v5487 = vadd.f32 %v5444, %v5486
    %v5488 = vpop.f32.mrf.mxu0
    %v5489 = vadd.f32 %v5446, %v5488
    %5490 = vdwg.mxu0
    %5491 = vmatprep.subr.bf16.mxu0 %v3884
    %5492 = vmatpush1.bf16.msra.mxu0 %v3883
    %5493 = vmatprep.subr.bf16.mxu0 %v3876
    %5494 = vmatpush1.bf16.msra.mxu0 %v3875
    %5495 = vmatprep.subr.bf16.mxu0 %v3868
    %5496 = vmatpush1.bf16.msra.mxu0 %v3867
    %5497 = vmatprep.subr.bf16.mxu0 %v3860
    %5498 = vmatpush1.bf16.msra.mxu0 %v3859
    %5499 = vmatprep.subr.bf16.mxu0 %v3852
    %5500 = vmatpush1.bf16.msra.mxu0 %v3851
    %5501 = vmatprep.subr.bf16.mxu0 %v3844
    %5502 = vmatpush1.bf16.msra.mxu0 %v3843
    %5503 = vmatprep.subr.bf16.mxu0 %v3836
    %5504 = vmatpush1.bf16.msra.mxu0 %v3835
    %5505 = vmatprep.subr.bf16.mxu0 %v3828
    %5506 = vmatpush1.bf16.msra.mxu0 %v3827
    %5507 = vmatprep.subr.bf16.mxu0 %v3948
    %5508 = vmatpush2.bf16.msra.mxu0 %v3947
    %5509 = vmatprep.subr.bf16.mxu0 %v3940
    %5510 = vmatpush2.bf16.msra.mxu0 %v3939
    %5511 = vmatprep.subr.bf16.mxu0 %v3932
    %5512 = vmatpush2.bf16.msra.mxu0 %v3931
    %5513 = vmatprep.subr.bf16.mxu0 %v3924
    %5514 = vmatpush2.bf16.msra.mxu0 %v3923
    %5515 = vmatprep.subr.bf16.mxu0 %v3916
    %5516 = vmatpush2.bf16.msra.mxu0 %v3915
    %5517 = vmatprep.subr.bf16.mxu0 %v3908
    %5518 = vmatpush2.bf16.msra.mxu0 %v3907
    %5519 = vmatprep.subr.bf16.mxu0 %v3900
    %5520 = vmatpush2.bf16.msra.mxu0 %v3899
    %5521 = vmatprep.subr.bf16.mxu0 %v3892
    %5522 = vmatpush2.bf16.msra.mxu0 %v3891
    %5523 = vmatprep.mubr.bf16.mxu0 %v1504
    %5524 = vmatmul.mubr.bf16.gmra.mxu0 %v1503
    %v5525 = vpop.f32.mrf.mxu0
    %v5526 = vadd.f32 %v5483, %v5525
    %v5527 = vpop.f32.mrf.mxu0
    %v5528 = vadd.f32 %v5485, %v5527
    %v5529 = vpop.f32.mrf.mxu0
    %v5530 = vadd.f32 %v5487, %v5529
    %v5531 = vpop.f32.mrf.mxu0
    %v5532 = vadd.f32 %v5489, %v5531
    %5533 = vdwg.mxu0
    %5534 = vmatprep.subr.bf16.mxu0 %v4012
    %5535 = vmatpush1.bf16.msra.mxu0 %v4011
    %5536 = vmatprep.subr.bf16.mxu0 %v4004
    %5537 = vmatpush1.bf16.msra.mxu0 %v4003
    %5538 = vmatprep.subr.bf16.mxu0 %v3996
    %5539 = vmatpush1.bf16.msra.mxu0 %v3995
    %5540 = vmatprep.subr.bf16.mxu0 %v3988
    %5541 = vmatpush1.bf16.msra.mxu0 %v3987
    %5542 = vmatprep.subr.bf16.mxu0 %v3980
    %5543 = vmatpush1.bf16.msra.mxu0 %v3979
    %5544 = vmatprep.subr.bf16.mxu0 %v3972
    %5545 = vmatpush1.bf16.msra.mxu0 %v3971
    %5546 = vmatprep.subr.bf16.mxu0 %v3964
    %5547 = vmatpush1.bf16.msra.mxu0 %v3963
    %5548 = vmatprep.subr.bf16.mxu0 %v3956
    %5549 = vmatpush1.bf16.msra.mxu0 %v3955
    %5550 = vmatprep.subr.bf16.mxu0 %v4076
    %5551 = vmatpush2.bf16.msra.mxu0 %v4075
    %5552 = vmatprep.subr.bf16.mxu0 %v4068
    %5553 = vmatpush2.bf16.msra.mxu0 %v4067
    %5554 = vmatprep.subr.bf16.mxu0 %v4060
    %5555 = vmatpush2.bf16.msra.mxu0 %v4059
    %5556 = vmatprep.subr.bf16.mxu0 %v4052
    %5557 = vmatpush2.bf16.msra.mxu0 %v4051
    %5558 = vmatprep.subr.bf16.mxu0 %v4044
    %5559 = vmatpush2.bf16.msra.mxu0 %v4043
    %5560 = vmatprep.subr.bf16.mxu0 %v4036
    %5561 = vmatpush2.bf16.msra.mxu0 %v4035
    %5562 = vmatprep.subr.bf16.mxu0 %v4028
    %5563 = vmatpush2.bf16.msra.mxu0 %v4027
    %5564 = vmatprep.subr.bf16.mxu0 %v4020
    %5565 = vmatpush2.bf16.msra.mxu0 %v4019
    %5566 = vmatprep.mubr.bf16.mxu0 %v1506
    %5567 = vmatmul.mubr.bf16.gmra.mxu0 %v1505
    %v5568 = vpop.f32.mrf.mxu0
    %v5569 = vadd.f32 %v5526, %v5568
    %v5570 = vpop.f32.mrf.mxu0
    %v5571 = vadd.f32 %v5528, %v5570
    %v5572 = vpop.f32.mrf.mxu0
    %v5573 = vadd.f32 %v5530, %v5572
    %v5574 = vpop.f32.mrf.mxu0
    %v5575 = vadd.f32 %v5532, %v5574
    %5576 = vdwg.mxu0
    %v5587 = vunpack.c.l.b16 %v167
    %v5588 = vunpack.c.h.b16 %v167
    %v5589 = vunpack.c.l.b16 %v168
    %v5590 = vunpack.c.h.b16 %v168
    %v5591 = vunpack.c.l.b16 %v169
    %v5592 = vunpack.c.h.b16 %v169
    %v5593 = vunpack.c.l.b16 %v170
    %v5594 = vunpack.c.h.b16 %v170
    %v5595 = vunpack.c.l.b16 %v171
    %v5596 = vunpack.c.h.b16 %v171
    %v5597 = vunpack.c.l.b16 %v172
    %v5598 = vunpack.c.h.b16 %v172
    %v5599 = vunpack.c.l.b16 %v173
    %v5600 = vunpack.c.h.b16 %v173
    %v5601 = vunpack.c.l.b16 %v174
    %v5602 = vunpack.c.h.b16 %v174
    %v5603 = vunpack.c.l.b16 %v175
    %v5604 = vunpack.c.h.b16 %v175
    %v5605 = vunpack.c.l.b16 %v176
    %v5606 = vunpack.c.h.b16 %v176
    %v5607 = vpack.c.b16 %v5597, %v5587
    %v5608 = vpack.c.b16 %v5598, %v5588
    %v5609 = vpack.c.b16 %v5599, %v5589
    %v5610 = vpack.c.b16 %v5600, %v5590
    %v5611 = vpack.c.b16 %v5601, %v5591
    %v5612 = vpack.c.b16 %v5602, %v5592
    %v5613 = vpack.c.b16 %v5603, %v5593
    %v5614 = vpack.c.b16 %v5604, %v5594
    %v5615 = vpack.c.b16 %v5605, %v5595
    %v5616 = vpack.c.b16 %v5606, %v5596
    %v6267 = vunpack.c.l.b16 %v177
    %v6268 = vunpack.c.h.b16 %v177
    %v6269 = vunpack.c.l.b16 %v178
    %v6270 = vunpack.c.h.b16 %v178
    %v6271 = vunpack.c.l.b16 %v179
    %v6272 = vunpack.c.h.b16 %v179
    %v6273 = vunpack.c.l.b16 %v180
    %v6274 = vunpack.c.h.b16 %v180
    %v6275 = vunpack.c.l.b16 %v181
    %v6276 = vunpack.c.h.b16 %v181
    %v6277 = vunpack.c.l.b16 %v182
    %v6278 = vunpack.c.h.b16 %v182
    %v6279 = vunpack.c.l.b16 %v183
    %v6280 = vunpack.c.h.b16 %v183
    %v6281 = vunpack.c.l.b16 %v184
    %v6282 = vunpack.c.h.b16 %v184
    %v6283 = vunpack.c.l.b16 %v185
    %v6284 = vunpack.c.h.b16 %v185
    %v6285 = vunpack.c.l.b16 %v186
    %v6286 = vunpack.c.h.b16 %v186
    %v6287 = vunpack.c.l.b16 %v187
    %v6288 = vunpack.c.h.b16 %v187
    %v6289 = vunpack.c.l.b16 %v188
    %v6290 = vunpack.c.h.b16 %v188
    %v6291 = vunpack.c.l.b16 %v189
    %v6292 = vunpack.c.h.b16 %v189
    %v6293 = vunpack.c.l.b16 %v190
    %v6294 = vunpack.c.h.b16 %v190
    %v6295 = vunpack.c.l.b16 %v191
    %v6296 = vunpack.c.h.b16 %v191
    %v6297 = vunpack.c.l.b16 %v192
    %v6298 = vunpack.c.h.b16 %v192
    %v6299 = vunpack.c.l.b16 %v193
    %v6300 = vunpack.c.h.b16 %v193
    %v6301 = vunpack.c.l.b16 %v194
    %v6302 = vunpack.c.h.b16 %v194
    %v6303 = vunpack.c.l.b16 %v195
    %v6304 = vunpack.c.h.b16 %v195
    %v6305 = vunpack.c.l.b16 %v196
    %v6306 = vunpack.c.h.b16 %v196
    %v6307 = vunpack.c.l.b16 %v197
    %v6308 = vunpack.c.h.b16 %v197
    %v6309 = vunpack.c.l.b16 %v198
    %v6310 = vunpack.c.h.b16 %v198
    %v6311 = vunpack.c.l.b16 %v199
    %v6312 = vunpack.c.h.b16 %v199
    %v6313 = vunpack.c.l.b16 %v200
    %v6314 = vunpack.c.h.b16 %v200
    %v6315 = vunpack.c.l.b16 %v201
    %v6316 = vunpack.c.h.b16 %v201
    %v6317 = vunpack.c.l.b16 %v202
    %v6318 = vunpack.c.h.b16 %v202
    %v6319 = vunpack.c.l.b16 %v203
    %v6320 = vunpack.c.h.b16 %v203
    %v6321 = vunpack.c.l.b16 %v204
    %v6322 = vunpack.c.h.b16 %v204
    %v6323 = vunpack.c.l.b16 %v205
    %v6324 = vunpack.c.h.b16 %v205
    %v6325 = vunpack.c.l.b16 %v206
    %v6326 = vunpack.c.h.b16 %v206
    %v6327 = vunpack.c.l.b16 %v207
    %v6328 = vunpack.c.h.b16 %v207
    %v6329 = vunpack.c.l.b16 %v208
    %v6330 = vunpack.c.h.b16 %v208
    %v6331 = vunpack.c.l.b16 %v209
    %v6332 = vunpack.c.h.b16 %v209
    %v6333 = vunpack.c.l.b16 %v210
    %v6334 = vunpack.c.h.b16 %v210
    %v6335 = vunpack.c.l.b16 %v211
    %v6336 = vunpack.c.h.b16 %v211
    %v6337 = vunpack.c.l.b16 %v212
    %v6338 = vunpack.c.h.b16 %v212
    %v6339 = vunpack.c.l.b16 %v213
    %v6340 = vunpack.c.h.b16 %v213
    %v6341 = vunpack.c.l.b16 %v214
    %v6342 = vunpack.c.h.b16 %v214
    %v6343 = vunpack.c.l.b16 %v215
    %v6344 = vunpack.c.h.b16 %v215
    %v6345 = vunpack.c.l.b16 %v216
    %v6346 = vunpack.c.h.b16 %v216
    %v6347 = vunpack.c.l.b16 %v217
    %v6348 = vunpack.c.h.b16 %v217
    %v6349 = vunpack.c.l.b16 %v218
    %v6350 = vunpack.c.h.b16 %v218
    %v6351 = vunpack.c.l.b16 %v219
    %v6352 = vunpack.c.h.b16 %v219
    %v6353 = vunpack.c.l.b16 %v220
    %v6354 = vunpack.c.h.b16 %v220
    %v6355 = vunpack.c.l.b16 %v221
    %v6356 = vunpack.c.h.b16 %v221
    %v6357 = vunpack.c.l.b16 %v222
    %v6358 = vunpack.c.h.b16 %v222
    %v6359 = vunpack.c.l.b16 %v223
    %v6360 = vunpack.c.h.b16 %v223
    %v6361 = vunpack.c.l.b16 %v224
    %v6362 = vunpack.c.h.b16 %v224
    %v6363 = vunpack.c.l.b16 %v225
    %v6364 = vunpack.c.h.b16 %v225
    %v6365 = vunpack.c.l.b16 %v226
    %v6366 = vunpack.c.h.b16 %v226
    %v6367 = vunpack.c.l.b16 %v227
    %v6368 = vunpack.c.h.b16 %v227
    %v6369 = vunpack.c.l.b16 %v228
    %v6370 = vunpack.c.h.b16 %v228
    %v6371 = vunpack.c.l.b16 %v229
    %v6372 = vunpack.c.h.b16 %v229
    %v6373 = vunpack.c.l.b16 %v230
    %v6374 = vunpack.c.h.b16 %v230
    %v6375 = vunpack.c.l.b16 %v231
    %v6376 = vunpack.c.h.b16 %v231
    %v6377 = vunpack.c.l.b16 %v232
    %v6378 = vunpack.c.h.b16 %v232
    %v6379 = vunpack.c.l.b16 %v233
    %v6380 = vunpack.c.h.b16 %v233
    %v6381 = vunpack.c.l.b16 %v234
    %v6382 = vunpack.c.h.b16 %v234
    %v6383 = vunpack.c.l.b16 %v235
    %v6384 = vunpack.c.h.b16 %v235
    %v6385 = vunpack.c.l.b16 %v236
    %v6386 = vunpack.c.h.b16 %v236
    %v6387 = vunpack.c.l.b16 %v237
    %v6388 = vunpack.c.h.b16 %v237
    %v6389 = vunpack.c.l.b16 %v238
    %v6390 = vunpack.c.h.b16 %v238
    %v6391 = vunpack.c.l.b16 %v239
    %v6392 = vunpack.c.h.b16 %v239
    %v6393 = vunpack.c.l.b16 %v240
    %v6394 = vunpack.c.h.b16 %v240
    %v6395 = vunpack.c.l.b16 %v241
    %v6396 = vunpack.c.h.b16 %v241
    %v6397 = vunpack.c.l.b16 %v242
    %v6398 = vunpack.c.h.b16 %v242
    %v6399 = vunpack.c.l.b16 %v243
    %v6400 = vunpack.c.h.b16 %v243
    %v6401 = vunpack.c.l.b16 %v244
    %v6402 = vunpack.c.h.b16 %v244
    %v6403 = vunpack.c.l.b16 %v245
    %v6404 = vunpack.c.h.b16 %v245
    %v6405 = vunpack.c.l.b16 %v246
    %v6406 = vunpack.c.h.b16 %v246
    %v6407 = vunpack.c.l.b16 %v247
    %v6408 = vunpack.c.h.b16 %v247
    %v6409 = vunpack.c.l.b16 %v248
    %v6410 = vunpack.c.h.b16 %v248
    %v6411 = vunpack.c.l.b16 %v249
    %v6412 = vunpack.c.h.b16 %v249
    %v6413 = vunpack.c.l.b16 %v250
    %v6414 = vunpack.c.h.b16 %v250
    %v6415 = vunpack.c.l.b16 %v251
    %v6416 = vunpack.c.h.b16 %v251
    %v6417 = vunpack.c.l.b16 %v252
    %v6418 = vunpack.c.h.b16 %v252
    %v6419 = vunpack.c.l.b16 %v253
    %v6420 = vunpack.c.h.b16 %v253
    %v6421 = vunpack.c.l.b16 %v254
    %v6422 = vunpack.c.h.b16 %v254
    %v6423 = vunpack.c.l.b16 %v255
    %v6424 = vunpack.c.h.b16 %v255
    %v6425 = vunpack.c.l.b16 %v256
    %v6426 = vunpack.c.h.b16 %v256
    %v6427 = vunpack.c.l.b16 %v257
    %v6428 = vunpack.c.h.b16 %v257
    %v6429 = vunpack.c.l.b16 %v258
    %v6430 = vunpack.c.h.b16 %v258
    %v6431 = vunpack.c.l.b16 %v259
    %v6432 = vunpack.c.h.b16 %v259
    %v6433 = vunpack.c.l.b16 %v260
    %v6434 = vunpack.c.h.b16 %v260
    %v6435 = vunpack.c.l.b16 %v261
    %v6436 = vunpack.c.h.b16 %v261
    %v6437 = vunpack.c.l.b16 %v262
    %v6438 = vunpack.c.h.b16 %v262
    %v6439 = vunpack.c.l.b16 %v263
    %v6440 = vunpack.c.h.b16 %v263
    %v6441 = vunpack.c.l.b16 %v264
    %v6442 = vunpack.c.h.b16 %v264
    %v6443 = vunpack.c.l.b16 %v265
    %v6444 = vunpack.c.h.b16 %v265
    %v6445 = vunpack.c.l.b16 %v266
    %v6446 = vunpack.c.h.b16 %v266
    %v6447 = vunpack.c.l.b16 %v267
    %v6448 = vunpack.c.h.b16 %v267
    %v6449 = vunpack.c.l.b16 %v268
    %v6450 = vunpack.c.h.b16 %v268
    %v6451 = vunpack.c.l.b16 %v269
    %v6452 = vunpack.c.h.b16 %v269
    %v6453 = vunpack.c.l.b16 %v270
    %v6454 = vunpack.c.h.b16 %v270
    %v6455 = vunpack.c.l.b16 %v271
    %v6456 = vunpack.c.h.b16 %v271
    %v6457 = vunpack.c.l.b16 %v272
    %v6458 = vunpack.c.h.b16 %v272
    %v6459 = vunpack.c.l.b16 %v273
    %v6460 = vunpack.c.h.b16 %v273
    %v6461 = vunpack.c.l.b16 %v274
    %v6462 = vunpack.c.h.b16 %v274
    %v6463 = vunpack.c.l.b16 %v275
    %v6464 = vunpack.c.h.b16 %v275
    %v6465 = vunpack.c.l.b16 %v276
    %v6466 = vunpack.c.h.b16 %v276
    %v6467 = vunpack.c.l.b16 %v277
    %v6468 = vunpack.c.h.b16 %v277
    %v6469 = vunpack.c.l.b16 %v278
    %v6470 = vunpack.c.h.b16 %v278
    %v6471 = vunpack.c.l.b16 %v279
    %v6472 = vunpack.c.h.b16 %v279
    %v6473 = vunpack.c.l.b16 %v280
    %v6474 = vunpack.c.h.b16 %v280
    %v6475 = vunpack.c.l.b16 %v281
    %v6476 = vunpack.c.h.b16 %v281
    %v6477 = vunpack.c.l.b16 %v282
    %v6478 = vunpack.c.h.b16 %v282
    %v6479 = vunpack.c.l.b16 %v283
    %v6480 = vunpack.c.h.b16 %v283
    %v6481 = vunpack.c.l.b16 %v284
    %v6482 = vunpack.c.h.b16 %v284
    %v6483 = vunpack.c.l.b16 %v285
    %v6484 = vunpack.c.h.b16 %v285
    %v6485 = vunpack.c.l.b16 %v286
    %v6486 = vunpack.c.h.b16 %v286
    %v6487 = vunpack.c.l.b16 %v287
    %v6488 = vunpack.c.h.b16 %v287
    %v6489 = vunpack.c.l.b16 %v288
    %v6490 = vunpack.c.h.b16 %v288
    %v6491 = vunpack.c.l.b16 %v289
    %v6492 = vunpack.c.h.b16 %v289
    %v6493 = vunpack.c.l.b16 %v290
    %v6494 = vunpack.c.h.b16 %v290
    %v6495 = vunpack.c.l.b16 %v291
    %v6496 = vunpack.c.h.b16 %v291
    %v6497 = vunpack.c.l.b16 %v292
    %v6498 = vunpack.c.h.b16 %v292
    %v6499 = vunpack.c.l.b16 %v293
    %v6500 = vunpack.c.h.b16 %v293
    %v6501 = vunpack.c.l.b16 %v294
    %v6502 = vunpack.c.h.b16 %v294
    %v6503 = vunpack.c.l.b16 %v295
    %v6504 = vunpack.c.h.b16 %v295
    %v6505 = vunpack.c.l.b16 %v296
    %v6506 = vunpack.c.h.b16 %v296
    %v6507 = vunpack.c.l.b16 %v297
    %v6508 = vunpack.c.h.b16 %v297
    %v6509 = vunpack.c.l.b16 %v298
    %v6510 = vunpack.c.h.b16 %v298
    %v6511 = vunpack.c.l.b16 %v299
    %v6512 = vunpack.c.h.b16 %v299
    %v6513 = vunpack.c.l.b16 %v300
    %v6514 = vunpack.c.h.b16 %v300
    %v6515 = vunpack.c.l.b16 %v301
    %v6516 = vunpack.c.h.b16 %v301
    %v6517 = vunpack.c.l.b16 %v302
    %v6518 = vunpack.c.h.b16 %v302
    %v6519 = vunpack.c.l.b16 %v303
    %v6520 = vunpack.c.h.b16 %v303
    %v6521 = vunpack.c.l.b16 %v304
    %v6522 = vunpack.c.h.b16 %v304
    %v6523 = vunpack.c.l.b16 %v305
    %v6524 = vunpack.c.h.b16 %v305
    %v6525 = vunpack.c.l.b16 %v306
    %v6526 = vunpack.c.h.b16 %v306
    %v6527 = vunpack.c.l.b16 %v307
    %v6528 = vunpack.c.h.b16 %v307
    %v6529 = vunpack.c.l.b16 %v308
    %v6530 = vunpack.c.h.b16 %v308
    %v6531 = vunpack.c.l.b16 %v309
    %v6532 = vunpack.c.h.b16 %v309
    %v6533 = vunpack.c.l.b16 %v310
    %v6534 = vunpack.c.h.b16 %v310
    %v6535 = vunpack.c.l.b16 %v311
    %v6536 = vunpack.c.h.b16 %v311
    %v6537 = vunpack.c.l.b16 %v312
    %v6538 = vunpack.c.h.b16 %v312
    %v6539 = vunpack.c.l.b16 %v313
    %v6540 = vunpack.c.h.b16 %v313
    %v6541 = vunpack.c.l.b16 %v314
    %v6542 = vunpack.c.h.b16 %v314
    %v6543 = vunpack.c.l.b16 %v315
    %v6544 = vunpack.c.h.b16 %v315
    %v6545 = vunpack.c.l.b16 %v316
    %v6546 = vunpack.c.h.b16 %v316
    %v6547 = vunpack.c.l.b16 %v317
    %v6548 = vunpack.c.h.b16 %v317
    %v6549 = vunpack.c.l.b16 %v318
    %v6550 = vunpack.c.h.b16 %v318
    %v6551 = vunpack.c.l.b16 %v319
    %v6552 = vunpack.c.h.b16 %v319
    %v6553 = vunpack.c.l.b16 %v320
    %v6554 = vunpack.c.h.b16 %v320
    %v6555 = vunpack.c.l.b16 %v321
    %v6556 = vunpack.c.h.b16 %v321
    %v6557 = vunpack.c.l.b16 %v322
    %v6558 = vunpack.c.h.b16 %v322
    %v6559 = vunpack.c.l.b16 %v323
    %v6560 = vunpack.c.h.b16 %v323
    %v6561 = vunpack.c.l.b16 %v324
    %v6562 = vunpack.c.h.b16 %v324
    %v6563 = vunpack.c.l.b16 %v325
    %v6564 = vunpack.c.h.b16 %v325
    %v6565 = vunpack.c.l.b16 %v326
    %v6566 = vunpack.c.h.b16 %v326
    %v6567 = vunpack.c.l.b16 %v327
    %v6568 = vunpack.c.h.b16 %v327
    %v6569 = vunpack.c.l.b16 %v328
    %v6570 = vunpack.c.h.b16 %v328
    %v6571 = vunpack.c.l.b16 %v329
    %v6572 = vunpack.c.h.b16 %v329
    %v6573 = vunpack.c.l.b16 %v330
    %v6574 = vunpack.c.h.b16 %v330
    %v6575 = vunpack.c.l.b16 %v331
    %v6576 = vunpack.c.h.b16 %v331
    %v6577 = vunpack.c.l.b16 %v332
    %v6578 = vunpack.c.h.b16 %v332
    %v6579 = vunpack.c.l.b16 %v333
    %v6580 = vunpack.c.h.b16 %v333
    %v6581 = vunpack.c.l.b16 %v334
    %v6582 = vunpack.c.h.b16 %v334
    %v6583 = vunpack.c.l.b16 %v335
    %v6584 = vunpack.c.h.b16 %v335
    %v6585 = vunpack.c.l.b16 %v336
    %v6586 = vunpack.c.h.b16 %v336
    %v6587 = vunpack.c.l.b16 %v337
    %v6588 = vunpack.c.h.b16 %v337
    %v6589 = vunpack.c.l.b16 %v338
    %v6590 = vunpack.c.h.b16 %v338
    %v6591 = vunpack.c.l.b16 %v339
    %v6592 = vunpack.c.h.b16 %v339
    %v6593 = vunpack.c.l.b16 %v340
    %v6594 = vunpack.c.h.b16 %v340
    %v6595 = vunpack.c.l.b16 %v341
    %v6596 = vunpack.c.h.b16 %v341
    %v6597 = vunpack.c.l.b16 %v342
    %v6598 = vunpack.c.h.b16 %v342
    %v6599 = vunpack.c.l.b16 %v343
    %v6600 = vunpack.c.h.b16 %v343
    %v6601 = vunpack.c.l.b16 %v344
    %v6602 = vunpack.c.h.b16 %v344
    %v6603 = vunpack.c.l.b16 %v345
    %v6604 = vunpack.c.h.b16 %v345
    %v6605 = vunpack.c.l.b16 %v346
    %v6606 = vunpack.c.h.b16 %v346
    %v6607 = vunpack.c.l.b16 %v347
    %v6608 = vunpack.c.h.b16 %v347
    %v6609 = vunpack.c.l.b16 %v348
    %v6610 = vunpack.c.h.b16 %v348
    %v6611 = vunpack.c.l.b16 %v349
    %v6612 = vunpack.c.h.b16 %v349
    %v6613 = vunpack.c.l.b16 %v350
    %v6614 = vunpack.c.h.b16 %v350
    %v6615 = vunpack.c.l.b16 %v351
    %v6616 = vunpack.c.h.b16 %v351
    %v6617 = vunpack.c.l.b16 %v352
    %v6618 = vunpack.c.h.b16 %v352
    %v6619 = vunpack.c.l.b16 %v353
    %v6620 = vunpack.c.h.b16 %v353
    %v6621 = vunpack.c.l.b16 %v354
    %v6622 = vunpack.c.h.b16 %v354
    %v6623 = vunpack.c.l.b16 %v355
    %v6624 = vunpack.c.h.b16 %v355
    %v6625 = vunpack.c.l.b16 %v356
    %v6626 = vunpack.c.h.b16 %v356
    %v6627 = vunpack.c.l.b16 %v357
    %v6628 = vunpack.c.h.b16 %v357
    %v6629 = vunpack.c.l.b16 %v358
    %v6630 = vunpack.c.h.b16 %v358
    %v6631 = vunpack.c.l.b16 %v359
    %v6632 = vunpack.c.h.b16 %v359
    %v6633 = vunpack.c.l.b16 %v360
    %v6634 = vunpack.c.h.b16 %v360
    %v6635 = vunpack.c.l.b16 %v361
    %v6636 = vunpack.c.h.b16 %v361
    %v6637 = vunpack.c.l.b16 %v362
    %v6638 = vunpack.c.h.b16 %v362
    %v6639 = vunpack.c.l.b16 %v363
    %v6640 = vunpack.c.h.b16 %v363
    %v6641 = vunpack.c.l.b16 %v364
    %v6642 = vunpack.c.h.b16 %v364
    %v6643 = vunpack.c.l.b16 %v365
    %v6644 = vunpack.c.h.b16 %v365
    %v6645 = vunpack.c.l.b16 %v366
    %v6646 = vunpack.c.h.b16 %v366
    %v6647 = vunpack.c.l.b16 %v367
    %v6648 = vunpack.c.h.b16 %v367
    %v6649 = vunpack.c.l.b16 %v368
    %v6650 = vunpack.c.h.b16 %v368
    %v6651 = vunpack.c.l.b16 %v369
    %v6652 = vunpack.c.h.b16 %v369
    %v6653 = vunpack.c.l.b16 %v370
    %v6654 = vunpack.c.h.b16 %v370
    %v6655 = vunpack.c.l.b16 %v371
    %v6656 = vunpack.c.h.b16 %v371
    %v6657 = vunpack.c.l.b16 %v372
    %v6658 = vunpack.c.h.b16 %v372
    %v6659 = vunpack.c.l.b16 %v373
    %v6660 = vunpack.c.h.b16 %v373
    %v6661 = vunpack.c.l.b16 %v374
    %v6662 = vunpack.c.h.b16 %v374
    %v6663 = vunpack.c.l.b16 %v375
    %v6664 = vunpack.c.h.b16 %v375
    %v6665 = vunpack.c.l.b16 %v376
    %v6666 = vunpack.c.h.b16 %v376
    %v6667 = vunpack.c.l.b16 %v377
    %v6668 = vunpack.c.h.b16 %v377
    %v6669 = vunpack.c.l.b16 %v378
    %v6670 = vunpack.c.h.b16 %v378
    %v6671 = vunpack.c.l.b16 %v379
    %v6672 = vunpack.c.h.b16 %v379
    %v6673 = vunpack.c.l.b16 %v380
    %v6674 = vunpack.c.h.b16 %v380
    %v6675 = vunpack.c.l.b16 %v381
    %v6676 = vunpack.c.h.b16 %v381
    %v6677 = vunpack.c.l.b16 %v382
    %v6678 = vunpack.c.h.b16 %v382
    %v6679 = vunpack.c.l.b16 %v383
    %v6680 = vunpack.c.h.b16 %v383
    %v6681 = vunpack.c.l.b16 %v384
    %v6682 = vunpack.c.h.b16 %v384
    %v6683 = vunpack.c.l.b16 %v385
    %v6684 = vunpack.c.h.b16 %v385
    %v6685 = vunpack.c.l.b16 %v386
    %v6686 = vunpack.c.h.b16 %v386
    %v6687 = vunpack.c.l.b16 %v387
    %v6688 = vunpack.c.h.b16 %v387
    %v6689 = vunpack.c.l.b16 %v388
    %v6690 = vunpack.c.h.b16 %v388
    %v6691 = vunpack.c.l.b16 %v389
    %v6692 = vunpack.c.h.b16 %v389
    %v6693 = vunpack.c.l.b16 %v390
    %v6694 = vunpack.c.h.b16 %v390
    %v6695 = vunpack.c.l.b16 %v391
    %v6696 = vunpack.c.h.b16 %v391
    %v6697 = vunpack.c.l.b16 %v392
    %v6698 = vunpack.c.h.b16 %v392
    %v6699 = vunpack.c.l.b16 %v393
    %v6700 = vunpack.c.h.b16 %v393
    %v6701 = vunpack.c.l.b16 %v394
    %v6702 = vunpack.c.h.b16 %v394
    %v6703 = vunpack.c.l.b16 %v395
    %v6704 = vunpack.c.h.b16 %v395
    %v6705 = vunpack.c.l.b16 %v396
    %v6706 = vunpack.c.h.b16 %v396
    %v6707 = vunpack.c.l.b16 %v397
    %v6708 = vunpack.c.h.b16 %v397
    %v6709 = vunpack.c.l.b16 %v398
    %v6710 = vunpack.c.h.b16 %v398
    %v6711 = vunpack.c.l.b16 %v399
    %v6712 = vunpack.c.h.b16 %v399
    %v6713 = vunpack.c.l.b16 %v400
    %v6714 = vunpack.c.h.b16 %v400
    %v6715 = vunpack.c.l.b16 %v401
    %v6716 = vunpack.c.h.b16 %v401
    %v6717 = vunpack.c.l.b16 %v402
    %v6718 = vunpack.c.h.b16 %v402
    %v6719 = vunpack.c.l.b16 %v403
    %v6720 = vunpack.c.h.b16 %v403
    %v6721 = vunpack.c.l.b16 %v404
    %v6722 = vunpack.c.h.b16 %v404
    %v6723 = vunpack.c.l.b16 %v405
    %v6724 = vunpack.c.h.b16 %v405
    %v6725 = vunpack.c.l.b16 %v406
    %v6726 = vunpack.c.h.b16 %v406
    %v6727 = vunpack.c.l.b16 %v407
    %v6728 = vunpack.c.h.b16 %v407
    %v6729 = vunpack.c.l.b16 %v408
    %v6730 = vunpack.c.h.b16 %v408
    %v6731 = vunpack.c.l.b16 %v409
    %v6732 = vunpack.c.h.b16 %v409
    %v6733 = vunpack.c.l.b16 %v410
    %v6734 = vunpack.c.h.b16 %v410
    %v6735 = vunpack.c.l.b16 %v411
    %v6736 = vunpack.c.h.b16 %v411
    %v6737 = vunpack.c.l.b16 %v412
    %v6738 = vunpack.c.h.b16 %v412
    %v6739 = vunpack.c.l.b16 %v413
    %v6740 = vunpack.c.h.b16 %v413
    %v6741 = vunpack.c.l.b16 %v414
    %v6742 = vunpack.c.h.b16 %v414
    %v6743 = vunpack.c.l.b16 %v415
    %v6744 = vunpack.c.h.b16 %v415
    %v6745 = vunpack.c.l.b16 %v416
    %v6746 = vunpack.c.h.b16 %v416
    %v6747 = vunpack.c.l.b16 %v417
    %v6748 = vunpack.c.h.b16 %v417
    %v6749 = vunpack.c.l.b16 %v418
    %v6750 = vunpack.c.h.b16 %v418
    %v6751 = vunpack.c.l.b16 %v419
    %v6752 = vunpack.c.h.b16 %v419
    %v6753 = vunpack.c.l.b16 %v420
    %v6754 = vunpack.c.h.b16 %v420
    %v6755 = vunpack.c.l.b16 %v421
    %v6756 = vunpack.c.h.b16 %v421
    %v6757 = vunpack.c.l.b16 %v422
    %v6758 = vunpack.c.h.b16 %v422
    %v6759 = vunpack.c.l.b16 %v423
    %v6760 = vunpack.c.h.b16 %v423
    %v6761 = vunpack.c.l.b16 %v424
    %v6762 = vunpack.c.h.b16 %v424
    %v6763 = vunpack.c.l.b16 %v425
    %v6764 = vunpack.c.h.b16 %v425
    %v6765 = vunpack.c.l.b16 %v426
    %v6766 = vunpack.c.h.b16 %v426
    %v6767 = vunpack.c.l.b16 %v427
    %v6768 = vunpack.c.h.b16 %v427
    %v6769 = vunpack.c.l.b16 %v428
    %v6770 = vunpack.c.h.b16 %v428
    %v6771 = vunpack.c.l.b16 %v429
    %v6772 = vunpack.c.h.b16 %v429
    %v6773 = vunpack.c.l.b16 %v430
    %v6774 = vunpack.c.h.b16 %v430
    %v6775 = vunpack.c.l.b16 %v431
    %v6776 = vunpack.c.h.b16 %v431
    %v6777 = vunpack.c.l.b16 %v432
    %v6778 = vunpack.c.h.b16 %v432
    %v6779 = vunpack.c.l.b16 %v433
    %v6780 = vunpack.c.h.b16 %v433
    %v6781 = vunpack.c.l.b16 %v434
    %v6782 = vunpack.c.h.b16 %v434
    %v6783 = vunpack.c.l.b16 %v435
    %v6784 = vunpack.c.h.b16 %v435
    %v6785 = vunpack.c.l.b16 %v436
    %v6786 = vunpack.c.h.b16 %v436
    %v6787 = vunpack.c.l.b16 %v437
    %v6788 = vunpack.c.h.b16 %v437
    %v6789 = vunpack.c.l.b16 %v438
    %v6790 = vunpack.c.h.b16 %v438
    %v6791 = vunpack.c.l.b16 %v439
    %v6792 = vunpack.c.h.b16 %v439
    %v6793 = vunpack.c.l.b16 %v440
    %v6794 = vunpack.c.h.b16 %v440
    %v6795 = vunpack.c.l.b16 %v441
    %v6796 = vunpack.c.h.b16 %v441
    %v6797 = vunpack.c.l.b16 %v442
    %v6798 = vunpack.c.h.b16 %v442
    %v6799 = vunpack.c.l.b16 %v443
    %v6800 = vunpack.c.h.b16 %v443
    %v6801 = vunpack.c.l.b16 %v444
    %v6802 = vunpack.c.h.b16 %v444
    %v6803 = vunpack.c.l.b16 %v445
    %v6804 = vunpack.c.h.b16 %v445
    %v6805 = vunpack.c.l.b16 %v446
    %v6806 = vunpack.c.h.b16 %v446
    %v6807 = vunpack.c.l.b16 %v447
    %v6808 = vunpack.c.h.b16 %v447
    %v6809 = vunpack.c.l.b16 %v448
    %v6810 = vunpack.c.h.b16 %v448
    %v6811 = vunpack.c.l.b16 %v449
    %v6812 = vunpack.c.h.b16 %v449
    %v6813 = vunpack.c.l.b16 %v450
    %v6814 = vunpack.c.h.b16 %v450
    %v6815 = vunpack.c.l.b16 %v451
    %v6816 = vunpack.c.h.b16 %v451
    %v6817 = vunpack.c.l.b16 %v452
    %v6818 = vunpack.c.h.b16 %v452
    %v6819 = vunpack.c.l.b16 %v453
    %v6820 = vunpack.c.h.b16 %v453
    %v6821 = vunpack.c.l.b16 %v454
    %v6822 = vunpack.c.h.b16 %v454
    %v6823 = vunpack.c.l.b16 %v455
    %v6824 = vunpack.c.h.b16 %v455
    %v6825 = vunpack.c.l.b16 %v456
    %v6826 = vunpack.c.h.b16 %v456
    %v6827 = vunpack.c.l.b16 %v457
    %v6828 = vunpack.c.h.b16 %v457
    %v6829 = vunpack.c.l.b16 %v458
    %v6830 = vunpack.c.h.b16 %v458
    %v6831 = vunpack.c.l.b16 %v459
    %v6832 = vunpack.c.h.b16 %v459
    %v6833 = vunpack.c.l.b16 %v460
    %v6834 = vunpack.c.h.b16 %v460
    %v6835 = vunpack.c.l.b16 %v461
    %v6836 = vunpack.c.h.b16 %v461
    %v6837 = vunpack.c.l.b16 %v462
    %v6838 = vunpack.c.h.b16 %v462
    %v6839 = vunpack.c.l.b16 %v463
    %v6840 = vunpack.c.h.b16 %v463
    %v6841 = vunpack.c.l.b16 %v464
    %v6842 = vunpack.c.h.b16 %v464
    %v6843 = vunpack.c.l.b16 %v465
    %v6844 = vunpack.c.h.b16 %v465
    %v6845 = vunpack.c.l.b16 %v466
    %v6846 = vunpack.c.h.b16 %v466
    %v6847 = vunpack.c.l.b16 %v467
    %v6848 = vunpack.c.h.b16 %v467
    %v6849 = vunpack.c.l.b16 %v468
    %v6850 = vunpack.c.h.b16 %v468
    %v6851 = vunpack.c.l.b16 %v469
    %v6852 = vunpack.c.h.b16 %v469
    %v6853 = vunpack.c.l.b16 %v470
    %v6854 = vunpack.c.h.b16 %v470
    %v6855 = vunpack.c.l.b16 %v471
    %v6856 = vunpack.c.h.b16 %v471
    %v6857 = vunpack.c.l.b16 %v472
    %v6858 = vunpack.c.h.b16 %v472
    %v6859 = vunpack.c.l.b16 %v473
    %v6860 = vunpack.c.h.b16 %v473
    %v6861 = vunpack.c.l.b16 %v474
    %v6862 = vunpack.c.h.b16 %v474
    %v6863 = vunpack.c.l.b16 %v475
    %v6864 = vunpack.c.h.b16 %v475
    %v6865 = vunpack.c.l.b16 %v476
    %v6866 = vunpack.c.h.b16 %v476
    %v6867 = vunpack.c.l.b16 %v477
    %v6868 = vunpack.c.h.b16 %v477
    %v6869 = vunpack.c.l.b16 %v478
    %v6870 = vunpack.c.h.b16 %v478
    %v6871 = vunpack.c.l.b16 %v479
    %v6872 = vunpack.c.h.b16 %v479
    %v6873 = vunpack.c.l.b16 %v480
    %v6874 = vunpack.c.h.b16 %v480
    %v6875 = vunpack.c.l.b16 %v481
    %v6876 = vunpack.c.h.b16 %v481
    %v6877 = vunpack.c.l.b16 %v482
    %v6878 = vunpack.c.h.b16 %v482
    %v6879 = vunpack.c.l.b16 %v483
    %v6880 = vunpack.c.h.b16 %v483
    %v6881 = vunpack.c.l.b16 %v484
    %v6882 = vunpack.c.h.b16 %v484
    %v6883 = vunpack.c.l.b16 %v485
    %v6884 = vunpack.c.h.b16 %v485
    %v6885 = vunpack.c.l.b16 %v486
    %v6886 = vunpack.c.h.b16 %v486
    %v6887 = vunpack.c.l.b16 %v487
    %v6888 = vunpack.c.h.b16 %v487
    %v6889 = vunpack.c.l.b16 %v488
    %v6890 = vunpack.c.h.b16 %v488
    %v6891 = vunpack.c.l.b16 %v489
    %v6892 = vunpack.c.h.b16 %v489
    %v6893 = vunpack.c.l.b16 %v490
    %v6894 = vunpack.c.h.b16 %v490
    %v6895 = vunpack.c.l.b16 %v491
    %v6896 = vunpack.c.h.b16 %v491
    %v6897 = vunpack.c.l.b16 %v492
    %v6898 = vunpack.c.h.b16 %v492
    %v6899 = vunpack.c.l.b16 %v493
    %v6900 = vunpack.c.h.b16 %v493
    %v6901 = vunpack.c.l.b16 %v494
    %v6902 = vunpack.c.h.b16 %v494
    %v6903 = vunpack.c.l.b16 %v495
    %v6904 = vunpack.c.h.b16 %v495
    %v6905 = vunpack.c.l.b16 %v496
    %v6906 = vunpack.c.h.b16 %v496
    %v6907 = vunpack.c.l.b16 %v497
    %v6908 = vunpack.c.h.b16 %v497
    %v6909 = vunpack.c.l.b16 %v498
    %v6910 = vunpack.c.h.b16 %v498
    %v6911 = vunpack.c.l.b16 %v499
    %v6912 = vunpack.c.h.b16 %v499
    %v6913 = vunpack.c.l.b16 %v500
    %v6914 = vunpack.c.h.b16 %v500
    %v6915 = vunpack.c.l.b16 %v501
    %v6916 = vunpack.c.h.b16 %v501
    %v6917 = vunpack.c.l.b16 %v502
    %v6918 = vunpack.c.h.b16 %v502
    %v6919 = vunpack.c.l.b16 %v503
    %v6920 = vunpack.c.h.b16 %v503
    %v6921 = vunpack.c.l.b16 %v504
    %v6922 = vunpack.c.h.b16 %v504
    %v6923 = vunpack.c.l.b16 %v505
    %v6924 = vunpack.c.h.b16 %v505
    %v6925 = vunpack.c.l.b16 %v506
    %v6926 = vunpack.c.h.b16 %v506
    %v6927 = vunpack.c.l.b16 %v507
    %v6928 = vunpack.c.h.b16 %v507
    %v6929 = vunpack.c.l.b16 %v508
    %v6930 = vunpack.c.h.b16 %v508
    %v6931 = vunpack.c.l.b16 %v509
    %v6932 = vunpack.c.h.b16 %v509
    %v6933 = vunpack.c.l.b16 %v510
    %v6934 = vunpack.c.h.b16 %v510
    %v6935 = vunpack.c.l.b16 %v511
    %v6936 = vunpack.c.h.b16 %v511
    %v6937 = vunpack.c.l.b16 %v512
    %v6938 = vunpack.c.h.b16 %v512
    %v6939 = vunpack.c.l.b16 %v513
    %v6940 = vunpack.c.h.b16 %v513
    %v6941 = vunpack.c.l.b16 %v514
    %v6942 = vunpack.c.h.b16 %v514
    %v6943 = vunpack.c.l.b16 %v515
    %v6944 = vunpack.c.h.b16 %v515
    %v6945 = vunpack.c.l.b16 %v516
    %v6946 = vunpack.c.h.b16 %v516
    %v6947 = vunpack.c.l.b16 %v517
    %v6948 = vunpack.c.h.b16 %v517
    %v6949 = vunpack.c.l.b16 %v518
    %v6950 = vunpack.c.h.b16 %v518
    %v6951 = vunpack.c.l.b16 %v519
    %v6952 = vunpack.c.h.b16 %v519
    %v6953 = vunpack.c.l.b16 %v520
    %v6954 = vunpack.c.h.b16 %v520
    %v6955 = vunpack.c.l.b16 %v521
    %v6956 = vunpack.c.h.b16 %v521
    %v6957 = vunpack.c.l.b16 %v522
    %v6958 = vunpack.c.h.b16 %v522
    %v6959 = vunpack.c.l.b16 %v523
    %v6960 = vunpack.c.h.b16 %v523
    %v6961 = vunpack.c.l.b16 %v524
    %v6962 = vunpack.c.h.b16 %v524
    %v6963 = vunpack.c.l.b16 %v525
    %v6964 = vunpack.c.h.b16 %v525
    %v6965 = vunpack.c.l.b16 %v526
    %v6966 = vunpack.c.h.b16 %v526
    %v6967 = vunpack.c.l.b16 %v527
    %v6968 = vunpack.c.h.b16 %v527
    %v6969 = vunpack.c.l.b16 %v528
    %v6970 = vunpack.c.h.b16 %v528
    %v6971 = vunpack.c.l.b16 %v529
    %v6972 = vunpack.c.h.b16 %v529
    %v6973 = vunpack.c.l.b16 %v530
    %v6974 = vunpack.c.h.b16 %v530
    %v6975 = vunpack.c.l.b16 %v531
    %v6976 = vunpack.c.h.b16 %v531
    %v6977 = vunpack.c.l.b16 %v532
    %v6978 = vunpack.c.h.b16 %v532
    %v6979 = vunpack.c.l.b16 %v533
    %v6980 = vunpack.c.h.b16 %v533
    %v6981 = vunpack.c.l.b16 %v534
    %v6982 = vunpack.c.h.b16 %v534
    %v6983 = vunpack.c.l.b16 %v535
    %v6984 = vunpack.c.h.b16 %v535
    %v6985 = vunpack.c.l.b16 %v536
    %v6986 = vunpack.c.h.b16 %v536
    %v6987 = vunpack.c.l.b16 %v537
    %v6988 = vunpack.c.h.b16 %v537
    %v6989 = vunpack.c.l.b16 %v538
    %v6990 = vunpack.c.h.b16 %v538
    %v6991 = vunpack.c.l.b16 %v539
    %v6992 = vunpack.c.h.b16 %v539
    %v6993 = vunpack.c.l.b16 %v540
    %v6994 = vunpack.c.h.b16 %v540
    %v6995 = vunpack.c.l.b16 %v541
    %v6996 = vunpack.c.h.b16 %v541
    %v6997 = vunpack.c.l.b16 %v542
    %v6998 = vunpack.c.h.b16 %v542
    %v6999 = vunpack.c.l.b16 %v543
    %v7000 = vunpack.c.h.b16 %v543
    %v7001 = vunpack.c.l.b16 %v544
    %v7002 = vunpack.c.h.b16 %v544
    %v7003 = vunpack.c.l.b16 %v545
    %v7004 = vunpack.c.h.b16 %v545
    %v7005 = vunpack.c.l.b16 %v546
    %v7006 = vunpack.c.h.b16 %v546
    %v7007 = vunpack.c.l.b16 %v547
    %v7008 = vunpack.c.h.b16 %v547
    %v7009 = vunpack.c.l.b16 %v548
    %v7010 = vunpack.c.h.b16 %v548
    %v7011 = vunpack.c.l.b16 %v549
    %v7012 = vunpack.c.h.b16 %v549
    %v7013 = vunpack.c.l.b16 %v550
    %v7014 = vunpack.c.h.b16 %v550
    %v7015 = vunpack.c.l.b16 %v551
    %v7016 = vunpack.c.h.b16 %v551
    %v7017 = vunpack.c.l.b16 %v552
    %v7018 = vunpack.c.h.b16 %v552
    %v7019 = vunpack.c.l.b16 %v553
    %v7020 = vunpack.c.h.b16 %v553
    %v7021 = vunpack.c.l.b16 %v554
    %v7022 = vunpack.c.h.b16 %v554
    %v7023 = vunpack.c.l.b16 %v555
    %v7024 = vunpack.c.h.b16 %v555
    %v7025 = vunpack.c.l.b16 %v556
    %v7026 = vunpack.c.h.b16 %v556
    %v7027 = vunpack.c.l.b16 %v557
    %v7028 = vunpack.c.h.b16 %v557
    %v7029 = vunpack.c.l.b16 %v558
    %v7030 = vunpack.c.h.b16 %v558
    %v7031 = vunpack.c.l.b16 %v559
    %v7032 = vunpack.c.h.b16 %v559
    %v7033 = vunpack.c.l.b16 %v560
    %v7034 = vunpack.c.h.b16 %v560
    %v7035 = vunpack.c.l.b16 %v561
    %v7036 = vunpack.c.h.b16 %v561
    %v7037 = vunpack.c.l.b16 %v562
    %v7038 = vunpack.c.h.b16 %v562
    %v7039 = vunpack.c.l.b16 %v563
    %v7040 = vunpack.c.h.b16 %v563
    %v7041 = vunpack.c.l.b16 %v564
    %v7042 = vunpack.c.h.b16 %v564
    %v7043 = vunpack.c.l.b16 %v565
    %v7044 = vunpack.c.h.b16 %v565
    %v7045 = vunpack.c.l.b16 %v566
    %v7046 = vunpack.c.h.b16 %v566
    %v7047 = vunpack.c.l.b16 %v567
    %v7048 = vunpack.c.h.b16 %v567
    %v7049 = vunpack.c.l.b16 %v568
    %v7050 = vunpack.c.h.b16 %v568
    %v7051 = vunpack.c.l.b16 %v569
    %v7052 = vunpack.c.h.b16 %v569
    %v7053 = vunpack.c.l.b16 %v570
    %v7054 = vunpack.c.h.b16 %v570
    %v7055 = vunpack.c.l.b16 %v571
    %v7056 = vunpack.c.h.b16 %v571
    %v7057 = vunpack.c.l.b16 %v572
    %v7058 = vunpack.c.h.b16 %v572
    %v7059 = vunpack.c.l.b16 %v573
    %v7060 = vunpack.c.h.b16 %v573
    %v7061 = vunpack.c.l.b16 %v574
    %v7062 = vunpack.c.h.b16 %v574
    %v7063 = vunpack.c.l.b16 %v575
    %v7064 = vunpack.c.h.b16 %v575
    %v7065 = vunpack.c.l.b16 %v576
    %v7066 = vunpack.c.h.b16 %v576
    %v7067 = vunpack.c.l.b16 %v577
    %v7068 = vunpack.c.h.b16 %v577
    %v7069 = vunpack.c.l.b16 %v578
    %v7070 = vunpack.c.h.b16 %v578
    %v7071 = vunpack.c.l.b16 %v579
    %v7072 = vunpack.c.h.b16 %v579
    %v7073 = vunpack.c.l.b16 %v580
    %v7074 = vunpack.c.h.b16 %v580
    %v7075 = vunpack.c.l.b16 %v581
    %v7076 = vunpack.c.h.b16 %v581
    %v7077 = vunpack.c.l.b16 %v582
    %v7078 = vunpack.c.h.b16 %v582
    %v7079 = vunpack.c.l.b16 %v583
    %v7080 = vunpack.c.h.b16 %v583
    %v7081 = vunpack.c.l.b16 %v584
    %v7082 = vunpack.c.h.b16 %v584
    %v7083 = vunpack.c.l.b16 %v585
    %v7084 = vunpack.c.h.b16 %v585
    %v7085 = vunpack.c.l.b16 %v586
    %v7086 = vunpack.c.h.b16 %v586
    %v7087 = vunpack.c.l.b16 %v587
    %v7088 = vunpack.c.h.b16 %v587
    %v7089 = vunpack.c.l.b16 %v588
    %v7090 = vunpack.c.h.b16 %v588
    %v7091 = vunpack.c.l.b16 %v589
    %v7092 = vunpack.c.h.b16 %v589
    %v7093 = vunpack.c.l.b16 %v590
    %v7094 = vunpack.c.h.b16 %v590
    %v7095 = vunpack.c.l.b16 %v591
    %v7096 = vunpack.c.h.b16 %v591
    %v7097 = vunpack.c.l.b16 %v592
    %v7098 = vunpack.c.h.b16 %v592
    %v7099 = vunpack.c.l.b16 %v593
    %v7100 = vunpack.c.h.b16 %v593
    %v7101 = vunpack.c.l.b16 %v594
    %v7102 = vunpack.c.h.b16 %v594
    %v7103 = vunpack.c.l.b16 %v595
    %v7104 = vunpack.c.h.b16 %v595
    %v7105 = vunpack.c.l.b16 %v596
    %v7106 = vunpack.c.h.b16 %v596
    %v7107 = vunpack.c.l.b16 %v597
    %v7108 = vunpack.c.h.b16 %v597
    %v7109 = vunpack.c.l.b16 %v598
    %v7110 = vunpack.c.h.b16 %v598
    %v7111 = vunpack.c.l.b16 %v599
    %v7112 = vunpack.c.h.b16 %v599
    %v7113 = vunpack.c.l.b16 %v600
    %v7114 = vunpack.c.h.b16 %v600
    %v7115 = vunpack.c.l.b16 %v601
    %v7116 = vunpack.c.h.b16 %v601
    %v7117 = vunpack.c.l.b16 %v602
    %v7118 = vunpack.c.h.b16 %v602
    %v7119 = vunpack.c.l.b16 %v603
    %v7120 = vunpack.c.h.b16 %v603
    %v7121 = vunpack.c.l.b16 %v604
    %v7122 = vunpack.c.h.b16 %v604
    %v7123 = vunpack.c.l.b16 %v605
    %v7124 = vunpack.c.h.b16 %v605
    %v7125 = vunpack.c.l.b16 %v606
    %v7126 = vunpack.c.h.b16 %v606
    %v7127 = vunpack.c.l.b16 %v607
    %v7128 = vunpack.c.h.b16 %v607
    %v7129 = vunpack.c.l.b16 %v608
    %v7130 = vunpack.c.h.b16 %v608
    %v7131 = vunpack.c.l.b16 %v609
    %v7132 = vunpack.c.h.b16 %v609
    %v7133 = vunpack.c.l.b16 %v610
    %v7134 = vunpack.c.h.b16 %v610
    %v7135 = vunpack.c.l.b16 %v611
    %v7136 = vunpack.c.h.b16 %v611
    %v7137 = vunpack.c.l.b16 %v612
    %v7138 = vunpack.c.h.b16 %v612
    %v7139 = vunpack.c.l.b16 %v613
    %v7140 = vunpack.c.h.b16 %v613
    %v7141 = vunpack.c.l.b16 %v614
    %v7142 = vunpack.c.h.b16 %v614
    %v7143 = vunpack.c.l.b16 %v615
    %v7144 = vunpack.c.h.b16 %v615
    %v7145 = vunpack.c.l.b16 %v616
    %v7146 = vunpack.c.h.b16 %v616
    %v7147 = vunpack.c.l.b16 %v617
    %v7148 = vunpack.c.h.b16 %v617
    %v7149 = vunpack.c.l.b16 %v618
    %v7150 = vunpack.c.h.b16 %v618
    %v7151 = vunpack.c.l.b16 %v619
    %v7152 = vunpack.c.h.b16 %v619
    %v7153 = vunpack.c.l.b16 %v620
    %v7154 = vunpack.c.h.b16 %v620
    %v7155 = vunpack.c.l.b16 %v621
    %v7156 = vunpack.c.h.b16 %v621
    %v7157 = vunpack.c.l.b16 %v622
    %v7158 = vunpack.c.h.b16 %v622
    %v7159 = vunpack.c.l.b16 %v623
    %v7160 = vunpack.c.h.b16 %v623
    %v7161 = vunpack.c.l.b16 %v624
    %v7162 = vunpack.c.h.b16 %v624
    %v7163 = vunpack.c.l.b16 %v625
    %v7164 = vunpack.c.h.b16 %v625
    %v7165 = vunpack.c.l.b16 %v626
    %v7166 = vunpack.c.h.b16 %v626
    %v7167 = vunpack.c.l.b16 %v627
    %v7168 = vunpack.c.h.b16 %v627
    %v7169 = vunpack.c.l.b16 %v628
    %v7170 = vunpack.c.h.b16 %v628
    %v7171 = vunpack.c.l.b16 %v629
    %v7172 = vunpack.c.h.b16 %v629
    %v7173 = vunpack.c.l.b16 %v630
    %v7174 = vunpack.c.h.b16 %v630
    %v7175 = vunpack.c.l.b16 %v631
    %v7176 = vunpack.c.h.b16 %v631
    %v7177 = vunpack.c.l.b16 %v632
    %v7178 = vunpack.c.h.b16 %v632
    %v7179 = vunpack.c.l.b16 %v633
    %v7180 = vunpack.c.h.b16 %v633
    %v7181 = vunpack.c.l.b16 %v634
    %v7182 = vunpack.c.h.b16 %v634
    %v7183 = vunpack.c.l.b16 %v635
    %v7184 = vunpack.c.h.b16 %v635
    %v7185 = vunpack.c.l.b16 %v636
    %v7186 = vunpack.c.h.b16 %v636
    %v7187 = vunpack.c.l.b16 %v637
    %v7188 = vunpack.c.h.b16 %v637
    %v7189 = vunpack.c.l.b16 %v638
    %v7190 = vunpack.c.h.b16 %v638
    %v7191 = vunpack.c.l.b16 %v639
    %v7192 = vunpack.c.h.b16 %v639
    %v7193 = vunpack.c.l.b16 %v640
    %v7194 = vunpack.c.h.b16 %v640
    %v7195 = vunpack.c.l.b16 %v641
    %v7196 = vunpack.c.h.b16 %v641
    %v7197 = vunpack.c.l.b16 %v642
    %v7198 = vunpack.c.h.b16 %v642
    %v7199 = vunpack.c.l.b16 %v643
    %v7200 = vunpack.c.h.b16 %v643
    %v7201 = vunpack.c.l.b16 %v644
    %v7202 = vunpack.c.h.b16 %v644
    %v7203 = vunpack.c.l.b16 %v645
    %v7204 = vunpack.c.h.b16 %v645
    %v7205 = vunpack.c.l.b16 %v646
    %v7206 = vunpack.c.h.b16 %v646
    %v7207 = vunpack.c.l.b16 %v647
    %v7208 = vunpack.c.h.b16 %v647
    %v7209 = vunpack.c.l.b16 %v648
    %v7210 = vunpack.c.h.b16 %v648
    %v7211 = vunpack.c.l.b16 %v649
    %v7212 = vunpack.c.h.b16 %v649
    %v7213 = vunpack.c.l.b16 %v650
    %v7214 = vunpack.c.h.b16 %v650
    %v7215 = vunpack.c.l.b16 %v651
    %v7216 = vunpack.c.h.b16 %v651
    %v7217 = vunpack.c.l.b16 %v652
    %v7218 = vunpack.c.h.b16 %v652
    %v7219 = vunpack.c.l.b16 %v653
    %v7220 = vunpack.c.h.b16 %v653
    %v7221 = vunpack.c.l.b16 %v654
    %v7222 = vunpack.c.h.b16 %v654
    %v7223 = vunpack.c.l.b16 %v655
    %v7224 = vunpack.c.h.b16 %v655
    %v7225 = vunpack.c.l.b16 %v656
    %v7226 = vunpack.c.h.b16 %v656
    %v7227 = vunpack.c.l.b16 %v657
    %v7228 = vunpack.c.h.b16 %v657
    %v7229 = vunpack.c.l.b16 %v658
    %v7230 = vunpack.c.h.b16 %v658
    %v7231 = vunpack.c.l.b16 %v659
    %v7232 = vunpack.c.h.b16 %v659
    %v7233 = vunpack.c.l.b16 %v660
    %v7234 = vunpack.c.h.b16 %v660
    %v7235 = vunpack.c.l.b16 %v661
    %v7236 = vunpack.c.h.b16 %v661
    %v7237 = vunpack.c.l.b16 %v662
    %v7238 = vunpack.c.h.b16 %v662
    %v7239 = vunpack.c.l.b16 %v663
    %v7240 = vunpack.c.h.b16 %v663
    %v7241 = vunpack.c.l.b16 %v664
    %v7242 = vunpack.c.h.b16 %v664
    %v7243 = vunpack.c.l.b16 %v665
    %v7244 = vunpack.c.h.b16 %v665
    %v7245 = vunpack.c.l.b16 %v666
    %v7246 = vunpack.c.h.b16 %v666
    %v7247 = vunpack.c.l.b16 %v667
    %v7248 = vunpack.c.h.b16 %v667
    %v7249 = vunpack.c.l.b16 %v668
    %v7250 = vunpack.c.h.b16 %v668
    %v7251 = vunpack.c.l.b16 %v669
    %v7252 = vunpack.c.h.b16 %v669
    %v7253 = vunpack.c.l.b16 %v670
    %v7254 = vunpack.c.h.b16 %v670
    %v7255 = vunpack.c.l.b16 %v671
    %v7256 = vunpack.c.h.b16 %v671
    %v7257 = vunpack.c.l.b16 %v672
    %v7258 = vunpack.c.h.b16 %v672
    %v7259 = vunpack.c.l.b16 %v673
    %v7260 = vunpack.c.h.b16 %v673
    %v7261 = vunpack.c.l.b16 %v674
    %v7262 = vunpack.c.h.b16 %v674
    %v7263 = vunpack.c.l.b16 %v675
    %v7264 = vunpack.c.h.b16 %v675
    %v7265 = vunpack.c.l.b16 %v676
    %v7266 = vunpack.c.h.b16 %v676
    %v7267 = vunpack.c.l.b16 %v677
    %v7268 = vunpack.c.h.b16 %v677
    %v7269 = vunpack.c.l.b16 %v678
    %v7270 = vunpack.c.h.b16 %v678
    %v7271 = vunpack.c.l.b16 %v679
    %v7272 = vunpack.c.h.b16 %v679
    %v7273 = vunpack.c.l.b16 %v680
    %v7274 = vunpack.c.h.b16 %v680
    %v7275 = vunpack.c.l.b16 %v681
    %v7276 = vunpack.c.h.b16 %v681
    %v7277 = vunpack.c.l.b16 %v682
    %v7278 = vunpack.c.h.b16 %v682
    %v7279 = vunpack.c.l.b16 %v683
    %v7280 = vunpack.c.h.b16 %v683
    %v7281 = vunpack.c.l.b16 %v684
    %v7282 = vunpack.c.h.b16 %v684
    %v7283 = vunpack.c.l.b16 %v685
    %v7284 = vunpack.c.h.b16 %v685
    %v7285 = vunpack.c.l.b16 %v686
    %v7286 = vunpack.c.h.b16 %v686
    %v7287 = vunpack.c.l.b16 %v687
    %v7288 = vunpack.c.h.b16 %v687
    %v7289 = vunpack.c.l.b16 %v688
    %v7290 = vunpack.c.h.b16 %v688
    %v7291 = vunpack.c.l.b16 %v689
    %v7292 = vunpack.c.h.b16 %v689
    %v7293 = vunpack.c.l.b16 %v690
    %v7294 = vunpack.c.h.b16 %v690
    %v7295 = vunpack.c.l.b16 %v691
    %v7296 = vunpack.c.h.b16 %v691
    %v7297 = vunpack.c.l.b16 %v692
    %v7298 = vunpack.c.h.b16 %v692
    %v7299 = vunpack.c.l.b16 %v693
    %v7300 = vunpack.c.h.b16 %v693
    %v7301 = vunpack.c.l.b16 %v694
    %v7302 = vunpack.c.h.b16 %v694
    %v7303 = vunpack.c.l.b16 %v695
    %v7304 = vunpack.c.h.b16 %v695
    %v7305 = vunpack.c.l.b16 %v696
    %v7306 = vunpack.c.h.b16 %v696
    %v7307 = vunpack.c.l.b16 %v697
    %v7308 = vunpack.c.h.b16 %v697
    %v7309 = vunpack.c.l.b16 %v698
    %v7310 = vunpack.c.h.b16 %v698
    %v7311 = vunpack.c.l.b16 %v699
    %v7312 = vunpack.c.h.b16 %v699
    %v7313 = vunpack.c.l.b16 %v700
    %v7314 = vunpack.c.h.b16 %v700
    %v7315 = vunpack.c.l.b16 %v701
    %v7316 = vunpack.c.h.b16 %v701
    %v7317 = vunpack.c.l.b16 %v702
    %v7318 = vunpack.c.h.b16 %v702
    %v7319 = vunpack.c.l.b16 %v703
    %v7320 = vunpack.c.h.b16 %v703
    %v7321 = vunpack.c.l.b16 %v704
    %v7322 = vunpack.c.h.b16 %v704
    %v7323 = vunpack.c.l.b16 %v705
    %v7324 = vunpack.c.h.b16 %v705
    %v7325 = vunpack.c.l.b16 %v706
    %v7326 = vunpack.c.h.b16 %v706
    %v7327 = vunpack.c.l.b16 %v707
    %v7328 = vunpack.c.h.b16 %v707
    %v7329 = vunpack.c.l.b16 %v708
    %v7330 = vunpack.c.h.b16 %v708
    %v7331 = vunpack.c.l.b16 %v709
    %v7332 = vunpack.c.h.b16 %v709
    %v7333 = vunpack.c.l.b16 %v710
    %v7334 = vunpack.c.h.b16 %v710
    %v7335 = vunpack.c.l.b16 %v711
    %v7336 = vunpack.c.h.b16 %v711
    %v7337 = vunpack.c.l.b16 %v712
    %v7338 = vunpack.c.h.b16 %v712
    %v7339 = vunpack.c.l.b16 %v713
    %v7340 = vunpack.c.h.b16 %v713
    %v7341 = vunpack.c.l.b16 %v714
    %v7342 = vunpack.c.h.b16 %v714
    %v7343 = vunpack.c.l.b16 %v715
    %v7344 = vunpack.c.h.b16 %v715
    %v7345 = vunpack.c.l.b16 %v716
    %v7346 = vunpack.c.h.b16 %v716
    %v7347 = vunpack.c.l.b16 %v717
    %v7348 = vunpack.c.h.b16 %v717
    %v7349 = vunpack.c.l.b16 %v718
    %v7350 = vunpack.c.h.b16 %v718
    %v7351 = vunpack.c.l.b16 %v719
    %v7352 = vunpack.c.h.b16 %v719
    %v7353 = vunpack.c.l.b16 %v720
    %v7354 = vunpack.c.h.b16 %v720
    %v7355 = vunpack.c.l.b16 %v721
    %v7356 = vunpack.c.h.b16 %v721
    %v7357 = vunpack.c.l.b16 %v722
    %v7358 = vunpack.c.h.b16 %v722
    %v7359 = vunpack.c.l.b16 %v723
    %v7360 = vunpack.c.h.b16 %v723
    %v7361 = vunpack.c.l.b16 %v724
    %v7362 = vunpack.c.h.b16 %v724
    %v7363 = vunpack.c.l.b16 %v725
    %v7364 = vunpack.c.h.b16 %v725
    %v7365 = vunpack.c.l.b16 %v726
    %v7366 = vunpack.c.h.b16 %v726
    %v7367 = vunpack.c.l.b16 %v727
    %v7368 = vunpack.c.h.b16 %v727
    %v7369 = vunpack.c.l.b16 %v728
    %v7370 = vunpack.c.h.b16 %v728
    %v7371 = vunpack.c.l.b16 %v729
    %v7372 = vunpack.c.h.b16 %v729
    %v7373 = vunpack.c.l.b16 %v730
    %v7374 = vunpack.c.h.b16 %v730
    %v7375 = vunpack.c.l.b16 %v731
    %v7376 = vunpack.c.h.b16 %v731
    %v7377 = vunpack.c.l.b16 %v732
    %v7378 = vunpack.c.h.b16 %v732
    %v7379 = vunpack.c.l.b16 %v733
    %v7380 = vunpack.c.h.b16 %v733
    %v7381 = vunpack.c.l.b16 %v734
    %v7382 = vunpack.c.h.b16 %v734
    %v7383 = vunpack.c.l.b16 %v735
    %v7384 = vunpack.c.h.b16 %v735
    %v7385 = vunpack.c.l.b16 %v736
    %v7386 = vunpack.c.h.b16 %v736
    %v7387 = vunpack.c.l.b16 %v737
    %v7388 = vunpack.c.h.b16 %v737
    %v7389 = vunpack.c.l.b16 %v738
    %v7390 = vunpack.c.h.b16 %v738
    %v7391 = vunpack.c.l.b16 %v739
    %v7392 = vunpack.c.h.b16 %v739
    %v7393 = vunpack.c.l.b16 %v740
    %v7394 = vunpack.c.h.b16 %v740
    %v7395 = vunpack.c.l.b16 %v741
    %v7396 = vunpack.c.h.b16 %v741
    %v7397 = vunpack.c.l.b16 %v742
    %v7398 = vunpack.c.h.b16 %v742
    %v7399 = vunpack.c.l.b16 %v743
    %v7400 = vunpack.c.h.b16 %v743
    %v7401 = vunpack.c.l.b16 %v744
    %v7402 = vunpack.c.h.b16 %v744
    %v7403 = vunpack.c.l.b16 %v745
    %v7404 = vunpack.c.h.b16 %v745
    %v7405 = vunpack.c.l.b16 %v746
    %v7406 = vunpack.c.h.b16 %v746
    %v7407 = vunpack.c.l.b16 %v747
    %v7408 = vunpack.c.h.b16 %v747
    %v7409 = vunpack.c.l.b16 %v748
    %v7410 = vunpack.c.h.b16 %v748
    %v7411 = vunpack.c.l.b16 %v749
    %v7412 = vunpack.c.h.b16 %v749
    %v7413 = vunpack.c.l.b16 %v750
    %v7414 = vunpack.c.h.b16 %v750
    %v7415 = vunpack.c.l.b16 %v751
    %v7416 = vunpack.c.h.b16 %v751
    %v7417 = vunpack.c.l.b16 %v752
    %v7418 = vunpack.c.h.b16 %v752
    %v7419 = vunpack.c.l.b16 %v753
    %v7420 = vunpack.c.h.b16 %v753
    %v7421 = vunpack.c.l.b16 %v754
    %v7422 = vunpack.c.h.b16 %v754
    %v7423 = vunpack.c.l.b16 %v755
    %v7424 = vunpack.c.h.b16 %v755
    %v7425 = vunpack.c.l.b16 %v756
    %v7426 = vunpack.c.h.b16 %v756
    %v7427 = vunpack.c.l.b16 %v757
    %v7428 = vunpack.c.h.b16 %v757
    %v7429 = vunpack.c.l.b16 %v758
    %v7430 = vunpack.c.h.b16 %v758
    %v7431 = vunpack.c.l.b16 %v759
    %v7432 = vunpack.c.h.b16 %v759
    %v7433 = vunpack.c.l.b16 %v760
    %v7434 = vunpack.c.h.b16 %v760
    %v7435 = vunpack.c.l.b16 %v761
    %v7436 = vunpack.c.h.b16 %v761
    %v7437 = vunpack.c.l.b16 %v762
    %v7438 = vunpack.c.h.b16 %v762
    %v7439 = vunpack.c.l.b16 %v763
    %v7440 = vunpack.c.h.b16 %v763
    %v7441 = vunpack.c.l.b16 %v764
    %v7442 = vunpack.c.h.b16 %v764
    %v7443 = vunpack.c.l.b16 %v765
    %v7444 = vunpack.c.h.b16 %v765
    %v7445 = vunpack.c.l.b16 %v766
    %v7446 = vunpack.c.h.b16 %v766
    %v7447 = vunpack.c.l.b16 %v767
    %v7448 = vunpack.c.h.b16 %v767
    %v7449 = vunpack.c.l.b16 %v768
    %v7450 = vunpack.c.h.b16 %v768
    %v7451 = vunpack.c.l.b16 %v769
    %v7452 = vunpack.c.h.b16 %v769
    %v7453 = vunpack.c.l.b16 %v770
    %v7454 = vunpack.c.h.b16 %v770
    %v7455 = vunpack.c.l.b16 %v771
    %v7456 = vunpack.c.h.b16 %v771
    %v7457 = vunpack.c.l.b16 %v772
    %v7458 = vunpack.c.h.b16 %v772
    %v7459 = vunpack.c.l.b16 %v773
    %v7460 = vunpack.c.h.b16 %v773
    %v7461 = vunpack.c.l.b16 %v774
    %v7462 = vunpack.c.h.b16 %v774
    %v7463 = vunpack.c.l.b16 %v775
    %v7464 = vunpack.c.h.b16 %v775
    %v7465 = vunpack.c.l.b16 %v776
    %v7466 = vunpack.c.h.b16 %v776
    %v7467 = vunpack.c.l.b16 %v777
    %v7468 = vunpack.c.h.b16 %v777
    %v7469 = vunpack.c.l.b16 %v778
    %v7470 = vunpack.c.h.b16 %v778
    %v7471 = vunpack.c.l.b16 %v779
    %v7472 = vunpack.c.h.b16 %v779
    %v7473 = vunpack.c.l.b16 %v780
    %v7474 = vunpack.c.h.b16 %v780
    %v7475 = vunpack.c.l.b16 %v781
    %v7476 = vunpack.c.h.b16 %v781
    %v7477 = vunpack.c.l.b16 %v782
    %v7478 = vunpack.c.h.b16 %v782
    %v7479 = vunpack.c.l.b16 %v783
    %v7480 = vunpack.c.h.b16 %v783
    %v7481 = vunpack.c.l.b16 %v784
    %v7482 = vunpack.c.h.b16 %v784
    %v7483 = vunpack.c.l.b16 %v785
    %v7484 = vunpack.c.h.b16 %v785
    %v7485 = vunpack.c.l.b16 %v786
    %v7486 = vunpack.c.h.b16 %v786
    %v7487 = vunpack.c.l.b16 %v787
    %v7488 = vunpack.c.h.b16 %v787
    %v7489 = vunpack.c.l.b16 %v788
    %v7490 = vunpack.c.h.b16 %v788
    %v7491 = vunpack.c.l.b16 %v789
    %v7492 = vunpack.c.h.b16 %v789
    %v7493 = vunpack.c.l.b16 %v790
    %v7494 = vunpack.c.h.b16 %v790
    %v7495 = vunpack.c.l.b16 %v791
    %v7496 = vunpack.c.h.b16 %v791
    %v7497 = vunpack.c.l.b16 %v792
    %v7498 = vunpack.c.h.b16 %v792
    %v7499 = vunpack.c.l.b16 %v793
    %v7500 = vunpack.c.h.b16 %v793
    %v7501 = vunpack.c.l.b16 %v794
    %v7502 = vunpack.c.h.b16 %v794
    %v7503 = vunpack.c.l.b16 %v795
    %v7504 = vunpack.c.h.b16 %v795
    %v7505 = vunpack.c.l.b16 %v796
    %v7506 = vunpack.c.h.b16 %v796
    %v7507 = vunpack.c.l.b16 %v797
    %v7508 = vunpack.c.h.b16 %v797
    %v7509 = vunpack.c.l.b16 %v798
    %v7510 = vunpack.c.h.b16 %v798
    %v7511 = vunpack.c.l.b16 %v799
    %v7512 = vunpack.c.h.b16 %v799
    %v7513 = vunpack.c.l.b16 %v800
    %v7514 = vunpack.c.h.b16 %v800
    %v7515 = vunpack.c.l.b16 %v801
    %v7516 = vunpack.c.h.b16 %v801
    %v7517 = vunpack.c.l.b16 %v802
    %v7518 = vunpack.c.h.b16 %v802
    %v7519 = vunpack.c.l.b16 %v803
    %v7520 = vunpack.c.h.b16 %v803
    %v7521 = vunpack.c.l.b16 %v804
    %v7522 = vunpack.c.h.b16 %v804
    %v7523 = vunpack.c.l.b16 %v805
    %v7524 = vunpack.c.h.b16 %v805
    %v7525 = vunpack.c.l.b16 %v806
    %v7526 = vunpack.c.h.b16 %v806
    %v7527 = vunpack.c.l.b16 %v807
    %v7528 = vunpack.c.h.b16 %v807
    %v7529 = vunpack.c.l.b16 %v808
    %v7530 = vunpack.c.h.b16 %v808
    %v7531 = vunpack.c.l.b16 %v809
    %v7532 = vunpack.c.h.b16 %v809
    %v7533 = vunpack.c.l.b16 %v810
    %v7534 = vunpack.c.h.b16 %v810
    %v7535 = vunpack.c.l.b16 %v811
    %v7536 = vunpack.c.h.b16 %v811
    %v7537 = vunpack.c.l.b16 %v812
    %v7538 = vunpack.c.h.b16 %v812
    %v7539 = vunpack.c.l.b16 %v813
    %v7540 = vunpack.c.h.b16 %v813
    %v7541 = vunpack.c.l.b16 %v814
    %v7542 = vunpack.c.h.b16 %v814
    %v7543 = vunpack.c.l.b16 %v815
    %v7544 = vunpack.c.h.b16 %v815
    %v7545 = vunpack.c.l.b16 %v816
    %v7546 = vunpack.c.h.b16 %v816
    %v7547 = vpack.c.b16 %v6275, %v6267
    %v7548 = vpack.c.b16 %v6276, %v6268
    %v7549 = vpack.c.b16 %v6277, %v6269
    %v7550 = vpack.c.b16 %v6278, %v6270
    %v7551 = vpack.c.b16 %v6279, %v6271
    %v7552 = vpack.c.b16 %v6280, %v6272
    %v7553 = vpack.c.b16 %v6281, %v6273
    %v7554 = vpack.c.b16 %v6282, %v6274
    %v7555 = vpack.c.b16 %v6291, %v6283
    %v7556 = vpack.c.b16 %v6292, %v6284
    %v7557 = vpack.c.b16 %v6293, %v6285
    %v7558 = vpack.c.b16 %v6294, %v6286
    %v7559 = vpack.c.b16 %v6295, %v6287
    %v7560 = vpack.c.b16 %v6296, %v6288
    %v7561 = vpack.c.b16 %v6297, %v6289
    %v7562 = vpack.c.b16 %v6298, %v6290
    %v7563 = vpack.c.b16 %v6307, %v6299
    %v7564 = vpack.c.b16 %v6308, %v6300
    %v7565 = vpack.c.b16 %v6309, %v6301
    %v7566 = vpack.c.b16 %v6310, %v6302
    %v7567 = vpack.c.b16 %v6311, %v6303
    %v7568 = vpack.c.b16 %v6312, %v6304
    %v7569 = vpack.c.b16 %v6313, %v6305
    %v7570 = vpack.c.b16 %v6314, %v6306
    %v7571 = vpack.c.b16 %v6323, %v6315
    %v7572 = vpack.c.b16 %v6324, %v6316
    %v7573 = vpack.c.b16 %v6325, %v6317
    %v7574 = vpack.c.b16 %v6326, %v6318
    %v7575 = vpack.c.b16 %v6327, %v6319
    %v7576 = vpack.c.b16 %v6328, %v6320
    %v7577 = vpack.c.b16 %v6329, %v6321
    %v7578 = vpack.c.b16 %v6330, %v6322
    %v7579 = vpack.c.b16 %v6339, %v6331
    %v7580 = vpack.c.b16 %v6340, %v6332
    %v7581 = vpack.c.b16 %v6341, %v6333
    %v7582 = vpack.c.b16 %v6342, %v6334
    %v7583 = vpack.c.b16 %v6343, %v6335
    %v7584 = vpack.c.b16 %v6344, %v6336
    %v7585 = vpack.c.b16 %v6345, %v6337
    %v7586 = vpack.c.b16 %v6346, %v6338
    %v7587 = vpack.c.b16 %v6355, %v6347
    %v7588 = vpack.c.b16 %v6356, %v6348
    %v7589 = vpack.c.b16 %v6357, %v6349
    %v7590 = vpack.c.b16 %v6358, %v6350
    %v7591 = vpack.c.b16 %v6359, %v6351
    %v7592 = vpack.c.b16 %v6360, %v6352
    %v7593 = vpack.c.b16 %v6361, %v6353
    %v7594 = vpack.c.b16 %v6362, %v6354
    %v7595 = vpack.c.b16 %v6371, %v6363
    %v7596 = vpack.c.b16 %v6372, %v6364
    %v7597 = vpack.c.b16 %v6373, %v6365
    %v7598 = vpack.c.b16 %v6374, %v6366
    %v7599 = vpack.c.b16 %v6375, %v6367
    %v7600 = vpack.c.b16 %v6376, %v6368
    %v7601 = vpack.c.b16 %v6377, %v6369
    %v7602 = vpack.c.b16 %v6378, %v6370
    %v7603 = vpack.c.b16 %v6387, %v6379
    %v7604 = vpack.c.b16 %v6388, %v6380
    %v7605 = vpack.c.b16 %v6389, %v6381
    %v7606 = vpack.c.b16 %v6390, %v6382
    %v7607 = vpack.c.b16 %v6391, %v6383
    %v7608 = vpack.c.b16 %v6392, %v6384
    %v7609 = vpack.c.b16 %v6393, %v6385
    %v7610 = vpack.c.b16 %v6394, %v6386
    %v7611 = vpack.c.b16 %v6403, %v6395
    %v7612 = vpack.c.b16 %v6404, %v6396
    %v7613 = vpack.c.b16 %v6405, %v6397
    %v7614 = vpack.c.b16 %v6406, %v6398
    %v7615 = vpack.c.b16 %v6407, %v6399
    %v7616 = vpack.c.b16 %v6408, %v6400
    %v7617 = vpack.c.b16 %v6409, %v6401
    %v7618 = vpack.c.b16 %v6410, %v6402
    %v7619 = vpack.c.b16 %v6419, %v6411
    %v7620 = vpack.c.b16 %v6420, %v6412
    %v7621 = vpack.c.b16 %v6421, %v6413
    %v7622 = vpack.c.b16 %v6422, %v6414
    %v7623 = vpack.c.b16 %v6423, %v6415
    %v7624 = vpack.c.b16 %v6424, %v6416
    %v7625 = vpack.c.b16 %v6425, %v6417
    %v7626 = vpack.c.b16 %v6426, %v6418
    %v7627 = vpack.c.b16 %v6435, %v6427
    %v7628 = vpack.c.b16 %v6436, %v6428
    %v7629 = vpack.c.b16 %v6437, %v6429
    %v7630 = vpack.c.b16 %v6438, %v6430
    %v7631 = vpack.c.b16 %v6439, %v6431
    %v7632 = vpack.c.b16 %v6440, %v6432
    %v7633 = vpack.c.b16 %v6441, %v6433
    %v7634 = vpack.c.b16 %v6442, %v6434
    %v7635 = vpack.c.b16 %v6451, %v6443
    %v7636 = vpack.c.b16 %v6452, %v6444
    %v7637 = vpack.c.b16 %v6453, %v6445
    %v7638 = vpack.c.b16 %v6454, %v6446
    %v7639 = vpack.c.b16 %v6455, %v6447
    %v7640 = vpack.c.b16 %v6456, %v6448
    %v7641 = vpack.c.b16 %v6457, %v6449
    %v7642 = vpack.c.b16 %v6458, %v6450
    %v7643 = vpack.c.b16 %v6467, %v6459
    %v7644 = vpack.c.b16 %v6468, %v6460
    %v7645 = vpack.c.b16 %v6469, %v6461
    %v7646 = vpack.c.b16 %v6470, %v6462
    %v7647 = vpack.c.b16 %v6471, %v6463
    %v7648 = vpack.c.b16 %v6472, %v6464
    %v7649 = vpack.c.b16 %v6473, %v6465
    %v7650 = vpack.c.b16 %v6474, %v6466
    %v7651 = vpack.c.b16 %v6483, %v6475
    %v7652 = vpack.c.b16 %v6484, %v6476
    %v7653 = vpack.c.b16 %v6485, %v6477
    %v7654 = vpack.c.b16 %v6486, %v6478
    %v7655 = vpack.c.b16 %v6487, %v6479
    %v7656 = vpack.c.b16 %v6488, %v6480
    %v7657 = vpack.c.b16 %v6489, %v6481
    %v7658 = vpack.c.b16 %v6490, %v6482
    %v7659 = vpack.c.b16 %v6499, %v6491
    %v7660 = vpack.c.b16 %v6500, %v6492
    %v7661 = vpack.c.b16 %v6501, %v6493
    %v7662 = vpack.c.b16 %v6502, %v6494
    %v7663 = vpack.c.b16 %v6503, %v6495
    %v7664 = vpack.c.b16 %v6504, %v6496
    %v7665 = vpack.c.b16 %v6505, %v6497
    %v7666 = vpack.c.b16 %v6506, %v6498
    %v7667 = vpack.c.b16 %v6515, %v6507
    %v7668 = vpack.c.b16 %v6516, %v6508
    %v7669 = vpack.c.b16 %v6517, %v6509
    %v7670 = vpack.c.b16 %v6518, %v6510
    %v7671 = vpack.c.b16 %v6519, %v6511
    %v7672 = vpack.c.b16 %v6520, %v6512
    %v7673 = vpack.c.b16 %v6521, %v6513
    %v7674 = vpack.c.b16 %v6522, %v6514
    %v7675 = vpack.c.b16 %v6531, %v6523
    %v7676 = vpack.c.b16 %v6532, %v6524
    %v7677 = vpack.c.b16 %v6533, %v6525
    %v7678 = vpack.c.b16 %v6534, %v6526
    %v7679 = vpack.c.b16 %v6535, %v6527
    %v7680 = vpack.c.b16 %v6536, %v6528
    %v7681 = vpack.c.b16 %v6537, %v6529
    %v7682 = vpack.c.b16 %v6538, %v6530
    %v7683 = vpack.c.b16 %v6547, %v6539
    %v7684 = vpack.c.b16 %v6548, %v6540
    %v7685 = vpack.c.b16 %v6549, %v6541
    %v7686 = vpack.c.b16 %v6550, %v6542
    %v7687 = vpack.c.b16 %v6551, %v6543
    %v7688 = vpack.c.b16 %v6552, %v6544
    %v7689 = vpack.c.b16 %v6553, %v6545
    %v7690 = vpack.c.b16 %v6554, %v6546
    %v7691 = vpack.c.b16 %v6563, %v6555
    %v7692 = vpack.c.b16 %v6564, %v6556
    %v7693 = vpack.c.b16 %v6565, %v6557
    %v7694 = vpack.c.b16 %v6566, %v6558
    %v7695 = vpack.c.b16 %v6567, %v6559
    %v7696 = vpack.c.b16 %v6568, %v6560
    %v7697 = vpack.c.b16 %v6569, %v6561
    %v7698 = vpack.c.b16 %v6570, %v6562
    %v7699 = vpack.c.b16 %v6579, %v6571
    %v7700 = vpack.c.b16 %v6580, %v6572
    %v7701 = vpack.c.b16 %v6581, %v6573
    %v7702 = vpack.c.b16 %v6582, %v6574
    %v7703 = vpack.c.b16 %v6583, %v6575
    %v7704 = vpack.c.b16 %v6584, %v6576
    %v7705 = vpack.c.b16 %v6585, %v6577
    %v7706 = vpack.c.b16 %v6586, %v6578
    %v7707 = vpack.c.b16 %v6595, %v6587
    %v7708 = vpack.c.b16 %v6596, %v6588
    %v7709 = vpack.c.b16 %v6597, %v6589
    %v7710 = vpack.c.b16 %v6598, %v6590
    %v7711 = vpack.c.b16 %v6599, %v6591
    %v7712 = vpack.c.b16 %v6600, %v6592
    %v7713 = vpack.c.b16 %v6601, %v6593
    %v7714 = vpack.c.b16 %v6602, %v6594
    %v7715 = vpack.c.b16 %v6611, %v6603
    %v7716 = vpack.c.b16 %v6612, %v6604
    %v7717 = vpack.c.b16 %v6613, %v6605
    %v7718 = vpack.c.b16 %v6614, %v6606
    %v7719 = vpack.c.b16 %v6615, %v6607
    %v7720 = vpack.c.b16 %v6616, %v6608
    %v7721 = vpack.c.b16 %v6617, %v6609
    %v7722 = vpack.c.b16 %v6618, %v6610
    %v7723 = vpack.c.b16 %v6627, %v6619
    %v7724 = vpack.c.b16 %v6628, %v6620
    %v7725 = vpack.c.b16 %v6629, %v6621
    %v7726 = vpack.c.b16 %v6630, %v6622
    %v7727 = vpack.c.b16 %v6631, %v6623
    %v7728 = vpack.c.b16 %v6632, %v6624
    %v7729 = vpack.c.b16 %v6633, %v6625
    %v7730 = vpack.c.b16 %v6634, %v6626
    %v7731 = vpack.c.b16 %v6643, %v6635
    %v7732 = vpack.c.b16 %v6644, %v6636
    %v7733 = vpack.c.b16 %v6645, %v6637
    %v7734 = vpack.c.b16 %v6646, %v6638
    %v7735 = vpack.c.b16 %v6647, %v6639
    %v7736 = vpack.c.b16 %v6648, %v6640
    %v7737 = vpack.c.b16 %v6649, %v6641
    %v7738 = vpack.c.b16 %v6650, %v6642
    %v7739 = vpack.c.b16 %v6659, %v6651
    %v7740 = vpack.c.b16 %v6660, %v6652
    %v7741 = vpack.c.b16 %v6661, %v6653
    %v7742 = vpack.c.b16 %v6662, %v6654
    %v7743 = vpack.c.b16 %v6663, %v6655
    %v7744 = vpack.c.b16 %v6664, %v6656
    %v7745 = vpack.c.b16 %v6665, %v6657
    %v7746 = vpack.c.b16 %v6666, %v6658
    %v7747 = vpack.c.b16 %v6675, %v6667
    %v7748 = vpack.c.b16 %v6676, %v6668
    %v7749 = vpack.c.b16 %v6677, %v6669
    %v7750 = vpack.c.b16 %v6678, %v6670
    %v7751 = vpack.c.b16 %v6679, %v6671
    %v7752 = vpack.c.b16 %v6680, %v6672
    %v7753 = vpack.c.b16 %v6681, %v6673
    %v7754 = vpack.c.b16 %v6682, %v6674
    %v7755 = vpack.c.b16 %v6691, %v6683
    %v7756 = vpack.c.b16 %v6692, %v6684
    %v7757 = vpack.c.b16 %v6693, %v6685
    %v7758 = vpack.c.b16 %v6694, %v6686
    %v7759 = vpack.c.b16 %v6695, %v6687
    %v7760 = vpack.c.b16 %v6696, %v6688
    %v7761 = vpack.c.b16 %v6697, %v6689
    %v7762 = vpack.c.b16 %v6698, %v6690
    %v7763 = vpack.c.b16 %v6707, %v6699
    %v7764 = vpack.c.b16 %v6708, %v6700
    %v7765 = vpack.c.b16 %v6709, %v6701
    %v7766 = vpack.c.b16 %v6710, %v6702
    %v7767 = vpack.c.b16 %v6711, %v6703
    %v7768 = vpack.c.b16 %v6712, %v6704
    %v7769 = vpack.c.b16 %v6713, %v6705
    %v7770 = vpack.c.b16 %v6714, %v6706
    %v7771 = vpack.c.b16 %v6723, %v6715
    %v7772 = vpack.c.b16 %v6724, %v6716
    %v7773 = vpack.c.b16 %v6725, %v6717
    %v7774 = vpack.c.b16 %v6726, %v6718
    %v7775 = vpack.c.b16 %v6727, %v6719
    %v7776 = vpack.c.b16 %v6728, %v6720
    %v7777 = vpack.c.b16 %v6729, %v6721
    %v7778 = vpack.c.b16 %v6730, %v6722
    %v7779 = vpack.c.b16 %v6739, %v6731
    %v7780 = vpack.c.b16 %v6740, %v6732
    %v7781 = vpack.c.b16 %v6741, %v6733
    %v7782 = vpack.c.b16 %v6742, %v6734
    %v7783 = vpack.c.b16 %v6743, %v6735
    %v7784 = vpack.c.b16 %v6744, %v6736
    %v7785 = vpack.c.b16 %v6745, %v6737
    %v7786 = vpack.c.b16 %v6746, %v6738
    %v7787 = vpack.c.b16 %v6755, %v6747
    %v7788 = vpack.c.b16 %v6756, %v6748
    %v7789 = vpack.c.b16 %v6757, %v6749
    %v7790 = vpack.c.b16 %v6758, %v6750
    %v7791 = vpack.c.b16 %v6759, %v6751
    %v7792 = vpack.c.b16 %v6760, %v6752
    %v7793 = vpack.c.b16 %v6761, %v6753
    %v7794 = vpack.c.b16 %v6762, %v6754
    %v7795 = vpack.c.b16 %v6771, %v6763
    %v7796 = vpack.c.b16 %v6772, %v6764
    %v7797 = vpack.c.b16 %v6773, %v6765
    %v7798 = vpack.c.b16 %v6774, %v6766
    %v7799 = vpack.c.b16 %v6775, %v6767
    %v7800 = vpack.c.b16 %v6776, %v6768
    %v7801 = vpack.c.b16 %v6777, %v6769
    %v7802 = vpack.c.b16 %v6778, %v6770
    %v7803 = vpack.c.b16 %v6787, %v6779
    %v7804 = vpack.c.b16 %v6788, %v6780
    %v7805 = vpack.c.b16 %v6789, %v6781
    %v7806 = vpack.c.b16 %v6790, %v6782
    %v7807 = vpack.c.b16 %v6791, %v6783
    %v7808 = vpack.c.b16 %v6792, %v6784
    %v7809 = vpack.c.b16 %v6793, %v6785
    %v7810 = vpack.c.b16 %v6794, %v6786
    %v7811 = vpack.c.b16 %v6803, %v6795
    %v7812 = vpack.c.b16 %v6804, %v6796
    %v7813 = vpack.c.b16 %v6805, %v6797
    %v7814 = vpack.c.b16 %v6806, %v6798
    %v7815 = vpack.c.b16 %v6807, %v6799
    %v7816 = vpack.c.b16 %v6808, %v6800
    %v7817 = vpack.c.b16 %v6809, %v6801
    %v7818 = vpack.c.b16 %v6810, %v6802
    %v7819 = vpack.c.b16 %v6819, %v6811
    %v7820 = vpack.c.b16 %v6820, %v6812
    %v7821 = vpack.c.b16 %v6821, %v6813
    %v7822 = vpack.c.b16 %v6822, %v6814
    %v7823 = vpack.c.b16 %v6823, %v6815
    %v7824 = vpack.c.b16 %v6824, %v6816
    %v7825 = vpack.c.b16 %v6825, %v6817
    %v7826 = vpack.c.b16 %v6826, %v6818
    %v7827 = vpack.c.b16 %v6835, %v6827
    %v7828 = vpack.c.b16 %v6836, %v6828
    %v7829 = vpack.c.b16 %v6837, %v6829
    %v7830 = vpack.c.b16 %v6838, %v6830
    %v7831 = vpack.c.b16 %v6839, %v6831
    %v7832 = vpack.c.b16 %v6840, %v6832
    %v7833 = vpack.c.b16 %v6841, %v6833
    %v7834 = vpack.c.b16 %v6842, %v6834
    %v7835 = vpack.c.b16 %v6851, %v6843
    %v7836 = vpack.c.b16 %v6852, %v6844
    %v7837 = vpack.c.b16 %v6853, %v6845
    %v7838 = vpack.c.b16 %v6854, %v6846
    %v7839 = vpack.c.b16 %v6855, %v6847
    %v7840 = vpack.c.b16 %v6856, %v6848
    %v7841 = vpack.c.b16 %v6857, %v6849
    %v7842 = vpack.c.b16 %v6858, %v6850
    %v7843 = vpack.c.b16 %v6867, %v6859
    %v7844 = vpack.c.b16 %v6868, %v6860
    %v7845 = vpack.c.b16 %v6869, %v6861
    %v7846 = vpack.c.b16 %v6870, %v6862
    %v7847 = vpack.c.b16 %v6871, %v6863
    %v7848 = vpack.c.b16 %v6872, %v6864
    %v7849 = vpack.c.b16 %v6873, %v6865
    %v7850 = vpack.c.b16 %v6874, %v6866
    %v7851 = vpack.c.b16 %v6883, %v6875
    %v7852 = vpack.c.b16 %v6884, %v6876
    %v7853 = vpack.c.b16 %v6885, %v6877
    %v7854 = vpack.c.b16 %v6886, %v6878
    %v7855 = vpack.c.b16 %v6887, %v6879
    %v7856 = vpack.c.b16 %v6888, %v6880
    %v7857 = vpack.c.b16 %v6889, %v6881
    %v7858 = vpack.c.b16 %v6890, %v6882
    %v7859 = vpack.c.b16 %v6899, %v6891
    %v7860 = vpack.c.b16 %v6900, %v6892
    %v7861 = vpack.c.b16 %v6901, %v6893
    %v7862 = vpack.c.b16 %v6902, %v6894
    %v7863 = vpack.c.b16 %v6903, %v6895
    %v7864 = vpack.c.b16 %v6904, %v6896
    %v7865 = vpack.c.b16 %v6905, %v6897
    %v7866 = vpack.c.b16 %v6906, %v6898
    %v7867 = vpack.c.b16 %v6915, %v6907
    %v7868 = vpack.c.b16 %v6916, %v6908
    %v7869 = vpack.c.b16 %v6917, %v6909
    %v7870 = vpack.c.b16 %v6918, %v6910
    %v7871 = vpack.c.b16 %v6919, %v6911
    %v7872 = vpack.c.b16 %v6920, %v6912
    %v7873 = vpack.c.b16 %v6921, %v6913
    %v7874 = vpack.c.b16 %v6922, %v6914
    %v7875 = vpack.c.b16 %v6931, %v6923
    %v7876 = vpack.c.b16 %v6932, %v6924
    %v7877 = vpack.c.b16 %v6933, %v6925
    %v7878 = vpack.c.b16 %v6934, %v6926
    %v7879 = vpack.c.b16 %v6935, %v6927
    %v7880 = vpack.c.b16 %v6936, %v6928
    %v7881 = vpack.c.b16 %v6937, %v6929
    %v7882 = vpack.c.b16 %v6938, %v6930
    %v7883 = vpack.c.b16 %v6947, %v6939
    %v7884 = vpack.c.b16 %v6948, %v6940
    %v7885 = vpack.c.b16 %v6949, %v6941
    %v7886 = vpack.c.b16 %v6950, %v6942
    %v7887 = vpack.c.b16 %v6951, %v6943
    %v7888 = vpack.c.b16 %v6952, %v6944
    %v7889 = vpack.c.b16 %v6953, %v6945
    %v7890 = vpack.c.b16 %v6954, %v6946
    %v7891 = vpack.c.b16 %v6963, %v6955
    %v7892 = vpack.c.b16 %v6964, %v6956
    %v7893 = vpack.c.b16 %v6965, %v6957
    %v7894 = vpack.c.b16 %v6966, %v6958
    %v7895 = vpack.c.b16 %v6967, %v6959
    %v7896 = vpack.c.b16 %v6968, %v6960
    %v7897 = vpack.c.b16 %v6969, %v6961
    %v7898 = vpack.c.b16 %v6970, %v6962
    %v7899 = vpack.c.b16 %v6979, %v6971
    %v7900 = vpack.c.b16 %v6980, %v6972
    %v7901 = vpack.c.b16 %v6981, %v6973
    %v7902 = vpack.c.b16 %v6982, %v6974
    %v7903 = vpack.c.b16 %v6983, %v6975
    %v7904 = vpack.c.b16 %v6984, %v6976
    %v7905 = vpack.c.b16 %v6985, %v6977
    %v7906 = vpack.c.b16 %v6986, %v6978
    %v7907 = vpack.c.b16 %v6995, %v6987
    %v7908 = vpack.c.b16 %v6996, %v6988
    %v7909 = vpack.c.b16 %v6997, %v6989
    %v7910 = vpack.c.b16 %v6998, %v6990
    %v7911 = vpack.c.b16 %v6999, %v6991
    %v7912 = vpack.c.b16 %v7000, %v6992
    %v7913 = vpack.c.b16 %v7001, %v6993
    %v7914 = vpack.c.b16 %v7002, %v6994
    %v7915 = vpack.c.b16 %v7011, %v7003
    %v7916 = vpack.c.b16 %v7012, %v7004
    %v7917 = vpack.c.b16 %v7013, %v7005
    %v7918 = vpack.c.b16 %v7014, %v7006
    %v7919 = vpack.c.b16 %v7015, %v7007
    %v7920 = vpack.c.b16 %v7016, %v7008
    %v7921 = vpack.c.b16 %v7017, %v7009
    %v7922 = vpack.c.b16 %v7018, %v7010
    %v7923 = vpack.c.b16 %v7027, %v7019
    %v7924 = vpack.c.b16 %v7028, %v7020
    %v7925 = vpack.c.b16 %v7029, %v7021
    %v7926 = vpack.c.b16 %v7030, %v7022
    %v7927 = vpack.c.b16 %v7031, %v7023
    %v7928 = vpack.c.b16 %v7032, %v7024
    %v7929 = vpack.c.b16 %v7033, %v7025
    %v7930 = vpack.c.b16 %v7034, %v7026
    %v7931 = vpack.c.b16 %v7043, %v7035
    %v7932 = vpack.c.b16 %v7044, %v7036
    %v7933 = vpack.c.b16 %v7045, %v7037
    %v7934 = vpack.c.b16 %v7046, %v7038
    %v7935 = vpack.c.b16 %v7047, %v7039
    %v7936 = vpack.c.b16 %v7048, %v7040
    %v7937 = vpack.c.b16 %v7049, %v7041
    %v7938 = vpack.c.b16 %v7050, %v7042
    %v7939 = vpack.c.b16 %v7059, %v7051
    %v7940 = vpack.c.b16 %v7060, %v7052
    %v7941 = vpack.c.b16 %v7061, %v7053
    %v7942 = vpack.c.b16 %v7062, %v7054
    %v7943 = vpack.c.b16 %v7063, %v7055
    %v7944 = vpack.c.b16 %v7064, %v7056
    %v7945 = vpack.c.b16 %v7065, %v7057
    %v7946 = vpack.c.b16 %v7066, %v7058
    %v7947 = vpack.c.b16 %v7075, %v7067
    %v7948 = vpack.c.b16 %v7076, %v7068
    %v7949 = vpack.c.b16 %v7077, %v7069
    %v7950 = vpack.c.b16 %v7078, %v7070
    %v7951 = vpack.c.b16 %v7079, %v7071
    %v7952 = vpack.c.b16 %v7080, %v7072
    %v7953 = vpack.c.b16 %v7081, %v7073
    %v7954 = vpack.c.b16 %v7082, %v7074
    %v7955 = vpack.c.b16 %v7091, %v7083
    %v7956 = vpack.c.b16 %v7092, %v7084
    %v7957 = vpack.c.b16 %v7093, %v7085
    %v7958 = vpack.c.b16 %v7094, %v7086
    %v7959 = vpack.c.b16 %v7095, %v7087
    %v7960 = vpack.c.b16 %v7096, %v7088
    %v7961 = vpack.c.b16 %v7097, %v7089
    %v7962 = vpack.c.b16 %v7098, %v7090
    %v7963 = vpack.c.b16 %v7107, %v7099
    %v7964 = vpack.c.b16 %v7108, %v7100
    %v7965 = vpack.c.b16 %v7109, %v7101
    %v7966 = vpack.c.b16 %v7110, %v7102
    %v7967 = vpack.c.b16 %v7111, %v7103
    %v7968 = vpack.c.b16 %v7112, %v7104
    %v7969 = vpack.c.b16 %v7113, %v7105
    %v7970 = vpack.c.b16 %v7114, %v7106
    %v7971 = vpack.c.b16 %v7123, %v7115
    %v7972 = vpack.c.b16 %v7124, %v7116
    %v7973 = vpack.c.b16 %v7125, %v7117
    %v7974 = vpack.c.b16 %v7126, %v7118
    %v7975 = vpack.c.b16 %v7127, %v7119
    %v7976 = vpack.c.b16 %v7128, %v7120
    %v7977 = vpack.c.b16 %v7129, %v7121
    %v7978 = vpack.c.b16 %v7130, %v7122
    %v7979 = vpack.c.b16 %v7139, %v7131
    %v7980 = vpack.c.b16 %v7140, %v7132
    %v7981 = vpack.c.b16 %v7141, %v7133
    %v7982 = vpack.c.b16 %v7142, %v7134
    %v7983 = vpack.c.b16 %v7143, %v7135
    %v7984 = vpack.c.b16 %v7144, %v7136
    %v7985 = vpack.c.b16 %v7145, %v7137
    %v7986 = vpack.c.b16 %v7146, %v7138
    %v7987 = vpack.c.b16 %v7155, %v7147
    %v7988 = vpack.c.b16 %v7156, %v7148
    %v7989 = vpack.c.b16 %v7157, %v7149
    %v7990 = vpack.c.b16 %v7158, %v7150
    %v7991 = vpack.c.b16 %v7159, %v7151
    %v7992 = vpack.c.b16 %v7160, %v7152
    %v7993 = vpack.c.b16 %v7161, %v7153
    %v7994 = vpack.c.b16 %v7162, %v7154
    %v7995 = vpack.c.b16 %v7171, %v7163
    %v7996 = vpack.c.b16 %v7172, %v7164
    %v7997 = vpack.c.b16 %v7173, %v7165
    %v7998 = vpack.c.b16 %v7174, %v7166
    %v7999 = vpack.c.b16 %v7175, %v7167
    %v8000 = vpack.c.b16 %v7176, %v7168
    %v8001 = vpack.c.b16 %v7177, %v7169
    %v8002 = vpack.c.b16 %v7178, %v7170
    %v8003 = vpack.c.b16 %v7187, %v7179
    %v8004 = vpack.c.b16 %v7188, %v7180
    %v8005 = vpack.c.b16 %v7189, %v7181
    %v8006 = vpack.c.b16 %v7190, %v7182
    %v8007 = vpack.c.b16 %v7191, %v7183
    %v8008 = vpack.c.b16 %v7192, %v7184
    %v8009 = vpack.c.b16 %v7193, %v7185
    %v8010 = vpack.c.b16 %v7194, %v7186
    %v8011 = vpack.c.b16 %v7203, %v7195
    %v8012 = vpack.c.b16 %v7204, %v7196
    %v8013 = vpack.c.b16 %v7205, %v7197
    %v8014 = vpack.c.b16 %v7206, %v7198
    %v8015 = vpack.c.b16 %v7207, %v7199
    %v8016 = vpack.c.b16 %v7208, %v7200
    %v8017 = vpack.c.b16 %v7209, %v7201
    %v8018 = vpack.c.b16 %v7210, %v7202
    %v8019 = vpack.c.b16 %v7219, %v7211
    %v8020 = vpack.c.b16 %v7220, %v7212
    %v8021 = vpack.c.b16 %v7221, %v7213
    %v8022 = vpack.c.b16 %v7222, %v7214
    %v8023 = vpack.c.b16 %v7223, %v7215
    %v8024 = vpack.c.b16 %v7224, %v7216
    %v8025 = vpack.c.b16 %v7225, %v7217
    %v8026 = vpack.c.b16 %v7226, %v7218
    %v8027 = vpack.c.b16 %v7235, %v7227
    %v8028 = vpack.c.b16 %v7236, %v7228
    %v8029 = vpack.c.b16 %v7237, %v7229
    %v8030 = vpack.c.b16 %v7238, %v7230
    %v8031 = vpack.c.b16 %v7239, %v7231
    %v8032 = vpack.c.b16 %v7240, %v7232
    %v8033 = vpack.c.b16 %v7241, %v7233
    %v8034 = vpack.c.b16 %v7242, %v7234
    %v8035 = vpack.c.b16 %v7251, %v7243
    %v8036 = vpack.c.b16 %v7252, %v7244
    %v8037 = vpack.c.b16 %v7253, %v7245
    %v8038 = vpack.c.b16 %v7254, %v7246
    %v8039 = vpack.c.b16 %v7255, %v7247
    %v8040 = vpack.c.b16 %v7256, %v7248
    %v8041 = vpack.c.b16 %v7257, %v7249
    %v8042 = vpack.c.b16 %v7258, %v7250
    %v8043 = vpack.c.b16 %v7267, %v7259
    %v8044 = vpack.c.b16 %v7268, %v7260
    %v8045 = vpack.c.b16 %v7269, %v7261
    %v8046 = vpack.c.b16 %v7270, %v7262
    %v8047 = vpack.c.b16 %v7271, %v7263
    %v8048 = vpack.c.b16 %v7272, %v7264
    %v8049 = vpack.c.b16 %v7273, %v7265
    %v8050 = vpack.c.b16 %v7274, %v7266
    %v8051 = vpack.c.b16 %v7283, %v7275
    %v8052 = vpack.c.b16 %v7284, %v7276
    %v8053 = vpack.c.b16 %v7285, %v7277
    %v8054 = vpack.c.b16 %v7286, %v7278
    %v8055 = vpack.c.b16 %v7287, %v7279
    %v8056 = vpack.c.b16 %v7288, %v7280
    %v8057 = vpack.c.b16 %v7289, %v7281
    %v8058 = vpack.c.b16 %v7290, %v7282
    %v8059 = vpack.c.b16 %v7299, %v7291
    %v8060 = vpack.c.b16 %v7300, %v7292
    %v8061 = vpack.c.b16 %v7301, %v7293
    %v8062 = vpack.c.b16 %v7302, %v7294
    %v8063 = vpack.c.b16 %v7303, %v7295
    %v8064 = vpack.c.b16 %v7304, %v7296
    %v8065 = vpack.c.b16 %v7305, %v7297
    %v8066 = vpack.c.b16 %v7306, %v7298
    %v8067 = vpack.c.b16 %v7315, %v7307
    %v8068 = vpack.c.b16 %v7316, %v7308
    %v8069 = vpack.c.b16 %v7317, %v7309
    %v8070 = vpack.c.b16 %v7318, %v7310
    %v8071 = vpack.c.b16 %v7319, %v7311
    %v8072 = vpack.c.b16 %v7320, %v7312
    %v8073 = vpack.c.b16 %v7321, %v7313
    %v8074 = vpack.c.b16 %v7322, %v7314
    %v8075 = vpack.c.b16 %v7331, %v7323
    %v8076 = vpack.c.b16 %v7332, %v7324
    %v8077 = vpack.c.b16 %v7333, %v7325
    %v8078 = vpack.c.b16 %v7334, %v7326
    %v8079 = vpack.c.b16 %v7335, %v7327
    %v8080 = vpack.c.b16 %v7336, %v7328
    %v8081 = vpack.c.b16 %v7337, %v7329
    %v8082 = vpack.c.b16 %v7338, %v7330
    %v8083 = vpack.c.b16 %v7347, %v7339
    %v8084 = vpack.c.b16 %v7348, %v7340
    %v8085 = vpack.c.b16 %v7349, %v7341
    %v8086 = vpack.c.b16 %v7350, %v7342
    %v8087 = vpack.c.b16 %v7351, %v7343
    %v8088 = vpack.c.b16 %v7352, %v7344
    %v8089 = vpack.c.b16 %v7353, %v7345
    %v8090 = vpack.c.b16 %v7354, %v7346
    %v8091 = vpack.c.b16 %v7363, %v7355
    %v8092 = vpack.c.b16 %v7364, %v7356
    %v8093 = vpack.c.b16 %v7365, %v7357
    %v8094 = vpack.c.b16 %v7366, %v7358
    %v8095 = vpack.c.b16 %v7367, %v7359
    %v8096 = vpack.c.b16 %v7368, %v7360
    %v8097 = vpack.c.b16 %v7369, %v7361
    %v8098 = vpack.c.b16 %v7370, %v7362
    %v8099 = vpack.c.b16 %v7379, %v7371
    %v8100 = vpack.c.b16 %v7380, %v7372
    %v8101 = vpack.c.b16 %v7381, %v7373
    %v8102 = vpack.c.b16 %v7382, %v7374
    %v8103 = vpack.c.b16 %v7383, %v7375
    %v8104 = vpack.c.b16 %v7384, %v7376
    %v8105 = vpack.c.b16 %v7385, %v7377
    %v8106 = vpack.c.b16 %v7386, %v7378
    %v8107 = vpack.c.b16 %v7395, %v7387
    %v8108 = vpack.c.b16 %v7396, %v7388
    %v8109 = vpack.c.b16 %v7397, %v7389
    %v8110 = vpack.c.b16 %v7398, %v7390
    %v8111 = vpack.c.b16 %v7399, %v7391
    %v8112 = vpack.c.b16 %v7400, %v7392
    %v8113 = vpack.c.b16 %v7401, %v7393
    %v8114 = vpack.c.b16 %v7402, %v7394
    %v8115 = vpack.c.b16 %v7411, %v7403
    %v8116 = vpack.c.b16 %v7412, %v7404
    %v8117 = vpack.c.b16 %v7413, %v7405
    %v8118 = vpack.c.b16 %v7414, %v7406
    %v8119 = vpack.c.b16 %v7415, %v7407
    %v8120 = vpack.c.b16 %v7416, %v7408
    %v8121 = vpack.c.b16 %v7417, %v7409
    %v8122 = vpack.c.b16 %v7418, %v7410
    %v8123 = vpack.c.b16 %v7427, %v7419
    %v8124 = vpack.c.b16 %v7428, %v7420
    %v8125 = vpack.c.b16 %v7429, %v7421
    %v8126 = vpack.c.b16 %v7430, %v7422
    %v8127 = vpack.c.b16 %v7431, %v7423
    %v8128 = vpack.c.b16 %v7432, %v7424
    %v8129 = vpack.c.b16 %v7433, %v7425
    %v8130 = vpack.c.b16 %v7434, %v7426
    %v8131 = vpack.c.b16 %v7443, %v7435
    %v8132 = vpack.c.b16 %v7444, %v7436
    %v8133 = vpack.c.b16 %v7445, %v7437
    %v8134 = vpack.c.b16 %v7446, %v7438
    %v8135 = vpack.c.b16 %v7447, %v7439
    %v8136 = vpack.c.b16 %v7448, %v7440
    %v8137 = vpack.c.b16 %v7449, %v7441
    %v8138 = vpack.c.b16 %v7450, %v7442
    %v8139 = vpack.c.b16 %v7459, %v7451
    %v8140 = vpack.c.b16 %v7460, %v7452
    %v8141 = vpack.c.b16 %v7461, %v7453
    %v8142 = vpack.c.b16 %v7462, %v7454
    %v8143 = vpack.c.b16 %v7463, %v7455
    %v8144 = vpack.c.b16 %v7464, %v7456
    %v8145 = vpack.c.b16 %v7465, %v7457
    %v8146 = vpack.c.b16 %v7466, %v7458
    %v8147 = vpack.c.b16 %v7475, %v7467
    %v8148 = vpack.c.b16 %v7476, %v7468
    %v8149 = vpack.c.b16 %v7477, %v7469
    %v8150 = vpack.c.b16 %v7478, %v7470
    %v8151 = vpack.c.b16 %v7479, %v7471
    %v8152 = vpack.c.b16 %v7480, %v7472
    %v8153 = vpack.c.b16 %v7481, %v7473
    %v8154 = vpack.c.b16 %v7482, %v7474
    %v8155 = vpack.c.b16 %v7491, %v7483
    %v8156 = vpack.c.b16 %v7492, %v7484
    %v8157 = vpack.c.b16 %v7493, %v7485
    %v8158 = vpack.c.b16 %v7494, %v7486
    %v8159 = vpack.c.b16 %v7495, %v7487
    %v8160 = vpack.c.b16 %v7496, %v7488
    %v8161 = vpack.c.b16 %v7497, %v7489
    %v8162 = vpack.c.b16 %v7498, %v7490
    %v8163 = vpack.c.b16 %v7507, %v7499
    %v8164 = vpack.c.b16 %v7508, %v7500
    %v8165 = vpack.c.b16 %v7509, %v7501
    %v8166 = vpack.c.b16 %v7510, %v7502
    %v8167 = vpack.c.b16 %v7511, %v7503
    %v8168 = vpack.c.b16 %v7512, %v7504
    %v8169 = vpack.c.b16 %v7513, %v7505
    %v8170 = vpack.c.b16 %v7514, %v7506
    %v8171 = vpack.c.b16 %v7523, %v7515
    %v8172 = vpack.c.b16 %v7524, %v7516
    %v8173 = vpack.c.b16 %v7525, %v7517
    %v8174 = vpack.c.b16 %v7526, %v7518
    %v8175 = vpack.c.b16 %v7527, %v7519
    %v8176 = vpack.c.b16 %v7528, %v7520
    %v8177 = vpack.c.b16 %v7529, %v7521
    %v8178 = vpack.c.b16 %v7530, %v7522
    %v8179 = vpack.c.b16 %v7539, %v7531
    %v8180 = vpack.c.b16 %v7540, %v7532
    %v8181 = vpack.c.b16 %v7541, %v7533
    %v8182 = vpack.c.b16 %v7542, %v7534
    %v8183 = vpack.c.b16 %v7543, %v7535
    %v8184 = vpack.c.b16 %v7544, %v7536
    %v8185 = vpack.c.b16 %v7545, %v7537
    %v8186 = vpack.c.b16 %v7546, %v7538
    %8827 = vmatprep.subr.bf16.mxu0 %v7604
    %8828 = vmatpush1.bf16.msra.mxu0 %v7603
    %8829 = vmatprep.subr.bf16.mxu0 %v7596
    %8830 = vmatpush1.bf16.msra.mxu0 %v7595
    %8831 = vmatprep.subr.bf16.mxu0 %v7588
    %8832 = vmatpush1.bf16.msra.mxu0 %v7587
    %8833 = vmatprep.subr.bf16.mxu0 %v7580
    %8834 = vmatpush1.bf16.msra.mxu0 %v7579
    %8835 = vmatprep.subr.bf16.mxu0 %v7572
    %8836 = vmatpush1.bf16.msra.mxu0 %v7571
    %8837 = vmatprep.subr.bf16.mxu0 %v7564
    %8838 = vmatpush1.bf16.msra.mxu0 %v7563
    %8839 = vmatprep.subr.bf16.mxu0 %v7556
    %8840 = vmatpush1.bf16.msra.mxu0 %v7555
    %8841 = vmatprep.subr.bf16.mxu0 %v7548
    %8842 = vmatpush1.bf16.msra.mxu0 %v7547
    %8843 = vmatprep.subr.bf16.mxu0 %v7668
    %8844 = vmatpush2.bf16.msra.mxu0 %v7667
    %8845 = vmatprep.subr.bf16.mxu0 %v7660
    %8846 = vmatpush2.bf16.msra.mxu0 %v7659
    %8847 = vmatprep.subr.bf16.mxu0 %v7652
    %8848 = vmatpush2.bf16.msra.mxu0 %v7651
    %8849 = vmatprep.subr.bf16.mxu0 %v7644
    %8850 = vmatpush2.bf16.msra.mxu0 %v7643
    %8851 = vmatprep.subr.bf16.mxu0 %v7636
    %8852 = vmatpush2.bf16.msra.mxu0 %v7635
    %8853 = vmatprep.subr.bf16.mxu0 %v7628
    %8854 = vmatpush2.bf16.msra.mxu0 %v7627
    %8855 = vmatprep.subr.bf16.mxu0 %v7620
    %8856 = vmatpush2.bf16.msra.mxu0 %v7619
    %8857 = vmatprep.subr.bf16.mxu0 %v7612
    %8858 = vmatpush2.bf16.msra.mxu0 %v7611
    %8859 = vmatprep.mubr.bf16.mxu0 %v5608
    %8860 = vmatmul.mubr.bf16.gmra.mxu0 %v5607
    %v8861 = vpop.f32.mrf.mxu0
    %v8862 = vadd.f32 %v4924, %v8861
    %v8863 = vpop.f32.mrf.mxu0
    %v8864 = vadd.f32 %v4926, %v8863
    %v8865 = vpop.f32.mrf.mxu0
    %v8866 = vadd.f32 %v4928, %v8865
    %v8867 = vpop.f32.mrf.mxu0
    %v8868 = vadd.f32 %v4930, %v8867
    %8869 = vdwg.mxu0
    %8870 = vmatprep.subr.bf16.mxu0 %v7732
    %8871 = vmatpush1.bf16.msra.mxu0 %v7731
    %8872 = vmatprep.subr.bf16.mxu0 %v7724
    %8873 = vmatpush1.bf16.msra.mxu0 %v7723
    %8874 = vmatprep.subr.bf16.mxu0 %v7716
    %8875 = vmatpush1.bf16.msra.mxu0 %v7715
    %8876 = vmatprep.subr.bf16.mxu0 %v7708
    %8877 = vmatpush1.bf16.msra.mxu0 %v7707
    %8878 = vmatprep.subr.bf16.mxu0 %v7700
    %8879 = vmatpush1.bf16.msra.mxu0 %v7699
    %8880 = vmatprep.subr.bf16.mxu0 %v7692
    %8881 = vmatpush1.bf16.msra.mxu0 %v7691
    %8882 = vmatprep.subr.bf16.mxu0 %v7684
    %8883 = vmatpush1.bf16.msra.mxu0 %v7683
    %8884 = vmatprep.subr.bf16.mxu0 %v7676
    %8885 = vmatpush1.bf16.msra.mxu0 %v7675
    %8886 = vmatprep.subr.bf16.mxu0 %v7796
    %8887 = vmatpush2.bf16.msra.mxu0 %v7795
    %8888 = vmatprep.subr.bf16.mxu0 %v7788
    %8889 = vmatpush2.bf16.msra.mxu0 %v7787
    %8890 = vmatprep.subr.bf16.mxu0 %v7780
    %8891 = vmatpush2.bf16.msra.mxu0 %v7779
    %8892 = vmatprep.subr.bf16.mxu0 %v7772
    %8893 = vmatpush2.bf16.msra.mxu0 %v7771
    %8894 = vmatprep.subr.bf16.mxu0 %v7764
    %8895 = vmatpush2.bf16.msra.mxu0 %v7763
    %8896 = vmatprep.subr.bf16.mxu0 %v7756
    %8897 = vmatpush2.bf16.msra.mxu0 %v7755
    %8898 = vmatprep.subr.bf16.mxu0 %v7748
    %8899 = vmatpush2.bf16.msra.mxu0 %v7747
    %8900 = vmatprep.subr.bf16.mxu0 %v7740
    %8901 = vmatpush2.bf16.msra.mxu0 %v7739
    %8902 = vmatprep.mubr.bf16.mxu0 %v5610
    %8903 = vmatmul.mubr.bf16.gmra.mxu0 %v5609
    %v8904 = vpop.f32.mrf.mxu0
    %v8905 = vadd.f32 %v8862, %v8904
    %v8906 = vpop.f32.mrf.mxu0
    %v8907 = vadd.f32 %v8864, %v8906
    %v8908 = vpop.f32.mrf.mxu0
    %v8909 = vadd.f32 %v8866, %v8908
    %v8910 = vpop.f32.mrf.mxu0
    %v8911 = vadd.f32 %v8868, %v8910
    %8912 = vdwg.mxu0
    %8913 = vmatprep.subr.bf16.mxu0 %v7860
    %8914 = vmatpush1.bf16.msra.mxu0 %v7859
    %8915 = vmatprep.subr.bf16.mxu0 %v7852
    %8916 = vmatpush1.bf16.msra.mxu0 %v7851
    %8917 = vmatprep.subr.bf16.mxu0 %v7844
    %8918 = vmatpush1.bf16.msra.mxu0 %v7843
    %8919 = vmatprep.subr.bf16.mxu0 %v7836
    %8920 = vmatpush1.bf16.msra.mxu0 %v7835
    %8921 = vmatprep.subr.bf16.mxu0 %v7828
    %8922 = vmatpush1.bf16.msra.mxu0 %v7827
    %8923 = vmatprep.subr.bf16.mxu0 %v7820
    %8924 = vmatpush1.bf16.msra.mxu0 %v7819
    %8925 = vmatprep.subr.bf16.mxu0 %v7812
    %8926 = vmatpush1.bf16.msra.mxu0 %v7811
    %8927 = vmatprep.subr.bf16.mxu0 %v7804
    %8928 = vmatpush1.bf16.msra.mxu0 %v7803
    %8929 = vmatprep.subr.bf16.mxu0 %v7924
    %8930 = vmatpush2.bf16.msra.mxu0 %v7923
    %8931 = vmatprep.subr.bf16.mxu0 %v7916
    %8932 = vmatpush2.bf16.msra.mxu0 %v7915
    %8933 = vmatprep.subr.bf16.mxu0 %v7908
    %8934 = vmatpush2.bf16.msra.mxu0 %v7907
    %8935 = vmatprep.subr.bf16.mxu0 %v7900
    %8936 = vmatpush2.bf16.msra.mxu0 %v7899
    %8937 = vmatprep.subr.bf16.mxu0 %v7892
    %8938 = vmatpush2.bf16.msra.mxu0 %v7891
    %8939 = vmatprep.subr.bf16.mxu0 %v7884
    %8940 = vmatpush2.bf16.msra.mxu0 %v7883
    %8941 = vmatprep.subr.bf16.mxu0 %v7876
    %8942 = vmatpush2.bf16.msra.mxu0 %v7875
    %8943 = vmatprep.subr.bf16.mxu0 %v7868
    %8944 = vmatpush2.bf16.msra.mxu0 %v7867
    %8945 = vmatprep.mubr.bf16.mxu0 %v5612
    %8946 = vmatmul.mubr.bf16.gmra.mxu0 %v5611
    %v8947 = vpop.f32.mrf.mxu0
    %v8948 = vadd.f32 %v8905, %v8947
    %v8949 = vpop.f32.mrf.mxu0
    %v8950 = vadd.f32 %v8907, %v8949
    %v8951 = vpop.f32.mrf.mxu0
    %v8952 = vadd.f32 %v8909, %v8951
    %v8953 = vpop.f32.mrf.mxu0
    %v8954 = vadd.f32 %v8911, %v8953
    %8955 = vdwg.mxu0
    %8956 = vmatprep.subr.bf16.mxu0 %v7988
    %8957 = vmatpush1.bf16.msra.mxu0 %v7987
    %8958 = vmatprep.subr.bf16.mxu0 %v7980
    %8959 = vmatpush1.bf16.msra.mxu0 %v7979
    %8960 = vmatprep.subr.bf16.mxu0 %v7972
    %8961 = vmatpush1.bf16.msra.mxu0 %v7971
    %8962 = vmatprep.subr.bf16.mxu0 %v7964
    %8963 = vmatpush1.bf16.msra.mxu0 %v7963
    %8964 = vmatprep.subr.bf16.mxu0 %v7956
    %8965 = vmatpush1.bf16.msra.mxu0 %v7955
    %8966 = vmatprep.subr.bf16.mxu0 %v7948
    %8967 = vmatpush1.bf16.msra.mxu0 %v7947
    %8968 = vmatprep.subr.bf16.mxu0 %v7940
    %8969 = vmatpush1.bf16.msra.mxu0 %v7939
    %8970 = vmatprep.subr.bf16.mxu0 %v7932
    %8971 = vmatpush1.bf16.msra.mxu0 %v7931
    %8972 = vmatprep.subr.bf16.mxu0 %v8052
    %8973 = vmatpush2.bf16.msra.mxu0 %v8051
    %8974 = vmatprep.subr.bf16.mxu0 %v8044
    %8975 = vmatpush2.bf16.msra.mxu0 %v8043
    %8976 = vmatprep.subr.bf16.mxu0 %v8036
    %8977 = vmatpush2.bf16.msra.mxu0 %v8035
    %8978 = vmatprep.subr.bf16.mxu0 %v8028
    %8979 = vmatpush2.bf16.msra.mxu0 %v8027
    %8980 = vmatprep.subr.bf16.mxu0 %v8020
    %8981 = vmatpush2.bf16.msra.mxu0 %v8019
    %8982 = vmatprep.subr.bf16.mxu0 %v8012
    %8983 = vmatpush2.bf16.msra.mxu0 %v8011
    %8984 = vmatprep.subr.bf16.mxu0 %v8004
    %8985 = vmatpush2.bf16.msra.mxu0 %v8003
    %8986 = vmatprep.subr.bf16.mxu0 %v7996
    %8987 = vmatpush2.bf16.msra.mxu0 %v7995
    %8988 = vmatprep.mubr.bf16.mxu0 %v5614
    %8989 = vmatmul.mubr.bf16.gmra.mxu0 %v5613
    %v8990 = vpop.f32.mrf.mxu0
    %v8991 = vadd.f32 %v8948, %v8990
    %v8992 = vpop.f32.mrf.mxu0
    %v8993 = vadd.f32 %v8950, %v8992
    %v8994 = vpop.f32.mrf.mxu0
    %v8995 = vadd.f32 %v8952, %v8994
    %v8996 = vpop.f32.mrf.mxu0
    %v8997 = vadd.f32 %v8954, %v8996
    %8998 = vdwg.mxu0
    %8999 = vmatprep.subr.bf16.mxu0 %v8116
    %9000 = vmatpush1.bf16.msra.mxu0 %v8115
    %9001 = vmatprep.subr.bf16.mxu0 %v8108
    %9002 = vmatpush1.bf16.msra.mxu0 %v8107
    %9003 = vmatprep.subr.bf16.mxu0 %v8100
    %9004 = vmatpush1.bf16.msra.mxu0 %v8099
    %9005 = vmatprep.subr.bf16.mxu0 %v8092
    %9006 = vmatpush1.bf16.msra.mxu0 %v8091
    %9007 = vmatprep.subr.bf16.mxu0 %v8084
    %9008 = vmatpush1.bf16.msra.mxu0 %v8083
    %9009 = vmatprep.subr.bf16.mxu0 %v8076
    %9010 = vmatpush1.bf16.msra.mxu0 %v8075
    %9011 = vmatprep.subr.bf16.mxu0 %v8068
    %9012 = vmatpush1.bf16.msra.mxu0 %v8067
    %9013 = vmatprep.subr.bf16.mxu0 %v8060
    %9014 = vmatpush1.bf16.msra.mxu0 %v8059
    %9015 = vmatprep.subr.bf16.mxu0 %v8180
    %9016 = vmatpush2.bf16.msra.mxu0 %v8179
    %9017 = vmatprep.subr.bf16.mxu0 %v8172
    %9018 = vmatpush2.bf16.msra.mxu0 %v8171
    %9019 = vmatprep.subr.bf16.mxu0 %v8164
    %9020 = vmatpush2.bf16.msra.mxu0 %v8163
    %9021 = vmatprep.subr.bf16.mxu0 %v8156
    %9022 = vmatpush2.bf16.msra.mxu0 %v8155
    %9023 = vmatprep.subr.bf16.mxu0 %v8148
    %9024 = vmatpush2.bf16.msra.mxu0 %v8147
    %9025 = vmatprep.subr.bf16.mxu0 %v8140
    %9026 = vmatpush2.bf16.msra.mxu0 %v8139
    %9027 = vmatprep.subr.bf16.mxu0 %v8132
    %9028 = vmatpush2.bf16.msra.mxu0 %v8131
    %9029 = vmatprep.subr.bf16.mxu0 %v8124
    %9030 = vmatpush2.bf16.msra.mxu0 %v8123
    %9031 = vmatprep.mubr.bf16.mxu0 %v5616
    %9032 = vmatmul.mubr.bf16.gmra.mxu0 %v5615
    %v9033 = vpop.f32.mrf.mxu0
    %v9034 = vadd.f32 %v8991, %v9033
    %v9035 = vpop.f32.mrf.mxu0
    %v9036 = vadd.f32 %v8993, %v9035
    %v9037 = vpop.f32.mrf.mxu0
    %v9038 = vadd.f32 %v8995, %v9037
    %v9039 = vpop.f32.mrf.mxu0
    %v9040 = vadd.f32 %v8997, %v9039
    %9041 = vdwg.mxu0
    %9042 = vmatprep.subr.bf16.mxu0 %v7606
    %9043 = vmatpush1.bf16.msra.mxu0 %v7605
    %9044 = vmatprep.subr.bf16.mxu0 %v7598
    %9045 = vmatpush1.bf16.msra.mxu0 %v7597
    %9046 = vmatprep.subr.bf16.mxu0 %v7590
    %9047 = vmatpush1.bf16.msra.mxu0 %v7589
    %9048 = vmatprep.subr.bf16.mxu0 %v7582
    %9049 = vmatpush1.bf16.msra.mxu0 %v7581
    %9050 = vmatprep.subr.bf16.mxu0 %v7574
    %9051 = vmatpush1.bf16.msra.mxu0 %v7573
    %9052 = vmatprep.subr.bf16.mxu0 %v7566
    %9053 = vmatpush1.bf16.msra.mxu0 %v7565
    %9054 = vmatprep.subr.bf16.mxu0 %v7558
    %9055 = vmatpush1.bf16.msra.mxu0 %v7557
    %9056 = vmatprep.subr.bf16.mxu0 %v7550
    %9057 = vmatpush1.bf16.msra.mxu0 %v7549
    %9058 = vmatprep.subr.bf16.mxu0 %v7670
    %9059 = vmatpush2.bf16.msra.mxu0 %v7669
    %9060 = vmatprep.subr.bf16.mxu0 %v7662
    %9061 = vmatpush2.bf16.msra.mxu0 %v7661
    %9062 = vmatprep.subr.bf16.mxu0 %v7654
    %9063 = vmatpush2.bf16.msra.mxu0 %v7653
    %9064 = vmatprep.subr.bf16.mxu0 %v7646
    %9065 = vmatpush2.bf16.msra.mxu0 %v7645
    %9066 = vmatprep.subr.bf16.mxu0 %v7638
    %9067 = vmatpush2.bf16.msra.mxu0 %v7637
    %9068 = vmatprep.subr.bf16.mxu0 %v7630
    %9069 = vmatpush2.bf16.msra.mxu0 %v7629
    %9070 = vmatprep.subr.bf16.mxu0 %v7622
    %9071 = vmatpush2.bf16.msra.mxu0 %v7621
    %9072 = vmatprep.subr.bf16.mxu0 %v7614
    %9073 = vmatpush2.bf16.msra.mxu0 %v7613
    %9074 = vmatprep.mubr.bf16.mxu0 %v5608
    %9075 = vmatmul.mubr.bf16.gmra.mxu0 %v5607
    %v9076 = vpop.f32.mrf.mxu0
    %v9077 = vadd.f32 %v5139, %v9076
    %v9078 = vpop.f32.mrf.mxu0
    %v9079 = vadd.f32 %v5141, %v9078
    %v9080 = vpop.f32.mrf.mxu0
    %v9081 = vadd.f32 %v5143, %v9080
    %v9082 = vpop.f32.mrf.mxu0
    %v9083 = vadd.f32 %v5145, %v9082
    %9084 = vdwg.mxu0
    %9085 = vmatprep.subr.bf16.mxu0 %v7734
    %9086 = vmatpush1.bf16.msra.mxu0 %v7733
    %9087 = vmatprep.subr.bf16.mxu0 %v7726
    %9088 = vmatpush1.bf16.msra.mxu0 %v7725
    %9089 = vmatprep.subr.bf16.mxu0 %v7718
    %9090 = vmatpush1.bf16.msra.mxu0 %v7717
    %9091 = vmatprep.subr.bf16.mxu0 %v7710
    %9092 = vmatpush1.bf16.msra.mxu0 %v7709
    %9093 = vmatprep.subr.bf16.mxu0 %v7702
    %9094 = vmatpush1.bf16.msra.mxu0 %v7701
    %9095 = vmatprep.subr.bf16.mxu0 %v7694
    %9096 = vmatpush1.bf16.msra.mxu0 %v7693
    %9097 = vmatprep.subr.bf16.mxu0 %v7686
    %9098 = vmatpush1.bf16.msra.mxu0 %v7685
    %9099 = vmatprep.subr.bf16.mxu0 %v7678
    %9100 = vmatpush1.bf16.msra.mxu0 %v7677
    %9101 = vmatprep.subr.bf16.mxu0 %v7798
    %9102 = vmatpush2.bf16.msra.mxu0 %v7797
    %9103 = vmatprep.subr.bf16.mxu0 %v7790
    %9104 = vmatpush2.bf16.msra.mxu0 %v7789
    %9105 = vmatprep.subr.bf16.mxu0 %v7782
    %9106 = vmatpush2.bf16.msra.mxu0 %v7781
    %9107 = vmatprep.subr.bf16.mxu0 %v7774
    %9108 = vmatpush2.bf16.msra.mxu0 %v7773
    %9109 = vmatprep.subr.bf16.mxu0 %v7766
    %9110 = vmatpush2.bf16.msra.mxu0 %v7765
    %9111 = vmatprep.subr.bf16.mxu0 %v7758
    %9112 = vmatpush2.bf16.msra.mxu0 %v7757
    %9113 = vmatprep.subr.bf16.mxu0 %v7750
    %9114 = vmatpush2.bf16.msra.mxu0 %v7749
    %9115 = vmatprep.subr.bf16.mxu0 %v7742
    %9116 = vmatpush2.bf16.msra.mxu0 %v7741
    %9117 = vmatprep.mubr.bf16.mxu0 %v5610
    %9118 = vmatmul.mubr.bf16.gmra.mxu0 %v5609
    %v9119 = vpop.f32.mrf.mxu0
    %v9120 = vadd.f32 %v9077, %v9119
    %v9121 = vpop.f32.mrf.mxu0
    %v9122 = vadd.f32 %v9079, %v9121
    %v9123 = vpop.f32.mrf.mxu0
    %v9124 = vadd.f32 %v9081, %v9123
    %v9125 = vpop.f32.mrf.mxu0
    %v9126 = vadd.f32 %v9083, %v9125
    %9127 = vdwg.mxu0
    %9128 = vmatprep.subr.bf16.mxu0 %v7862
    %9129 = vmatpush1.bf16.msra.mxu0 %v7861
    %9130 = vmatprep.subr.bf16.mxu0 %v7854
    %9131 = vmatpush1.bf16.msra.mxu0 %v7853
    %9132 = vmatprep.subr.bf16.mxu0 %v7846
    %9133 = vmatpush1.bf16.msra.mxu0 %v7845
    %9134 = vmatprep.subr.bf16.mxu0 %v7838
    %9135 = vmatpush1.bf16.msra.mxu0 %v7837
    %9136 = vmatprep.subr.bf16.mxu0 %v7830
    %9137 = vmatpush1.bf16.msra.mxu0 %v7829
    %9138 = vmatprep.subr.bf16.mxu0 %v7822
    %9139 = vmatpush1.bf16.msra.mxu0 %v7821
    %9140 = vmatprep.subr.bf16.mxu0 %v7814
    %9141 = vmatpush1.bf16.msra.mxu0 %v7813
    %9142 = vmatprep.subr.bf16.mxu0 %v7806
    %9143 = vmatpush1.bf16.msra.mxu0 %v7805
    %9144 = vmatprep.subr.bf16.mxu0 %v7926
    %9145 = vmatpush2.bf16.msra.mxu0 %v7925
    %9146 = vmatprep.subr.bf16.mxu0 %v7918
    %9147 = vmatpush2.bf16.msra.mxu0 %v7917
    %9148 = vmatprep.subr.bf16.mxu0 %v7910
    %9149 = vmatpush2.bf16.msra.mxu0 %v7909
    %9150 = vmatprep.subr.bf16.mxu0 %v7902
    %9151 = vmatpush2.bf16.msra.mxu0 %v7901
    %9152 = vmatprep.subr.bf16.mxu0 %v7894
    %9153 = vmatpush2.bf16.msra.mxu0 %v7893
    %9154 = vmatprep.subr.bf16.mxu0 %v7886
    %9155 = vmatpush2.bf16.msra.mxu0 %v7885
    %9156 = vmatprep.subr.bf16.mxu0 %v7878
    %9157 = vmatpush2.bf16.msra.mxu0 %v7877
    %9158 = vmatprep.subr.bf16.mxu0 %v7870
    %9159 = vmatpush2.bf16.msra.mxu0 %v7869
    %9160 = vmatprep.mubr.bf16.mxu0 %v5612
    %9161 = vmatmul.mubr.bf16.gmra.mxu0 %v5611
    %v9162 = vpop.f32.mrf.mxu0
    %v9163 = vadd.f32 %v9120, %v9162
    %v9164 = vpop.f32.mrf.mxu0
    %v9165 = vadd.f32 %v9122, %v9164
    %v9166 = vpop.f32.mrf.mxu0
    %v9167 = vadd.f32 %v9124, %v9166
    %v9168 = vpop.f32.mrf.mxu0
    %v9169 = vadd.f32 %v9126, %v9168
    %9170 = vdwg.mxu0
    %9171 = vmatprep.subr.bf16.mxu0 %v7990
    %9172 = vmatpush1.bf16.msra.mxu0 %v7989
    %9173 = vmatprep.subr.bf16.mxu0 %v7982
    %9174 = vmatpush1.bf16.msra.mxu0 %v7981
    %9175 = vmatprep.subr.bf16.mxu0 %v7974
    %9176 = vmatpush1.bf16.msra.mxu0 %v7973
    %9177 = vmatprep.subr.bf16.mxu0 %v7966
    %9178 = vmatpush1.bf16.msra.mxu0 %v7965
    %9179 = vmatprep.subr.bf16.mxu0 %v7958
    %9180 = vmatpush1.bf16.msra.mxu0 %v7957
    %9181 = vmatprep.subr.bf16.mxu0 %v7950
    %9182 = vmatpush1.bf16.msra.mxu0 %v7949
    %9183 = vmatprep.subr.bf16.mxu0 %v7942
    %9184 = vmatpush1.bf16.msra.mxu0 %v7941
    %9185 = vmatprep.subr.bf16.mxu0 %v7934
    %9186 = vmatpush1.bf16.msra.mxu0 %v7933
    %9187 = vmatprep.subr.bf16.mxu0 %v8054
    %9188 = vmatpush2.bf16.msra.mxu0 %v8053
    %9189 = vmatprep.subr.bf16.mxu0 %v8046
    %9190 = vmatpush2.bf16.msra.mxu0 %v8045
    %9191 = vmatprep.subr.bf16.mxu0 %v8038
    %9192 = vmatpush2.bf16.msra.mxu0 %v8037
    %9193 = vmatprep.subr.bf16.mxu0 %v8030
    %9194 = vmatpush2.bf16.msra.mxu0 %v8029
    %9195 = vmatprep.subr.bf16.mxu0 %v8022
    %9196 = vmatpush2.bf16.msra.mxu0 %v8021
    %9197 = vmatprep.subr.bf16.mxu0 %v8014
    %9198 = vmatpush2.bf16.msra.mxu0 %v8013
    %9199 = vmatprep.subr.bf16.mxu0 %v8006
    %9200 = vmatpush2.bf16.msra.mxu0 %v8005
    %9201 = vmatprep.subr.bf16.mxu0 %v7998
    %9202 = vmatpush2.bf16.msra.mxu0 %v7997
    %9203 = vmatprep.mubr.bf16.mxu0 %v5614
    %9204 = vmatmul.mubr.bf16.gmra.mxu0 %v5613
    %v9205 = vpop.f32.mrf.mxu0
    %v9206 = vadd.f32 %v9163, %v9205
    %v9207 = vpop.f32.mrf.mxu0
    %v9208 = vadd.f32 %v9165, %v9207
    %v9209 = vpop.f32.mrf.mxu0
    %v9210 = vadd.f32 %v9167, %v9209
    %v9211 = vpop.f32.mrf.mxu0
    %v9212 = vadd.f32 %v9169, %v9211
    %9213 = vdwg.mxu0
    %9214 = vmatprep.subr.bf16.mxu0 %v8118
    %9215 = vmatpush1.bf16.msra.mxu0 %v8117
    %9216 = vmatprep.subr.bf16.mxu0 %v8110
    %9217 = vmatpush1.bf16.msra.mxu0 %v8109
    %9218 = vmatprep.subr.bf16.mxu0 %v8102
    %9219 = vmatpush1.bf16.msra.mxu0 %v8101
    %9220 = vmatprep.subr.bf16.mxu0 %v8094
    %9221 = vmatpush1.bf16.msra.mxu0 %v8093
    %9222 = vmatprep.subr.bf16.mxu0 %v8086
    %9223 = vmatpush1.bf16.msra.mxu0 %v8085
    %9224 = vmatprep.subr.bf16.mxu0 %v8078
    %9225 = vmatpush1.bf16.msra.mxu0 %v8077
    %9226 = vmatprep.subr.bf16.mxu0 %v8070
    %9227 = vmatpush1.bf16.msra.mxu0 %v8069
    %9228 = vmatprep.subr.bf16.mxu0 %v8062
    %9229 = vmatpush1.bf16.msra.mxu0 %v8061
    %9230 = vmatprep.subr.bf16.mxu0 %v8182
    %9231 = vmatpush2.bf16.msra.mxu0 %v8181
    %9232 = vmatprep.subr.bf16.mxu0 %v8174
    %9233 = vmatpush2.bf16.msra.mxu0 %v8173
    %9234 = vmatprep.subr.bf16.mxu0 %v8166
    %9235 = vmatpush2.bf16.msra.mxu0 %v8165
    %9236 = vmatprep.subr.bf16.mxu0 %v8158
    %9237 = vmatpush2.bf16.msra.mxu0 %v8157
    %9238 = vmatprep.subr.bf16.mxu0 %v8150
    %9239 = vmatpush2.bf16.msra.mxu0 %v8149
    %9240 = vmatprep.subr.bf16.mxu0 %v8142
    %9241 = vmatpush2.bf16.msra.mxu0 %v8141
    %9242 = vmatprep.subr.bf16.mxu0 %v8134
    %9243 = vmatpush2.bf16.msra.mxu0 %v8133
    %9244 = vmatprep.subr.bf16.mxu0 %v8126
    %9245 = vmatpush2.bf16.msra.mxu0 %v8125
    %9246 = vmatprep.mubr.bf16.mxu0 %v5616
    %9247 = vmatmul.mubr.bf16.gmra.mxu0 %v5615
    %v9248 = vpop.f32.mrf.mxu0
    %v9249 = vadd.f32 %v9206, %v9248
    %v9250 = vpop.f32.mrf.mxu0
    %v9251 = vadd.f32 %v9208, %v9250
    %v9252 = vpop.f32.mrf.mxu0
    %v9253 = vadd.f32 %v9210, %v9252
    %v9254 = vpop.f32.mrf.mxu0
    %v9255 = vadd.f32 %v9212, %v9254
    %9256 = vdwg.mxu0
    %9257 = vmatprep.subr.bf16.mxu0 %v7608
    %9258 = vmatpush1.bf16.msra.mxu0 %v7607
    %9259 = vmatprep.subr.bf16.mxu0 %v7600
    %9260 = vmatpush1.bf16.msra.mxu0 %v7599
    %9261 = vmatprep.subr.bf16.mxu0 %v7592
    %9262 = vmatpush1.bf16.msra.mxu0 %v7591
    %9263 = vmatprep.subr.bf16.mxu0 %v7584
    %9264 = vmatpush1.bf16.msra.mxu0 %v7583
    %9265 = vmatprep.subr.bf16.mxu0 %v7576
    %9266 = vmatpush1.bf16.msra.mxu0 %v7575
    %9267 = vmatprep.subr.bf16.mxu0 %v7568
    %9268 = vmatpush1.bf16.msra.mxu0 %v7567
    %9269 = vmatprep.subr.bf16.mxu0 %v7560
    %9270 = vmatpush1.bf16.msra.mxu0 %v7559
    %9271 = vmatprep.subr.bf16.mxu0 %v7552
    %9272 = vmatpush1.bf16.msra.mxu0 %v7551
    %9273 = vmatprep.subr.bf16.mxu0 %v7672
    %9274 = vmatpush2.bf16.msra.mxu0 %v7671
    %9275 = vmatprep.subr.bf16.mxu0 %v7664
    %9276 = vmatpush2.bf16.msra.mxu0 %v7663
    %9277 = vmatprep.subr.bf16.mxu0 %v7656
    %9278 = vmatpush2.bf16.msra.mxu0 %v7655
    %9279 = vmatprep.subr.bf16.mxu0 %v7648
    %9280 = vmatpush2.bf16.msra.mxu0 %v7647
    %9281 = vmatprep.subr.bf16.mxu0 %v7640
    %9282 = vmatpush2.bf16.msra.mxu0 %v7639
    %9283 = vmatprep.subr.bf16.mxu0 %v7632
    %9284 = vmatpush2.bf16.msra.mxu0 %v7631
    %9285 = vmatprep.subr.bf16.mxu0 %v7624
    %9286 = vmatpush2.bf16.msra.mxu0 %v7623
    %9287 = vmatprep.subr.bf16.mxu0 %v7616
    %9288 = vmatpush2.bf16.msra.mxu0 %v7615
    %9289 = vmatprep.mubr.bf16.mxu0 %v5608
    %9290 = vmatmul.mubr.bf16.gmra.mxu0 %v5607
    %v9291 = vpop.f32.mrf.mxu0
    %v9292 = vadd.f32 %v5354, %v9291
    %v9293 = vpop.f32.mrf.mxu0
    %v9294 = vadd.f32 %v5356, %v9293
    %v9295 = vpop.f32.mrf.mxu0
    %v9296 = vadd.f32 %v5358, %v9295
    %v9297 = vpop.f32.mrf.mxu0
    %v9298 = vadd.f32 %v5360, %v9297
    %9299 = vdwg.mxu0
    %9300 = vmatprep.subr.bf16.mxu0 %v7736
    %9301 = vmatpush1.bf16.msra.mxu0 %v7735
    %9302 = vmatprep.subr.bf16.mxu0 %v7728
    %9303 = vmatpush1.bf16.msra.mxu0 %v7727
    %9304 = vmatprep.subr.bf16.mxu0 %v7720
    %9305 = vmatpush1.bf16.msra.mxu0 %v7719
    %9306 = vmatprep.subr.bf16.mxu0 %v7712
    %9307 = vmatpush1.bf16.msra.mxu0 %v7711
    %9308 = vmatprep.subr.bf16.mxu0 %v7704
    %9309 = vmatpush1.bf16.msra.mxu0 %v7703
    %9310 = vmatprep.subr.bf16.mxu0 %v7696
    %9311 = vmatpush1.bf16.msra.mxu0 %v7695
    %9312 = vmatprep.subr.bf16.mxu0 %v7688
    %9313 = vmatpush1.bf16.msra.mxu0 %v7687
    %9314 = vmatprep.subr.bf16.mxu0 %v7680
    %9315 = vmatpush1.bf16.msra.mxu0 %v7679
    %9316 = vmatprep.subr.bf16.mxu0 %v7800
    %9317 = vmatpush2.bf16.msra.mxu0 %v7799
    %9318 = vmatprep.subr.bf16.mxu0 %v7792
    %9319 = vmatpush2.bf16.msra.mxu0 %v7791
    %9320 = vmatprep.subr.bf16.mxu0 %v7784
    %9321 = vmatpush2.bf16.msra.mxu0 %v7783
    %9322 = vmatprep.subr.bf16.mxu0 %v7776
    %9323 = vmatpush2.bf16.msra.mxu0 %v7775
    %9324 = vmatprep.subr.bf16.mxu0 %v7768
    %9325 = vmatpush2.bf16.msra.mxu0 %v7767
    %9326 = vmatprep.subr.bf16.mxu0 %v7760
    %9327 = vmatpush2.bf16.msra.mxu0 %v7759
    %9328 = vmatprep.subr.bf16.mxu0 %v7752
    %9329 = vmatpush2.bf16.msra.mxu0 %v7751
    %9330 = vmatprep.subr.bf16.mxu0 %v7744
    %9331 = vmatpush2.bf16.msra.mxu0 %v7743
    %9332 = vmatprep.mubr.bf16.mxu0 %v5610
    %9333 = vmatmul.mubr.bf16.gmra.mxu0 %v5609
    %v9334 = vpop.f32.mrf.mxu0
    %v9335 = vadd.f32 %v9292, %v9334
    %v9336 = vpop.f32.mrf.mxu0
    %v9337 = vadd.f32 %v9294, %v9336
    %v9338 = vpop.f32.mrf.mxu0
    %v9339 = vadd.f32 %v9296, %v9338
    %v9340 = vpop.f32.mrf.mxu0
    %v9341 = vadd.f32 %v9298, %v9340
    %9342 = vdwg.mxu0
    %9343 = vmatprep.subr.bf16.mxu0 %v7864
    %9344 = vmatpush1.bf16.msra.mxu0 %v7863
    %9345 = vmatprep.subr.bf16.mxu0 %v7856
    %9346 = vmatpush1.bf16.msra.mxu0 %v7855
    %9347 = vmatprep.subr.bf16.mxu0 %v7848
    %9348 = vmatpush1.bf16.msra.mxu0 %v7847
    %9349 = vmatprep.subr.bf16.mxu0 %v7840
    %9350 = vmatpush1.bf16.msra.mxu0 %v7839
    %9351 = vmatprep.subr.bf16.mxu0 %v7832
    %9352 = vmatpush1.bf16.msra.mxu0 %v7831
    %9353 = vmatprep.subr.bf16.mxu0 %v7824
    %9354 = vmatpush1.bf16.msra.mxu0 %v7823
    %9355 = vmatprep.subr.bf16.mxu0 %v7816
    %9356 = vmatpush1.bf16.msra.mxu0 %v7815
    %9357 = vmatprep.subr.bf16.mxu0 %v7808
    %9358 = vmatpush1.bf16.msra.mxu0 %v7807
    %9359 = vmatprep.subr.bf16.mxu0 %v7928
    %9360 = vmatpush2.bf16.msra.mxu0 %v7927
    %9361 = vmatprep.subr.bf16.mxu0 %v7920
    %9362 = vmatpush2.bf16.msra.mxu0 %v7919
    %9363 = vmatprep.subr.bf16.mxu0 %v7912
    %9364 = vmatpush2.bf16.msra.mxu0 %v7911
    %9365 = vmatprep.subr.bf16.mxu0 %v7904
    %9366 = vmatpush2.bf16.msra.mxu0 %v7903
    %9367 = vmatprep.subr.bf16.mxu0 %v7896
    %9368 = vmatpush2.bf16.msra.mxu0 %v7895
    %9369 = vmatprep.subr.bf16.mxu0 %v7888
    %9370 = vmatpush2.bf16.msra.mxu0 %v7887
    %9371 = vmatprep.subr.bf16.mxu0 %v7880
    %9372 = vmatpush2.bf16.msra.mxu0 %v7879
    %9373 = vmatprep.subr.bf16.mxu0 %v7872
    %9374 = vmatpush2.bf16.msra.mxu0 %v7871
    %9375 = vmatprep.mubr.bf16.mxu0 %v5612
    %9376 = vmatmul.mubr.bf16.gmra.mxu0 %v5611
    %v9377 = vpop.f32.mrf.mxu0
    %v9378 = vadd.f32 %v9335, %v9377
    %v9379 = vpop.f32.mrf.mxu0
    %v9380 = vadd.f32 %v9337, %v9379
    %v9381 = vpop.f32.mrf.mxu0
    %v9382 = vadd.f32 %v9339, %v9381
    %v9383 = vpop.f32.mrf.mxu0
    %v9384 = vadd.f32 %v9341, %v9383
    %9385 = vdwg.mxu0
    %9386 = vmatprep.subr.bf16.mxu0 %v7992
    %9387 = vmatpush1.bf16.msra.mxu0 %v7991
    %9388 = vmatprep.subr.bf16.mxu0 %v7984
    %9389 = vmatpush1.bf16.msra.mxu0 %v7983
    %9390 = vmatprep.subr.bf16.mxu0 %v7976
    %9391 = vmatpush1.bf16.msra.mxu0 %v7975
    %9392 = vmatprep.subr.bf16.mxu0 %v7968
    %9393 = vmatpush1.bf16.msra.mxu0 %v7967
    %9394 = vmatprep.subr.bf16.mxu0 %v7960
    %9395 = vmatpush1.bf16.msra.mxu0 %v7959
    %9396 = vmatprep.subr.bf16.mxu0 %v7952
    %9397 = vmatpush1.bf16.msra.mxu0 %v7951
    %9398 = vmatprep.subr.bf16.mxu0 %v7944
    %9399 = vmatpush1.bf16.msra.mxu0 %v7943
    %9400 = vmatprep.subr.bf16.mxu0 %v7936
    %9401 = vmatpush1.bf16.msra.mxu0 %v7935
    %9402 = vmatprep.subr.bf16.mxu0 %v8056
    %9403 = vmatpush2.bf16.msra.mxu0 %v8055
    %9404 = vmatprep.subr.bf16.mxu0 %v8048
    %9405 = vmatpush2.bf16.msra.mxu0 %v8047
    %9406 = vmatprep.subr.bf16.mxu0 %v8040
    %9407 = vmatpush2.bf16.msra.mxu0 %v8039
    %9408 = vmatprep.subr.bf16.mxu0 %v8032
    %9409 = vmatpush2.bf16.msra.mxu0 %v8031
    %9410 = vmatprep.subr.bf16.mxu0 %v8024
    %9411 = vmatpush2.bf16.msra.mxu0 %v8023
    %9412 = vmatprep.subr.bf16.mxu0 %v8016
    %9413 = vmatpush2.bf16.msra.mxu0 %v8015
    %9414 = vmatprep.subr.bf16.mxu0 %v8008
    %9415 = vmatpush2.bf16.msra.mxu0 %v8007
    %9416 = vmatprep.subr.bf16.mxu0 %v8000
    %9417 = vmatpush2.bf16.msra.mxu0 %v7999
    %9418 = vmatprep.mubr.bf16.mxu0 %v5614
    %9419 = vmatmul.mubr.bf16.gmra.mxu0 %v5613
    %v9420 = vpop.f32.mrf.mxu0
    %v9421 = vadd.f32 %v9378, %v9420
    %v9422 = vpop.f32.mrf.mxu0
    %v9423 = vadd.f32 %v9380, %v9422
    %v9424 = vpop.f32.mrf.mxu0
    %v9425 = vadd.f32 %v9382, %v9424
    %v9426 = vpop.f32.mrf.mxu0
    %v9427 = vadd.f32 %v9384, %v9426
    %9428 = vdwg.mxu0
    %9429 = vmatprep.subr.bf16.mxu0 %v8120
    %9430 = vmatpush1.bf16.msra.mxu0 %v8119
    %9431 = vmatprep.subr.bf16.mxu0 %v8112
    %9432 = vmatpush1.bf16.msra.mxu0 %v8111
    %9433 = vmatprep.subr.bf16.mxu0 %v8104
    %9434 = vmatpush1.bf16.msra.mxu0 %v8103
    %9435 = vmatprep.subr.bf16.mxu0 %v8096
    %9436 = vmatpush1.bf16.msra.mxu0 %v8095
    %9437 = vmatprep.subr.bf16.mxu0 %v8088
    %9438 = vmatpush1.bf16.msra.mxu0 %v8087
    %9439 = vmatprep.subr.bf16.mxu0 %v8080
    %9440 = vmatpush1.bf16.msra.mxu0 %v8079
    %9441 = vmatprep.subr.bf16.mxu0 %v8072
    %9442 = vmatpush1.bf16.msra.mxu0 %v8071
    %9443 = vmatprep.subr.bf16.mxu0 %v8064
    %9444 = vmatpush1.bf16.msra.mxu0 %v8063
    %9445 = vmatprep.subr.bf16.mxu0 %v8184
    %9446 = vmatpush2.bf16.msra.mxu0 %v8183
    %9447 = vmatprep.subr.bf16.mxu0 %v8176
    %9448 = vmatpush2.bf16.msra.mxu0 %v8175
    %9449 = vmatprep.subr.bf16.mxu0 %v8168
    %9450 = vmatpush2.bf16.msra.mxu0 %v8167
    %9451 = vmatprep.subr.bf16.mxu0 %v8160
    %9452 = vmatpush2.bf16.msra.mxu0 %v8159
    %9453 = vmatprep.subr.bf16.mxu0 %v8152
    %9454 = vmatpush2.bf16.msra.mxu0 %v8151
    %9455 = vmatprep.subr.bf16.mxu0 %v8144
    %9456 = vmatpush2.bf16.msra.mxu0 %v8143
    %9457 = vmatprep.subr.bf16.mxu0 %v8136
    %9458 = vmatpush2.bf16.msra.mxu0 %v8135
    %9459 = vmatprep.subr.bf16.mxu0 %v8128
    %9460 = vmatpush2.bf16.msra.mxu0 %v8127
    %9461 = vmatprep.mubr.bf16.mxu0 %v5616
    %9462 = vmatmul.mubr.bf16.gmra.mxu0 %v5615
    %v9463 = vpop.f32.mrf.mxu0
    %v9464 = vadd.f32 %v9421, %v9463
    %v9465 = vpop.f32.mrf.mxu0
    %v9466 = vadd.f32 %v9423, %v9465
    %v9467 = vpop.f32.mrf.mxu0
    %v9468 = vadd.f32 %v9425, %v9467
    %v9469 = vpop.f32.mrf.mxu0
    %v9470 = vadd.f32 %v9427, %v9469
    %9471 = vdwg.mxu0
    %9472 = vmatprep.subr.bf16.mxu0 %v7610
    %9473 = vmatpush1.bf16.msra.mxu0 %v7609
    %9474 = vmatprep.subr.bf16.mxu0 %v7602
    %9475 = vmatpush1.bf16.msra.mxu0 %v7601
    %9476 = vmatprep.subr.bf16.mxu0 %v7594
    %9477 = vmatpush1.bf16.msra.mxu0 %v7593
    %9478 = vmatprep.subr.bf16.mxu0 %v7586
    %9479 = vmatpush1.bf16.msra.mxu0 %v7585
    %9480 = vmatprep.subr.bf16.mxu0 %v7578
    %9481 = vmatpush1.bf16.msra.mxu0 %v7577
    %9482 = vmatprep.subr.bf16.mxu0 %v7570
    %9483 = vmatpush1.bf16.msra.mxu0 %v7569
    %9484 = vmatprep.subr.bf16.mxu0 %v7562
    %9485 = vmatpush1.bf16.msra.mxu0 %v7561
    %9486 = vmatprep.subr.bf16.mxu0 %v7554
    %9487 = vmatpush1.bf16.msra.mxu0 %v7553
    %9488 = vmatprep.subr.bf16.mxu0 %v7674
    %9489 = vmatpush2.bf16.msra.mxu0 %v7673
    %9490 = vmatprep.subr.bf16.mxu0 %v7666
    %9491 = vmatpush2.bf16.msra.mxu0 %v7665
    %9492 = vmatprep.subr.bf16.mxu0 %v7658
    %9493 = vmatpush2.bf16.msra.mxu0 %v7657
    %9494 = vmatprep.subr.bf16.mxu0 %v7650
    %9495 = vmatpush2.bf16.msra.mxu0 %v7649
    %9496 = vmatprep.subr.bf16.mxu0 %v7642
    %9497 = vmatpush2.bf16.msra.mxu0 %v7641
    %9498 = vmatprep.subr.bf16.mxu0 %v7634
    %9499 = vmatpush2.bf16.msra.mxu0 %v7633
    %9500 = vmatprep.subr.bf16.mxu0 %v7626
    %9501 = vmatpush2.bf16.msra.mxu0 %v7625
    %9502 = vmatprep.subr.bf16.mxu0 %v7618
    %9503 = vmatpush2.bf16.msra.mxu0 %v7617
    %9504 = vmatprep.mubr.bf16.mxu0 %v5608
    %9505 = vmatmul.mubr.bf16.gmra.mxu0 %v5607
    %v9506 = vpop.f32.mrf.mxu0
    %v9507 = vadd.f32 %v5569, %v9506
    %v9508 = vpop.f32.mrf.mxu0
    %v9509 = vadd.f32 %v5571, %v9508
    %v9510 = vpop.f32.mrf.mxu0
    %v9511 = vadd.f32 %v5573, %v9510
    %v9512 = vpop.f32.mrf.mxu0
    %v9513 = vadd.f32 %v5575, %v9512
    %9514 = vdwg.mxu0
    %9515 = vmatprep.subr.bf16.mxu0 %v7738
    %9516 = vmatpush1.bf16.msra.mxu0 %v7737
    %9517 = vmatprep.subr.bf16.mxu0 %v7730
    %9518 = vmatpush1.bf16.msra.mxu0 %v7729
    %9519 = vmatprep.subr.bf16.mxu0 %v7722
    %9520 = vmatpush1.bf16.msra.mxu0 %v7721
    %9521 = vmatprep.subr.bf16.mxu0 %v7714
    %9522 = vmatpush1.bf16.msra.mxu0 %v7713
    %9523 = vmatprep.subr.bf16.mxu0 %v7706
    %9524 = vmatpush1.bf16.msra.mxu0 %v7705
    %9525 = vmatprep.subr.bf16.mxu0 %v7698
    %9526 = vmatpush1.bf16.msra.mxu0 %v7697
    %9527 = vmatprep.subr.bf16.mxu0 %v7690
    %9528 = vmatpush1.bf16.msra.mxu0 %v7689
    %9529 = vmatprep.subr.bf16.mxu0 %v7682
    %9530 = vmatpush1.bf16.msra.mxu0 %v7681
    %9531 = vmatprep.subr.bf16.mxu0 %v7802
    %9532 = vmatpush2.bf16.msra.mxu0 %v7801
    %9533 = vmatprep.subr.bf16.mxu0 %v7794
    %9534 = vmatpush2.bf16.msra.mxu0 %v7793
    %9535 = vmatprep.subr.bf16.mxu0 %v7786
    %9536 = vmatpush2.bf16.msra.mxu0 %v7785
    %9537 = vmatprep.subr.bf16.mxu0 %v7778
    %9538 = vmatpush2.bf16.msra.mxu0 %v7777
    %9539 = vmatprep.subr.bf16.mxu0 %v7770
    %9540 = vmatpush2.bf16.msra.mxu0 %v7769
    %9541 = vmatprep.subr.bf16.mxu0 %v7762
    %9542 = vmatpush2.bf16.msra.mxu0 %v7761
    %9543 = vmatprep.subr.bf16.mxu0 %v7754
    %9544 = vmatpush2.bf16.msra.mxu0 %v7753
    %9545 = vmatprep.subr.bf16.mxu0 %v7746
    %9546 = vmatpush2.bf16.msra.mxu0 %v7745
    %9547 = vmatprep.mubr.bf16.mxu0 %v5610
    %9548 = vmatmul.mubr.bf16.gmra.mxu0 %v5609
    %v9549 = vpop.f32.mrf.mxu0
    %v9550 = vadd.f32 %v9507, %v9549
    %v9551 = vpop.f32.mrf.mxu0
    %v9552 = vadd.f32 %v9509, %v9551
    %v9553 = vpop.f32.mrf.mxu0
    %v9554 = vadd.f32 %v9511, %v9553
    %v9555 = vpop.f32.mrf.mxu0
    %v9556 = vadd.f32 %v9513, %v9555
    %9557 = vdwg.mxu0
    %9558 = vmatprep.subr.bf16.mxu0 %v7866
    %9559 = vmatpush1.bf16.msra.mxu0 %v7865
    %9560 = vmatprep.subr.bf16.mxu0 %v7858
    %9561 = vmatpush1.bf16.msra.mxu0 %v7857
    %9562 = vmatprep.subr.bf16.mxu0 %v7850
    %9563 = vmatpush1.bf16.msra.mxu0 %v7849
    %9564 = vmatprep.subr.bf16.mxu0 %v7842
    %9565 = vmatpush1.bf16.msra.mxu0 %v7841
    %9566 = vmatprep.subr.bf16.mxu0 %v7834
    %9567 = vmatpush1.bf16.msra.mxu0 %v7833
    %9568 = vmatprep.subr.bf16.mxu0 %v7826
    %9569 = vmatpush1.bf16.msra.mxu0 %v7825
    %9570 = vmatprep.subr.bf16.mxu0 %v7818
    %9571 = vmatpush1.bf16.msra.mxu0 %v7817
    %9572 = vmatprep.subr.bf16.mxu0 %v7810
    %9573 = vmatpush1.bf16.msra.mxu0 %v7809
    %9574 = vmatprep.subr.bf16.mxu0 %v7930
    %9575 = vmatpush2.bf16.msra.mxu0 %v7929
    %9576 = vmatprep.subr.bf16.mxu0 %v7922
    %9577 = vmatpush2.bf16.msra.mxu0 %v7921
    %9578 = vmatprep.subr.bf16.mxu0 %v7914
    %9579 = vmatpush2.bf16.msra.mxu0 %v7913
    %9580 = vmatprep.subr.bf16.mxu0 %v7906
    %9581 = vmatpush2.bf16.msra.mxu0 %v7905
    %9582 = vmatprep.subr.bf16.mxu0 %v7898
    %9583 = vmatpush2.bf16.msra.mxu0 %v7897
    %9584 = vmatprep.subr.bf16.mxu0 %v7890
    %9585 = vmatpush2.bf16.msra.mxu0 %v7889
    %9586 = vmatprep.subr.bf16.mxu0 %v7882
    %9587 = vmatpush2.bf16.msra.mxu0 %v7881
    %9588 = vmatprep.subr.bf16.mxu0 %v7874
    %9589 = vmatpush2.bf16.msra.mxu0 %v7873
    %9590 = vmatprep.mubr.bf16.mxu0 %v5612
    %9591 = vmatmul.mubr.bf16.gmra.mxu0 %v5611
    %v9592 = vpop.f32.mrf.mxu0
    %v9593 = vadd.f32 %v9550, %v9592
    %v9594 = vpop.f32.mrf.mxu0
    %v9595 = vadd.f32 %v9552, %v9594
    %v9596 = vpop.f32.mrf.mxu0
    %v9597 = vadd.f32 %v9554, %v9596
    %v9598 = vpop.f32.mrf.mxu0
    %v9599 = vadd.f32 %v9556, %v9598
    %9600 = vdwg.mxu0
    %9601 = vmatprep.subr.bf16.mxu0 %v7994
    %9602 = vmatpush1.bf16.msra.mxu0 %v7993
    %9603 = vmatprep.subr.bf16.mxu0 %v7986
    %9604 = vmatpush1.bf16.msra.mxu0 %v7985
    %9605 = vmatprep.subr.bf16.mxu0 %v7978
    %9606 = vmatpush1.bf16.msra.mxu0 %v7977
    %9607 = vmatprep.subr.bf16.mxu0 %v7970
    %9608 = vmatpush1.bf16.msra.mxu0 %v7969
    %9609 = vmatprep.subr.bf16.mxu0 %v7962
    %9610 = vmatpush1.bf16.msra.mxu0 %v7961
    %9611 = vmatprep.subr.bf16.mxu0 %v7954
    %9612 = vmatpush1.bf16.msra.mxu0 %v7953
    %9613 = vmatprep.subr.bf16.mxu0 %v7946
    %9614 = vmatpush1.bf16.msra.mxu0 %v7945
    %9615 = vmatprep.subr.bf16.mxu0 %v7938
    %9616 = vmatpush1.bf16.msra.mxu0 %v7937
    %9617 = vmatprep.subr.bf16.mxu0 %v8058
    %9618 = vmatpush2.bf16.msra.mxu0 %v8057
    %9619 = vmatprep.subr.bf16.mxu0 %v8050
    %9620 = vmatpush2.bf16.msra.mxu0 %v8049
    %9621 = vmatprep.subr.bf16.mxu0 %v8042
    %9622 = vmatpush2.bf16.msra.mxu0 %v8041
    %9623 = vmatprep.subr.bf16.mxu0 %v8034
    %9624 = vmatpush2.bf16.msra.mxu0 %v8033
    %9625 = vmatprep.subr.bf16.mxu0 %v8026
    %9626 = vmatpush2.bf16.msra.mxu0 %v8025
    %9627 = vmatprep.subr.bf16.mxu0 %v8018
    %9628 = vmatpush2.bf16.msra.mxu0 %v8017
    %9629 = vmatprep.subr.bf16.mxu0 %v8010
    %9630 = vmatpush2.bf16.msra.mxu0 %v8009
    %9631 = vmatprep.subr.bf16.mxu0 %v8002
    %9632 = vmatpush2.bf16.msra.mxu0 %v8001
    %9633 = vmatprep.mubr.bf16.mxu0 %v5614
    %9634 = vmatmul.mubr.bf16.gmra.mxu0 %v5613
    %v9635 = vpop.f32.mrf.mxu0
    %v9636 = vadd.f32 %v9593, %v9635
    %v9637 = vpop.f32.mrf.mxu0
    %v9638 = vadd.f32 %v9595, %v9637
    %v9639 = vpop.f32.mrf.mxu0
    %v9640 = vadd.f32 %v9597, %v9639
    %v9641 = vpop.f32.mrf.mxu0
    %v9642 = vadd.f32 %v9599, %v9641
    %9643 = vdwg.mxu0
    %9644 = vmatprep.subr.bf16.mxu0 %v8122
    %9645 = vmatpush1.bf16.msra.mxu0 %v8121
    %9646 = vmatprep.subr.bf16.mxu0 %v8114
    %9647 = vmatpush1.bf16.msra.mxu0 %v8113
    %9648 = vmatprep.subr.bf16.mxu0 %v8106
    %9649 = vmatpush1.bf16.msra.mxu0 %v8105
    %9650 = vmatprep.subr.bf16.mxu0 %v8098
    %9651 = vmatpush1.bf16.msra.mxu0 %v8097
    %9652 = vmatprep.subr.bf16.mxu0 %v8090
    %9653 = vmatpush1.bf16.msra.mxu0 %v8089
    %9654 = vmatprep.subr.bf16.mxu0 %v8082
    %9655 = vmatpush1.bf16.msra.mxu0 %v8081
    %9656 = vmatprep.subr.bf16.mxu0 %v8074
    %9657 = vmatpush1.bf16.msra.mxu0 %v8073
    %9658 = vmatprep.subr.bf16.mxu0 %v8066
    %9659 = vmatpush1.bf16.msra.mxu0 %v8065
    %9660 = vmatprep.subr.bf16.mxu0 %v8186
    %9661 = vmatpush2.bf16.msra.mxu0 %v8185
    %9662 = vmatprep.subr.bf16.mxu0 %v8178
    %9663 = vmatpush2.bf16.msra.mxu0 %v8177
    %9664 = vmatprep.subr.bf16.mxu0 %v8170
    %9665 = vmatpush2.bf16.msra.mxu0 %v8169
    %9666 = vmatprep.subr.bf16.mxu0 %v8162
    %9667 = vmatpush2.bf16.msra.mxu0 %v8161
    %9668 = vmatprep.subr.bf16.mxu0 %v8154
    %9669 = vmatpush2.bf16.msra.mxu0 %v8153
    %9670 = vmatprep.subr.bf16.mxu0 %v8146
    %9671 = vmatpush2.bf16.msra.mxu0 %v8145
    %9672 = vmatprep.subr.bf16.mxu0 %v8138
    %9673 = vmatpush2.bf16.msra.mxu0 %v8137
    %9674 = vmatprep.subr.bf16.mxu0 %v8130
    %9675 = vmatpush2.bf16.msra.mxu0 %v8129
    %9676 = vmatprep.mubr.bf16.mxu0 %v5616
    %9677 = vmatmul.mubr.bf16.gmra.mxu0 %v5615
    %v9678 = vpop.f32.mrf.mxu0
    %v9679 = vadd.f32 %v9636, %v9678
    %v9680 = vpop.f32.mrf.mxu0
    %v9681 = vadd.f32 %v9638, %v9680
    %v9682 = vpop.f32.mrf.mxu0
    %v9683 = vadd.f32 %v9640, %v9682
    %v9684 = vpop.f32.mrf.mxu0
    %v9685 = vadd.f32 %v9642, %v9684
    %9686 = vdwg.mxu0
    %v9687 = vld [vmem:[#allocation7] sm:$0xff]
    %v9689 = vlaneseq
    %v9690 = vshrl.u32 %v9689, 7
    %v9691 = vsub.s32 0, %v9690
    %v9692 = vrot.slane %v9687, %v9691
    %v9693 = vlaneseq
    %v9694 = vshrl.u32 %v9693, 7
    %v9695 = vsub.s32 1, %v9694
    %v9696 = vrot.slane %v9687, %v9695
    %v9697 = vlaneseq
    %v9698 = vshrl.u32 %v9697, 7
    %v9699 = vsub.s32 2, %v9698
    %v9700 = vrot.slane %v9687, %v9699
    %v9701 = vlaneseq
    %v9702 = vshrl.u32 %v9701, 7
    %v9703 = vsub.s32 3, %v9702
    %v9704 = vrot.slane %v9687, %v9703
    %v9705 = vlaneseq
    %v9706 = vshrl.u32 %v9705, 7
    %v9707 = vsub.s32 4, %v9706
    %v9708 = vrot.slane %v9687, %v9707
    %v9709 = vlaneseq
    %v9710 = vshrl.u32 %v9709, 7
    %v9711 = vsub.s32 5, %v9710
    %v9712 = vrot.slane %v9687, %v9711
    %v9713 = vlaneseq
    %v9714 = vshrl.u32 %v9713, 7
    %v9715 = vsub.s32 6, %v9714
    %v9716 = vrot.slane %v9687, %v9715
    %v9717 = vlaneseq
    %v9718 = vshrl.u32 %v9717, 7
    %v9719 = vsub.s32 7, %v9718
    %v9720 = vrot.slane %v9687, %v9719
    %v9729 = vadd.f32 %v9034, %v9692
    %v9730 = vadd.f32 %v9036, %v9696
    %v9731 = vadd.f32 %v9249, %v9700
    %v9732 = vadd.f32 %v9251, %v9704
    %v9733 = vadd.f32 %v9464, %v9708
    %v9734 = vadd.f32 %v9466, %v9712
    %v9735 = vadd.f32 %v9679, %v9716
    %v9736 = vadd.f32 %v9681, %v9720
    %v9737 = vadd.f32 %v9038, %v9692
    %v9738 = vadd.f32 %v9040, %v9696
    %v9739 = vadd.f32 %v9253, %v9700
    %v9740 = vadd.f32 %v9255, %v9704
    %v9741 = vadd.f32 %v9468, %v9708
    %v9742 = vadd.f32 %v9470, %v9712
    %v9743 = vadd.f32 %v9683, %v9716
    %v9744 = vadd.f32 %v9685, %v9720
    %s9745 = sld [smem:[#allocation17]]
    %vm9746 = vcmp.gt.f32.partialorder %v9729, 0.0
    %vm9747 = vcmp.gt.f32.partialorder %v9730, 0.0
    %vm9748 = vcmp.gt.f32.partialorder %v9731, 0.0
    %vm9749 = vcmp.gt.f32.partialorder %v9732, 0.0
    %vm9750 = vcmp.gt.f32.partialorder %v9733, 0.0
    %vm9751 = vcmp.gt.f32.partialorder %v9734, 0.0
    %vm9752 = vcmp.gt.f32.partialorder %v9735, 0.0
    %vm9753 = vcmp.gt.f32.partialorder %v9736, 0.0
    %vm9754 = vcmp.gt.f32.partialorder %v9737, 0.0
    %vm9755 = vcmp.gt.f32.partialorder %v9738, 0.0
    %vm9756 = vcmp.gt.f32.partialorder %v9739, 0.0
    %vm9757 = vcmp.gt.f32.partialorder %v9740, 0.0
    %vm9758 = vcmp.gt.f32.partialorder %v9741, 0.0
    %vm9759 = vcmp.gt.f32.partialorder %v9742, 0.0
    %vm9760 = vcmp.gt.f32.partialorder %v9743, 0.0
    %vm9761 = vcmp.gt.f32.partialorder %v9744, 0.0
    %v9762 = vstv %s9745
    %v9763 = vmul.f32 %v9762, %v9729
    %v9764 = vmul.f32 %v9762, %v9730
    %v9765 = vmul.f32 %v9762, %v9731
    %v9766 = vmul.f32 %v9762, %v9732
    %v9767 = vmul.f32 %v9762, %v9733
    %v9768 = vmul.f32 %v9762, %v9734
    %v9769 = vmul.f32 %v9762, %v9735
    %v9770 = vmul.f32 %v9762, %v9736
    %v9771 = vmul.f32 %v9762, %v9737
    %v9772 = vmul.f32 %v9762, %v9738
    %v9773 = vmul.f32 %v9762, %v9739
    %v9774 = vmul.f32 %v9762, %v9740
    %v9775 = vmul.f32 %v9762, %v9741
    %v9776 = vmul.f32 %v9762, %v9742
    %v9777 = vmul.f32 %v9762, %v9743
    %v9778 = vmul.f32 %v9762, %v9744
    %v9779 = vsel %vm9746, %v9729, %v9763
    %v9780 = vsel %vm9747, %v9730, %v9764
    %v9781 = vsel %vm9748, %v9731, %v9765
    %v9782 = vsel %vm9749, %v9732, %v9766
    %v9783 = vsel %vm9750, %v9733, %v9767
    %v9784 = vsel %vm9751, %v9734, %v9768
    %v9785 = vsel %vm9752, %v9735, %v9769
    %v9786 = vsel %vm9753, %v9736, %v9770
    %v9787 = vsel %vm9754, %v9737, %v9771
    %v9788 = vsel %vm9755, %v9738, %v9772
    %v9789 = vsel %vm9756, %v9739, %v9773
    %v9790 = vsel %vm9757, %v9740, %v9774
    %v9791 = vsel %vm9758, %v9741, %v9775
    %v9792 = vsel %vm9759, %v9742, %v9776
    %v9793 = vsel %vm9760, %v9743, %v9777
    %v9794 = vsel %vm9761, %v9744, %v9778
    %v9795 = vpack.c.bf16 %v9787, %v9779
    %v9796 = vpack.c.bf16 %v9788, %v9780
    %v9797 = vpack.c.bf16 %v9789, %v9781
    %v9798 = vpack.c.bf16 %v9790, %v9782
    %v9799 = vpack.c.bf16 %v9791, %v9783
    %v9800 = vpack.c.bf16 %v9792, %v9784
    %v9801 = vpack.c.bf16 %v9793, %v9785
    %v9802 = vpack.c.bf16 %v9794, %v9786
    %v9803 = vld [vmem:[#allocation8] sm:$0xff]
    %v9804 = vld [vmem:[#allocation8 + $0x8] sm:$0xff]
    %v9805 = vld [vmem:[#allocation8 + $0x10] sm:$0xff]
    %v9806 = vld [vmem:[#allocation8 + $0x18] sm:$0xff]
    %v9807 = vld [vmem:[#allocation8 + $0x20] sm:$0xff]
    %v9808 = vld [vmem:[#allocation8 + $0x28] sm:$0xff]
    %v9809 = vld [vmem:[#allocation8 + $0x30] sm:$0xff]
    %v9810 = vld [vmem:[#allocation8 + $0x38] sm:$0xff]
    %v9811 = vld [vmem:[#allocation8 + $0x40] sm:$0xff]
    %v9812 = vld [vmem:[#allocation8 + $0x48] sm:$0xff]
    %v9813 = vld [vmem:[#allocation8 + $0x50] sm:$0xff]
    %v9814 = vld [vmem:[#allocation8 + $0x58] sm:$0xff]
    %v9815 = vld [vmem:[#allocation8 + $0x60] sm:$0xff]
    %v9816 = vld [vmem:[#allocation8 + $0x68] sm:$0xff]
    %v9817 = vld [vmem:[#allocation8 + $0x70] sm:$0xff]
    %v9818 = vld [vmem:[#allocation8 + $0x78] sm:$0xff]
    %v9819 = vld [vmem:[#allocation8 + $0x80] sm:$0xff]
    %v9820 = vld [vmem:[#allocation8 + $0x88] sm:$0xff]
    %v9821 = vld [vmem:[#allocation8 + $0x90] sm:$0xff]
    %v9822 = vld [vmem:[#allocation8 + $0x98] sm:$0xff]
    %v9823 = vld [vmem:[#allocation8 + $0xa0] sm:$0xff]
    %v9824 = vld [vmem:[#allocation8 + $0xa8] sm:$0xff]
    %v9825 = vld [vmem:[#allocation8 + $0xb0] sm:$0xff]
    %v9826 = vld [vmem:[#allocation8 + $0xb8] sm:$0xff]
    %v9827 = vld [vmem:[#allocation8 + $0xc0] sm:$0xff]
    %v9828 = vld [vmem:[#allocation8 + $0xc8] sm:$0xff]
    %v9829 = vld [vmem:[#allocation8 + $0xd0] sm:$0xff]
    %v9830 = vld [vmem:[#allocation8 + $0xd8] sm:$0xff]
    %v9831 = vld [vmem:[#allocation8 + $0xe0] sm:$0xff]
    %v9832 = vld [vmem:[#allocation8 + $0xe8] sm:$0xff]
    %v9833 = vld [vmem:[#allocation8 + $0xf0] sm:$0xff]
    %v9834 = vld [vmem:[#allocation8 + $0xf8] sm:$0xff]
    %v9835 = vld [vmem:[#allocation8 + $0x100] sm:$0xff]
    %v9836 = vld [vmem:[#allocation8 + $0x108] sm:$0xff]
    %v9837 = vld [vmem:[#allocation8 + $0x110] sm:$0xff]
    %v9838 = vld [vmem:[#allocation8 + $0x118] sm:$0xff]
    %v9839 = vld [vmem:[#allocation8 + $0x120] sm:$0xff]
    %v9840 = vld [vmem:[#allocation8 + $0x128] sm:$0xff]
    %v9841 = vld [vmem:[#allocation8 + $0x130] sm:$0xff]
    %v9842 = vld [vmem:[#allocation8 + $0x138] sm:$0xff]
    %v9843 = vld [vmem:[#allocation8 + $0x140] sm:$0xff]
    %v9844 = vld [vmem:[#allocation8 + $0x148] sm:$0xff]
    %v9845 = vld [vmem:[#allocation8 + $0x150] sm:$0xff]
    %v9846 = vld [vmem:[#allocation8 + $0x158] sm:$0xff]
    %v9847 = vld [vmem:[#allocation8 + $0x160] sm:$0xff]
    %v9848 = vld [vmem:[#allocation8 + $0x168] sm:$0xff]
    %v9849 = vld [vmem:[#allocation8 + $0x170] sm:$0xff]
    %v9850 = vld [vmem:[#allocation8 + $0x178] sm:$0xff]
    %v9851 = vld [vmem:[#allocation8 + $0x180] sm:$0xff]
    %v9852 = vld [vmem:[#allocation8 + $0x188] sm:$0xff]
    %v9853 = vld [vmem:[#allocation8 + $0x190] sm:$0xff]
    %v9854 = vld [vmem:[#allocation8 + $0x198] sm:$0xff]
    %v9855 = vld [vmem:[#allocation8 + $0x1a0] sm:$0xff]
    %v9856 = vld [vmem:[#allocation8 + $0x1a8] sm:$0xff]
    %v9857 = vld [vmem:[#allocation8 + $0x1b0] sm:$0xff]
    %v9858 = vld [vmem:[#allocation8 + $0x1b8] sm:$0xff]
    %v9859 = vld [vmem:[#allocation8 + $0x1c0] sm:$0xff]
    %v9860 = vld [vmem:[#allocation8 + $0x1c8] sm:$0xff]
    %v9861 = vld [vmem:[#allocation8 + $0x1d0] sm:$0xff]
    %v9862 = vld [vmem:[#allocation8 + $0x1d8] sm:$0xff]
    %v9863 = vld [vmem:[#allocation8 + $0x1e0] sm:$0xff]
    %v9864 = vld [vmem:[#allocation8 + $0x1e8] sm:$0xff]
    %v9865 = vld [vmem:[#allocation8 + $0x1f0] sm:$0xff]
    %v9866 = vld [vmem:[#allocation8 + $0x1f8] sm:$0xff]
    %v9867 = vld [vmem:[#allocation8 + $0x200] sm:$0xff]
    %v9868 = vld [vmem:[#allocation8 + $0x208] sm:$0xff]
    %v9869 = vld [vmem:[#allocation8 + $0x210] sm:$0xff]
    %v9870 = vld [vmem:[#allocation8 + $0x218] sm:$0xff]
    %v9871 = vld [vmem:[#allocation8 + $0x220] sm:$0xff]
    %v9872 = vld [vmem:[#allocation8 + $0x228] sm:$0xff]
    %v9873 = vld [vmem:[#allocation8 + $0x230] sm:$0xff]
    %v9874 = vld [vmem:[#allocation8 + $0x238] sm:$0xff]
    %v9875 = vld [vmem:[#allocation8 + $0x240] sm:$0xff]
    %v9876 = vld [vmem:[#allocation8 + $0x248] sm:$0xff]
    %v9877 = vld [vmem:[#allocation8 + $0x250] sm:$0xff]
    %v9878 = vld [vmem:[#allocation8 + $0x258] sm:$0xff]
    %v9879 = vld [vmem:[#allocation8 + $0x260] sm:$0xff]
    %v9880 = vld [vmem:[#allocation8 + $0x268] sm:$0xff]
    %v9881 = vld [vmem:[#allocation8 + $0x270] sm:$0xff]
    %v9882 = vld [vmem:[#allocation8 + $0x278] sm:$0xff]
    %v9883 = vld [vmem:[#allocation8 + $0x280] sm:$0xff]
    %v9884 = vld [vmem:[#allocation8 + $0x288] sm:$0xff]
    %v9885 = vld [vmem:[#allocation8 + $0x290] sm:$0xff]
    %v9886 = vld [vmem:[#allocation8 + $0x298] sm:$0xff]
    %v9887 = vld [vmem:[#allocation8 + $0x2a0] sm:$0xff]
    %v9888 = vld [vmem:[#allocation8 + $0x2a8] sm:$0xff]
    %v9889 = vld [vmem:[#allocation8 + $0x2b0] sm:$0xff]
    %v9890 = vld [vmem:[#allocation8 + $0x2b8] sm:$0xff]
    %v9891 = vld [vmem:[#allocation8 + $0x2c0] sm:$0xff]
    %v9892 = vld [vmem:[#allocation8 + $0x2c8] sm:$0xff]
    %v9893 = vld [vmem:[#allocation8 + $0x2d0] sm:$0xff]
    %v9894 = vld [vmem:[#allocation8 + $0x2d8] sm:$0xff]
    %v9895 = vld [vmem:[#allocation8 + $0x2e0] sm:$0xff]
    %v9896 = vld [vmem:[#allocation8 + $0x2e8] sm:$0xff]
    %v9897 = vld [vmem:[#allocation8 + $0x2f0] sm:$0xff]
    %v9898 = vld [vmem:[#allocation8 + $0x2f8] sm:$0xff]
    %v9899 = vld [vmem:[#allocation8 + $0x300] sm:$0xff]
    %v9900 = vld [vmem:[#allocation8 + $0x308] sm:$0xff]
    %v9901 = vld [vmem:[#allocation8 + $0x310] sm:$0xff]
    %v9902 = vld [vmem:[#allocation8 + $0x318] sm:$0xff]
    %v9903 = vld [vmem:[#allocation8 + $0x320] sm:$0xff]
    %v9904 = vld [vmem:[#allocation8 + $0x328] sm:$0xff]
    %v9905 = vld [vmem:[#allocation8 + $0x330] sm:$0xff]
    %v9906 = vld [vmem:[#allocation8 + $0x338] sm:$0xff]
    %v9907 = vld [vmem:[#allocation8 + $0x340] sm:$0xff]
    %v9908 = vld [vmem:[#allocation8 + $0x348] sm:$0xff]
    %v9909 = vld [vmem:[#allocation8 + $0x350] sm:$0xff]
    %v9910 = vld [vmem:[#allocation8 + $0x358] sm:$0xff]
    %v9911 = vld [vmem:[#allocation8 + $0x360] sm:$0xff]
    %v9912 = vld [vmem:[#allocation8 + $0x368] sm:$0xff]
    %v9913 = vld [vmem:[#allocation8 + $0x370] sm:$0xff]
    %v9914 = vld [vmem:[#allocation8 + $0x378] sm:$0xff]
    %v9915 = vld [vmem:[#allocation8 + $0x380] sm:$0xff]
    %v9916 = vld [vmem:[#allocation8 + $0x388] sm:$0xff]
    %v9917 = vld [vmem:[#allocation8 + $0x390] sm:$0xff]
    %v9918 = vld [vmem:[#allocation8 + $0x398] sm:$0xff]
    %v9919 = vld [vmem:[#allocation8 + $0x3a0] sm:$0xff]
    %v9920 = vld [vmem:[#allocation8 + $0x3a8] sm:$0xff]
    %v9921 = vld [vmem:[#allocation8 + $0x3b0] sm:$0xff]
    %v9922 = vld [vmem:[#allocation8 + $0x3b8] sm:$0xff]
    %v9923 = vld [vmem:[#allocation8 + $0x3c0] sm:$0xff]
    %v9924 = vld [vmem:[#allocation8 + $0x3c8] sm:$0xff]
    %v9925 = vld [vmem:[#allocation8 + $0x3d0] sm:$0xff]
    %v9926 = vld [vmem:[#allocation8 + $0x3d8] sm:$0xff]
    %v9927 = vld [vmem:[#allocation8 + $0x3e0] sm:$0xff]
    %v9928 = vld [vmem:[#allocation8 + $0x3e8] sm:$0xff]
    %v9929 = vld [vmem:[#allocation8 + $0x3f0] sm:$0xff]
    %v9930 = vld [vmem:[#allocation8 + $0x3f8] sm:$0xff]
    %v9931 = vld [vmem:[#allocation8 + $0x400] sm:$0xff]
    %v9932 = vld [vmem:[#allocation8 + $0x408] sm:$0xff]
    %v9933 = vld [vmem:[#allocation8 + $0x410] sm:$0xff]
    %v9934 = vld [vmem:[#allocation8 + $0x418] sm:$0xff]
    %v9935 = vld [vmem:[#allocation8 + $0x420] sm:$0xff]
    %v9936 = vld [vmem:[#allocation8 + $0x428] sm:$0xff]
    %v9937 = vld [vmem:[#allocation8 + $0x430] sm:$0xff]
    %v9938 = vld [vmem:[#allocation8 + $0x438] sm:$0xff]
    %v9939 = vld [vmem:[#allocation8 + $0x440] sm:$0xff]
    %v9940 = vld [vmem:[#allocation8 + $0x448] sm:$0xff]
    %v9941 = vld [vmem:[#allocation8 + $0x450] sm:$0xff]
    %v9942 = vld [vmem:[#allocation8 + $0x458] sm:$0xff]
    %v9943 = vld [vmem:[#allocation8 + $0x460] sm:$0xff]
    %v9944 = vld [vmem:[#allocation8 + $0x468] sm:$0xff]
    %v9945 = vld [vmem:[#allocation8 + $0x470] sm:$0xff]
    %v9946 = vld [vmem:[#allocation8 + $0x478] sm:$0xff]
    %v9947 = vld [vmem:[#allocation8 + $0x480] sm:$0xff]
    %v9948 = vld [vmem:[#allocation8 + $0x488] sm:$0xff]
    %v9949 = vld [vmem:[#allocation8 + $0x490] sm:$0xff]
    %v9950 = vld [vmem:[#allocation8 + $0x498] sm:$0xff]
    %v9951 = vld [vmem:[#allocation8 + $0x4a0] sm:$0xff]
    %v9952 = vld [vmem:[#allocation8 + $0x4a8] sm:$0xff]
    %v9953 = vld [vmem:[#allocation8 + $0x4b0] sm:$0xff]
    %v9954 = vld [vmem:[#allocation8 + $0x4b8] sm:$0xff]
    %v9955 = vld [vmem:[#allocation8 + $0x4c0] sm:$0xff]
    %v9956 = vld [vmem:[#allocation8 + $0x4c8] sm:$0xff]
    %v9957 = vld [vmem:[#allocation8 + $0x4d0] sm:$0xff]
    %v9958 = vld [vmem:[#allocation8 + $0x4d8] sm:$0xff]
    %v9959 = vld [vmem:[#allocation8 + $0x4e0] sm:$0xff]
    %v9960 = vld [vmem:[#allocation8 + $0x4e8] sm:$0xff]
    %v9961 = vld [vmem:[#allocation8 + $0x4f0] sm:$0xff]
    %v9962 = vld [vmem:[#allocation8 + $0x4f8] sm:$0xff]
    %v9963 = vld [vmem:[#allocation8 + $0x500] sm:$0xff]
    %v9964 = vld [vmem:[#allocation8 + $0x508] sm:$0xff]
    %v9965 = vld [vmem:[#allocation8 + $0x510] sm:$0xff]
    %v9966 = vld [vmem:[#allocation8 + $0x518] sm:$0xff]
    %v9967 = vld [vmem:[#allocation8 + $0x520] sm:$0xff]
    %v9968 = vld [vmem:[#allocation8 + $0x528] sm:$0xff]
    %v9969 = vld [vmem:[#allocation8 + $0x530] sm:$0xff]
    %v9970 = vld [vmem:[#allocation8 + $0x538] sm:$0xff]
    %v9971 = vld [vmem:[#allocation8 + $0x540] sm:$0xff]
    %v9972 = vld [vmem:[#allocation8 + $0x548] sm:$0xff]
    %v9973 = vld [vmem:[#allocation8 + $0x550] sm:$0xff]
    %v9974 = vld [vmem:[#allocation8 + $0x558] sm:$0xff]
    %v9975 = vld [vmem:[#allocation8 + $0x560] sm:$0xff]
    %v9976 = vld [vmem:[#allocation8 + $0x568] sm:$0xff]
    %v9977 = vld [vmem:[#allocation8 + $0x570] sm:$0xff]
    %v9978 = vld [vmem:[#allocation8 + $0x578] sm:$0xff]
    %v9979 = vld [vmem:[#allocation8 + $0x580] sm:$0xff]
    %v9980 = vld [vmem:[#allocation8 + $0x588] sm:$0xff]
    %v9981 = vld [vmem:[#allocation8 + $0x590] sm:$0xff]
    %v9982 = vld [vmem:[#allocation8 + $0x598] sm:$0xff]
    %v9983 = vld [vmem:[#allocation8 + $0x5a0] sm:$0xff]
    %v9984 = vld [vmem:[#allocation8 + $0x5a8] sm:$0xff]
    %v9985 = vld [vmem:[#allocation8 + $0x5b0] sm:$0xff]
    %v9986 = vld [vmem:[#allocation8 + $0x5b8] sm:$0xff]
    %v9987 = vld [vmem:[#allocation8 + $0x5c0] sm:$0xff]
    %v9988 = vld [vmem:[#allocation8 + $0x5c8] sm:$0xff]
    %v9989 = vld [vmem:[#allocation8 + $0x5d0] sm:$0xff]
    %v9990 = vld [vmem:[#allocation8 + $0x5d8] sm:$0xff]
    %v9991 = vld [vmem:[#allocation8 + $0x5e0] sm:$0xff]
    %v9992 = vld [vmem:[#allocation8 + $0x5e8] sm:$0xff]
    %v9993 = vld [vmem:[#allocation8 + $0x5f0] sm:$0xff]
    %v9994 = vld [vmem:[#allocation8 + $0x5f8] sm:$0xff]
    %v9995 = vld [vmem:[#allocation8 + $0x600] sm:$0xff]
    %v9996 = vld [vmem:[#allocation8 + $0x608] sm:$0xff]
    %v9997 = vld [vmem:[#allocation8 + $0x610] sm:$0xff]
    %v9998 = vld [vmem:[#allocation8 + $0x618] sm:$0xff]
    %v9999 = vld [vmem:[#allocation8 + $0x620] sm:$0xff]
    %v10000 = vld [vmem:[#allocation8 + $0x628] sm:$0xff]
    %v10001 = vld [vmem:[#allocation8 + $0x630] sm:$0xff]
    %v10002 = vld [vmem:[#allocation8 + $0x638] sm:$0xff]
    %v10003 = vld [vmem:[#allocation8 + $0x640] sm:$0xff]
    %v10004 = vld [vmem:[#allocation8 + $0x648] sm:$0xff]
    %v10005 = vld [vmem:[#allocation8 + $0x650] sm:$0xff]
    %v10006 = vld [vmem:[#allocation8 + $0x658] sm:$0xff]
    %v10007 = vld [vmem:[#allocation8 + $0x660] sm:$0xff]
    %v10008 = vld [vmem:[#allocation8 + $0x668] sm:$0xff]
    %v10009 = vld [vmem:[#allocation8 + $0x670] sm:$0xff]
    %v10010 = vld [vmem:[#allocation8 + $0x678] sm:$0xff]
    %v10011 = vld [vmem:[#allocation8 + $0x680] sm:$0xff]
    %v10012 = vld [vmem:[#allocation8 + $0x688] sm:$0xff]
    %v10013 = vld [vmem:[#allocation8 + $0x690] sm:$0xff]
    %v10014 = vld [vmem:[#allocation8 + $0x698] sm:$0xff]
    %v10015 = vld [vmem:[#allocation8 + $0x6a0] sm:$0xff]
    %v10016 = vld [vmem:[#allocation8 + $0x6a8] sm:$0xff]
    %v10017 = vld [vmem:[#allocation8 + $0x6b0] sm:$0xff]
    %v10018 = vld [vmem:[#allocation8 + $0x6b8] sm:$0xff]
    %v10019 = vld [vmem:[#allocation8 + $0x6c0] sm:$0xff]
    %v10020 = vld [vmem:[#allocation8 + $0x6c8] sm:$0xff]
    %v10021 = vld [vmem:[#allocation8 + $0x6d0] sm:$0xff]
    %v10022 = vld [vmem:[#allocation8 + $0x6d8] sm:$0xff]
    %v10023 = vld [vmem:[#allocation8 + $0x6e0] sm:$0xff]
    %v10024 = vld [vmem:[#allocation8 + $0x6e8] sm:$0xff]
    %v10025 = vld [vmem:[#allocation8 + $0x6f0] sm:$0xff]
    %v10026 = vld [vmem:[#allocation8 + $0x6f8] sm:$0xff]
    %v10027 = vld [vmem:[#allocation8 + $0x700] sm:$0xff]
    %v10028 = vld [vmem:[#allocation8 + $0x708] sm:$0xff]
    %v10029 = vld [vmem:[#allocation8 + $0x710] sm:$0xff]
    %v10030 = vld [vmem:[#allocation8 + $0x718] sm:$0xff]
    %v10031 = vld [vmem:[#allocation8 + $0x720] sm:$0xff]
    %v10032 = vld [vmem:[#allocation8 + $0x728] sm:$0xff]
    %v10033 = vld [vmem:[#allocation8 + $0x730] sm:$0xff]
    %v10034 = vld [vmem:[#allocation8 + $0x738] sm:$0xff]
    %v10035 = vld [vmem:[#allocation8 + $0x740] sm:$0xff]
    %v10036 = vld [vmem:[#allocation8 + $0x748] sm:$0xff]
    %v10037 = vld [vmem:[#allocation8 + $0x750] sm:$0xff]
    %v10038 = vld [vmem:[#allocation8 + $0x758] sm:$0xff]
    %v10039 = vld [vmem:[#allocation8 + $0x760] sm:$0xff]
    %v10040 = vld [vmem:[#allocation8 + $0x768] sm:$0xff]
    %v10041 = vld [vmem:[#allocation8 + $0x770] sm:$0xff]
    %v10042 = vld [vmem:[#allocation8 + $0x778] sm:$0xff]
    %v10043 = vld [vmem:[#allocation8 + $0x780] sm:$0xff]
    %v10044 = vld [vmem:[#allocation8 + $0x788] sm:$0xff]
    %v10045 = vld [vmem:[#allocation8 + $0x790] sm:$0xff]
    %v10046 = vld [vmem:[#allocation8 + $0x798] sm:$0xff]
    %v10047 = vld [vmem:[#allocation8 + $0x7a0] sm:$0xff]
    %v10048 = vld [vmem:[#allocation8 + $0x7a8] sm:$0xff]
    %v10049 = vld [vmem:[#allocation8 + $0x7b0] sm:$0xff]
    %v10050 = vld [vmem:[#allocation8 + $0x7b8] sm:$0xff]
    %v10051 = vld [vmem:[#allocation8 + $0x7c0] sm:$0xff]
    %v10052 = vld [vmem:[#allocation8 + $0x7c8] sm:$0xff]
    %v10053 = vld [vmem:[#allocation8 + $0x7d0] sm:$0xff]
    %v10054 = vld [vmem:[#allocation8 + $0x7d8] sm:$0xff]
    %v10055 = vld [vmem:[#allocation8 + $0x7e0] sm:$0xff]
    %v10056 = vld [vmem:[#allocation8 + $0x7e8] sm:$0xff]
    %v10057 = vld [vmem:[#allocation8 + $0x7f0] sm:$0xff]
    %v10058 = vld [vmem:[#allocation8 + $0x7f8] sm:$0xff]
    %v10059 = vld [vmem:[#allocation10] sm:$0xf]
    %v10061 = vlaneseq
    %v10062 = vshrl.u32 %v10061, 7
    %v10063 = vsub.s32 0, %v10062
    %v10064 = vrot.slane %v10059, %v10063
    %v10065 = vlaneseq
    %v10066 = vshrl.u32 %v10065, 7
    %v10067 = vsub.s32 1, %v10066
    %v10068 = vrot.slane %v10059, %v10067
    %v10069 = vlaneseq
    %v10070 = vshrl.u32 %v10069, 7
    %v10071 = vsub.s32 2, %v10070
    %v10072 = vrot.slane %v10059, %v10071
    %v10073 = vlaneseq
    %v10074 = vshrl.u32 %v10073, 7
    %v10075 = vsub.s32 3, %v10074
    %v10076 = vrot.slane %v10059, %v10075
    %v10337 = vunpack.c.l.b16 %v9803
    %v10338 = vunpack.c.h.b16 %v9803
    %v10339 = vunpack.c.l.b16 %v9804
    %v10340 = vunpack.c.h.b16 %v9804
    %v10341 = vunpack.c.l.b16 %v9805
    %v10342 = vunpack.c.h.b16 %v9805
    %v10343 = vunpack.c.l.b16 %v9806
    %v10344 = vunpack.c.h.b16 %v9806
    %v10345 = vunpack.c.l.b16 %v9807
    %v10346 = vunpack.c.h.b16 %v9807
    %v10347 = vunpack.c.l.b16 %v9808
    %v10348 = vunpack.c.h.b16 %v9808
    %v10349 = vunpack.c.l.b16 %v9809
    %v10350 = vunpack.c.h.b16 %v9809
    %v10351 = vunpack.c.l.b16 %v9810
    %v10352 = vunpack.c.h.b16 %v9810
    %v10353 = vunpack.c.l.b16 %v9811
    %v10354 = vunpack.c.h.b16 %v9811
    %v10355 = vunpack.c.l.b16 %v9812
    %v10356 = vunpack.c.h.b16 %v9812
    %v10357 = vunpack.c.l.b16 %v9813
    %v10358 = vunpack.c.h.b16 %v9813
    %v10359 = vunpack.c.l.b16 %v9814
    %v10360 = vunpack.c.h.b16 %v9814
    %v10361 = vunpack.c.l.b16 %v9815
    %v10362 = vunpack.c.h.b16 %v9815
    %v10363 = vunpack.c.l.b16 %v9816
    %v10364 = vunpack.c.h.b16 %v9816
    %v10365 = vunpack.c.l.b16 %v9817
    %v10366 = vunpack.c.h.b16 %v9817
    %v10367 = vunpack.c.l.b16 %v9818
    %v10368 = vunpack.c.h.b16 %v9818
    %v10369 = vunpack.c.l.b16 %v9819
    %v10370 = vunpack.c.h.b16 %v9819
    %v10371 = vunpack.c.l.b16 %v9820
    %v10372 = vunpack.c.h.b16 %v9820
    %v10373 = vunpack.c.l.b16 %v9821
    %v10374 = vunpack.c.h.b16 %v9821
    %v10375 = vunpack.c.l.b16 %v9822
    %v10376 = vunpack.c.h.b16 %v9822
    %v10377 = vunpack.c.l.b16 %v9823
    %v10378 = vunpack.c.h.b16 %v9823
    %v10379 = vunpack.c.l.b16 %v9824
    %v10380 = vunpack.c.h.b16 %v9824
    %v10381 = vunpack.c.l.b16 %v9825
    %v10382 = vunpack.c.h.b16 %v9825
    %v10383 = vunpack.c.l.b16 %v9826
    %v10384 = vunpack.c.h.b16 %v9826
    %v10385 = vunpack.c.l.b16 %v9827
    %v10386 = vunpack.c.h.b16 %v9827
    %v10387 = vunpack.c.l.b16 %v9828
    %v10388 = vunpack.c.h.b16 %v9828
    %v10389 = vunpack.c.l.b16 %v9829
    %v10390 = vunpack.c.h.b16 %v9829
    %v10391 = vunpack.c.l.b16 %v9830
    %v10392 = vunpack.c.h.b16 %v9830
    %v10393 = vunpack.c.l.b16 %v9831
    %v10394 = vunpack.c.h.b16 %v9831
    %v10395 = vunpack.c.l.b16 %v9832
    %v10396 = vunpack.c.h.b16 %v9832
    %v10397 = vunpack.c.l.b16 %v9833
    %v10398 = vunpack.c.h.b16 %v9833
    %v10399 = vunpack.c.l.b16 %v9834
    %v10400 = vunpack.c.h.b16 %v9834
    %v10401 = vunpack.c.l.b16 %v9835
    %v10402 = vunpack.c.h.b16 %v9835
    %v10403 = vunpack.c.l.b16 %v9836
    %v10404 = vunpack.c.h.b16 %v9836
    %v10405 = vunpack.c.l.b16 %v9837
    %v10406 = vunpack.c.h.b16 %v9837
    %v10407 = vunpack.c.l.b16 %v9838
    %v10408 = vunpack.c.h.b16 %v9838
    %v10409 = vunpack.c.l.b16 %v9839
    %v10410 = vunpack.c.h.b16 %v9839
    %v10411 = vunpack.c.l.b16 %v9840
    %v10412 = vunpack.c.h.b16 %v9840
    %v10413 = vunpack.c.l.b16 %v9841
    %v10414 = vunpack.c.h.b16 %v9841
    %v10415 = vunpack.c.l.b16 %v9842
    %v10416 = vunpack.c.h.b16 %v9842
    %v10417 = vunpack.c.l.b16 %v9843
    %v10418 = vunpack.c.h.b16 %v9843
    %v10419 = vunpack.c.l.b16 %v9844
    %v10420 = vunpack.c.h.b16 %v9844
    %v10421 = vunpack.c.l.b16 %v9845
    %v10422 = vunpack.c.h.b16 %v9845
    %v10423 = vunpack.c.l.b16 %v9846
    %v10424 = vunpack.c.h.b16 %v9846
    %v10425 = vunpack.c.l.b16 %v9847
    %v10426 = vunpack.c.h.b16 %v9847
    %v10427 = vunpack.c.l.b16 %v9848
    %v10428 = vunpack.c.h.b16 %v9848
    %v10429 = vunpack.c.l.b16 %v9849
    %v10430 = vunpack.c.h.b16 %v9849
    %v10431 = vunpack.c.l.b16 %v9850
    %v10432 = vunpack.c.h.b16 %v9850
    %v10433 = vunpack.c.l.b16 %v9851
    %v10434 = vunpack.c.h.b16 %v9851
    %v10435 = vunpack.c.l.b16 %v9852
    %v10436 = vunpack.c.h.b16 %v9852
    %v10437 = vunpack.c.l.b16 %v9853
    %v10438 = vunpack.c.h.b16 %v9853
    %v10439 = vunpack.c.l.b16 %v9854
    %v10440 = vunpack.c.h.b16 %v9854
    %v10441 = vunpack.c.l.b16 %v9855
    %v10442 = vunpack.c.h.b16 %v9855
    %v10443 = vunpack.c.l.b16 %v9856
    %v10444 = vunpack.c.h.b16 %v9856
    %v10445 = vunpack.c.l.b16 %v9857
    %v10446 = vunpack.c.h.b16 %v9857
    %v10447 = vunpack.c.l.b16 %v9858
    %v10448 = vunpack.c.h.b16 %v9858
    %v10449 = vunpack.c.l.b16 %v9859
    %v10450 = vunpack.c.h.b16 %v9859
    %v10451 = vunpack.c.l.b16 %v9860
    %v10452 = vunpack.c.h.b16 %v9860
    %v10453 = vunpack.c.l.b16 %v9861
    %v10454 = vunpack.c.h.b16 %v9861
    %v10455 = vunpack.c.l.b16 %v9862
    %v10456 = vunpack.c.h.b16 %v9862
    %v10457 = vunpack.c.l.b16 %v9863
    %v10458 = vunpack.c.h.b16 %v9863
    %v10459 = vunpack.c.l.b16 %v9864
    %v10460 = vunpack.c.h.b16 %v9864
    %v10461 = vunpack.c.l.b16 %v9865
    %v10462 = vunpack.c.h.b16 %v9865
    %v10463 = vunpack.c.l.b16 %v9866
    %v10464 = vunpack.c.h.b16 %v9866
    %v10465 = vunpack.c.l.b16 %v9867
    %v10466 = vunpack.c.h.b16 %v9867
    %v10467 = vunpack.c.l.b16 %v9868
    %v10468 = vunpack.c.h.b16 %v9868
    %v10469 = vunpack.c.l.b16 %v9869
    %v10470 = vunpack.c.h.b16 %v9869
    %v10471 = vunpack.c.l.b16 %v9870
    %v10472 = vunpack.c.h.b16 %v9870
    %v10473 = vunpack.c.l.b16 %v9871
    %v10474 = vunpack.c.h.b16 %v9871
    %v10475 = vunpack.c.l.b16 %v9872
    %v10476 = vunpack.c.h.b16 %v9872
    %v10477 = vunpack.c.l.b16 %v9873
    %v10478 = vunpack.c.h.b16 %v9873
    %v10479 = vunpack.c.l.b16 %v9874
    %v10480 = vunpack.c.h.b16 %v9874
    %v10481 = vunpack.c.l.b16 %v9875
    %v10482 = vunpack.c.h.b16 %v9875
    %v10483 = vunpack.c.l.b16 %v9876
    %v10484 = vunpack.c.h.b16 %v9876
    %v10485 = vunpack.c.l.b16 %v9877
    %v10486 = vunpack.c.h.b16 %v9877
    %v10487 = vunpack.c.l.b16 %v9878
    %v10488 = vunpack.c.h.b16 %v9878
    %v10489 = vunpack.c.l.b16 %v9879
    %v10490 = vunpack.c.h.b16 %v9879
    %v10491 = vunpack.c.l.b16 %v9880
    %v10492 = vunpack.c.h.b16 %v9880
    %v10493 = vunpack.c.l.b16 %v9881
    %v10494 = vunpack.c.h.b16 %v9881
    %v10495 = vunpack.c.l.b16 %v9882
    %v10496 = vunpack.c.h.b16 %v9882
    %v10497 = vunpack.c.l.b16 %v9883
    %v10498 = vunpack.c.h.b16 %v9883
    %v10499 = vunpack.c.l.b16 %v9884
    %v10500 = vunpack.c.h.b16 %v9884
    %v10501 = vunpack.c.l.b16 %v9885
    %v10502 = vunpack.c.h.b16 %v9885
    %v10503 = vunpack.c.l.b16 %v9886
    %v10504 = vunpack.c.h.b16 %v9886
    %v10505 = vunpack.c.l.b16 %v9887
    %v10506 = vunpack.c.h.b16 %v9887
    %v10507 = vunpack.c.l.b16 %v9888
    %v10508 = vunpack.c.h.b16 %v9888
    %v10509 = vunpack.c.l.b16 %v9889
    %v10510 = vunpack.c.h.b16 %v9889
    %v10511 = vunpack.c.l.b16 %v9890
    %v10512 = vunpack.c.h.b16 %v9890
    %v10513 = vunpack.c.l.b16 %v9891
    %v10514 = vunpack.c.h.b16 %v9891
    %v10515 = vunpack.c.l.b16 %v9892
    %v10516 = vunpack.c.h.b16 %v9892
    %v10517 = vunpack.c.l.b16 %v9893
    %v10518 = vunpack.c.h.b16 %v9893
    %v10519 = vunpack.c.l.b16 %v9894
    %v10520 = vunpack.c.h.b16 %v9894
    %v10521 = vunpack.c.l.b16 %v9895
    %v10522 = vunpack.c.h.b16 %v9895
    %v10523 = vunpack.c.l.b16 %v9896
    %v10524 = vunpack.c.h.b16 %v9896
    %v10525 = vunpack.c.l.b16 %v9897
    %v10526 = vunpack.c.h.b16 %v9897
    %v10527 = vunpack.c.l.b16 %v9898
    %v10528 = vunpack.c.h.b16 %v9898
    %v10529 = vunpack.c.l.b16 %v9899
    %v10530 = vunpack.c.h.b16 %v9899
    %v10531 = vunpack.c.l.b16 %v9900
    %v10532 = vunpack.c.h.b16 %v9900
    %v10533 = vunpack.c.l.b16 %v9901
    %v10534 = vunpack.c.h.b16 %v9901
    %v10535 = vunpack.c.l.b16 %v9902
    %v10536 = vunpack.c.h.b16 %v9902
    %v10537 = vunpack.c.l.b16 %v9903
    %v10538 = vunpack.c.h.b16 %v9903
    %v10539 = vunpack.c.l.b16 %v9904
    %v10540 = vunpack.c.h.b16 %v9904
    %v10541 = vunpack.c.l.b16 %v9905
    %v10542 = vunpack.c.h.b16 %v9905
    %v10543 = vunpack.c.l.b16 %v9906
    %v10544 = vunpack.c.h.b16 %v9906
    %v10545 = vunpack.c.l.b16 %v9907
    %v10546 = vunpack.c.h.b16 %v9907
    %v10547 = vunpack.c.l.b16 %v9908
    %v10548 = vunpack.c.h.b16 %v9908
    %v10549 = vunpack.c.l.b16 %v9909
    %v10550 = vunpack.c.h.b16 %v9909
    %v10551 = vunpack.c.l.b16 %v9910
    %v10552 = vunpack.c.h.b16 %v9910
    %v10553 = vunpack.c.l.b16 %v9911
    %v10554 = vunpack.c.h.b16 %v9911
    %v10555 = vunpack.c.l.b16 %v9912
    %v10556 = vunpack.c.h.b16 %v9912
    %v10557 = vunpack.c.l.b16 %v9913
    %v10558 = vunpack.c.h.b16 %v9913
    %v10559 = vunpack.c.l.b16 %v9914
    %v10560 = vunpack.c.h.b16 %v9914
    %v10561 = vunpack.c.l.b16 %v9915
    %v10562 = vunpack.c.h.b16 %v9915
    %v10563 = vunpack.c.l.b16 %v9916
    %v10564 = vunpack.c.h.b16 %v9916
    %v10565 = vunpack.c.l.b16 %v9917
    %v10566 = vunpack.c.h.b16 %v9917
    %v10567 = vunpack.c.l.b16 %v9918
    %v10568 = vunpack.c.h.b16 %v9918
    %v10569 = vunpack.c.l.b16 %v9919
    %v10570 = vunpack.c.h.b16 %v9919
    %v10571 = vunpack.c.l.b16 %v9920
    %v10572 = vunpack.c.h.b16 %v9920
    %v10573 = vunpack.c.l.b16 %v9921
    %v10574 = vunpack.c.h.b16 %v9921
    %v10575 = vunpack.c.l.b16 %v9922
    %v10576 = vunpack.c.h.b16 %v9922
    %v10577 = vunpack.c.l.b16 %v9923
    %v10578 = vunpack.c.h.b16 %v9923
    %v10579 = vunpack.c.l.b16 %v9924
    %v10580 = vunpack.c.h.b16 %v9924
    %v10581 = vunpack.c.l.b16 %v9925
    %v10582 = vunpack.c.h.b16 %v9925
    %v10583 = vunpack.c.l.b16 %v9926
    %v10584 = vunpack.c.h.b16 %v9926
    %v10585 = vunpack.c.l.b16 %v9927
    %v10586 = vunpack.c.h.b16 %v9927
    %v10587 = vunpack.c.l.b16 %v9928
    %v10588 = vunpack.c.h.b16 %v9928
    %v10589 = vunpack.c.l.b16 %v9929
    %v10590 = vunpack.c.h.b16 %v9929
    %v10591 = vunpack.c.l.b16 %v9930
    %v10592 = vunpack.c.h.b16 %v9930
    %v10593 = vunpack.c.l.b16 %v9931
    %v10594 = vunpack.c.h.b16 %v9931
    %v10595 = vunpack.c.l.b16 %v9932
    %v10596 = vunpack.c.h.b16 %v9932
    %v10597 = vunpack.c.l.b16 %v9933
    %v10598 = vunpack.c.h.b16 %v9933
    %v10599 = vunpack.c.l.b16 %v9934
    %v10600 = vunpack.c.h.b16 %v9934
    %v10601 = vunpack.c.l.b16 %v9935
    %v10602 = vunpack.c.h.b16 %v9935
    %v10603 = vunpack.c.l.b16 %v9936
    %v10604 = vunpack.c.h.b16 %v9936
    %v10605 = vunpack.c.l.b16 %v9937
    %v10606 = vunpack.c.h.b16 %v9937
    %v10607 = vunpack.c.l.b16 %v9938
    %v10608 = vunpack.c.h.b16 %v9938
    %v10609 = vunpack.c.l.b16 %v9939
    %v10610 = vunpack.c.h.b16 %v9939
    %v10611 = vunpack.c.l.b16 %v9940
    %v10612 = vunpack.c.h.b16 %v9940
    %v10613 = vunpack.c.l.b16 %v9941
    %v10614 = vunpack.c.h.b16 %v9941
    %v10615 = vunpack.c.l.b16 %v9942
    %v10616 = vunpack.c.h.b16 %v9942
    %v10617 = vunpack.c.l.b16 %v9943
    %v10618 = vunpack.c.h.b16 %v9943
    %v10619 = vunpack.c.l.b16 %v9944
    %v10620 = vunpack.c.h.b16 %v9944
    %v10621 = vunpack.c.l.b16 %v9945
    %v10622 = vunpack.c.h.b16 %v9945
    %v10623 = vunpack.c.l.b16 %v9946
    %v10624 = vunpack.c.h.b16 %v9946
    %v10625 = vunpack.c.l.b16 %v9947
    %v10626 = vunpack.c.h.b16 %v9947
    %v10627 = vunpack.c.l.b16 %v9948
    %v10628 = vunpack.c.h.b16 %v9948
    %v10629 = vunpack.c.l.b16 %v9949
    %v10630 = vunpack.c.h.b16 %v9949
    %v10631 = vunpack.c.l.b16 %v9950
    %v10632 = vunpack.c.h.b16 %v9950
    %v10633 = vunpack.c.l.b16 %v9951
    %v10634 = vunpack.c.h.b16 %v9951
    %v10635 = vunpack.c.l.b16 %v9952
    %v10636 = vunpack.c.h.b16 %v9952
    %v10637 = vunpack.c.l.b16 %v9953
    %v10638 = vunpack.c.h.b16 %v9953
    %v10639 = vunpack.c.l.b16 %v9954
    %v10640 = vunpack.c.h.b16 %v9954
    %v10641 = vunpack.c.l.b16 %v9955
    %v10642 = vunpack.c.h.b16 %v9955
    %v10643 = vunpack.c.l.b16 %v9956
    %v10644 = vunpack.c.h.b16 %v9956
    %v10645 = vunpack.c.l.b16 %v9957
    %v10646 = vunpack.c.h.b16 %v9957
    %v10647 = vunpack.c.l.b16 %v9958
    %v10648 = vunpack.c.h.b16 %v9958
    %v10649 = vunpack.c.l.b16 %v9959
    %v10650 = vunpack.c.h.b16 %v9959
    %v10651 = vunpack.c.l.b16 %v9960
    %v10652 = vunpack.c.h.b16 %v9960
    %v10653 = vunpack.c.l.b16 %v9961
    %v10654 = vunpack.c.h.b16 %v9961
    %v10655 = vunpack.c.l.b16 %v9962
    %v10656 = vunpack.c.h.b16 %v9962
    %v10657 = vunpack.c.l.b16 %v9963
    %v10658 = vunpack.c.h.b16 %v9963
    %v10659 = vunpack.c.l.b16 %v9964
    %v10660 = vunpack.c.h.b16 %v9964
    %v10661 = vunpack.c.l.b16 %v9965
    %v10662 = vunpack.c.h.b16 %v9965
    %v10663 = vunpack.c.l.b16 %v9966
    %v10664 = vunpack.c.h.b16 %v9966
    %v10665 = vunpack.c.l.b16 %v9967
    %v10666 = vunpack.c.h.b16 %v9967
    %v10667 = vunpack.c.l.b16 %v9968
    %v10668 = vunpack.c.h.b16 %v9968
    %v10669 = vunpack.c.l.b16 %v9969
    %v10670 = vunpack.c.h.b16 %v9969
    %v10671 = vunpack.c.l.b16 %v9970
    %v10672 = vunpack.c.h.b16 %v9970
    %v10673 = vunpack.c.l.b16 %v9971
    %v10674 = vunpack.c.h.b16 %v9971
    %v10675 = vunpack.c.l.b16 %v9972
    %v10676 = vunpack.c.h.b16 %v9972
    %v10677 = vunpack.c.l.b16 %v9973
    %v10678 = vunpack.c.h.b16 %v9973
    %v10679 = vunpack.c.l.b16 %v9974
    %v10680 = vunpack.c.h.b16 %v9974
    %v10681 = vunpack.c.l.b16 %v9975
    %v10682 = vunpack.c.h.b16 %v9975
    %v10683 = vunpack.c.l.b16 %v9976
    %v10684 = vunpack.c.h.b16 %v9976
    %v10685 = vunpack.c.l.b16 %v9977
    %v10686 = vunpack.c.h.b16 %v9977
    %v10687 = vunpack.c.l.b16 %v9978
    %v10688 = vunpack.c.h.b16 %v9978
    %v10689 = vunpack.c.l.b16 %v9979
    %v10690 = vunpack.c.h.b16 %v9979
    %v10691 = vunpack.c.l.b16 %v9980
    %v10692 = vunpack.c.h.b16 %v9980
    %v10693 = vunpack.c.l.b16 %v9981
    %v10694 = vunpack.c.h.b16 %v9981
    %v10695 = vunpack.c.l.b16 %v9982
    %v10696 = vunpack.c.h.b16 %v9982
    %v10697 = vunpack.c.l.b16 %v9983
    %v10698 = vunpack.c.h.b16 %v9983
    %v10699 = vunpack.c.l.b16 %v9984
    %v10700 = vunpack.c.h.b16 %v9984
    %v10701 = vunpack.c.l.b16 %v9985
    %v10702 = vunpack.c.h.b16 %v9985
    %v10703 = vunpack.c.l.b16 %v9986
    %v10704 = vunpack.c.h.b16 %v9986
    %v10705 = vunpack.c.l.b16 %v9987
    %v10706 = vunpack.c.h.b16 %v9987
    %v10707 = vunpack.c.l.b16 %v9988
    %v10708 = vunpack.c.h.b16 %v9988
    %v10709 = vunpack.c.l.b16 %v9989
    %v10710 = vunpack.c.h.b16 %v9989
    %v10711 = vunpack.c.l.b16 %v9990
    %v10712 = vunpack.c.h.b16 %v9990
    %v10713 = vunpack.c.l.b16 %v9991
    %v10714 = vunpack.c.h.b16 %v9991
    %v10715 = vunpack.c.l.b16 %v9992
    %v10716 = vunpack.c.h.b16 %v9992
    %v10717 = vunpack.c.l.b16 %v9993
    %v10718 = vunpack.c.h.b16 %v9993
    %v10719 = vunpack.c.l.b16 %v9994
    %v10720 = vunpack.c.h.b16 %v9994
    %v10721 = vunpack.c.l.b16 %v9995
    %v10722 = vunpack.c.h.b16 %v9995
    %v10723 = vunpack.c.l.b16 %v9996
    %v10724 = vunpack.c.h.b16 %v9996
    %v10725 = vunpack.c.l.b16 %v9997
    %v10726 = vunpack.c.h.b16 %v9997
    %v10727 = vunpack.c.l.b16 %v9998
    %v10728 = vunpack.c.h.b16 %v9998
    %v10729 = vunpack.c.l.b16 %v9999
    %v10730 = vunpack.c.h.b16 %v9999
    %v10731 = vunpack.c.l.b16 %v10000
    %v10732 = vunpack.c.h.b16 %v10000
    %v10733 = vunpack.c.l.b16 %v10001
    %v10734 = vunpack.c.h.b16 %v10001
    %v10735 = vunpack.c.l.b16 %v10002
    %v10736 = vunpack.c.h.b16 %v10002
    %v10737 = vunpack.c.l.b16 %v10003
    %v10738 = vunpack.c.h.b16 %v10003
    %v10739 = vunpack.c.l.b16 %v10004
    %v10740 = vunpack.c.h.b16 %v10004
    %v10741 = vunpack.c.l.b16 %v10005
    %v10742 = vunpack.c.h.b16 %v10005
    %v10743 = vunpack.c.l.b16 %v10006
    %v10744 = vunpack.c.h.b16 %v10006
    %v10745 = vunpack.c.l.b16 %v10007
    %v10746 = vunpack.c.h.b16 %v10007
    %v10747 = vunpack.c.l.b16 %v10008
    %v10748 = vunpack.c.h.b16 %v10008
    %v10749 = vunpack.c.l.b16 %v10009
    %v10750 = vunpack.c.h.b16 %v10009
    %v10751 = vunpack.c.l.b16 %v10010
    %v10752 = vunpack.c.h.b16 %v10010
    %v10753 = vunpack.c.l.b16 %v10011
    %v10754 = vunpack.c.h.b16 %v10011
    %v10755 = vunpack.c.l.b16 %v10012
    %v10756 = vunpack.c.h.b16 %v10012
    %v10757 = vunpack.c.l.b16 %v10013
    %v10758 = vunpack.c.h.b16 %v10013
    %v10759 = vunpack.c.l.b16 %v10014
    %v10760 = vunpack.c.h.b16 %v10014
    %v10761 = vunpack.c.l.b16 %v10015
    %v10762 = vunpack.c.h.b16 %v10015
    %v10763 = vunpack.c.l.b16 %v10016
    %v10764 = vunpack.c.h.b16 %v10016
    %v10765 = vunpack.c.l.b16 %v10017
    %v10766 = vunpack.c.h.b16 %v10017
    %v10767 = vunpack.c.l.b16 %v10018
    %v10768 = vunpack.c.h.b16 %v10018
    %v10769 = vunpack.c.l.b16 %v10019
    %v10770 = vunpack.c.h.b16 %v10019
    %v10771 = vunpack.c.l.b16 %v10020
    %v10772 = vunpack.c.h.b16 %v10020
    %v10773 = vunpack.c.l.b16 %v10021
    %v10774 = vunpack.c.h.b16 %v10021
    %v10775 = vunpack.c.l.b16 %v10022
    %v10776 = vunpack.c.h.b16 %v10022
    %v10777 = vunpack.c.l.b16 %v10023
    %v10778 = vunpack.c.h.b16 %v10023
    %v10779 = vunpack.c.l.b16 %v10024
    %v10780 = vunpack.c.h.b16 %v10024
    %v10781 = vunpack.c.l.b16 %v10025
    %v10782 = vunpack.c.h.b16 %v10025
    %v10783 = vunpack.c.l.b16 %v10026
    %v10784 = vunpack.c.h.b16 %v10026
    %v10785 = vunpack.c.l.b16 %v10027
    %v10786 = vunpack.c.h.b16 %v10027
    %v10787 = vunpack.c.l.b16 %v10028
    %v10788 = vunpack.c.h.b16 %v10028
    %v10789 = vunpack.c.l.b16 %v10029
    %v10790 = vunpack.c.h.b16 %v10029
    %v10791 = vunpack.c.l.b16 %v10030
    %v10792 = vunpack.c.h.b16 %v10030
    %v10793 = vunpack.c.l.b16 %v10031
    %v10794 = vunpack.c.h.b16 %v10031
    %v10795 = vunpack.c.l.b16 %v10032
    %v10796 = vunpack.c.h.b16 %v10032
    %v10797 = vunpack.c.l.b16 %v10033
    %v10798 = vunpack.c.h.b16 %v10033
    %v10799 = vunpack.c.l.b16 %v10034
    %v10800 = vunpack.c.h.b16 %v10034
    %v10801 = vunpack.c.l.b16 %v10035
    %v10802 = vunpack.c.h.b16 %v10035
    %v10803 = vunpack.c.l.b16 %v10036
    %v10804 = vunpack.c.h.b16 %v10036
    %v10805 = vunpack.c.l.b16 %v10037
    %v10806 = vunpack.c.h.b16 %v10037
    %v10807 = vunpack.c.l.b16 %v10038
    %v10808 = vunpack.c.h.b16 %v10038
    %v10809 = vunpack.c.l.b16 %v10039
    %v10810 = vunpack.c.h.b16 %v10039
    %v10811 = vunpack.c.l.b16 %v10040
    %v10812 = vunpack.c.h.b16 %v10040
    %v10813 = vunpack.c.l.b16 %v10041
    %v10814 = vunpack.c.h.b16 %v10041
    %v10815 = vunpack.c.l.b16 %v10042
    %v10816 = vunpack.c.h.b16 %v10042
    %v10817 = vunpack.c.l.b16 %v10043
    %v10818 = vunpack.c.h.b16 %v10043
    %v10819 = vunpack.c.l.b16 %v10044
    %v10820 = vunpack.c.h.b16 %v10044
    %v10821 = vunpack.c.l.b16 %v10045
    %v10822 = vunpack.c.h.b16 %v10045
    %v10823 = vunpack.c.l.b16 %v10046
    %v10824 = vunpack.c.h.b16 %v10046
    %v10825 = vunpack.c.l.b16 %v10047
    %v10826 = vunpack.c.h.b16 %v10047
    %v10827 = vunpack.c.l.b16 %v10048
    %v10828 = vunpack.c.h.b16 %v10048
    %v10829 = vunpack.c.l.b16 %v10049
    %v10830 = vunpack.c.h.b16 %v10049
    %v10831 = vunpack.c.l.b16 %v10050
    %v10832 = vunpack.c.h.b16 %v10050
    %v10833 = vunpack.c.l.b16 %v10051
    %v10834 = vunpack.c.h.b16 %v10051
    %v10835 = vunpack.c.l.b16 %v10052
    %v10836 = vunpack.c.h.b16 %v10052
    %v10837 = vunpack.c.l.b16 %v10053
    %v10838 = vunpack.c.h.b16 %v10053
    %v10839 = vunpack.c.l.b16 %v10054
    %v10840 = vunpack.c.h.b16 %v10054
    %v10841 = vunpack.c.l.b16 %v10055
    %v10842 = vunpack.c.h.b16 %v10055
    %v10843 = vunpack.c.l.b16 %v10056
    %v10844 = vunpack.c.h.b16 %v10056
    %v10845 = vunpack.c.l.b16 %v10057
    %v10846 = vunpack.c.h.b16 %v10057
    %v10847 = vunpack.c.l.b16 %v10058
    %v10848 = vunpack.c.h.b16 %v10058
    %v10849 = vpack.c.b16 %v10341, %v10337
    %v10850 = vpack.c.b16 %v10342, %v10338
    %v10851 = vpack.c.b16 %v10343, %v10339
    %v10852 = vpack.c.b16 %v10344, %v10340
    %v10853 = vpack.c.b16 %v10349, %v10345
    %v10854 = vpack.c.b16 %v10350, %v10346
    %v10855 = vpack.c.b16 %v10351, %v10347
    %v10856 = vpack.c.b16 %v10352, %v10348
    %v10857 = vpack.c.b16 %v10357, %v10353
    %v10858 = vpack.c.b16 %v10358, %v10354
    %v10859 = vpack.c.b16 %v10359, %v10355
    %v10860 = vpack.c.b16 %v10360, %v10356
    %v10861 = vpack.c.b16 %v10365, %v10361
    %v10862 = vpack.c.b16 %v10366, %v10362
    %v10863 = vpack.c.b16 %v10367, %v10363
    %v10864 = vpack.c.b16 %v10368, %v10364
    %v10865 = vpack.c.b16 %v10373, %v10369
    %v10866 = vpack.c.b16 %v10374, %v10370
    %v10867 = vpack.c.b16 %v10375, %v10371
    %v10868 = vpack.c.b16 %v10376, %v10372
    %v10869 = vpack.c.b16 %v10381, %v10377
    %v10870 = vpack.c.b16 %v10382, %v10378
    %v10871 = vpack.c.b16 %v10383, %v10379
    %v10872 = vpack.c.b16 %v10384, %v10380
    %v10873 = vpack.c.b16 %v10389, %v10385
    %v10874 = vpack.c.b16 %v10390, %v10386
    %v10875 = vpack.c.b16 %v10391, %v10387
    %v10876 = vpack.c.b16 %v10392, %v10388
    %v10877 = vpack.c.b16 %v10397, %v10393
    %v10878 = vpack.c.b16 %v10398, %v10394
    %v10879 = vpack.c.b16 %v10399, %v10395
    %v10880 = vpack.c.b16 %v10400, %v10396
    %v10881 = vpack.c.b16 %v10405, %v10401
    %v10882 = vpack.c.b16 %v10406, %v10402
    %v10883 = vpack.c.b16 %v10407, %v10403
    %v10884 = vpack.c.b16 %v10408, %v10404
    %v10885 = vpack.c.b16 %v10413, %v10409
    %v10886 = vpack.c.b16 %v10414, %v10410
    %v10887 = vpack.c.b16 %v10415, %v10411
    %v10888 = vpack.c.b16 %v10416, %v10412
    %v10889 = vpack.c.b16 %v10421, %v10417
    %v10890 = vpack.c.b16 %v10422, %v10418
    %v10891 = vpack.c.b16 %v10423, %v10419
    %v10892 = vpack.c.b16 %v10424, %v10420
    %v10893 = vpack.c.b16 %v10429, %v10425
    %v10894 = vpack.c.b16 %v10430, %v10426
    %v10895 = vpack.c.b16 %v10431, %v10427
    %v10896 = vpack.c.b16 %v10432, %v10428
    %v10897 = vpack.c.b16 %v10437, %v10433
    %v10898 = vpack.c.b16 %v10438, %v10434
    %v10899 = vpack.c.b16 %v10439, %v10435
    %v10900 = vpack.c.b16 %v10440, %v10436
    %v10901 = vpack.c.b16 %v10445, %v10441
    %v10902 = vpack.c.b16 %v10446, %v10442
    %v10903 = vpack.c.b16 %v10447, %v10443
    %v10904 = vpack.c.b16 %v10448, %v10444
    %v10905 = vpack.c.b16 %v10453, %v10449
    %v10906 = vpack.c.b16 %v10454, %v10450
    %v10907 = vpack.c.b16 %v10455, %v10451
    %v10908 = vpack.c.b16 %v10456, %v10452
    %v10909 = vpack.c.b16 %v10461, %v10457
    %v10910 = vpack.c.b16 %v10462, %v10458
    %v10911 = vpack.c.b16 %v10463, %v10459
    %v10912 = vpack.c.b16 %v10464, %v10460
    %v10913 = vpack.c.b16 %v10469, %v10465
    %v10914 = vpack.c.b16 %v10470, %v10466
    %v10915 = vpack.c.b16 %v10471, %v10467
    %v10916 = vpack.c.b16 %v10472, %v10468
    %v10917 = vpack.c.b16 %v10477, %v10473
    %v10918 = vpack.c.b16 %v10478, %v10474
    %v10919 = vpack.c.b16 %v10479, %v10475
    %v10920 = vpack.c.b16 %v10480, %v10476
    %v10921 = vpack.c.b16 %v10485, %v10481
    %v10922 = vpack.c.b16 %v10486, %v10482
    %v10923 = vpack.c.b16 %v10487, %v10483
    %v10924 = vpack.c.b16 %v10488, %v10484
    %v10925 = vpack.c.b16 %v10493, %v10489
    %v10926 = vpack.c.b16 %v10494, %v10490
    %v10927 = vpack.c.b16 %v10495, %v10491
    %v10928 = vpack.c.b16 %v10496, %v10492
    %v10929 = vpack.c.b16 %v10501, %v10497
    %v10930 = vpack.c.b16 %v10502, %v10498
    %v10931 = vpack.c.b16 %v10503, %v10499
    %v10932 = vpack.c.b16 %v10504, %v10500
    %v10933 = vpack.c.b16 %v10509, %v10505
    %v10934 = vpack.c.b16 %v10510, %v10506
    %v10935 = vpack.c.b16 %v10511, %v10507
    %v10936 = vpack.c.b16 %v10512, %v10508
    %v10937 = vpack.c.b16 %v10517, %v10513
    %v10938 = vpack.c.b16 %v10518, %v10514
    %v10939 = vpack.c.b16 %v10519, %v10515
    %v10940 = vpack.c.b16 %v10520, %v10516
    %v10941 = vpack.c.b16 %v10525, %v10521
    %v10942 = vpack.c.b16 %v10526, %v10522
    %v10943 = vpack.c.b16 %v10527, %v10523
    %v10944 = vpack.c.b16 %v10528, %v10524
    %v10945 = vpack.c.b16 %v10533, %v10529
    %v10946 = vpack.c.b16 %v10534, %v10530
    %v10947 = vpack.c.b16 %v10535, %v10531
    %v10948 = vpack.c.b16 %v10536, %v10532
    %v10949 = vpack.c.b16 %v10541, %v10537
    %v10950 = vpack.c.b16 %v10542, %v10538
    %v10951 = vpack.c.b16 %v10543, %v10539
    %v10952 = vpack.c.b16 %v10544, %v10540
    %v10953 = vpack.c.b16 %v10549, %v10545
    %v10954 = vpack.c.b16 %v10550, %v10546
    %v10955 = vpack.c.b16 %v10551, %v10547
    %v10956 = vpack.c.b16 %v10552, %v10548
    %v10957 = vpack.c.b16 %v10557, %v10553
    %v10958 = vpack.c.b16 %v10558, %v10554
    %v10959 = vpack.c.b16 %v10559, %v10555
    %v10960 = vpack.c.b16 %v10560, %v10556
    %v10961 = vpack.c.b16 %v10565, %v10561
    %v10962 = vpack.c.b16 %v10566, %v10562
    %v10963 = vpack.c.b16 %v10567, %v10563
    %v10964 = vpack.c.b16 %v10568, %v10564
    %v10965 = vpack.c.b16 %v10573, %v10569
    %v10966 = vpack.c.b16 %v10574, %v10570
    %v10967 = vpack.c.b16 %v10575, %v10571
    %v10968 = vpack.c.b16 %v10576, %v10572
    %v10969 = vpack.c.b16 %v10581, %v10577
    %v10970 = vpack.c.b16 %v10582, %v10578
    %v10971 = vpack.c.b16 %v10583, %v10579
    %v10972 = vpack.c.b16 %v10584, %v10580
    %v10973 = vpack.c.b16 %v10589, %v10585
    %v10974 = vpack.c.b16 %v10590, %v10586
    %v10975 = vpack.c.b16 %v10591, %v10587
    %v10976 = vpack.c.b16 %v10592, %v10588
    %v10977 = vpack.c.b16 %v10597, %v10593
    %v10978 = vpack.c.b16 %v10598, %v10594
    %v10979 = vpack.c.b16 %v10599, %v10595
    %v10980 = vpack.c.b16 %v10600, %v10596
    %v10981 = vpack.c.b16 %v10605, %v10601
    %v10982 = vpack.c.b16 %v10606, %v10602
    %v10983 = vpack.c.b16 %v10607, %v10603
    %v10984 = vpack.c.b16 %v10608, %v10604
    %v10985 = vpack.c.b16 %v10613, %v10609
    %v10986 = vpack.c.b16 %v10614, %v10610
    %v10987 = vpack.c.b16 %v10615, %v10611
    %v10988 = vpack.c.b16 %v10616, %v10612
    %v10989 = vpack.c.b16 %v10621, %v10617
    %v10990 = vpack.c.b16 %v10622, %v10618
    %v10991 = vpack.c.b16 %v10623, %v10619
    %v10992 = vpack.c.b16 %v10624, %v10620
    %v10993 = vpack.c.b16 %v10629, %v10625
    %v10994 = vpack.c.b16 %v10630, %v10626
    %v10995 = vpack.c.b16 %v10631, %v10627
    %v10996 = vpack.c.b16 %v10632, %v10628
    %v10997 = vpack.c.b16 %v10637, %v10633
    %v10998 = vpack.c.b16 %v10638, %v10634
    %v10999 = vpack.c.b16 %v10639, %v10635
    %v11000 = vpack.c.b16 %v10640, %v10636
    %v11001 = vpack.c.b16 %v10645, %v10641
    %v11002 = vpack.c.b16 %v10646, %v10642
    %v11003 = vpack.c.b16 %v10647, %v10643
    %v11004 = vpack.c.b16 %v10648, %v10644
    %v11005 = vpack.c.b16 %v10653, %v10649
    %v11006 = vpack.c.b16 %v10654, %v10650
    %v11007 = vpack.c.b16 %v10655, %v10651
    %v11008 = vpack.c.b16 %v10656, %v10652
    %v11009 = vpack.c.b16 %v10661, %v10657
    %v11010 = vpack.c.b16 %v10662, %v10658
    %v11011 = vpack.c.b16 %v10663, %v10659
    %v11012 = vpack.c.b16 %v10664, %v10660
    %v11013 = vpack.c.b16 %v10669, %v10665
    %v11014 = vpack.c.b16 %v10670, %v10666
    %v11015 = vpack.c.b16 %v10671, %v10667
    %v11016 = vpack.c.b16 %v10672, %v10668
    %v11017 = vpack.c.b16 %v10677, %v10673
    %v11018 = vpack.c.b16 %v10678, %v10674
    %v11019 = vpack.c.b16 %v10679, %v10675
    %v11020 = vpack.c.b16 %v10680, %v10676
    %v11021 = vpack.c.b16 %v10685, %v10681
    %v11022 = vpack.c.b16 %v10686, %v10682
    %v11023 = vpack.c.b16 %v10687, %v10683
    %v11024 = vpack.c.b16 %v10688, %v10684
    %v11025 = vpack.c.b16 %v10693, %v10689
    %v11026 = vpack.c.b16 %v10694, %v10690
    %v11027 = vpack.c.b16 %v10695, %v10691
    %v11028 = vpack.c.b16 %v10696, %v10692
    %v11029 = vpack.c.b16 %v10701, %v10697
    %v11030 = vpack.c.b16 %v10702, %v10698
    %v11031 = vpack.c.b16 %v10703, %v10699
    %v11032 = vpack.c.b16 %v10704, %v10700
    %v11033 = vpack.c.b16 %v10709, %v10705
    %v11034 = vpack.c.b16 %v10710, %v10706
    %v11035 = vpack.c.b16 %v10711, %v10707
    %v11036 = vpack.c.b16 %v10712, %v10708
    %v11037 = vpack.c.b16 %v10717, %v10713
    %v11038 = vpack.c.b16 %v10718, %v10714
    %v11039 = vpack.c.b16 %v10719, %v10715
    %v11040 = vpack.c.b16 %v10720, %v10716
    %v11041 = vpack.c.b16 %v10725, %v10721
    %v11042 = vpack.c.b16 %v10726, %v10722
    %v11043 = vpack.c.b16 %v10727, %v10723
    %v11044 = vpack.c.b16 %v10728, %v10724
    %v11045 = vpack.c.b16 %v10733, %v10729
    %v11046 = vpack.c.b16 %v10734, %v10730
    %v11047 = vpack.c.b16 %v10735, %v10731
    %v11048 = vpack.c.b16 %v10736, %v10732
    %v11049 = vpack.c.b16 %v10741, %v10737
    %v11050 = vpack.c.b16 %v10742, %v10738
    %v11051 = vpack.c.b16 %v10743, %v10739
    %v11052 = vpack.c.b16 %v10744, %v10740
    %v11053 = vpack.c.b16 %v10749, %v10745
    %v11054 = vpack.c.b16 %v10750, %v10746
    %v11055 = vpack.c.b16 %v10751, %v10747
    %v11056 = vpack.c.b16 %v10752, %v10748
    %v11057 = vpack.c.b16 %v10757, %v10753
    %v11058 = vpack.c.b16 %v10758, %v10754
    %v11059 = vpack.c.b16 %v10759, %v10755
    %v11060 = vpack.c.b16 %v10760, %v10756
    %v11061 = vpack.c.b16 %v10765, %v10761
    %v11062 = vpack.c.b16 %v10766, %v10762
    %v11063 = vpack.c.b16 %v10767, %v10763
    %v11064 = vpack.c.b16 %v10768, %v10764
    %v11065 = vpack.c.b16 %v10773, %v10769
    %v11066 = vpack.c.b16 %v10774, %v10770
    %v11067 = vpack.c.b16 %v10775, %v10771
    %v11068 = vpack.c.b16 %v10776, %v10772
    %v11069 = vpack.c.b16 %v10781, %v10777
    %v11070 = vpack.c.b16 %v10782, %v10778
    %v11071 = vpack.c.b16 %v10783, %v10779
    %v11072 = vpack.c.b16 %v10784, %v10780
    %v11073 = vpack.c.b16 %v10789, %v10785
    %v11074 = vpack.c.b16 %v10790, %v10786
    %v11075 = vpack.c.b16 %v10791, %v10787
    %v11076 = vpack.c.b16 %v10792, %v10788
    %v11077 = vpack.c.b16 %v10797, %v10793
    %v11078 = vpack.c.b16 %v10798, %v10794
    %v11079 = vpack.c.b16 %v10799, %v10795
    %v11080 = vpack.c.b16 %v10800, %v10796
    %v11081 = vpack.c.b16 %v10805, %v10801
    %v11082 = vpack.c.b16 %v10806, %v10802
    %v11083 = vpack.c.b16 %v10807, %v10803
    %v11084 = vpack.c.b16 %v10808, %v10804
    %v11085 = vpack.c.b16 %v10813, %v10809
    %v11086 = vpack.c.b16 %v10814, %v10810
    %v11087 = vpack.c.b16 %v10815, %v10811
    %v11088 = vpack.c.b16 %v10816, %v10812
    %v11089 = vpack.c.b16 %v10821, %v10817
    %v11090 = vpack.c.b16 %v10822, %v10818
    %v11091 = vpack.c.b16 %v10823, %v10819
    %v11092 = vpack.c.b16 %v10824, %v10820
    %v11093 = vpack.c.b16 %v10829, %v10825
    %v11094 = vpack.c.b16 %v10830, %v10826
    %v11095 = vpack.c.b16 %v10831, %v10827
    %v11096 = vpack.c.b16 %v10832, %v10828
    %v11097 = vpack.c.b16 %v10837, %v10833
    %v11098 = vpack.c.b16 %v10838, %v10834
    %v11099 = vpack.c.b16 %v10839, %v10835
    %v11100 = vpack.c.b16 %v10840, %v10836
    %v11101 = vpack.c.b16 %v10845, %v10841
    %v11102 = vpack.c.b16 %v10846, %v10842
    %v11103 = vpack.c.b16 %v10847, %v10843
    %v11104 = vpack.c.b16 %v10848, %v10844
    %11361 = vmatprep.subr.bf16.mxu0 %v10878
    %11362 = vmatpush1.bf16.msra.mxu0 %v10877
    %11363 = vmatprep.subr.bf16.mxu0 %v10874
    %11364 = vmatpush1.bf16.msra.mxu0 %v10873
    %11365 = vmatprep.subr.bf16.mxu0 %v10870
    %11366 = vmatpush1.bf16.msra.mxu0 %v10869
    %11367 = vmatprep.subr.bf16.mxu0 %v10866
    %11368 = vmatpush1.bf16.msra.mxu0 %v10865
    %11369 = vmatprep.subr.bf16.mxu0 %v10862
    %11370 = vmatpush1.bf16.msra.mxu0 %v10861
    %11371 = vmatprep.subr.bf16.mxu0 %v10858
    %11372 = vmatpush1.bf16.msra.mxu0 %v10857
    %11373 = vmatprep.subr.bf16.mxu0 %v10854
    %11374 = vmatpush1.bf16.msra.mxu0 %v10853
    %11375 = vmatprep.subr.bf16.mxu0 %v10850
    %11376 = vmatpush1.bf16.msra.mxu0 %v10849
    %11377 = vmatprep.subr.bf16.mxu0 %v10910
    %11378 = vmatpush2.bf16.msra.mxu0 %v10909
    %11379 = vmatprep.subr.bf16.mxu0 %v10906
    %11380 = vmatpush2.bf16.msra.mxu0 %v10905
    %11381 = vmatprep.subr.bf16.mxu0 %v10902
    %11382 = vmatpush2.bf16.msra.mxu0 %v10901
    %11383 = vmatprep.subr.bf16.mxu0 %v10898
    %11384 = vmatpush2.bf16.msra.mxu0 %v10897
    %11385 = vmatprep.subr.bf16.mxu0 %v10894
    %11386 = vmatpush2.bf16.msra.mxu0 %v10893
    %11387 = vmatprep.subr.bf16.mxu0 %v10890
    %11388 = vmatpush2.bf16.msra.mxu0 %v10889
    %11389 = vmatprep.subr.bf16.mxu0 %v10886
    %11390 = vmatpush2.bf16.msra.mxu0 %v10885
    %11391 = vmatprep.subr.bf16.mxu0 %v10882
    %11392 = vmatpush2.bf16.msra.mxu0 %v10881
    %11393 = vmatprep.mubr.bf16.mxu0 %v9796
    %11394 = vmatmul.mubr.bf16.gmra.mxu0 %v9795
    %v11395 = vpop.f32.mrf.mxu0
    %v11396 = vadd.f32 %v10064, %v11395
    %v11397 = vpop.f32.mrf.mxu0
    %v11398 = vadd.f32 %v10068, %v11397
    %v11399 = vpop.f32.mrf.mxu0
    %v11400 = vadd.f32 %v10064, %v11399
    %v11401 = vpop.f32.mrf.mxu0
    %v11402 = vadd.f32 %v10068, %v11401
    %11403 = vdwg.mxu0
    %11404 = vmatprep.subr.bf16.mxu0 %v10942
    %11405 = vmatpush1.bf16.msra.mxu0 %v10941
    %11406 = vmatprep.subr.bf16.mxu0 %v10938
    %11407 = vmatpush1.bf16.msra.mxu0 %v10937
    %11408 = vmatprep.subr.bf16.mxu0 %v10934
    %11409 = vmatpush1.bf16.msra.mxu0 %v10933
    %11410 = vmatprep.subr.bf16.mxu0 %v10930
    %11411 = vmatpush1.bf16.msra.mxu0 %v10929
    %11412 = vmatprep.subr.bf16.mxu0 %v10926
    %11413 = vmatpush1.bf16.msra.mxu0 %v10925
    %11414 = vmatprep.subr.bf16.mxu0 %v10922
    %11415 = vmatpush1.bf16.msra.mxu0 %v10921
    %11416 = vmatprep.subr.bf16.mxu0 %v10918
    %11417 = vmatpush1.bf16.msra.mxu0 %v10917
    %11418 = vmatprep.subr.bf16.mxu0 %v10914
    %11419 = vmatpush1.bf16.msra.mxu0 %v10913
    %11420 = vmatprep.subr.bf16.mxu0 %v10974
    %11421 = vmatpush2.bf16.msra.mxu0 %v10973
    %11422 = vmatprep.subr.bf16.mxu0 %v10970
    %11423 = vmatpush2.bf16.msra.mxu0 %v10969
    %11424 = vmatprep.subr.bf16.mxu0 %v10966
    %11425 = vmatpush2.bf16.msra.mxu0 %v10965
    %11426 = vmatprep.subr.bf16.mxu0 %v10962
    %11427 = vmatpush2.bf16.msra.mxu0 %v10961
    %11428 = vmatprep.subr.bf16.mxu0 %v10958
    %11429 = vmatpush2.bf16.msra.mxu0 %v10957
    %11430 = vmatprep.subr.bf16.mxu0 %v10954
    %11431 = vmatpush2.bf16.msra.mxu0 %v10953
    %11432 = vmatprep.subr.bf16.mxu0 %v10950
    %11433 = vmatpush2.bf16.msra.mxu0 %v10949
    %11434 = vmatprep.subr.bf16.mxu0 %v10946
    %11435 = vmatpush2.bf16.msra.mxu0 %v10945
    %11436 = vmatprep.mubr.bf16.mxu0 %v9798
    %11437 = vmatmul.mubr.bf16.gmra.mxu0 %v9797
    %v11438 = vpop.f32.mrf.mxu0
    %v11439 = vadd.f32 %v11396, %v11438
    %v11440 = vpop.f32.mrf.mxu0
    %v11441 = vadd.f32 %v11398, %v11440
    %v11442 = vpop.f32.mrf.mxu0
    %v11443 = vadd.f32 %v11400, %v11442
    %v11444 = vpop.f32.mrf.mxu0
    %v11445 = vadd.f32 %v11402, %v11444
    %11446 = vdwg.mxu0
    %11447 = vmatprep.subr.bf16.mxu0 %v11006
    %11448 = vmatpush1.bf16.msra.mxu0 %v11005
    %11449 = vmatprep.subr.bf16.mxu0 %v11002
    %11450 = vmatpush1.bf16.msra.mxu0 %v11001
    %11451 = vmatprep.subr.bf16.mxu0 %v10998
    %11452 = vmatpush1.bf16.msra.mxu0 %v10997
    %11453 = vmatprep.subr.bf16.mxu0 %v10994
    %11454 = vmatpush1.bf16.msra.mxu0 %v10993
    %11455 = vmatprep.subr.bf16.mxu0 %v10990
    %11456 = vmatpush1.bf16.msra.mxu0 %v10989
    %11457 = vmatprep.subr.bf16.mxu0 %v10986
    %11458 = vmatpush1.bf16.msra.mxu0 %v10985
    %11459 = vmatprep.subr.bf16.mxu0 %v10982
    %11460 = vmatpush1.bf16.msra.mxu0 %v10981
    %11461 = vmatprep.subr.bf16.mxu0 %v10978
    %11462 = vmatpush1.bf16.msra.mxu0 %v10977
    %11463 = vmatprep.subr.bf16.mxu0 %v11038
    %11464 = vmatpush2.bf16.msra.mxu0 %v11037
    %11465 = vmatprep.subr.bf16.mxu0 %v11034
    %11466 = vmatpush2.bf16.msra.mxu0 %v11033
    %11467 = vmatprep.subr.bf16.mxu0 %v11030
    %11468 = vmatpush2.bf16.msra.mxu0 %v11029
    %11469 = vmatprep.subr.bf16.mxu0 %v11026
    %11470 = vmatpush2.bf16.msra.mxu0 %v11025
    %11471 = vmatprep.subr.bf16.mxu0 %v11022
    %11472 = vmatpush2.bf16.msra.mxu0 %v11021
    %11473 = vmatprep.subr.bf16.mxu0 %v11018
    %11474 = vmatpush2.bf16.msra.mxu0 %v11017
    %11475 = vmatprep.subr.bf16.mxu0 %v11014
    %11476 = vmatpush2.bf16.msra.mxu0 %v11013
    %11477 = vmatprep.subr.bf16.mxu0 %v11010
    %11478 = vmatpush2.bf16.msra.mxu0 %v11009
    %11479 = vmatprep.mubr.bf16.mxu0 %v9800
    %11480 = vmatmul.mubr.bf16.gmra.mxu0 %v9799
    %v11481 = vpop.f32.mrf.mxu0
    %v11482 = vadd.f32 %v11439, %v11481
    %v11483 = vpop.f32.mrf.mxu0
    %v11484 = vadd.f32 %v11441, %v11483
    %v11485 = vpop.f32.mrf.mxu0
    %v11486 = vadd.f32 %v11443, %v11485
    %v11487 = vpop.f32.mrf.mxu0
    %v11488 = vadd.f32 %v11445, %v11487
    %11489 = vdwg.mxu0
    %11490 = vmatprep.subr.bf16.mxu0 %v11070
    %11491 = vmatpush1.bf16.msra.mxu0 %v11069
    %11492 = vmatprep.subr.bf16.mxu0 %v11066
    %11493 = vmatpush1.bf16.msra.mxu0 %v11065
    %11494 = vmatprep.subr.bf16.mxu0 %v11062
    %11495 = vmatpush1.bf16.msra.mxu0 %v11061
    %11496 = vmatprep.subr.bf16.mxu0 %v11058
    %11497 = vmatpush1.bf16.msra.mxu0 %v11057
    %11498 = vmatprep.subr.bf16.mxu0 %v11054
    %11499 = vmatpush1.bf16.msra.mxu0 %v11053
    %11500 = vmatprep.subr.bf16.mxu0 %v11050
    %11501 = vmatpush1.bf16.msra.mxu0 %v11049
    %11502 = vmatprep.subr.bf16.mxu0 %v11046
    %11503 = vmatpush1.bf16.msra.mxu0 %v11045
    %11504 = vmatprep.subr.bf16.mxu0 %v11042
    %11505 = vmatpush1.bf16.msra.mxu0 %v11041
    %11506 = vmatprep.subr.bf16.mxu0 %v11102
    %11507 = vmatpush2.bf16.msra.mxu0 %v11101
    %11508 = vmatprep.subr.bf16.mxu0 %v11098
    %11509 = vmatpush2.bf16.msra.mxu0 %v11097
    %11510 = vmatprep.subr.bf16.mxu0 %v11094
    %11511 = vmatpush2.bf16.msra.mxu0 %v11093
    %11512 = vmatprep.subr.bf16.mxu0 %v11090
    %11513 = vmatpush2.bf16.msra.mxu0 %v11089
    %11514 = vmatprep.subr.bf16.mxu0 %v11086
    %11515 = vmatpush2.bf16.msra.mxu0 %v11085
    %11516 = vmatprep.subr.bf16.mxu0 %v11082
    %11517 = vmatpush2.bf16.msra.mxu0 %v11081
    %11518 = vmatprep.subr.bf16.mxu0 %v11078
    %11519 = vmatpush2.bf16.msra.mxu0 %v11077
    %11520 = vmatprep.subr.bf16.mxu0 %v11074
    %11521 = vmatpush2.bf16.msra.mxu0 %v11073
    %11522 = vmatprep.mubr.bf16.mxu0 %v9802
    %11523 = vmatmul.mubr.bf16.gmra.mxu0 %v9801
    %v11524 = vpop.f32.mrf.mxu0
    %v11525 = vadd.f32 %v11482, %v11524
    %v11526 = vpop.f32.mrf.mxu0
    %v11527 = vadd.f32 %v11484, %v11526
    %v11528 = vpop.f32.mrf.mxu0
    %v11529 = vadd.f32 %v11486, %v11528
    %v11530 = vpop.f32.mrf.mxu0
    %v11531 = vadd.f32 %v11488, %v11530
    %11532 = vdwg.mxu0
    %11533 = vmatprep.subr.bf16.mxu0 %v10880
    %11534 = vmatpush1.bf16.msra.mxu0 %v10879
    %11535 = vmatprep.subr.bf16.mxu0 %v10876
    %11536 = vmatpush1.bf16.msra.mxu0 %v10875
    %11537 = vmatprep.subr.bf16.mxu0 %v10872
    %11538 = vmatpush1.bf16.msra.mxu0 %v10871
    %11539 = vmatprep.subr.bf16.mxu0 %v10868
    %11540 = vmatpush1.bf16.msra.mxu0 %v10867
    %11541 = vmatprep.subr.bf16.mxu0 %v10864
    %11542 = vmatpush1.bf16.msra.mxu0 %v10863
    %11543 = vmatprep.subr.bf16.mxu0 %v10860
    %11544 = vmatpush1.bf16.msra.mxu0 %v10859
    %11545 = vmatprep.subr.bf16.mxu0 %v10856
    %11546 = vmatpush1.bf16.msra.mxu0 %v10855
    %11547 = vmatprep.subr.bf16.mxu0 %v10852
    %11548 = vmatpush1.bf16.msra.mxu0 %v10851
    %11549 = vmatprep.subr.bf16.mxu0 %v10912
    %11550 = vmatpush2.bf16.msra.mxu0 %v10911
    %11551 = vmatprep.subr.bf16.mxu0 %v10908
    %11552 = vmatpush2.bf16.msra.mxu0 %v10907
    %11553 = vmatprep.subr.bf16.mxu0 %v10904
    %11554 = vmatpush2.bf16.msra.mxu0 %v10903
    %11555 = vmatprep.subr.bf16.mxu0 %v10900
    %11556 = vmatpush2.bf16.msra.mxu0 %v10899
    %11557 = vmatprep.subr.bf16.mxu0 %v10896
    %11558 = vmatpush2.bf16.msra.mxu0 %v10895
    %11559 = vmatprep.subr.bf16.mxu0 %v10892
    %11560 = vmatpush2.bf16.msra.mxu0 %v10891
    %11561 = vmatprep.subr.bf16.mxu0 %v10888
    %11562 = vmatpush2.bf16.msra.mxu0 %v10887
    %11563 = vmatprep.subr.bf16.mxu0 %v10884
    %11564 = vmatpush2.bf16.msra.mxu0 %v10883
    %11565 = vmatprep.mubr.bf16.mxu0 %v9796
    %11566 = vmatmul.mubr.bf16.gmra.mxu0 %v9795
    %v11567 = vpop.f32.mrf.mxu0
    %v11568 = vadd.f32 %v10072, %v11567
    %v11569 = vpop.f32.mrf.mxu0
    %v11570 = vadd.f32 %v10076, %v11569
    %v11571 = vpop.f32.mrf.mxu0
    %v11572 = vadd.f32 %v10072, %v11571
    %v11573 = vpop.f32.mrf.mxu0
    %v11574 = vadd.f32 %v10076, %v11573
    %11575 = vdwg.mxu0
    %11576 = vmatprep.subr.bf16.mxu0 %v10944
    %11577 = vmatpush1.bf16.msra.mxu0 %v10943
    %11578 = vmatprep.subr.bf16.mxu0 %v10940
    %11579 = vmatpush1.bf16.msra.mxu0 %v10939
    %11580 = vmatprep.subr.bf16.mxu0 %v10936
    %11581 = vmatpush1.bf16.msra.mxu0 %v10935
    %11582 = vmatprep.subr.bf16.mxu0 %v10932
    %11583 = vmatpush1.bf16.msra.mxu0 %v10931
    %11584 = vmatprep.subr.bf16.mxu0 %v10928
    %11585 = vmatpush1.bf16.msra.mxu0 %v10927
    %11586 = vmatprep.subr.bf16.mxu0 %v10924
    %11587 = vmatpush1.bf16.msra.mxu0 %v10923
    %11588 = vmatprep.subr.bf16.mxu0 %v10920
    %11589 = vmatpush1.bf16.msra.mxu0 %v10919
    %11590 = vmatprep.subr.bf16.mxu0 %v10916
    %11591 = vmatpush1.bf16.msra.mxu0 %v10915
    %11592 = vmatprep.subr.bf16.mxu0 %v10976
    %11593 = vmatpush2.bf16.msra.mxu0 %v10975
    %11594 = vmatprep.subr.bf16.mxu0 %v10972
    %11595 = vmatpush2.bf16.msra.mxu0 %v10971
    %11596 = vmatprep.subr.bf16.mxu0 %v10968
    %11597 = vmatpush2.bf16.msra.mxu0 %v10967
    %11598 = vmatprep.subr.bf16.mxu0 %v10964
    %11599 = vmatpush2.bf16.msra.mxu0 %v10963
    %11600 = vmatprep.subr.bf16.mxu0 %v10960
    %11601 = vmatpush2.bf16.msra.mxu0 %v10959
    %11602 = vmatprep.subr.bf16.mxu0 %v10956
    %11603 = vmatpush2.bf16.msra.mxu0 %v10955
    %11604 = vmatprep.subr.bf16.mxu0 %v10952
    %11605 = vmatpush2.bf16.msra.mxu0 %v10951
    %11606 = vmatprep.subr.bf16.mxu0 %v10948
    %11607 = vmatpush2.bf16.msra.mxu0 %v10947
    %11608 = vmatprep.mubr.bf16.mxu0 %v9798
    %11609 = vmatmul.mubr.bf16.gmra.mxu0 %v9797
    %v11610 = vpop.f32.mrf.mxu0
    %v11611 = vadd.f32 %v11568, %v11610
    %v11612 = vpop.f32.mrf.mxu0
    %v11613 = vadd.f32 %v11570, %v11612
    %v11614 = vpop.f32.mrf.mxu0
    %v11615 = vadd.f32 %v11572, %v11614
    %v11616 = vpop.f32.mrf.mxu0
    %v11617 = vadd.f32 %v11574, %v11616
    %11618 = vdwg.mxu0
    %11619 = vmatprep.subr.bf16.mxu0 %v11008
    %11620 = vmatpush1.bf16.msra.mxu0 %v11007
    %11621 = vmatprep.subr.bf16.mxu0 %v11004
    %11622 = vmatpush1.bf16.msra.mxu0 %v11003
    %11623 = vmatprep.subr.bf16.mxu0 %v11000
    %11624 = vmatpush1.bf16.msra.mxu0 %v10999
    %11625 = vmatprep.subr.bf16.mxu0 %v10996
    %11626 = vmatpush1.bf16.msra.mxu0 %v10995
    %11627 = vmatprep.subr.bf16.mxu0 %v10992
    %11628 = vmatpush1.bf16.msra.mxu0 %v10991
    %11629 = vmatprep.subr.bf16.mxu0 %v10988
    %11630 = vmatpush1.bf16.msra.mxu0 %v10987
    %11631 = vmatprep.subr.bf16.mxu0 %v10984
    %11632 = vmatpush1.bf16.msra.mxu0 %v10983
    %11633 = vmatprep.subr.bf16.mxu0 %v10980
    %11634 = vmatpush1.bf16.msra.mxu0 %v10979
    %11635 = vmatprep.subr.bf16.mxu0 %v11040
    %11636 = vmatpush2.bf16.msra.mxu0 %v11039
    %11637 = vmatprep.subr.bf16.mxu0 %v11036
    %11638 = vmatpush2.bf16.msra.mxu0 %v11035
    %11639 = vmatprep.subr.bf16.mxu0 %v11032
    %11640 = vmatpush2.bf16.msra.mxu0 %v11031
    %11641 = vmatprep.subr.bf16.mxu0 %v11028
    %11642 = vmatpush2.bf16.msra.mxu0 %v11027
    %11643 = vmatprep.subr.bf16.mxu0 %v11024
    %11644 = vmatpush2.bf16.msra.mxu0 %v11023
    %11645 = vmatprep.subr.bf16.mxu0 %v11020
    %11646 = vmatpush2.bf16.msra.mxu0 %v11019
    %11647 = vmatprep.subr.bf16.mxu0 %v11016
    %11648 = vmatpush2.bf16.msra.mxu0 %v11015
    %11649 = vmatprep.subr.bf16.mxu0 %v11012
    %11650 = vmatpush2.bf16.msra.mxu0 %v11011
    %11651 = vmatprep.mubr.bf16.mxu0 %v9800
    %11652 = vmatmul.mubr.bf16.gmra.mxu0 %v9799
    %v11653 = vpop.f32.mrf.mxu0
    %v11654 = vadd.f32 %v11611, %v11653
    %v11655 = vpop.f32.mrf.mxu0
    %v11656 = vadd.f32 %v11613, %v11655
    %v11657 = vpop.f32.mrf.mxu0
    %v11658 = vadd.f32 %v11615, %v11657
    %v11659 = vpop.f32.mrf.mxu0
    %v11660 = vadd.f32 %v11617, %v11659
    %11661 = vdwg.mxu0
    %11662 = vmatprep.subr.bf16.mxu0 %v11072
    %11663 = vmatpush1.bf16.msra.mxu0 %v11071
    %11664 = vmatprep.subr.bf16.mxu0 %v11068
    %11665 = vmatpush1.bf16.msra.mxu0 %v11067
    %11666 = vmatprep.subr.bf16.mxu0 %v11064
    %11667 = vmatpush1.bf16.msra.mxu0 %v11063
    %11668 = vmatprep.subr.bf16.mxu0 %v11060
    %11669 = vmatpush1.bf16.msra.mxu0 %v11059
    %11670 = vmatprep.subr.bf16.mxu0 %v11056
    %11671 = vmatpush1.bf16.msra.mxu0 %v11055
    %11672 = vmatprep.subr.bf16.mxu0 %v11052
    %11673 = vmatpush1.bf16.msra.mxu0 %v11051
    %11674 = vmatprep.subr.bf16.mxu0 %v11048
    %11675 = vmatpush1.bf16.msra.mxu0 %v11047
    %11676 = vmatprep.subr.bf16.mxu0 %v11044
    %11677 = vmatpush1.bf16.msra.mxu0 %v11043
    %11678 = vmatprep.subr.bf16.mxu0 %v11104
    %11679 = vmatpush2.bf16.msra.mxu0 %v11103
    %11680 = vmatprep.subr.bf16.mxu0 %v11100
    %11681 = vmatpush2.bf16.msra.mxu0 %v11099
    %11682 = vmatprep.subr.bf16.mxu0 %v11096
    %11683 = vmatpush2.bf16.msra.mxu0 %v11095
    %11684 = vmatprep.subr.bf16.mxu0 %v11092
    %11685 = vmatpush2.bf16.msra.mxu0 %v11091
    %11686 = vmatprep.subr.bf16.mxu0 %v11088
    %11687 = vmatpush2.bf16.msra.mxu0 %v11087
    %11688 = vmatprep.subr.bf16.mxu0 %v11084
    %11689 = vmatpush2.bf16.msra.mxu0 %v11083
    %11690 = vmatprep.subr.bf16.mxu0 %v11080
    %11691 = vmatpush2.bf16.msra.mxu0 %v11079
    %11692 = vmatprep.subr.bf16.mxu0 %v11076
    %11693 = vmatpush2.bf16.msra.mxu0 %v11075
    %11694 = vmatprep.mubr.bf16.mxu0 %v9802
    %11695 = vmatmul.mubr.bf16.gmra.mxu0 %v9801
    %v11696 = vpop.f32.mrf.mxu0
    %v11697 = vadd.f32 %v11654, %v11696
    %v11698 = vpop.f32.mrf.mxu0
    %v11699 = vadd.f32 %v11656, %v11698
    %v11700 = vpop.f32.mrf.mxu0
    %v11701 = vadd.f32 %v11658, %v11700
    %v11702 = vpop.f32.mrf.mxu0
    %v11703 = vadd.f32 %v11660, %v11702
    %11704 = vdwg.mxu0
    %s11705 = sld [smem:[#allocation17 + $0x1]]
    %vm11706 = vcmp.gt.f32.partialorder %v11525, 0.0
    %vm11707 = vcmp.gt.f32.partialorder %v11527, 0.0
    %vm11708 = vcmp.gt.f32.partialorder %v11697, 0.0
    %vm11709 = vcmp.gt.f32.partialorder %v11699, 0.0
    %vm11710 = vcmp.gt.f32.partialorder %v11529, 0.0
    %vm11711 = vcmp.gt.f32.partialorder %v11531, 0.0
    %vm11712 = vcmp.gt.f32.partialorder %v11701, 0.0
    %vm11713 = vcmp.gt.f32.partialorder %v11703, 0.0
    %v11714 = vstv %s11705
    %v11715 = vmul.f32 %v11714, %v11525
    %v11716 = vmul.f32 %v11714, %v11527
    %v11717 = vmul.f32 %v11714, %v11697
    %v11718 = vmul.f32 %v11714, %v11699
    %v11719 = vmul.f32 %v11714, %v11529
    %v11720 = vmul.f32 %v11714, %v11531
    %v11721 = vmul.f32 %v11714, %v11701
    %v11722 = vmul.f32 %v11714, %v11703
    %v11723 = vsel %vm11706, %v11525, %v11715
    %v11724 = vsel %vm11707, %v11527, %v11716
    %v11725 = vsel %vm11708, %v11697, %v11717
    %v11726 = vsel %vm11709, %v11699, %v11718
    %v11727 = vsel %vm11710, %v11529, %v11719
    %v11728 = vsel %vm11711, %v11531, %v11720
    %v11729 = vsel %vm11712, %v11701, %v11721
    %v11730 = vsel %vm11713, %v11703, %v11722
    %v11731 = vpack.c.bf16 %v11727, %v11723
    %v11732 = vpack.c.bf16 %v11728, %v11724
    %v11733 = vpack.c.bf16 %v11729, %v11725
    %v11734 = vpack.c.bf16 %v11730, %v11726
    %v11735 = vld [vmem:[#allocation11] sm:$0xff]
    %v11736 = vld [vmem:[#allocation11 + $0x8] sm:$0xff]
    %v11737 = vld [vmem:[#allocation11 + $0x10] sm:$0xff]
    %v11738 = vld [vmem:[#allocation11 + $0x18] sm:$0xff]
    %v11739 = vld [vmem:[#allocation11 + $0x20] sm:$0xff]
    %v11740 = vld [vmem:[#allocation11 + $0x28] sm:$0xff]
    %v11741 = vld [vmem:[#allocation11 + $0x30] sm:$0xff]
    %v11742 = vld [vmem:[#allocation11 + $0x38] sm:$0xff]
    %v11743 = vld [vmem:[#allocation11 + $0x40] sm:$0xff]
    %v11744 = vld [vmem:[#allocation11 + $0x48] sm:$0xff]
    %v11745 = vld [vmem:[#allocation11 + $0x50] sm:$0xff]
    %v11746 = vld [vmem:[#allocation11 + $0x58] sm:$0xff]
    %v11747 = vld [vmem:[#allocation11 + $0x60] sm:$0xff]
    %v11748 = vld [vmem:[#allocation11 + $0x68] sm:$0xff]
    %v11749 = vld [vmem:[#allocation11 + $0x70] sm:$0xff]
    %v11750 = vld [vmem:[#allocation11 + $0x78] sm:$0xff]
    %v11751 = vld [vmem:[#allocation11 + $0x80] sm:$0xff]
    %v11752 = vld [vmem:[#allocation11 + $0x88] sm:$0xff]
    %v11753 = vld [vmem:[#allocation11 + $0x90] sm:$0xff]
    %v11754 = vld [vmem:[#allocation11 + $0x98] sm:$0xff]
    %v11755 = vld [vmem:[#allocation11 + $0xa0] sm:$0xff]
    %v11756 = vld [vmem:[#allocation11 + $0xa8] sm:$0xff]
    %v11757 = vld [vmem:[#allocation11 + $0xb0] sm:$0xff]
    %v11758 = vld [vmem:[#allocation11 + $0xb8] sm:$0xff]
    %v11759 = vld [vmem:[#allocation11 + $0xc0] sm:$0xff]
    %v11760 = vld [vmem:[#allocation11 + $0xc8] sm:$0xff]
    %v11761 = vld [vmem:[#allocation11 + $0xd0] sm:$0xff]
    %v11762 = vld [vmem:[#allocation11 + $0xd8] sm:$0xff]
    %v11763 = vld [vmem:[#allocation11 + $0xe0] sm:$0xff]
    %v11764 = vld [vmem:[#allocation11 + $0xe8] sm:$0xff]
    %v11765 = vld [vmem:[#allocation11 + $0xf0] sm:$0xff]
    %v11766 = vld [vmem:[#allocation11 + $0xf8] sm:$0xff]
    %v11767 = vld [vmem:[#allocation11 + $0x100] sm:$0xff]
    %v11768 = vld [vmem:[#allocation11 + $0x108] sm:$0xff]
    %v11769 = vld [vmem:[#allocation11 + $0x110] sm:$0xff]
    %v11770 = vld [vmem:[#allocation11 + $0x118] sm:$0xff]
    %v11771 = vld [vmem:[#allocation11 + $0x120] sm:$0xff]
    %v11772 = vld [vmem:[#allocation11 + $0x128] sm:$0xff]
    %v11773 = vld [vmem:[#allocation11 + $0x130] sm:$0xff]
    %v11774 = vld [vmem:[#allocation11 + $0x138] sm:$0xff]
    %v11775 = vld [vmem:[#allocation11 + $0x140] sm:$0xff]
    %v11776 = vld [vmem:[#allocation11 + $0x148] sm:$0xff]
    %v11777 = vld [vmem:[#allocation11 + $0x150] sm:$0xff]
    %v11778 = vld [vmem:[#allocation11 + $0x158] sm:$0xff]
    %v11779 = vld [vmem:[#allocation11 + $0x160] sm:$0xff]
    %v11780 = vld [vmem:[#allocation11 + $0x168] sm:$0xff]
    %v11781 = vld [vmem:[#allocation11 + $0x170] sm:$0xff]
    %v11782 = vld [vmem:[#allocation11 + $0x178] sm:$0xff]
    %v11783 = vld [vmem:[#allocation11 + $0x180] sm:$0xff]
    %v11784 = vld [vmem:[#allocation11 + $0x188] sm:$0xff]
    %v11785 = vld [vmem:[#allocation11 + $0x190] sm:$0xff]
    %v11786 = vld [vmem:[#allocation11 + $0x198] sm:$0xff]
    %v11787 = vld [vmem:[#allocation11 + $0x1a0] sm:$0xff]
    %v11788 = vld [vmem:[#allocation11 + $0x1a8] sm:$0xff]
    %v11789 = vld [vmem:[#allocation11 + $0x1b0] sm:$0xff]
    %v11790 = vld [vmem:[#allocation11 + $0x1b8] sm:$0xff]
    %v11791 = vld [vmem:[#allocation11 + $0x1c0] sm:$0xff]
    %v11792 = vld [vmem:[#allocation11 + $0x1c8] sm:$0xff]
    %v11793 = vld [vmem:[#allocation11 + $0x1d0] sm:$0xff]
    %v11794 = vld [vmem:[#allocation11 + $0x1d8] sm:$0xff]
    %v11795 = vld [vmem:[#allocation11 + $0x1e0] sm:$0xff]
    %v11796 = vld [vmem:[#allocation11 + $0x1e8] sm:$0xff]
    %v11797 = vld [vmem:[#allocation11 + $0x1f0] sm:$0xff]
    %v11798 = vld [vmem:[#allocation11 + $0x1f8] sm:$0xff]
    %v11799 = vld [vmem:[#allocation13] sm:$0x3]
    %v11801 = vlaneseq
    %v11802 = vshrl.u32 %v11801, 7
    %v11803 = vsub.s32 0, %v11802
    %v11804 = vrot.slane %v11799, %v11803
    %v11805 = vlaneseq
    %v11806 = vshrl.u32 %v11805, 7
    %v11807 = vsub.s32 1, %v11806
    %v11808 = vrot.slane %v11799, %v11807
    %v11875 = vunpack.c.l.b16 %v11735
    %v11876 = vunpack.c.h.b16 %v11735
    %v11877 = vunpack.c.l.b16 %v11736
    %v11878 = vunpack.c.h.b16 %v11736
    %v11879 = vunpack.c.l.b16 %v11737
    %v11880 = vunpack.c.h.b16 %v11737
    %v11881 = vunpack.c.l.b16 %v11738
    %v11882 = vunpack.c.h.b16 %v11738
    %v11883 = vunpack.c.l.b16 %v11739
    %v11884 = vunpack.c.h.b16 %v11739
    %v11885 = vunpack.c.l.b16 %v11740
    %v11886 = vunpack.c.h.b16 %v11740
    %v11887 = vunpack.c.l.b16 %v11741
    %v11888 = vunpack.c.h.b16 %v11741
    %v11889 = vunpack.c.l.b16 %v11742
    %v11890 = vunpack.c.h.b16 %v11742
    %v11891 = vunpack.c.l.b16 %v11743
    %v11892 = vunpack.c.h.b16 %v11743
    %v11893 = vunpack.c.l.b16 %v11744
    %v11894 = vunpack.c.h.b16 %v11744
    %v11895 = vunpack.c.l.b16 %v11745
    %v11896 = vunpack.c.h.b16 %v11745
    %v11897 = vunpack.c.l.b16 %v11746
    %v11898 = vunpack.c.h.b16 %v11746
    %v11899 = vunpack.c.l.b16 %v11747
    %v11900 = vunpack.c.h.b16 %v11747
    %v11901 = vunpack.c.l.b16 %v11748
    %v11902 = vunpack.c.h.b16 %v11748
    %v11903 = vunpack.c.l.b16 %v11749
    %v11904 = vunpack.c.h.b16 %v11749
    %v11905 = vunpack.c.l.b16 %v11750
    %v11906 = vunpack.c.h.b16 %v11750
    %v11907 = vunpack.c.l.b16 %v11751
    %v11908 = vunpack.c.h.b16 %v11751
    %v11909 = vunpack.c.l.b16 %v11752
    %v11910 = vunpack.c.h.b16 %v11752
    %v11911 = vunpack.c.l.b16 %v11753
    %v11912 = vunpack.c.h.b16 %v11753
    %v11913 = vunpack.c.l.b16 %v11754
    %v11914 = vunpack.c.h.b16 %v11754
    %v11915 = vunpack.c.l.b16 %v11755
    %v11916 = vunpack.c.h.b16 %v11755
    %v11917 = vunpack.c.l.b16 %v11756
    %v11918 = vunpack.c.h.b16 %v11756
    %v11919 = vunpack.c.l.b16 %v11757
    %v11920 = vunpack.c.h.b16 %v11757
    %v11921 = vunpack.c.l.b16 %v11758
    %v11922 = vunpack.c.h.b16 %v11758
    %v11923 = vunpack.c.l.b16 %v11759
    %v11924 = vunpack.c.h.b16 %v11759
    %v11925 = vunpack.c.l.b16 %v11760
    %v11926 = vunpack.c.h.b16 %v11760
    %v11927 = vunpack.c.l.b16 %v11761
    %v11928 = vunpack.c.h.b16 %v11761
    %v11929 = vunpack.c.l.b16 %v11762
    %v11930 = vunpack.c.h.b16 %v11762
    %v11931 = vunpack.c.l.b16 %v11763
    %v11932 = vunpack.c.h.b16 %v11763
    %v11933 = vunpack.c.l.b16 %v11764
    %v11934 = vunpack.c.h.b16 %v11764
    %v11935 = vunpack.c.l.b16 %v11765
    %v11936 = vunpack.c.h.b16 %v11765
    %v11937 = vunpack.c.l.b16 %v11766
    %v11938 = vunpack.c.h.b16 %v11766
    %v11939 = vunpack.c.l.b16 %v11767
    %v11940 = vunpack.c.h.b16 %v11767
    %v11941 = vunpack.c.l.b16 %v11768
    %v11942 = vunpack.c.h.b16 %v11768
    %v11943 = vunpack.c.l.b16 %v11769
    %v11944 = vunpack.c.h.b16 %v11769
    %v11945 = vunpack.c.l.b16 %v11770
    %v11946 = vunpack.c.h.b16 %v11770
    %v11947 = vunpack.c.l.b16 %v11771
    %v11948 = vunpack.c.h.b16 %v11771
    %v11949 = vunpack.c.l.b16 %v11772
    %v11950 = vunpack.c.h.b16 %v11772
    %v11951 = vunpack.c.l.b16 %v11773
    %v11952 = vunpack.c.h.b16 %v11773
    %v11953 = vunpack.c.l.b16 %v11774
    %v11954 = vunpack.c.h.b16 %v11774
    %v11955 = vunpack.c.l.b16 %v11775
    %v11956 = vunpack.c.h.b16 %v11775
    %v11957 = vunpack.c.l.b16 %v11776
    %v11958 = vunpack.c.h.b16 %v11776
    %v11959 = vunpack.c.l.b16 %v11777
    %v11960 = vunpack.c.h.b16 %v11777
    %v11961 = vunpack.c.l.b16 %v11778
    %v11962 = vunpack.c.h.b16 %v11778
    %v11963 = vunpack.c.l.b16 %v11779
    %v11964 = vunpack.c.h.b16 %v11779
    %v11965 = vunpack.c.l.b16 %v11780
    %v11966 = vunpack.c.h.b16 %v11780
    %v11967 = vunpack.c.l.b16 %v11781
    %v11968 = vunpack.c.h.b16 %v11781
    %v11969 = vunpack.c.l.b16 %v11782
    %v11970 = vunpack.c.h.b16 %v11782
    %v11971 = vunpack.c.l.b16 %v11783
    %v11972 = vunpack.c.h.b16 %v11783
    %v11973 = vunpack.c.l.b16 %v11784
    %v11974 = vunpack.c.h.b16 %v11784
    %v11975 = vunpack.c.l.b16 %v11785
    %v11976 = vunpack.c.h.b16 %v11785
    %v11977 = vunpack.c.l.b16 %v11786
    %v11978 = vunpack.c.h.b16 %v11786
    %v11979 = vunpack.c.l.b16 %v11787
    %v11980 = vunpack.c.h.b16 %v11787
    %v11981 = vunpack.c.l.b16 %v11788
    %v11982 = vunpack.c.h.b16 %v11788
    %v11983 = vunpack.c.l.b16 %v11789
    %v11984 = vunpack.c.h.b16 %v11789
    %v11985 = vunpack.c.l.b16 %v11790
    %v11986 = vunpack.c.h.b16 %v11790
    %v11987 = vunpack.c.l.b16 %v11791
    %v11988 = vunpack.c.h.b16 %v11791
    %v11989 = vunpack.c.l.b16 %v11792
    %v11990 = vunpack.c.h.b16 %v11792
    %v11991 = vunpack.c.l.b16 %v11793
    %v11992 = vunpack.c.h.b16 %v11793
    %v11993 = vunpack.c.l.b16 %v11794
    %v11994 = vunpack.c.h.b16 %v11794
    %v11995 = vunpack.c.l.b16 %v11795
    %v11996 = vunpack.c.h.b16 %v11795
    %v11997 = vunpack.c.l.b16 %v11796
    %v11998 = vunpack.c.h.b16 %v11796
    %v11999 = vunpack.c.l.b16 %v11797
    %v12000 = vunpack.c.h.b16 %v11797
    %v12001 = vunpack.c.l.b16 %v11798
    %v12002 = vunpack.c.h.b16 %v11798
    %v12003 = vpack.c.b16 %v11877, %v11875
    %v12004 = vpack.c.b16 %v11878, %v11876
    %v12005 = vpack.c.b16 %v11881, %v11879
    %v12006 = vpack.c.b16 %v11882, %v11880
    %v12007 = vpack.c.b16 %v11885, %v11883
    %v12008 = vpack.c.b16 %v11886, %v11884
    %v12009 = vpack.c.b16 %v11889, %v11887
    %v12010 = vpack.c.b16 %v11890, %v11888
    %v12011 = vpack.c.b16 %v11893, %v11891
    %v12012 = vpack.c.b16 %v11894, %v11892
    %v12013 = vpack.c.b16 %v11897, %v11895
    %v12014 = vpack.c.b16 %v11898, %v11896
    %v12015 = vpack.c.b16 %v11901, %v11899
    %v12016 = vpack.c.b16 %v11902, %v11900
    %v12017 = vpack.c.b16 %v11905, %v11903
    %v12018 = vpack.c.b16 %v11906, %v11904
    %v12019 = vpack.c.b16 %v11909, %v11907
    %v12020 = vpack.c.b16 %v11910, %v11908
    %v12021 = vpack.c.b16 %v11913, %v11911
    %v12022 = vpack.c.b16 %v11914, %v11912
    %v12023 = vpack.c.b16 %v11917, %v11915
    %v12024 = vpack.c.b16 %v11918, %v11916
    %v12025 = vpack.c.b16 %v11921, %v11919
    %v12026 = vpack.c.b16 %v11922, %v11920
    %v12027 = vpack.c.b16 %v11925, %v11923
    %v12028 = vpack.c.b16 %v11926, %v11924
    %v12029 = vpack.c.b16 %v11929, %v11927
    %v12030 = vpack.c.b16 %v11930, %v11928
    %v12031 = vpack.c.b16 %v11933, %v11931
    %v12032 = vpack.c.b16 %v11934, %v11932
    %v12033 = vpack.c.b16 %v11937, %v11935
    %v12034 = vpack.c.b16 %v11938, %v11936
    %v12035 = vpack.c.b16 %v11941, %v11939
    %v12036 = vpack.c.b16 %v11942, %v11940
    %v12037 = vpack.c.b16 %v11945, %v11943
    %v12038 = vpack.c.b16 %v11946, %v11944
    %v12039 = vpack.c.b16 %v11949, %v11947
    %v12040 = vpack.c.b16 %v11950, %v11948
    %v12041 = vpack.c.b16 %v11953, %v11951
    %v12042 = vpack.c.b16 %v11954, %v11952
    %v12043 = vpack.c.b16 %v11957, %v11955
    %v12044 = vpack.c.b16 %v11958, %v11956
    %v12045 = vpack.c.b16 %v11961, %v11959
    %v12046 = vpack.c.b16 %v11962, %v11960
    %v12047 = vpack.c.b16 %v11965, %v11963
    %v12048 = vpack.c.b16 %v11966, %v11964
    %v12049 = vpack.c.b16 %v11969, %v11967
    %v12050 = vpack.c.b16 %v11970, %v11968
    %v12051 = vpack.c.b16 %v11973, %v11971
    %v12052 = vpack.c.b16 %v11974, %v11972
    %v12053 = vpack.c.b16 %v11977, %v11975
    %v12054 = vpack.c.b16 %v11978, %v11976
    %v12055 = vpack.c.b16 %v11981, %v11979
    %v12056 = vpack.c.b16 %v11982, %v11980
    %v12057 = vpack.c.b16 %v11985, %v11983
    %v12058 = vpack.c.b16 %v11986, %v11984
    %v12059 = vpack.c.b16 %v11989, %v11987
    %v12060 = vpack.c.b16 %v11990, %v11988
    %v12061 = vpack.c.b16 %v11993, %v11991
    %v12062 = vpack.c.b16 %v11994, %v11992
    %v12063 = vpack.c.b16 %v11997, %v11995
    %v12064 = vpack.c.b16 %v11998, %v11996
    %v12065 = vpack.c.b16 %v12001, %v11999
    %v12066 = vpack.c.b16 %v12002, %v12000
    %12131 = vmatprep.subr.bf16.mxu0 %v12018
    %12132 = vmatpush1.bf16.msra.mxu0 %v12017
    %12133 = vmatprep.subr.bf16.mxu0 %v12016
    %12134 = vmatpush1.bf16.msra.mxu0 %v12015
    %12135 = vmatprep.subr.bf16.mxu0 %v12014
    %12136 = vmatpush1.bf16.msra.mxu0 %v12013
    %12137 = vmatprep.subr.bf16.mxu0 %v12012
    %12138 = vmatpush1.bf16.msra.mxu0 %v12011
    %12139 = vmatprep.subr.bf16.mxu0 %v12010
    %12140 = vmatpush1.bf16.msra.mxu0 %v12009
    %12141 = vmatprep.subr.bf16.mxu0 %v12008
    %12142 = vmatpush1.bf16.msra.mxu0 %v12007
    %12143 = vmatprep.subr.bf16.mxu0 %v12006
    %12144 = vmatpush1.bf16.msra.mxu0 %v12005
    %12145 = vmatprep.subr.bf16.mxu0 %v12004
    %12146 = vmatpush1.bf16.msra.mxu0 %v12003
    %12147 = vmatprep.subr.bf16.mxu0 %v12034
    %12148 = vmatpush2.bf16.msra.mxu0 %v12033
    %12149 = vmatprep.subr.bf16.mxu0 %v12032
    %12150 = vmatpush2.bf16.msra.mxu0 %v12031
    %12151 = vmatprep.subr.bf16.mxu0 %v12030
    %12152 = vmatpush2.bf16.msra.mxu0 %v12029
    %12153 = vmatprep.subr.bf16.mxu0 %v12028
    %12154 = vmatpush2.bf16.msra.mxu0 %v12027
    %12155 = vmatprep.subr.bf16.mxu0 %v12026
    %12156 = vmatpush2.bf16.msra.mxu0 %v12025
    %12157 = vmatprep.subr.bf16.mxu0 %v12024
    %12158 = vmatpush2.bf16.msra.mxu0 %v12023
    %12159 = vmatprep.subr.bf16.mxu0 %v12022
    %12160 = vmatpush2.bf16.msra.mxu0 %v12021
    %12161 = vmatprep.subr.bf16.mxu0 %v12020
    %12162 = vmatpush2.bf16.msra.mxu0 %v12019
    %12163 = vmatprep.mubr.bf16.mxu0 %v11732
    %12164 = vmatmul.mubr.bf16.gmra.mxu0 %v11731
    %v12165 = vpop.f32.mrf.mxu0
    %v12166 = vadd.f32 %v11804, %v12165
    %v12167 = vpop.f32.mrf.mxu0
    %v12168 = vadd.f32 %v11808, %v12167
    %v12169 = vpop.f32.mrf.mxu0
    %v12170 = vadd.f32 %v11804, %v12169
    %v12171 = vpop.f32.mrf.mxu0
    %v12172 = vadd.f32 %v11808, %v12171
    %12173 = vdwg.mxu0
    %12174 = vmatprep.subr.bf16.mxu0 %v12050
    %12175 = vmatpush1.bf16.msra.mxu0 %v12049
    %12176 = vmatprep.subr.bf16.mxu0 %v12048
    %12177 = vmatpush1.bf16.msra.mxu0 %v12047
    %12178 = vmatprep.subr.bf16.mxu0 %v12046
    %12179 = vmatpush1.bf16.msra.mxu0 %v12045
    %12180 = vmatprep.subr.bf16.mxu0 %v12044
    %12181 = vmatpush1.bf16.msra.mxu0 %v12043
    %12182 = vmatprep.subr.bf16.mxu0 %v12042
    %12183 = vmatpush1.bf16.msra.mxu0 %v12041
    %12184 = vmatprep.subr.bf16.mxu0 %v12040
    %12185 = vmatpush1.bf16.msra.mxu0 %v12039
    %12186 = vmatprep.subr.bf16.mxu0 %v12038
    %12187 = vmatpush1.bf16.msra.mxu0 %v12037
    %12188 = vmatprep.subr.bf16.mxu0 %v12036
    %12189 = vmatpush1.bf16.msra.mxu0 %v12035
    %12190 = vmatprep.subr.bf16.mxu0 %v12066
    %12191 = vmatpush2.bf16.msra.mxu0 %v12065
    %12192 = vmatprep.subr.bf16.mxu0 %v12064
    %12193 = vmatpush2.bf16.msra.mxu0 %v12063
    %12194 = vmatprep.subr.bf16.mxu0 %v12062
    %12195 = vmatpush2.bf16.msra.mxu0 %v12061
    %12196 = vmatprep.subr.bf16.mxu0 %v12060
    %12197 = vmatpush2.bf16.msra.mxu0 %v12059
    %12198 = vmatprep.subr.bf16.mxu0 %v12058
    %12199 = vmatpush2.bf16.msra.mxu0 %v12057
    %12200 = vmatprep.subr.bf16.mxu0 %v12056
    %12201 = vmatpush2.bf16.msra.mxu0 %v12055
    %12202 = vmatprep.subr.bf16.mxu0 %v12054
    %12203 = vmatpush2.bf16.msra.mxu0 %v12053
    %12204 = vmatprep.subr.bf16.mxu0 %v12052
    %12205 = vmatpush2.bf16.msra.mxu0 %v12051
    %12206 = vmatprep.mubr.bf16.mxu0 %v11734
    %12207 = vmatmul.mubr.bf16.gmra.mxu0 %v11733
    %v12208 = vpop.f32.mrf.mxu0
    %v12209 = vadd.f32 %v12166, %v12208
    %v12210 = vpop.f32.mrf.mxu0
    %v12211 = vadd.f32 %v12168, %v12210
    %v12212 = vpop.f32.mrf.mxu0
    %v12213 = vadd.f32 %v12170, %v12212
    %v12214 = vpop.f32.mrf.mxu0
    %v12215 = vadd.f32 %v12172, %v12214
    %12216 = vdwg.mxu0
    %s12217 = sld [smem:[#allocation17 + $0x2]]
    %vm12218 = vcmp.gt.f32.partialorder %v12209, 0.0
    %vm12219 = vcmp.gt.f32.partialorder %v12211, 0.0
    %vm12220 = vcmp.gt.f32.partialorder %v12213, 0.0
    %vm12221 = vcmp.gt.f32.partialorder %v12215, 0.0
    %v12222 = vstv %s12217
    %v12223 = vmul.f32 %v12222, %v12209
    %v12224 = vmul.f32 %v12222, %v12211
    %v12225 = vmul.f32 %v12222, %v12213
    %v12226 = vmul.f32 %v12222, %v12215
    %v12227 = vsel %vm12218, %v12209, %v12223
    %v12228 = vsel %vm12219, %v12211, %v12224
    %v12229 = vsel %vm12220, %v12213, %v12225
    %v12230 = vsel %vm12221, %v12215, %v12226
    %v12231 = vpack.c.bf16 %v12229, %v12227
    %v12232 = vpack.c.bf16 %v12230, %v12228
    %v12233 = vld [vmem:[#allocation14] sm:$0xf]
    %v12234 = vld [vmem:[#allocation14 + $0x4] sm:$0xf]
    %v12235 = vld [vmem:[#allocation14 + $0x8] sm:$0xf]
    %v12236 = vld [vmem:[#allocation14 + $0xc] sm:$0xf]
    %v12237 = vld [vmem:[#allocation14 + $0x10] sm:$0xf]
    %v12238 = vld [vmem:[#allocation14 + $0x14] sm:$0xf]
    %v12239 = vld [vmem:[#allocation14 + $0x18] sm:$0xf]
    %v12240 = vld [vmem:[#allocation14 + $0x1c] sm:$0xf]
    %v12241 = vld [vmem:[#allocation14 + $0x20] sm:$0xf]
    %v12242 = vld [vmem:[#allocation14 + $0x24] sm:$0xf]
    %v12243 = vld [vmem:[#allocation14 + $0x28] sm:$0xf]
    %v12244 = vld [vmem:[#allocation14 + $0x2c] sm:$0xf]
    %v12245 = vld [vmem:[#allocation14 + $0x30] sm:$0xf]
    %v12246 = vld [vmem:[#allocation14 + $0x34] sm:$0xf]
    %v12247 = vld [vmem:[#allocation14 + $0x38] sm:$0xf]
    %v12248 = vld [vmem:[#allocation14 + $0x3c] sm:$0xf]
    %v12249 = vld [vmem:[#allocation14 + $0x40] sm:$0xf]
    %v12250 = vld [vmem:[#allocation14 + $0x44] sm:$0xf]
    %v12251 = vld [vmem:[#allocation14 + $0x48] sm:$0xf]
    %v12252 = vld [vmem:[#allocation14 + $0x4c] sm:$0xf]
    %v12253 = vld [vmem:[#allocation14 + $0x50] sm:$0xf]
    %v12254 = vld [vmem:[#allocation14 + $0x54] sm:$0xf]
    %v12255 = vld [vmem:[#allocation14 + $0x58] sm:$0xf]
    %v12256 = vld [vmem:[#allocation14 + $0x5c] sm:$0xf]
    %v12257 = vld [vmem:[#allocation14 + $0x60] sm:$0xf]
    %v12258 = vld [vmem:[#allocation14 + $0x64] sm:$0xf]
    %v12259 = vld [vmem:[#allocation14 + $0x68] sm:$0xf]
    %v12260 = vld [vmem:[#allocation14 + $0x6c] sm:$0xf]
    %v12261 = vld [vmem:[#allocation14 + $0x70] sm:$0xf]
    %v12262 = vld [vmem:[#allocation14 + $0x74] sm:$0xf]
    %v12263 = vld [vmem:[#allocation14 + $0x78] sm:$0xf]
    %v12264 = vld [vmem:[#allocation14 + $0x7c] sm:$0xf]
    %v12265 = vld [vmem:[#allocation16] sm:$0x1]
    %v12267 = vlaneseq
    %v12268 = vshrl.u32 %v12267, 7
    %v12269 = vsub.s32 0, %v12268
    %v12270 = vrot.slane %v12265, %v12269
    %v12304 = vunpack.c.l.b16 %v12233
    %v12305 = vunpack.c.l.b16 %v12234
    %v12306 = vunpack.c.l.b16 %v12235
    %v12307 = vunpack.c.l.b16 %v12236
    %v12308 = vunpack.c.l.b16 %v12237
    %v12309 = vunpack.c.l.b16 %v12238
    %v12310 = vunpack.c.l.b16 %v12239
    %v12311 = vunpack.c.l.b16 %v12240
    %v12312 = vunpack.c.l.b16 %v12241
    %v12313 = vunpack.c.l.b16 %v12242
    %v12314 = vunpack.c.l.b16 %v12243
    %v12315 = vunpack.c.l.b16 %v12244
    %v12316 = vunpack.c.l.b16 %v12245
    %v12317 = vunpack.c.l.b16 %v12246
    %v12318 = vunpack.c.l.b16 %v12247
    %v12319 = vunpack.c.l.b16 %v12248
    %v12320 = vunpack.c.l.b16 %v12249
    %v12321 = vunpack.c.l.b16 %v12250
    %v12322 = vunpack.c.l.b16 %v12251
    %v12323 = vunpack.c.l.b16 %v12252
    %v12324 = vunpack.c.l.b16 %v12253
    %v12325 = vunpack.c.l.b16 %v12254
    %v12326 = vunpack.c.l.b16 %v12255
    %v12327 = vunpack.c.l.b16 %v12256
    %v12328 = vunpack.c.l.b16 %v12257
    %v12329 = vunpack.c.l.b16 %v12258
    %v12330 = vunpack.c.l.b16 %v12259
    %v12331 = vunpack.c.l.b16 %v12260
    %v12332 = vunpack.c.l.b16 %v12261
    %v12333 = vunpack.c.l.b16 %v12262
    %v12334 = vunpack.c.l.b16 %v12263
    %v12335 = vunpack.c.l.b16 %v12264
    %v12336 = vpack.c.b16 %v12305, %v12304
    %v12337 = vpack.c.b16 %v12307, %v12306
    %v12338 = vpack.c.b16 %v12309, %v12308
    %v12339 = vpack.c.b16 %v12311, %v12310
    %v12340 = vpack.c.b16 %v12313, %v12312
    %v12341 = vpack.c.b16 %v12315, %v12314
    %v12342 = vpack.c.b16 %v12317, %v12316
    %v12343 = vpack.c.b16 %v12319, %v12318
    %v12344 = vpack.c.b16 %v12321, %v12320
    %v12345 = vpack.c.b16 %v12323, %v12322
    %v12346 = vpack.c.b16 %v12325, %v12324
    %v12347 = vpack.c.b16 %v12327, %v12326
    %v12348 = vpack.c.b16 %v12329, %v12328
    %v12349 = vpack.c.b16 %v12331, %v12330
    %v12350 = vpack.c.b16 %v12333, %v12332
    %v12351 = vpack.c.b16 %v12335, %v12334
    %12368 = vmatprep.subr.bf16.mxu0 0
    %12369 = vmatpush1.bf16.msra.mxu0 %v12343
    %12370 = vmatprep.subr.bf16.mxu0 0
    %12371 = vmatpush1.bf16.msra.mxu0 %v12342
    %12372 = vmatprep.subr.bf16.mxu0 0
    %12373 = vmatpush1.bf16.msra.mxu0 %v12341
    %12374 = vmatprep.subr.bf16.mxu0 0
    %12375 = vmatpush1.bf16.msra.mxu0 %v12340
    %12376 = vmatprep.subr.bf16.mxu0 0
    %12377 = vmatpush1.bf16.msra.mxu0 %v12339
    %12378 = vmatprep.subr.bf16.mxu0 0
    %12379 = vmatpush1.bf16.msra.mxu0 %v12338
    %12380 = vmatprep.subr.bf16.mxu0 0
    %12381 = vmatpush1.bf16.msra.mxu0 %v12337
    %12382 = vmatprep.subr.bf16.mxu0 0
    %12383 = vmatpush1.bf16.msra.mxu0 %v12336
    %12384 = vmatprep.subr.bf16.mxu0 0
    %12385 = vmatpush2.bf16.msra.mxu0 %v12351
    %12386 = vmatprep.subr.bf16.mxu0 0
    %12387 = vmatpush2.bf16.msra.mxu0 %v12350
    %12388 = vmatprep.subr.bf16.mxu0 0
    %12389 = vmatpush2.bf16.msra.mxu0 %v12349
    %12390 = vmatprep.subr.bf16.mxu0 0
    %12391 = vmatpush2.bf16.msra.mxu0 %v12348
    %12392 = vmatprep.subr.bf16.mxu0 0
    %12393 = vmatpush2.bf16.msra.mxu0 %v12347
    %12394 = vmatprep.subr.bf16.mxu0 0
    %12395 = vmatpush2.bf16.msra.mxu0 %v12346
    %12396 = vmatprep.subr.bf16.mxu0 0
    %12397 = vmatpush2.bf16.msra.mxu0 %v12345
    %12398 = vmatprep.subr.bf16.mxu0 0
    %12399 = vmatpush2.bf16.msra.mxu0 %v12344
    %12400 = vmatprep.mubr.bf16.mxu0 %v12232
    %12401 = vmatmul.mubr.bf16.gmra.mxu0 %v12231
    %v12402 = vpop.f32.mrf.mxu0
    %v12403 = vadd.f32 %v12270, %v12402
    %v12404 = vpop.f32.mrf.mxu0
    %v12405 = vpop.f32.mrf.mxu0
    %v12406 = vadd.f32 %v12270, %v12405
    %v12407 = vpop.f32.mrf.mxu0
    %12408 = vdwg.mxu0
    %12409 = vst [vmem:[%s12] sm:$0xff] %v12403
    %12410 = vst [vmem:[%s12 + $0x8] sm:$0xff] %v12406
    // Predicated region
    $region90: #{two_stream_video_embedding.1} parent=1 // pred_check
      _
    $region91: #{two_stream_video_embedding.1} parent=1 // pred_check_branch
      %12412 = sbr.rel (0) target = $region93
    $region92: #{two_stream_video_embedding.1} parent=1 // pred_region
      _
    $region93: #{two_stream_video_embedding.1} parent=1 // pred_fallthru
      _
    // Predicated region
    $region94: #{two_stream_video_embedding.1} parent=1 // pred_check
      _
    $region95: #{two_stream_video_embedding.1} parent=1 // pred_check_branch
      %12414 = sbr.rel (0) target = $region97
    $region96: #{two_stream_video_embedding.1} parent=1 // pred_region
      _
    $region97: #{two_stream_video_embedding.1} parent=1 // pred_fallthru
      _
    %12415 = vsyncpa [#allocation3], 1
    %12416 = vsyncpa [#allocation6], 1
    %12417 = vsyncpa [#allocation9], 1
    %12418 = vsyncpa [#allocation12], 1
    %12419 = vsyncpa [#allocation15], 1
    %12420 = vsyncpa [#allocation4], 1

</llo_original>
